<compile_context>
chip_gen: v6e
topology: v6e:2x2x1
jax: 0.10.0
libtpu: 0.0.40
codegen_flags: <defaults>
</compile_context>

<pallas_src>
import functools

import numpy as np
import jax
import jax.numpy as jnp
from jax.experimental import pallas as pl
from jax.experimental.pallas import tpu as pltpu

# Full-precision f32 matmuls in the pure-JAX reference so the Pallas path can be
# checked at ~1e-5 tolerance (TPU default matmul precision is bf16-ish).
jax.config.update("jax_default_matmul_precision", "highest")

REDUCE, SHIFT = 0, 1


# ----------------------------- shared cell math -----------------------------


def _lstm_cell(x, h, c, wih, whh, b, H):
    gates = (jnp.dot(x, wih, preferred_element_type=jnp.float32)
             + jnp.dot(h, whh, preferred_element_type=jnp.float32)
             + b)                                      # (B, 4H); 4H == 128 lanes
    i = jax.nn.sigmoid(gates[:, 0 * H:1 * H])
    f = jax.nn.sigmoid(gates[:, 1 * H:2 * H])
    g = jnp.tanh(gates[:, 2 * H:3 * H])
    o = jax.nn.sigmoid(gates[:, 3 * H:4 * H])
    c_new = f * c + i * g
    h_new = o * jnp.tanh(c_new)
    return h_new, c_new


# ----------------------------- Pallas kernels -----------------------------


def _lstm2_seq_kernel(x_ref, wih0_ref, whh0_ref, b0_ref,
                      wih1_ref, whh1_ref, b1_ref, out_ref):
    """Fused 2-layer LSTM over a full sequence; whole sequence resident in VMEM."""
    _, T, B, _ = x_ref.shape
    H = whh0_ref.shape[1]
    xs = x_ref[...]                                     # (1, T, B, Din)
    wih0, whh0, b0 = wih0_ref[0], whh0_ref[0], b0_ref[0]
    wih1, whh1, b1 = wih1_ref[0], whh1_ref[0], b1_ref[0]

    h0 = jnp.zeros((B, H), jnp.float32)
    c0, h1, c1 = h0, h0, h0
    outs = []
    # Serial recurrence fully unrolled in-kernel (T is small); both layers fused.
    for t in range(T):
        h0, c0 = _lstm_cell(xs[0, t], h0, c0, wih0, whh0, b0, H)
        h1, c1 = _lstm_cell(h0, h1, c1, wih1, whh1, b1, H)
        outs.append(h1)
    out_ref[0] = jnp.stack(outs, axis=0)                # single (T, B, H) store


def lstm2_seq(x, p):
    """x: (N, T, B, Din); p: 6-tuple of lstm2 weights stacked with leading N.
    Returns (N, T, B, H) layer-1 hidden states.  Grid axis N is 'parallel' so
    independent sequences (e.g. subtree fwd/bwd) can use both TCs on v7x."""
    wih0, whh0, b0, wih1, whh1, b1 = p
    N, T, B, Din = x.shape
    H = whh0.shape[1]
    w3 = lambda shape: pl.BlockSpec(shape, lambda n: (n, 0, 0))
    return pl.pallas_call(
        _lstm2_seq_kernel,
        out_shape=jax.ShapeDtypeStruct((N, T, B, H), jnp.float32),
        grid_spec=pltpu.PrefetchScalarGridSpec(
            num_scalar_prefetch=0,
            grid=(N,),
            in_specs=[
                pl.BlockSpec((1, T, B, Din), lambda n: (n, 0, 0, 0)),
                w3((1, Din, 4 * H)),
                w3((1, H, 4 * H)),
                w3((1, 1, 4 * H)),
                w3((1, H, 4 * H)),
                w3((1, H, 4 * H)),
                w3((1, 1, 4 * H)),
            ],
            out_specs=pl.BlockSpec((1, T, B, H), lambda n: (n, 0, 0, 0)),
        ),
        compiler_params=pltpu.CompilerParams(
            dimension_semantics=("parallel",)),
    )(x, wih0, whh0, b0, wih1, whh1, b1)


def _lstm2_cell_kernel(x_ref, st_ref, wih0_ref, whh0_ref, b0_ref,
                       wih1_ref, whh1_ref, b1_ref, out_ref):
    """One fused 2-layer LSTM step (incremental StackLSTM push)."""
    H = whh0_ref.shape[0]
    st = st_ref[...]                                    # (4, B, H) = h0,c0,h1,c1
    h0, c0 = _lstm_cell(x_ref[...], st[0], st[1],
                        wih0_ref[...], whh0_ref[...], b0_ref[...], H)
    h1, c1 = _lstm_cell(h0, st[2], st[3],
                        wih1_ref[...], whh1_ref[...], b1_ref[...], H)
    out_ref[...] = jnp.stack([h0, c0, h1, c1], axis=0)


def lstm2_cell(x, state, p):
    wih0, whh0, b0, wih1, whh1, b1 = p
    B = x.shape[0]
    H = whh0.shape[0]
    return pl.pallas_call(
        _lstm2_cell_kernel,
        out_shape=jax.ShapeDtypeStruct((4, B, H), jnp.float32),
        in_specs=[pl.BlockSpec(memory_space=pltpu.MemorySpace.VMEM)] * 8,
        out_specs=pl.BlockSpec(memory_space=pltpu.MemorySpace.VMEM),
    )(x, state, wih0, whh0, b0, wih1, whh1, b1)


def _linear_kernel(x_ref, w_ref, b_ref, o_ref):
    o_ref[...] = (jnp.dot(x_ref[...], w_ref[...],
                          preferred_element_type=jnp.float32) + b_ref[...])


def linear(x, p):
    w_t, b = p
    return pl.pallas_call(
        _linear_kernel,
        out_shape=jax.ShapeDtypeStruct((x.shape[0], w_t.shape[1]), jnp.float32),
        in_specs=[pl.BlockSpec(memory_space=pltpu.MemorySpace.VMEM)] * 3,
        out_specs=pl.BlockSpec(memory_space=pltpu.MemorySpace.VMEM),
    )(x, w_t, b)


def _mlp2_kernel(x_ref, w1_ref, b1_ref, w2_ref, b2_ref, o_ref):
    h = jnp.maximum(
        jnp.dot(x_ref[...], w1_ref[...], preferred_element_type=jnp.float32)
        + b1_ref[...], 0.0)
    o_ref[...] = (jnp.dot(h, w2_ref[...], preferred_element_type=jnp.float32)
                  + b2_ref[...])


def mlp2(x, p):
    w1_t, b1, w2_t, b2 = p
    return pl.pallas_call(
        _mlp2_kernel,
        out_shape=jax.ShapeDtypeStruct((x.shape[0], w2_t.shape[1]), jnp.float32),
        in_specs=[pl.BlockSpec(memory_space=pltpu.MemorySpace.VMEM)] * 5,
        out_specs=pl.BlockSpec(memory_space=pltpu.MemorySpace.VMEM),
    )(x, w1_t, b1, w2_t, b2)


def _action_loss_kernel(x_ref, t_ref, w1_ref, b1_ref, w2_ref, b2_ref, o_ref,
                        *, inv_batch):
    """Batched action MLP + cross-entropy over all action steps; scalar output."""
    h = jnp.maximum(
        jnp.dot(x_ref[...], w1_ref[...], preferred_element_type=jnp.float32)
        + b1_ref[...], 0.0)
    s = (jnp.dot(h, w2_ref[...], preferred_element_type=jnp.float32)
         + b2_ref[...])                                  # (Alen*B, n_actions)
    m = jnp.max(s, axis=-1, keepdims=True)
    lse = jnp.log(jnp.sum(jnp.exp(s - m), axis=-1, keepdims=True)) + m
    ids = jax.lax.broadcasted_iota(jnp.int32, s.shape, 1)
    picked = jnp.sum(jnp.where(ids == t_ref[...], s, 0.0), axis=-1, keepdims=True)
    o_ref[...] = jnp.sum(lse - picked, axis=0, keepdims=True) * inv_batch


def action_loss(parser_states, targets, p, batch_size):
    """Equals  sum_t mean_b CE(action_mlp(parser_state[t,b]), a[t,b])."""
    w1_t, b1, w2_t, b2 = p
    n = parser_states.shape[0]
    out = pl.pallas_call(
        functools.partial(_action_loss_kernel, inv_batch=1.0 / batch_size),
        out_shape=jax.ShapeDtypeStruct((1, 1), jnp.float32),
        in_specs=[pl.BlockSpec(memory_space=pltpu.MemorySpace.VMEM)] * 6,
        out_specs=pl.BlockSpec(memory_space=pltpu.MemorySpace.VMEM),
    )(parser_states, targets.reshape(n, 1).astype(jnp.int32), w1_t, b1, w2_t, b2)
    return out[0, 0]


# ----------------------------- pure-JAX references -----------------------------


def lstm2_seq_ref(x, p):
    wih0, whh0, b0, wih1, whh1, b1 = p
    H = whh0.shape[0]
    B = x.shape[1]

    def layer(xs, wih, whh, b):
        def step(carry, xt):
            h, c = carry
            gates = xt @ wih + h @ whh + b
            i = jax.nn.sigmoid(gates[:, :H])
            f = jax.nn.sigmoid(gates[:, H:2 * H])
            g = jnp.tanh(gates[:, 2 * H:3 * H])
            o = jax.nn.sigmoid(gates[:, 3 * H:])
            c = f * c + i * g
            h = o * jnp.tanh(c)
            return (h, c), h
        init = (jnp.zeros((B, H), jnp.float32), jnp.zeros((B, H), jnp.float32))
        _, ys = jax.lax.scan(step, init, xs)
        return ys

    return layer(layer(x, wih0, whh0, b0), wih1, whh1, b1)


def linear_ref(x, p):
    w_t, b = p
    return x @ w_t + b


def mlp2_ref(x, p):
    w1_t, b1, w2_t, b2 = p
    return jnp.maximum(x @ w1_t + b1, 0.0) @ w2_t + b2


def cross_entropy_ref(scores, targets):
    logp = jax.nn.log_softmax(scores, axis=-1)
    return -jnp.mean(logp[jnp.arange(scores.shape[0]), targets])


# ----------------------------- forward passes -----------------------------


def _stack_lstm2(param_tuples):
    """Stack flat lstm2 6-tuples along a new leading axis (the grid axis N)."""
    return tuple(jnp.stack([p[i] for p in param_tuples], axis=0)
                 for i in range(6))


def disc_rnng_forward_pallas(params, words, actions_np, action2nt):
    B, S = words.shape
    _, Alen = actions_np.shape
    H = params["stack_guard"].shape[0]
    STACK = params["buffer2stack"][0].shape[1]

    winputs = jnp.transpose(params["word_emb"][words], (1, 0, 2))       # (S,B,Wd)
    ainputs = jnp.transpose(params["action_emb"][jnp.asarray(actions_np)],
                            (1, 0, 2))                                  # (A,B,Ad)
    buff = winputs[::-1]
    Wd = buff.shape[-1]

    # Fused 2-layer sequence LSTMs: one pallas_call each, time loop in-kernel.
    buff_encoded = lstm2_seq(buff[None],
                             _stack_lstm2([params["buffer_encoder"]]))[0]
    hist_encoded = lstm2_seq(ainputs[None],
                             _stack_lstm2([params["history_encoder"]]))[0]
    subtree_both = _stack_lstm2([params["subtree_fwd"], params["subtree_bwd"]])

    # Batched projections: one launch for all buffer positions / all NT ids.
    buff_proj = linear(buff.reshape(S * B, Wd),
                       params["buffer2stack"]).reshape(S, B, STACK)
    nt_proj_all = linear(params["nt_emb"], params["nt2stack"])          # (NT,STACK)

    buffer_guard = jnp.broadcast_to(params["buffer_guard"][None, :], (B, H))
    history_guard = jnp.broadcast_to(params["history_guard"][None, :], (B, H))
    stack_guard = jnp.broadcast_to(params["stack_guard"][None, :], (B, H))
    zero_state = jnp.zeros((4, B, H), jnp.float32)

    buff_len, hist_len = S, 0
    stack, stack_open_nt, stack_states = [], [], []
    parser_states, targets = [], []

    for step in range(Alen):
        a_np = np.asarray(actions_np[:, step])

        buff_state = buff_encoded[buff_len - 1] if buff_len > 0 else buffer_guard
        hist_state = hist_encoded[hist_len - 1] if hist_len > 0 else history_guard
        stack_state = stack_states[-1][2] if stack_states else stack_guard
        parser_states.append(
            jnp.concatenate([buff_state, hist_state, stack_state], axis=-1))
        targets.append(a_np.astype(np.int32))

        a0 = int(a_np[0])
        if a0 == REDUCE:
            assert all(int(v) == REDUCE for v in a_np)
            children = []
            while stack_open_nt and not stack_open_nt[-1]:
                children.append(stack.pop())
                stack_open_nt.pop()
                stack_states.pop()
            assert stack_open_nt, "cannot REDUCE because no open nonterm"
            parent = stack.pop()
            stack_open_nt.pop()
            stack_states.pop()
            inputs_fwd = jnp.stack([parent] + children, axis=0)
            inputs_bwd = jnp.stack([parent] + children[::-1], axis=0)
            # fwd + bwd subtree encoders in ONE call (grid axis = direction).
            outs = lstm2_seq(jnp.stack([inputs_fwd, inputs_bwd], axis=0),
                             subtree_both)                              # (2,L,B,S)
            comb = jnp.concatenate([outs[0, -1], outs[1, -1]], axis=-1)
            new_elem = mlp2(comb, params["subtree_mlp"])
            open_nt = False
        elif a0 == SHIFT:
            assert all(int(v) == SHIFT for v in a_np)
            new_elem = buff_proj[buff_len - 1]
            buff_len -= 1
            open_nt = False
        else:
            nt_ids = jnp.asarray([action2nt[int(v)] for v in a_np], jnp.int32)
            new_elem = nt_proj_all[nt_ids]
            open_nt = True

        # Incremental StackLSTM push: one fused 2-layer LSTM cell per action.
        prev_state = stack_states[-1] if stack_states else zero_state
        stack_states.append(lstm2_cell(new_elem, prev_state,
                                       params["stack_encoder"]))
        stack.append(new_elem)
        stack_open_nt.append(open_nt)
        hist_len += 1

    parser_slab = jnp.concatenate(parser_states, axis=0)                # (A*B, 3H)
    target_vec = jnp.asarray(np.concatenate(targets), jnp.int32)
    return action_loss(parser_slab, target_vec, params["action_mlp"], B)


def disc_rnng_forward_ref(params, words, actions_np, action2nt):
    """Pure-JAX reference mirroring the PyTorch module structure 1:1."""
    B, S = words.shape
    _, Alen = actions_np.shape
    H = params["stack_guard"].shape[0]

    winputs = jnp.transpose(params["word_emb"][words], (1, 0, 2))
    ainputs = jnp.transpose(params["action_emb"][jnp.asarray(actions_np)],
                            (1, 0, 2))
    buff = winputs[::-1]
    buff_encoded = lstm2_seq_ref(buff, params["buffer_encoder"])
    hist_encoded = lstm2_seq_ref(ainputs, params["history_encoder"])

    buff_len, hist_len = S, 0
    stack, stack_open_nt = [], []
    loss = jnp.zeros((), jnp.float32)

    for step in range(Alen):
        a_np = np.asarray(actions_np[:, step])
        a = jnp.asarray(a_np, jnp.int32)
        buff_state = (buff_encoded[buff_len - 1] if buff_len > 0 else
                      jnp.broadcast_to(params["buffer_guard"][None, :], (B, H)))
        hist_state = (hist_encoded[hist_len - 1] if hist_len > 0 else
                      jnp.broadcast_to(params["history_guard"][None, :], (B, H)))
        if not stack:
            stack_state = jnp.broadcast_to(params["stack_guard"][None, :], (B, H))
        else:
            sout = lstm2_seq_ref(jnp.stack(stack, axis=0), params["stack_encoder"])
            stack_state = sout[-1]
        parser_state = jnp.concatenate([buff_state, hist_state, stack_state], -1)
        scores = mlp2_ref(parser_state, params["action_mlp"])
        loss = loss + cross_entropy_ref(scores, a)

        a0 = int(a_np[0])
        if a0 == REDUCE:
            children = []
            while stack_open_nt and not stack_open_nt[-1]:
                children.append(stack.pop())
                stack_open_nt.pop()
            assert stack_open_nt, "cannot REDUCE because no open nonterm"
            parent = stack.pop()
            stack_open_nt.pop()
            inputs_fwd = jnp.stack([parent] + children, axis=0)
            inputs_bwd = jnp.stack([parent] + children[::-1], axis=0)
            out_f = lstm2_seq_ref(inputs_fwd, params["subtree_fwd"])[-1]
            out_b = lstm2_seq_ref(inputs_bwd, params["subtree_bwd"])[-1]
            comb = jnp.concatenate([out_f, out_b], axis=-1)
            stack.append(mlp2_ref(comb, params["subtree_mlp"]))
            stack_open_nt.append(False)
        elif a0 == SHIFT:
            stack.append(linear_ref(buff[buff_len - 1], params["buffer2stack"]))
            stack_open_nt.append(False)
            buff_len -= 1
        else:
            nt_ids = jnp.asarray([action2nt[int(v)] for v in a_np], jnp.int32)
            stack.append(linear_ref(params["nt_emb"][nt_ids], params["nt2stack"]))
            stack_open_nt.append(True)
        hist_len += 1

    return loss


# ----------------------------- deterministic param init -----------------------------


def init_linear(key, din, dout):
    k1, k2 = jax.random.split(key)
    w = jax.random.normal(k1, (dout, din), jnp.float32) * 0.1
    b = jax.random.normal(k2, (dout,), jnp.float32) * 0.1
    return (jnp.transpose(w), b.reshape(1, dout))


def init_mlp2(key, din, dh, dout):
    k1, k2 = jax.random.split(key)
    return init_linear(k1, din, dh) + init_linear(k2, dh, dout)


def init_lstm2(key, din, h):
    keys = jax.random.split(key, 8)

    def one(kw, ku, kb1, kb2, d_in):
        w_ih = jax.random.normal(kw, (4 * h, d_in), jnp.float32) * 0.1
        w_hh = jax.random.normal(ku, (4 * h, h), jnp.float32) * 0.1
        b = (jax.random.normal(kb1, (4 * h,), jnp.float32) * 0.1
             + jax.random.normal(kb2, (4 * h,), jnp.float32) * 0.1)
        return (jnp.transpose(w_ih), jnp.transpose(w_hh), b.reshape(1, 4 * h))

    return (one(keys[0], keys[1], keys[2], keys[3], din)
            + one(keys[4], keys[5], keys[6], keys[7], h))   # flat 6-tuple


# ----------------------------- main -----------------------------

if __name__ == "__main__":
    VOCAB, WDIM = 20, 32
    NUM_NT, NTDIM = 3, 16
    N_ACTIONS, ADIM = 5, 16       # REDUCE=0, SHIFT=1, NT actions 2..4
    STACK, HIDDEN = 32, 32
    B, S = 2, 4

    key = jax.random.PRNGKey(0)
    keys = jax.random.split(key, 20)

    params = {
        "word_emb": jax.random.normal(keys[0], (VOCAB, WDIM), jnp.float32) * 0.1,
        "nt_emb": jax.random.normal(keys[1], (NUM_NT, NTDIM), jnp.float32) * 0.1,
        "action_emb": jax.random.normal(keys[2], (N_ACTIONS, ADIM), jnp.float32) * 0.1,
        "buffer2stack": init_linear(keys[3], WDIM, STACK),
        "nt2stack": init_linear(keys[4], NTDIM, STACK),
        "subtree_fwd": init_lstm2(keys[5], STACK, STACK),
        "subtree_bwd": init_lstm2(keys[6], STACK, STACK),
        "subtree_mlp": init_mlp2(keys[7], 2 * STACK, STACK, STACK),
        "buffer_encoder": init_lstm2(keys[8], WDIM, HIDDEN),
        "history_encoder": init_lstm2(keys[9], ADIM, HIDDEN),
        "stack_encoder": init_lstm2(keys[10], STACK, HIDDEN),
        "action_mlp": init_mlp2(keys[11], 3 * HIDDEN, HIDDEN, N_ACTIONS),
        "buffer_guard": jax.random.uniform(keys[12], (HIDDEN,), jnp.float32,
                                           -0.01, 0.01),
        "history_guard": jax.random.uniform(keys[13], (HIDDEN,), jnp.float32,
                                            -0.01, 0.01),
        "stack_guard": jax.random.uniform(keys[14], (HIDDEN,), jnp.float32,
                                          -0.01, 0.01),
    }

    action2nt = {2: 0, 3: 1, 4: 2}
    # Valid action sequence: NT(2) SHIFT SHIFT NT(3) SHIFT SHIFT REDUCE REDUCE
    act_seq = [2, 1, 1, 3, 1, 1, 0, 0]
    actions_np = np.tile(np.array(act_seq, dtype=np.int32), (B, 1))   # (B, 8)
    words = jax.random.randint(keys[15], (B, S), 0, VOCAB, dtype=jnp.int32)

    loss = disc_rnng_forward_pallas(params, words, actions_np, action2nt)
    loss = jax.block_until_ready(loss)

    ref = disc_rnng_forward_ref(params, words, actions_np, action2nt)
    ref = jax.block_until_ready(ref)

    assert np.isfinite(float(loss))
    np.testing.assert_allclose(float(loss), float(ref), rtol=2e-5, atol=2e-5)
    print("KERNEL_OK")
</pallas_src>

<mosaic_0001>
module attributes {stable_mosaic.version = 11 : i64} {
  func.func @_lstm2_seq_kernel(%arg0: i32, %arg1: memref<1x4x2x32xf32, #tpu.memory_space<vmem>>, %arg2: memref<1x32x128xf32, #tpu.memory_space<vmem>>, %arg3: memref<1x32x128xf32, #tpu.memory_space<vmem>>, %arg4: memref<1x1x128xf32, #tpu.memory_space<vmem>>, %arg5: memref<1x32x128xf32, #tpu.memory_space<vmem>>, %arg6: memref<1x32x128xf32, #tpu.memory_space<vmem>>, %arg7: memref<1x1x128xf32, #tpu.memory_space<vmem>>, %arg8: memref<1x4x2x32xf32, #tpu.memory_space<vmem>>) attributes {dimension_semantics = [#tpu.dimension_semantics<parallel>], iteration_bounds = array<i64: 1>, scalar_prefetch = 0 : i64, scratch_operands = 0 : i64, tpu.core_type = #tpu.core_type<tc>, window_params = [{transform_indices = @transform_0, window_bounds = array<i64: 1, 4, 2, 32>}, {transform_indices = @transform_1, window_bounds = array<i64: 1, 32, 128>}, {transform_indices = @transform_2, window_bounds = array<i64: 1, 32, 128>}, {transform_indices = @transform_3, window_bounds = array<i64: 1, 1, 128>}, {transform_indices = @transform_4, window_bounds = array<i64: 1, 32, 128>}, {transform_indices = @transform_5, window_bounds = array<i64: 1, 32, 128>}, {transform_indices = @transform_6, window_bounds = array<i64: 1, 1, 128>}, {transform_indices = @transform_7, window_bounds = array<i64: 1, 4, 2, 32>}]} {
    %c0 = arith.constant 0 : index
    %c0_0 = arith.constant 0 : index
    %c0_1 = arith.constant 0 : index
    %c0_2 = arith.constant 0 : index
    %0 = vector.load %arg1[%c0, %c0_0, %c0_1, %c0_2] : memref<1x4x2x32xf32, #tpu.memory_space<vmem>>, vector<1x4x2x32xf32>
    %c0_3 = arith.constant 0 : index
    %c0_4 = arith.constant 0 : index
    %c0_5 = arith.constant 0 : index
    %1 = vector.load %arg2[%c0_3, %c0_4, %c0_5] : memref<1x32x128xf32, #tpu.memory_space<vmem>>, vector<1x32x128xf32>
    %2 = vector.shape_cast %1 : vector<1x32x128xf32> to vector<32x128xf32>
    %c0_6 = arith.constant 0 : index
    %c0_7 = arith.constant 0 : index
    %c0_8 = arith.constant 0 : index
    %3 = vector.load %arg3[%c0_6, %c0_7, %c0_8] : memref<1x32x128xf32, #tpu.memory_space<vmem>>, vector<1x32x128xf32>
    %4 = vector.shape_cast %3 : vector<1x32x128xf32> to vector<32x128xf32>
    %c0_9 = arith.constant 0 : index
    %c0_10 = arith.constant 0 : index
    %c0_11 = arith.constant 0 : index
    %5 = vector.load %arg4[%c0_9, %c0_10, %c0_11] : memref<1x1x128xf32, #tpu.memory_space<vmem>>, vector<1x1x128xf32>
    %6 = vector.shape_cast %5 : vector<1x1x128xf32> to vector<1x128xf32>
    %c0_12 = arith.constant 0 : index
    %c0_13 = arith.constant 0 : index
    %c0_14 = arith.constant 0 : index
    %7 = vector.load %arg5[%c0_12, %c0_13, %c0_14] : memref<1x32x128xf32, #tpu.memory_space<vmem>>, vector<1x32x128xf32>
    %8 = vector.shape_cast %7 : vector<1x32x128xf32> to vector<32x128xf32>
    %c0_15 = arith.constant 0 : index
    %c0_16 = arith.constant 0 : index
    %c0_17 = arith.constant 0 : index
    %9 = vector.load %arg6[%c0_15, %c0_16, %c0_17] : memref<1x32x128xf32, #tpu.memory_space<vmem>>, vector<1x32x128xf32>
    %10 = vector.shape_cast %9 : vector<1x32x128xf32> to vector<32x128xf32>
    %c0_18 = arith.constant 0 : index
    %c0_19 = arith.constant 0 : index
    %c0_20 = arith.constant 0 : index
    %11 = vector.load %arg7[%c0_18, %c0_19, %c0_20] : memref<1x1x128xf32, #tpu.memory_space<vmem>>, vector<1x1x128xf32>
    %12 = vector.shape_cast %11 : vector<1x1x128xf32> to vector<1x128xf32>
    %cst = arith.constant 0.000000e+00 : f32
    %13 = vector.broadcast %cst : f32 to vector<2x32xf32>
    %14 = vector.extract_strided_slice %0 {offsets = [0, 0, 0, 0], sizes = [1, 1, 2, 32], strides = [1, 1, 1, 1]} : vector<1x4x2x32xf32> to vector<1x1x2x32xf32>
    %15 = vector.shape_cast %14 : vector<1x1x2x32xf32> to vector<2x32xf32>
    %cst_21 = arith.constant dense<0.000000e+00> : vector<2x128xf32>
    %16 = tpu.matmul %15, %2, %cst_21 {dimension_numbers = #tpu.dot_dimension_numbers<[1], [0], [0], [1], [0, 0, 1, 1], [], []>, precision = #tpu.contract_precision<fp32>} : vector<2x32xf32>, vector<32x128xf32>, vector<2x128xf32> -> vector<2x128xf32>
    %cst_22 = arith.constant dense<0.000000e+00> : vector<2x128xf32>
    %17 = tpu.matmul %13, %4, %cst_22 {dimension_numbers = #tpu.dot_dimension_numbers<[1], [0], [0], [1], [0, 0, 1, 1], [], []>, precision = #tpu.contract_precision<fp32>} : vector<2x32xf32>, vector<32x128xf32>, vector<2x128xf32> -> vector<2x128xf32>
    %18 = arith.addf %16, %17 : vector<2x128xf32>
    %19 = vector.broadcast %6 : vector<1x128xf32> to vector<2x128xf32>
    %20 = arith.addf %18, %19 : vector<2x128xf32>
    %21 = vector.extract_strided_slice %20 {offsets = [0, 0], sizes = [2, 32], strides = [1, 1]} : vector<2x128xf32> to vector<2x32xf32>
    %22 = arith.negf %21 : vector<2x32xf32>
    %23 = math.exp %22 : vector<2x32xf32>
    %cst_23 = arith.constant 1.000000e+00 : f32
    %24 = vector.broadcast %cst_23 : f32 to vector<2x32xf32>
    %25 = arith.addf %24, %23 : vector<2x32xf32>
    %26 = arith.divf %24, %25 : vector<2x32xf32>
    %27 = vector.extract_strided_slice %20 {offsets = [0, 32], sizes = [2, 32], strides = [1, 1]} : vector<2x128xf32> to vector<2x32xf32>
    %28 = arith.negf %27 : vector<2x32xf32>
    %29 = math.exp %28 : vector<2x32xf32>
    %cst_24 = arith.constant 1.000000e+00 : f32
    %30 = vector.broadcast %cst_24 : f32 to vector<2x32xf32>
    %31 = arith.addf %30, %29 : vector<2x32xf32>
    %32 = arith.divf %30, %31 : vector<2x32xf32>
    %33 = vector.extract_strided_slice %20 {offsets = [0, 64], sizes = [2, 32], strides = [1, 1]} : vector<2x128xf32> to vector<2x32xf32>
    %34 = math.tanh %33 : vector<2x32xf32>
    %35 = vector.extract_strided_slice %20 {offsets = [0, 96], sizes = [2, 32], strides = [1, 1]} : vector<2x128xf32> to vector<2x32xf32>
    %36 = arith.negf %35 : vector<2x32xf32>
    %37 = math.exp %36 : vector<2x32xf32>
    %cst_25 = arith.constant 1.000000e+00 : f32
    %38 = vector.broadcast %cst_25 : f32 to vector<2x32xf32>
    %39 = arith.addf %38, %37 : vector<2x32xf32>
    %40 = arith.divf %38, %39 : vector<2x32xf32>
    %41 = arith.mulf %32, %13 : vector<2x32xf32>
    %42 = arith.mulf %26, %34 : vector<2x32xf32>
    %43 = arith.addf %41, %42 : vector<2x32xf32>
    %44 = math.tanh %43 : vector<2x32xf32>
    %45 = arith.mulf %40, %44 : vector<2x32xf32>
    %cst_26 = arith.constant dense<0.000000e+00> : vector<2x128xf32>
    %46 = tpu.matmul %45, %8, %cst_26 {dimension_numbers = #tpu.dot_dimension_numbers<[1], [0], [0], [1], [0, 0, 1, 1], [], []>, precision = #tpu.contract_precision<fp32>} : vector<2x32xf32>, vector<32x128xf32>, vector<2x128xf32> -> vector<2x128xf32>
    %cst_27 = arith.constant dense<0.000000e+00> : vector<2x128xf32>
    %47 = tpu.matmul %13, %10, %cst_27 {dimension_numbers = #tpu.dot_dimension_numbers<[1], [0], [0], [1], [0, 0, 1, 1], [], []>, precision = #tpu.contract_precision<fp32>} : vector<2x32xf32>, vector<32x128xf32>, vector<2x128xf32> -> vector<2x128xf32>
    %48 = arith.addf %46, %47 : vector<2x128xf32>
    %49 = vector.broadcast %12 : vector<1x128xf32> to vector<2x128xf32>
    %50 = arith.addf %48, %49 : vector<2x128xf32>
    %51 = vector.extract_strided_slice %50 {offsets = [0, 0], sizes = [2, 32], strides = [1, 1]} : vector<2x128xf32> to vector<2x32xf32>
    %52 = arith.negf %51 : vector<2x32xf32>
    %53 = math.exp %52 : vector<2x32xf32>
    %cst_28 = arith.constant 1.000000e+00 : f32
    %54 = vector.broadcast %cst_28 : f32 to vector<2x32xf32>
    %55 = arith.addf %54, %53 : vector<2x32xf32>
    %56 = arith.divf %54, %55 : vector<2x32xf32>
    %57 = vector.extract_strided_slice %50 {offsets = [0, 32], sizes = [2, 32], strides = [1, 1]} : vector<2x128xf32> to vector<2x32xf32>
    %58 = arith.negf %57 : vector<2x32xf32>
    %59 = math.exp %58 : vector<2x32xf32>
    %cst_29 = arith.constant 1.000000e+00 : f32
    %60 = vector.broadcast %cst_29 : f32 to vector<2x32xf32>
    %61 = arith.addf %60, %59 : vector<2x32xf32>
    %62 = arith.divf %60, %61 : vector<2x32xf32>
    %63 = vector.extract_strided_slice %50 {offsets = [0, 64], sizes = [2, 32], strides = [1, 1]} : vector<2x128xf32> to vector<2x32xf32>
    %64 = math.tanh %63 : vector<2x32xf32>
    %65 = vector.extract_strided_slice %50 {offsets = [0, 96], sizes = [2, 32], strides = [1, 1]} : vector<2x128xf32> to vector<2x32xf32>
    %66 = arith.negf %65 : vector<2x32xf32>
    %67 = math.exp %66 : vector<2x32xf32>
    %cst_30 = arith.constant 1.000000e+00 : f32
    %68 = vector.broadcast %cst_30 : f32 to vector<2x32xf32>
    %69 = arith.addf %68, %67 : vector<2x32xf32>
    %70 = arith.divf %68, %69 : vector<2x32xf32>
    %71 = arith.mulf %62, %13 : vector<2x32xf32>
    %72 = arith.mulf %56, %64 : vector<2x32xf32>
    %73 = arith.addf %71, %72 : vector<2x32xf32>
    %74 = math.tanh %73 : vector<2x32xf32>
    %75 = arith.mulf %70, %74 : vector<2x32xf32>
    %76 = vector.extract_strided_slice %0 {offsets = [0, 1, 0, 0], sizes = [1, 1, 2, 32], strides = [1, 1, 1, 1]} : vector<1x4x2x32xf32> to vector<1x1x2x32xf32>
    %77 = vector.shape_cast %76 : vector<1x1x2x32xf32> to vector<2x32xf32>
    %cst_31 = arith.constant dense<0.000000e+00> : vector<2x128xf32>
    %78 = tpu.matmul %77, %2, %cst_31 {dimension_numbers = #tpu.dot_dimension_numbers<[1], [0], [0], [1], [0, 0, 1, 1], [], []>, precision = #tpu.contract_precision<fp32>} : vector<2x32xf32>, vector<32x128xf32>, vector<2x128xf32> -> vector<2x128xf32>
    %cst_32 = arith.constant dense<0.000000e+00> : vector<2x128xf32>
    %79 = tpu.matmul %45, %4, %cst_32 {dimension_numbers = #tpu.dot_dimension_numbers<[1], [0], [0], [1], [0, 0, 1, 1], [], []>, precision = #tpu.contract_precision<fp32>} : vector<2x32xf32>, vector<32x128xf32>, vector<2x128xf32> -> vector<2x128xf32>
    %80 = arith.addf %78, %79 : vector<2x128xf32>
    %81 = vector.broadcast %6 : vector<1x128xf32> to vector<2x128xf32>
    %82 = arith.addf %80, %81 : vector<2x128xf32>
    %83 = vector.extract_strided_slice %82 {offsets = [0, 0], sizes = [2, 32], strides = [1, 1]} : vector<2x128xf32> to vector<2x32xf32>
    %84 = arith.negf %83 : vector<2x32xf32>
    %85 = math.exp %84 : vector<2x32xf32>
    %cst_33 = arith.constant 1.000000e+00 : f32
    %86 = vector.broadcast %cst_33 : f32 to vector<2x32xf32>
    %87 = arith.addf %86, %85 : vector<2x32xf32>
    %88 = arith.divf %86, %87 : vector<2x32xf32>
    %89 = vector.extract_strided_slice %82 {offsets = [0, 32], sizes = [2, 32], strides = [1, 1]} : vector<2x128xf32> to vector<2x32xf32>
    %90 = arith.negf %89 : vector<2x32xf32>
    %91 = math.exp %90 : vector<2x32xf32>
    %cst_34 = arith.constant 1.000000e+00 : f32
    %92 = vector.broadcast %cst_34 : f32 to vector<2x32xf32>
    %93 = arith.addf %92, %91 : vector<2x32xf32>
    %94 = arith.divf %92, %93 : vector<2x32xf32>
    %95 = vector.extract_strided_slice %82 {offsets = [0, 64], sizes = [2, 32], strides = [1, 1]} : vector<2x128xf32> to vector<2x32xf32>
    %96 = math.tanh %95 : vector<2x32xf32>
    %97 = vector.extract_strided_slice %82 {offsets = [0, 96], sizes = [2, 32], strides = [1, 1]} : vector<2x128xf32> to vector<2x32xf32>
    %98 = arith.negf %97 : vector<2x32xf32>
    %99 = math.exp %98 : vector<2x32xf32>
    %cst_35 = arith.constant 1.000000e+00 : f32
    %100 = vector.broadcast %cst_35 : f32 to vector<2x32xf32>
    %101 = arith.addf %100, %99 : vector<2x32xf32>
    %102 = arith.divf %100, %101 : vector<2x32xf32>
    %103 = arith.mulf %94, %43 : vector<2x32xf32>
    %104 = arith.mulf %88, %96 : vector<2x32xf32>
    %105 = arith.addf %103, %104 : vector<2x32xf32>
    %106 = math.tanh %105 : vector<2x32xf32>
    %107 = arith.mulf %102, %106 : vector<2x32xf32>
    %cst_36 = arith.constant dense<0.000000e+00> : vector<2x128xf32>
    %108 = tpu.matmul %107, %8, %cst_36 {dimension_numbers = #tpu.dot_dimension_numbers<[1], [0], [0], [1], [0, 0, 1, 1], [], []>, precision = #tpu.contract_precision<fp32>} : vector<2x32xf32>, vector<32x128xf32>, vector<2x128xf32> -> vector<2x128xf32>
    %cst_37 = arith.constant dense<0.000000e+00> : vector<2x128xf32>
    %109 = tpu.matmul %75, %10, %cst_37 {dimension_numbers = #tpu.dot_dimension_numbers<[1], [0], [0], [1], [0, 0, 1, 1], [], []>, precision = #tpu.contract_precision<fp32>} : vector<2x32xf32>, vector<32x128xf32>, vector<2x128xf32> -> vector<2x128xf32>
    %110 = arith.addf %108, %109 : vector<2x128xf32>
    %111 = vector.broadcast %12 : vector<1x128xf32> to vector<2x128xf32>
    %112 = arith.addf %110, %111 : vector<2x128xf32>
    %113 = vector.extract_strided_slice %112 {offsets = [0, 0], sizes = [2, 32], strides = [1, 1]} : vector<2x128xf32> to vector<2x32xf32>
    %114 = arith.negf %113 : vector<2x32xf32>
    %115 = math.exp %114 : vector<2x32xf32>
    %cst_38 = arith.constant 1.000000e+00 : f32
    %116 = vector.broadcast %cst_38 : f32 to vector<2x32xf32>
    %117 = arith.addf %116, %115 : vector<2x32xf32>
    %118 = arith.divf %116, %117 : vector<2x32xf32>
    %119 = vector.extract_strided_slice %112 {offsets = [0, 32], sizes = [2, 32], strides = [1, 1]} : vector<2x128xf32> to vector<2x32xf32>
    %120 = arith.negf %119 : vector<2x32xf32>
    %121 = math.exp %120 : vector<2x32xf32>
    %cst_39 = arith.constant 1.000000e+00 : f32
    %122 = vector.broadcast %cst_39 : f32 to vector<2x32xf32>
    %123 = arith.addf %122, %121 : vector<2x32xf32>
    %124 = arith.divf %122, %123 : vector<2x32xf32>
    %125 = vector.extract_strided_slice %112 {offsets = [0, 64], sizes = [2, 32], strides = [1, 1]} : vector<2x128xf32> to vector<2x32xf32>
    %126 = math.tanh %125 : vector<2x32xf32>
    %127 = vector.extract_strided_slice %112 {offsets = [0, 96], sizes = [2, 32], strides = [1, 1]} : vector<2x128xf32> to vector<2x32xf32>
    %128 = arith.negf %127 : vector<2x32xf32>
    %129 = math.exp %128 : vector<2x32xf32>
    %cst_40 = arith.constant 1.000000e+00 : f32
    %130 = vector.broadcast %cst_40 : f32 to vector<2x32xf32>
    %131 = arith.addf %130, %129 : vector<2x32xf32>
    %132 = arith.divf %130, %131 : vector<2x32xf32>
    %133 = arith.mulf %124, %73 : vector<2x32xf32>
    %134 = arith.mulf %118, %126 : vector<2x32xf32>
    %135 = arith.addf %133, %134 : vector<2x32xf32>
    %136 = math.tanh %135 : vector<2x32xf32>
    %137 = arith.mulf %132, %136 : vector<2x32xf32>
    %138 = vector.extract_strided_slice %0 {offsets = [0, 2, 0, 0], sizes = [1, 1, 2, 32], strides = [1, 1, 1, 1]} : vector<1x4x2x32xf32> to vector<1x1x2x32xf32>
    %139 = vector.shape_cast %138 : vector<1x1x2x32xf32> to vector<2x32xf32>
    %cst_41 = arith.constant dense<0.000000e+00> : vector<2x128xf32>
    %140 = tpu.matmul %139, %2, %cst_41 {dimension_numbers = #tpu.dot_dimension_numbers<[1], [0], [0], [1], [0, 0, 1, 1], [], []>, precision = #tpu.contract_precision<fp32>} : vector<2x32xf32>, vector<32x128xf32>, vector<2x128xf32> -> vector<2x128xf32>
    %cst_42 = arith.constant dense<0.000000e+00> : vector<2x128xf32>
    %141 = tpu.matmul %107, %4, %cst_42 {dimension_numbers = #tpu.dot_dimension_numbers<[1], [0], [0], [1], [0, 0, 1, 1], [], []>, precision = #tpu.contract_precision<fp32>} : vector<2x32xf32>, vector<32x128xf32>, vector<2x128xf32> -> vector<2x128xf32>
    %142 = arith.addf %140, %141 : vector<2x128xf32>
    %143 = vector.broadcast %6 : vector<1x128xf32> to vector<2x128xf32>
    %144 = arith.addf %142, %143 : vector<2x128xf32>
    %145 = vector.extract_strided_slice %144 {offsets = [0, 0], sizes = [2, 32], strides = [1, 1]} : vector<2x128xf32> to vector<2x32xf32>
    %146 = arith.negf %145 : vector<2x32xf32>
    %147 = math.exp %146 : vector<2x32xf32>
    %cst_43 = arith.constant 1.000000e+00 : f32
    %148 = vector.broadcast %cst_43 : f32 to vector<2x32xf32>
    %149 = arith.addf %148, %147 : vector<2x32xf32>
    %150 = arith.divf %148, %149 : vector<2x32xf32>
    %151 = vector.extract_strided_slice %144 {offsets = [0, 32], sizes = [2, 32], strides = [1, 1]} : vector<2x128xf32> to vector<2x32xf32>
    %152 = arith.negf %151 : vector<2x32xf32>
    %153 = math.exp %152 : vector<2x32xf32>
    %cst_44 = arith.constant 1.000000e+00 : f32
    %154 = vector.broadcast %cst_44 : f32 to vector<2x32xf32>
    %155 = arith.addf %154, %153 : vector<2x32xf32>
    %156 = arith.divf %154, %155 : vector<2x32xf32>
    %157 = vector.extract_strided_slice %144 {offsets = [0, 64], sizes = [2, 32], strides = [1, 1]} : vector<2x128xf32> to vector<2x32xf32>
    %158 = math.tanh %157 : vector<2x32xf32>
    %159 = vector.extract_strided_slice %144 {offsets = [0, 96], sizes = [2, 32], strides = [1, 1]} : vector<2x128xf32> to vector<2x32xf32>
    %160 = arith.negf %159 : vector<2x32xf32>
    %161 = math.exp %160 : vector<2x32xf32>
    %cst_45 = arith.constant 1.000000e+00 : f32
    %162 = vector.broadcast %cst_45 : f32 to vector<2x32xf32>
    %163 = arith.addf %162, %161 : vector<2x32xf32>
    %164 = arith.divf %162, %163 : vector<2x32xf32>
    %165 = arith.mulf %156, %105 : vector<2x32xf32>
    %166 = arith.mulf %150, %158 : vector<2x32xf32>
    %167 = arith.addf %165, %166 : vector<2x32xf32>
    %168 = math.tanh %167 : vector<2x32xf32>
    %169 = arith.mulf %164, %168 : vector<2x32xf32>
    %cst_46 = arith.constant dense<0.000000e+00> : vector<2x128xf32>
    %170 = tpu.matmul %169, %8, %cst_46 {dimension_numbers = #tpu.dot_dimension_numbers<[1], [0], [0], [1], [0, 0, 1, 1], [], []>, precision = #tpu.contract_precision<fp32>} : vector<2x32xf32>, vector<32x128xf32>, vector<2x128xf32> -> vector<2x128xf32>
    %cst_47 = arith.constant dense<0.000000e+00> : vector<2x128xf32>
    %171 = tpu.matmul %137, %10, %cst_47 {dimension_numbers = #tpu.dot_dimension_numbers<[1], [0], [0], [1], [0, 0, 1, 1], [], []>, precision = #tpu.contract_precision<fp32>} : vector<2x32xf32>, vector<32x128xf32>, vector<2x128xf32> -> vector<2x128xf32>
    %172 = arith.addf %170, %171 : vector<2x128xf32>
    %173 = vector.broadcast %12 : vector<1x128xf32> to vector<2x128xf32>
    %174 = arith.addf %172, %173 : vector<2x128xf32>
    %175 = vector.extract_strided_slice %174 {offsets = [0, 0], sizes = [2, 32], strides = [1, 1]} : vector<2x128xf32> to vector<2x32xf32>
    %176 = arith.negf %175 : vector<2x32xf32>
    %177 = math.exp %176 : vector<2x32xf32>
    %cst_48 = arith.constant 1.000000e+00 : f32
    %178 = vector.broadcast %cst_48 : f32 to vector<2x32xf32>
    %179 = arith.addf %178, %177 : vector<2x32xf32>
    %180 = arith.divf %178, %179 : vector<2x32xf32>
    %181 = vector.extract_strided_slice %174 {offsets = [0, 32], sizes = [2, 32], strides = [1, 1]} : vector<2x128xf32> to vector<2x32xf32>
    %182 = arith.negf %181 : vector<2x32xf32>
    %183 = math.exp %182 : vector<2x32xf32>
    %cst_49 = arith.constant 1.000000e+00 : f32
    %184 = vector.broadcast %cst_49 : f32 to vector<2x32xf32>
    %185 = arith.addf %184, %183 : vector<2x32xf32>
    %186 = arith.divf %184, %185 : vector<2x32xf32>
    %187 = vector.extract_strided_slice %174 {offsets = [0, 64], sizes = [2, 32], strides = [1, 1]} : vector<2x128xf32> to vector<2x32xf32>
    %188 = math.tanh %187 : vector<2x32xf32>
    %189 = vector.extract_strided_slice %174 {offsets = [0, 96], sizes = [2, 32], strides = [1, 1]} : vector<2x128xf32> to vector<2x32xf32>
    %190 = arith.negf %189 : vector<2x32xf32>
    %191 = math.exp %190 : vector<2x32xf32>
    %cst_50 = arith.constant 1.000000e+00 : f32
    %192 = vector.broadcast %cst_50 : f32 to vector<2x32xf32>
    %193 = arith.addf %192, %191 : vector<2x32xf32>
    %194 = arith.divf %192, %193 : vector<2x32xf32>
    %195 = arith.mulf %186, %135 : vector<2x32xf32>
    %196 = arith.mulf %180, %188 : vector<2x32xf32>
    %197 = arith.addf %195, %196 : vector<2x32xf32>
    %198 = math.tanh %197 : vector<2x32xf32>
    %199 = arith.mulf %194, %198 : vector<2x32xf32>
    %200 = vector.extract_strided_slice %0 {offsets = [0, 3, 0, 0], sizes = [1, 1, 2, 32], strides = [1, 1, 1, 1]} : vector<1x4x2x32xf32> to vector<1x1x2x32xf32>
    %201 = vector.shape_cast %200 : vector<1x1x2x32xf32> to vector<2x32xf32>
    %cst_51 = arith.constant dense<0.000000e+00> : vector<2x128xf32>
    %202 = tpu.matmul %201, %2, %cst_51 {dimension_numbers = #tpu.dot_dimension_numbers<[1], [0], [0], [1], [0, 0, 1, 1], [], []>, precision = #tpu.contract_precision<fp32>} : vector<2x32xf32>, vector<32x128xf32>, vector<2x128xf32> -> vector<2x128xf32>
    %cst_52 = arith.constant dense<0.000000e+00> : vector<2x128xf32>
    %203 = tpu.matmul %169, %4, %cst_52 {dimension_numbers = #tpu.dot_dimension_numbers<[1], [0], [0], [1], [0, 0, 1, 1], [], []>, precision = #tpu.contract_precision<fp32>} : vector<2x32xf32>, vector<32x128xf32>, vector<2x128xf32> -> vector<2x128xf32>
    %204 = arith.addf %202, %203 : vector<2x128xf32>
    %205 = vector.broadcast %6 : vector<1x128xf32> to vector<2x128xf32>
    %206 = arith.addf %204, %205 : vector<2x128xf32>
    %207 = vector.extract_strided_slice %206 {offsets = [0, 0], sizes = [2, 32], strides = [1, 1]} : vector<2x128xf32> to vector<2x32xf32>
    %208 = arith.negf %207 : vector<2x32xf32>
    %209 = math.exp %208 : vector<2x32xf32>
    %cst_53 = arith.constant 1.000000e+00 : f32
    %210 = vector.broadcast %cst_53 : f32 to vector<2x32xf32>
    %211 = arith.addf %210, %209 : vector<2x32xf32>
    %212 = arith.divf %210, %211 : vector<2x32xf32>
    %213 = vector.extract_strided_slice %206 {offsets = [0, 32], sizes = [2, 32], strides = [1, 1]} : vector<2x128xf32> to vector<2x32xf32>
    %214 = arith.negf %213 : vector<2x32xf32>
    %215 = math.exp %214 : vector<2x32xf32>
    %cst_54 = arith.constant 1.000000e+00 : f32
    %216 = vector.broadcast %cst_54 : f32 to vector<2x32xf32>
    %217 = arith.addf %216, %215 : vector<2x32xf32>
    %218 = arith.divf %216, %217 : vector<2x32xf32>
    %219 = vector.extract_strided_slice %206 {offsets = [0, 64], sizes = [2, 32], strides = [1, 1]} : vector<2x128xf32> to vector<2x32xf32>
    %220 = math.tanh %219 : vector<2x32xf32>
    %221 = vector.extract_strided_slice %206 {offsets = [0, 96], sizes = [2, 32], strides = [1, 1]} : vector<2x128xf32> to vector<2x32xf32>
    %222 = arith.negf %221 : vector<2x32xf32>
    %223 = math.exp %222 : vector<2x32xf32>
    %cst_55 = arith.constant 1.000000e+00 : f32
    %224 = vector.broadcast %cst_55 : f32 to vector<2x32xf32>
    %225 = arith.addf %224, %223 : vector<2x32xf32>
    %226 = arith.divf %224, %225 : vector<2x32xf32>
    %227 = arith.mulf %218, %167 : vector<2x32xf32>
    %228 = arith.mulf %212, %220 : vector<2x32xf32>
    %229 = arith.addf %227, %228 : vector<2x32xf32>
    %230 = math.tanh %229 : vector<2x32xf32>
    %231 = arith.mulf %226, %230 : vector<2x32xf32>
    %cst_56 = arith.constant dense<0.000000e+00> : vector<2x128xf32>
    %232 = tpu.matmul %231, %8, %cst_56 {dimension_numbers = #tpu.dot_dimension_numbers<[1], [0], [0], [1], [0, 0, 1, 1], [], []>, precision = #tpu.contract_precision<fp32>} : vector<2x32xf32>, vector<32x128xf32>, vector<2x128xf32> -> vector<2x128xf32>
    %cst_57 = arith.constant dense<0.000000e+00> : vector<2x128xf32>
    %233 = tpu.matmul %199, %10, %cst_57 {dimension_numbers = #tpu.dot_dimension_numbers<[1], [0], [0], [1], [0, 0, 1, 1], [], []>, precision = #tpu.contract_precision<fp32>} : vector<2x32xf32>, vector<32x128xf32>, vector<2x128xf32> -> vector<2x128xf32>
    %234 = arith.addf %232, %233 : vector<2x128xf32>
    %235 = vector.broadcast %12 : vector<1x128xf32> to vector<2x128xf32>
    %236 = arith.addf %234, %235 : vector<2x128xf32>
    %237 = vector.extract_strided_slice %236 {offsets = [0, 0], sizes = [2, 32], strides = [1, 1]} : vector<2x128xf32> to vector<2x32xf32>
    %238 = arith.negf %237 : vector<2x32xf32>
    %239 = math.exp %238 : vector<2x32xf32>
    %cst_58 = arith.constant 1.000000e+00 : f32
    %240 = vector.broadcast %cst_58 : f32 to vector<2x32xf32>
    %241 = arith.addf %240, %239 : vector<2x32xf32>
    %242 = arith.divf %240, %241 : vector<2x32xf32>
    %243 = vector.extract_strided_slice %236 {offsets = [0, 32], sizes = [2, 32], strides = [1, 1]} : vector<2x128xf32> to vector<2x32xf32>
    %244 = arith.negf %243 : vector<2x32xf32>
    %245 = math.exp %244 : vector<2x32xf32>
    %cst_59 = arith.constant 1.000000e+00 : f32
    %246 = vector.broadcast %cst_59 : f32 to vector<2x32xf32>
    %247 = arith.addf %246, %245 : vector<2x32xf32>
    %248 = arith.divf %246, %247 : vector<2x32xf32>
    %249 = vector.extract_strided_slice %236 {offsets = [0, 64], sizes = [2, 32], strides = [1, 1]} : vector<2x128xf32> to vector<2x32xf32>
    %250 = math.tanh %249 : vector<2x32xf32>
    %251 = vector.extract_strided_slice %236 {offsets = [0, 96], sizes = [2, 32], strides = [1, 1]} : vector<2x128xf32> to vector<2x32xf32>
    %252 = arith.negf %251 : vector<2x32xf32>
    %253 = math.exp %252 : vector<2x32xf32>
    %cst_60 = arith.constant 1.000000e+00 : f32
    %254 = vector.broadcast %cst_60 : f32 to vector<2x32xf32>
    %255 = arith.addf %254, %253 : vector<2x32xf32>
    %256 = arith.divf %254, %255 : vector<2x32xf32>
    %257 = arith.mulf %248, %197 : vector<2x32xf32>
    %258 = arith.mulf %242, %250 : vector<2x32xf32>
    %259 = arith.addf %257, %258 : vector<2x32xf32>
    %260 = math.tanh %259 : vector<2x32xf32>
    %261 = arith.mulf %256, %260 : vector<2x32xf32>
    %262 = vector.shape_cast %75 : vector<2x32xf32> to vector<1x2x32xf32>
    %263 = vector.shape_cast %137 : vector<2x32xf32> to vector<1x2x32xf32>
    %264 = vector.shape_cast %199 : vector<2x32xf32> to vector<1x2x32xf32>
    %265 = vector.shape_cast %261 : vector<2x32xf32> to vector<1x2x32xf32>
    %266 = tpu.concatenate %262, %263, %264, %265 in 0 : vector<1x2x32xf32>, vector<1x2x32xf32>, vector<1x2x32xf32>, vector<1x2x32xf32> -> vector<4x2x32xf32>
    %c0_61 = arith.constant 0 : index
    %c0_62 = arith.constant 0 : index
    %c0_63 = arith.constant 0 : index
    %c0_64 = arith.constant 0 : index
    %267 = vector.load %arg8[%c0_61, %c0_62, %c0_63, %c0_64] : memref<1x4x2x32xf32, #tpu.memory_space<vmem>>, vector<1x4x2x32xf32>
    %268 = vector.shape_cast %267 : vector<1x4x2x32xf32> to vector<4x2x32xf32>
    %269 = vector.shape_cast %266 : vector<4x2x32xf32> to vector<1x4x2x32xf32>
    tpu.vector_store %arg8[%c0_61, %c0_62, %c0_63, %c0_64], %269 {strides = array<i32>} : memref<1x4x2x32xf32, #tpu.memory_space<vmem>>, vector<1x4x2x32xf32>,
    return
  }
  func.func @transform_0(%arg0: i32) -> (i32, i32, i32, i32) {
    %c0_i32 = arith.constant 0 : i32
    %c0_i32_0 = arith.constant 0 : i32
    %c0_i32_1 = arith.constant 0 : i32
    %c0_i32_2 = arith.constant 0 : i32
    return %arg0, %c0_i32, %c0_i32_0, %c0_i32_1 : i32, i32, i32, i32
  }
  func.func @transform_1(%arg0: i32) -> (i32, i32, i32) {
    %c0_i32 = arith.constant 0 : i32
    %c0_i32_0 = arith.constant 0 : i32
    %c0_i32_1 = arith.constant 0 : i32
    return %arg0, %c0_i32, %c0_i32_0 : i32, i32, i32
  }
  func.func @transform_2(%arg0: i32) -> (i32, i32, i32) {
    %c0_i32 = arith.constant 0 : i32
    %c0_i32_0 = arith.constant 0 : i32
    %c0_i32_1 = arith.constant 0 : i32
    return %arg0, %c0_i32, %c0_i32_0 : i32, i32, i32
  }
  func.func @transform_3(%arg0: i32) -> (i32, i32, i32) {
    %c0_i32 = arith.constant 0 : i32
    %c0_i32_0 = arith.constant 0 : i32
    %c0_i32_1 = arith.constant 0 : i32
    return %arg0, %c0_i32, %c0_i32_0 : i32, i32, i32
  }
  func.func @transform_4(%arg0: i32) -> (i32, i32, i32) {
    %c0_i32 = arith.constant 0 : i32
    %c0_i32_0 = arith.constant 0 : i32
    %c0_i32_1 = arith.constant 0 : i32
    return %arg0, %c0_i32, %c0_i32_0 : i32, i32, i32
  }
  func.func @transform_5(%arg0: i32) -> (i32, i32, i32) {
    %c0_i32 = arith.constant 0 : i32
    %c0_i32_0 = arith.constant 0 : i32
    %c0_i32_1 = arith.constant 0 : i32
    return %arg0, %c0_i32, %c0_i32_0 : i32, i32, i32
  }
  func.func @transform_6(%arg0: i32) -> (i32, i32, i32) {
    %c0_i32 = arith.constant 0 : i32
    %c0_i32_0 = arith.constant 0 : i32
    %c0_i32_1 = arith.constant 0 : i32
    return %arg0, %c0_i32, %c0_i32_0 : i32, i32, i32
  }
  func.func @transform_7(%arg0: i32) -> (i32, i32, i32, i32) {
    %c0_i32 = arith.constant 0 : i32
    %c0_i32_0 = arith.constant 0 : i32
    %c0_i32_1 = arith.constant 0 : i32
    %c0_i32_2 = arith.constant 0 : i32
    return %arg0, %c0_i32, %c0_i32_0, %c0_i32_1 : i32, i32, i32, i32
  }
}

</mosaic_0001>

<llo_original>
// kernel: tpu_custom_call.1
$region0: #{tpu_custom_call.1}
  #allocation0 [shape = 'u32[]', space=smem, size = 0x4, offset = 0x4, fixed_abs, tag = 'smem constant byte address 0x4 - core index']
  #allocation1 [shape = 'u32[144,128]{1,0:T(1,128)}', space=vmem, size = 0x12000, scoped, tag = 'internal scratch']
  %s0 = inlined_call_operand.hbm [shape: f32[1,4,2,32], index: 0, kind: input, shape index: {}]
  %s1 = inlined_call_operand.hbm [shape: f32[1,32,128], index: 1, kind: input, shape index: {}]
  %s2 = inlined_call_operand.hbm [shape: f32[1,32,128], index: 2, kind: input, shape index: {}]
  %s3 = inlined_call_operand.vmem [shape: f32[1,1,128], index: 3, kind: input, shape index: {}]
  %s4 = inlined_call_operand.hbm [shape: f32[1,32,128], index: 4, kind: input, shape index: {}]
  %s5 = inlined_call_operand.hbm [shape: f32[1,32,128], index: 5, kind: input, shape index: {}]
  %s6 = inlined_call_operand.vmem [shape: f32[1,1,128], index: 6, kind: input, shape index: {}]
  %s7 = inlined_call_operand.hbm [shape: f32[1,4,2,32], index: 7, kind: output, shape index: {}]
  %s8 = sld [smem:[#allocation0]]
  $region58: #{tpu_custom_call.1} parent=0
    _
  %s10 = ssub.s32 1, %s8
  %s11 = scalar_select 0, %s10, %s8
  $region1: #{tpu_custom_call.1} parent=0
    #allocation2 [shape = 'u8[4096]{0}', space=vmem, size = 0x1000, scoped, tag = 'input window, operand 0, single buffered']
    #allocation3 [shape = 's32[1]{0}', space=sflag, size = 0x4, scoped, tag = 'scoped memory for tpu_custom_call.1']
    #allocation4 [shape = 's32[1]{0}', space=sflag, size = 0x4, scoped, tag = 'scoped memory for tpu_custom_call.1']
    #allocation5 [shape = 'u8[16384]{0}', space=vmem, size = 0x4000, scoped, tag = 'input window, operand 1, single buffered']
    #allocation6 [shape = 's32[1]{0}', space=sflag, size = 0x4, scoped, tag = 'scoped memory for tpu_custom_call.1']
    #allocation7 [shape = 'u8[16384]{0}', space=vmem, size = 0x4000, scoped, tag = 'input window, operand 2, single buffered']
    #allocation8 [shape = 'u8[16384]{0}', space=vmem, size = 0x4000, scoped, tag = 'input window, operand 4, single buffered']
    #allocation9 [shape = 's32[1]{0}', space=sflag, size = 0x4, scoped, tag = 'scoped memory for tpu_custom_call.1']
    #allocation10 [shape = 'u8[16384]{0}', space=vmem, size = 0x4000, scoped, tag = 'input window, operand 5, single buffered']
    #allocation11 [shape = 'u8[4096]{0}', space=vmem, size = 0x1000, scoped, tag = 'output window, operand 0, single buffered']
    %12 = vsyncpa [#allocation3], 0
    %13 = vsyncpa [#allocation6], 0
    %14 = vsyncpa [#allocation9], 0
    %15 = vsyncpa [#allocation4], 0
    // Predicated region
    $region2: #{tpu_custom_call.1} parent=1 // pred_check
      _
    $region3: #{tpu_custom_call.1} parent=1 // pred_check_branch
      %17 = sbr.rel (0) target = $region5
    $region4: #{tpu_custom_call.1} parent=1 // pred_region
      %s19 = ssub.s32 128, 128
      %20 = vsyncadd [#allocation3], %s19
      %s21 = sshll.u32 [#allocation2], 4
      %s22 = int_to_ptr.vmem [resolvable:$true] %s21
      %27 = dma.hbm_to_vmem [thread:$0]  %s0, 128, %s22, [#allocation3], 32, 32, 2
    $region5: #{tpu_custom_call.1} parent=1 // pred_fallthru
      _
    // Predicated region
    $region6: #{tpu_custom_call.1} parent=1 // pred_check
      _
    $region7: #{tpu_custom_call.1} parent=1 // pred_check_branch
      %29 = sbr.rel (0) target = $region9
    $region8: #{tpu_custom_call.1} parent=1 // pred_region
      %s31 = ssub.s32 512, 512
      %32 = vsyncadd [#allocation6], %s31
      %s33 = sshll.u32 [#allocation5], 4
      %s34 = int_to_ptr.vmem [resolvable:$true] %s33
      %39 = dma.hbm_to_vmem [thread:$0]  %s1, 512, %s34, [#allocation6], 128, 128, 8
    $region9: #{tpu_custom_call.1} parent=1 // pred_fallthru
      _
    // Predicated region
    $region10: #{tpu_custom_call.1} parent=1 // pred_check
      _
    $region11: #{tpu_custom_call.1} parent=1 // pred_check_branch
      %41 = sbr.rel (0) target = $region13
    $region12: #{tpu_custom_call.1} parent=1 // pred_region
      %s43 = ssub.s32 512, 512
      %44 = vsyncadd [#allocation6], %s43
      %s45 = sshll.u32 [#allocation7], 4
      %s46 = int_to_ptr.vmem [resolvable:$true] %s45
      %51 = dma.hbm_to_vmem [thread:$0]  %s2, 512, %s46, [#allocation6], 128, 128, 8
    $region13: #{tpu_custom_call.1} parent=1 // pred_fallthru
      _
    // Predicated region
    $region14: #{tpu_custom_call.1} parent=1 // pred_check
      _
    $region15: #{tpu_custom_call.1} parent=1 // pred_check_branch
      %53 = sbr.rel (0) target = $region17
    $region16: #{tpu_custom_call.1} parent=1 // pred_region
      _
    $region17: #{tpu_custom_call.1} parent=1 // pred_fallthru
      _
    // Predicated region
    $region18: #{tpu_custom_call.1} parent=1 // pred_check
      _
    $region19: #{tpu_custom_call.1} parent=1 // pred_check_branch
      %55 = sbr.rel (0) target = $region21
    $region20: #{tpu_custom_call.1} parent=1 // pred_region
      %s57 = ssub.s32 512, 512
      %58 = vsyncadd [#allocation9], %s57
      %s59 = sshll.u32 [#allocation8], 4
      %s60 = int_to_ptr.vmem [resolvable:$true] %s59
      %65 = dma.hbm_to_vmem [thread:$0]  %s4, 512, %s60, [#allocation9], 128, 128, 8
    $region21: #{tpu_custom_call.1} parent=1 // pred_fallthru
      _
    // Predicated region
    $region22: #{tpu_custom_call.1} parent=1 // pred_check
      _
    $region23: #{tpu_custom_call.1} parent=1 // pred_check_branch
      %67 = sbr.rel (0) target = $region25
    $region24: #{tpu_custom_call.1} parent=1 // pred_region
      %s69 = ssub.s32 512, 512
      %70 = vsyncadd [#allocation9], %s69
      %s71 = sshll.u32 [#allocation10], 4
      %s72 = int_to_ptr.vmem [resolvable:$true] %s71
      %77 = dma.hbm_to_vmem [thread:$0]  %s5, 512, %s72, [#allocation9], 128, 128, 8
    $region25: #{tpu_custom_call.1} parent=1 // pred_fallthru
      _
    // Predicated region
    $region26: #{tpu_custom_call.1} parent=1 // pred_check
      _
    $region27: #{tpu_custom_call.1} parent=1 // pred_check_branch
      %79 = sbr.rel (0) target = $region29
    $region28: #{tpu_custom_call.1} parent=1 // pred_region
      _
    $region29: #{tpu_custom_call.1} parent=1 // pred_fallthru
      _
    // Predicated region
    $region30: #{tpu_custom_call.1} parent=1 // pred_check
      _
    $region31: #{tpu_custom_call.1} parent=1 // pred_check_branch
      %81 = sbr.rel (0) target = $region33
    $region32: #{tpu_custom_call.1} parent=1 // pred_region
      %82 = dma.done [#allocation3], 128
    $region33: #{tpu_custom_call.1} parent=1 // pred_fallthru
      _
    // Predicated region
    $region34: #{tpu_custom_call.1} parent=1 // pred_check
      _
    $region35: #{tpu_custom_call.1} parent=1 // pred_check_branch
      %84 = sbr.rel (0) target = $region37
    $region36: #{tpu_custom_call.1} parent=1 // pred_region
      %85 = dma.done [#allocation6], 512
    $region37: #{tpu_custom_call.1} parent=1 // pred_fallthru
      _
    // Predicated region
    $region38: #{tpu_custom_call.1} parent=1 // pred_check
      _
    $region39: #{tpu_custom_call.1} parent=1 // pred_check_branch
      %87 = sbr.rel (0) target = $region41
    $region40: #{tpu_custom_call.1} parent=1 // pred_region
      %88 = dma.done [#allocation6], 512
    $region41: #{tpu_custom_call.1} parent=1 // pred_fallthru
      _
    // Predicated region
    $region42: #{tpu_custom_call.1} parent=1 // pred_check
      _
    $region43: #{tpu_custom_call.1} parent=1 // pred_check_branch
      %90 = sbr.rel (0) target = $region45
    $region44: #{tpu_custom_call.1} parent=1 // pred_region
      %91 = dma.done [#allocation9], 512
    $region45: #{tpu_custom_call.1} parent=1 // pred_fallthru
      _
    // Predicated region
    $region46: #{tpu_custom_call.1} parent=1 // pred_check
      _
    $region47: #{tpu_custom_call.1} parent=1 // pred_check_branch
      %93 = sbr.rel (0) target = $region49
    $region48: #{tpu_custom_call.1} parent=1 // pred_region
      %94 = dma.done [#allocation9], 512
    $region49: #{tpu_custom_call.1} parent=1 // pred_fallthru
      _
    %v95 = vld [vmem:[#allocation2] sm:$0x3]
    %v96 = vld [vmem:[#allocation2 + $0x2] sm:$0x3]
    %v97 = vld [vmem:[#allocation2 + $0x4] sm:$0x3]
    %v98 = vld [vmem:[#allocation2 + $0x6] sm:$0x3]
    %v99 = vld [vmem:[#allocation5] sm:$0xff]
    %v100 = vld [vmem:[#allocation5 + $0x8] sm:$0xff]
    %v101 = vld [vmem:[#allocation5 + $0x10] sm:$0xff]
    %v102 = vld [vmem:[#allocation5 + $0x18] sm:$0xff]
    %v103 = vld [vmem:[#allocation7] sm:$0xff]
    %v104 = vld [vmem:[#allocation7 + $0x8] sm:$0xff]
    %v105 = vld [vmem:[#allocation7 + $0x10] sm:$0xff]
    %v106 = vld [vmem:[#allocation7 + $0x18] sm:$0xff]
    %v107 = vld [vmem:[%s3] sm:$0x1]
    %v108 = vld [vmem:[#allocation8] sm:$0xff]
    %v109 = vld [vmem:[#allocation8 + $0x8] sm:$0xff]
    %v110 = vld [vmem:[#allocation8 + $0x10] sm:$0xff]
    %v111 = vld [vmem:[#allocation8 + $0x18] sm:$0xff]
    %v112 = vld [vmem:[#allocation10] sm:$0xff]
    %v113 = vld [vmem:[#allocation10 + $0x8] sm:$0xff]
    %v114 = vld [vmem:[#allocation10 + $0x10] sm:$0xff]
    %v115 = vld [vmem:[#allocation10 + $0x18] sm:$0xff]
    %v116 = vld [vmem:[%s6] sm:$0x1]
    %vm117 = vcmask 261120
    %v119 = vsel %vm117, 0.0, 0
    %121 = vmatprep.subr.mxu0 0.0
    %122 = vmatpush1.msra.mxu0 0.0
    %123 = vmatprep.subr.mxu0 0.0
    %124 = vmatpush1.msra.mxu0 0.0
    %125 = vmatprep.subr.mxu0 0.0
    %126 = vmatpush1.msra.mxu0 0.0
    %127 = vmatprep.subr.mxu0 0.0
    %128 = vmatpush1.msra.mxu0 0.0
    %129 = vmatprep.subr.mxu0 0.0
    %130 = vmatpush1.msra.mxu0 0.0
    %131 = vmatprep.subr.mxu0 0.0
    %132 = vmatpush1.msra.mxu0 0.0
    %133 = vmatprep.subr.mxu0 0.0
    %134 = vmatpush1.msra.mxu0 0.0
    %135 = vmatprep.subr.mxu0 0.0
    %136 = vmatpush1.msra.mxu0 0.0
    %137 = vmatprep.subr.mxu0 0.0
    %138 = vmatpush1.msra.mxu0 0.0
    %139 = vmatprep.subr.mxu0 0.0
    %140 = vmatpush1.msra.mxu0 0.0
    %141 = vmatprep.subr.mxu0 0.0
    %142 = vmatpush1.msra.mxu0 0.0
    %143 = vmatprep.subr.mxu0 0.0
    %144 = vmatpush1.msra.mxu0 0.0
    %145 = vmatprep.subr.mxu0 0.0
    %v146 = vand.u32 %v106, 4294901760
    %147 = vmatpush1.msra.mxu0 %v146
    %148 = vmatprep.subr.mxu0 0.0
    %v149 = vand.u32 %v105, 4294901760
    %150 = vmatpush1.msra.mxu0 %v149
    %151 = vmatprep.subr.mxu0 0.0
    %v152 = vand.u32 %v104, 4294901760
    %153 = vmatpush1.msra.mxu0 %v152
    %154 = vmatprep.subr.mxu0 0.0
    %v155 = vand.u32 %v103, 4294901760
    %156 = vmatpush1.msra.mxu0 %v155
    %157 = vmatprep.subr.mxu0 0.0
    %158 = vmatpush2.msra.mxu0 0.0
    %159 = vmatprep.subr.mxu0 0.0
    %160 = vmatpush2.msra.mxu0 0.0
    %161 = vmatprep.subr.mxu0 0.0
    %162 = vmatpush2.msra.mxu0 0.0
    %163 = vmatprep.subr.mxu0 0.0
    %164 = vmatpush2.msra.mxu0 0.0
    %165 = vmatprep.subr.mxu0 0.0
    %166 = vmatpush2.msra.mxu0 0.0
    %167 = vmatprep.subr.mxu0 0.0
    %168 = vmatpush2.msra.mxu0 0.0
    %169 = vmatprep.subr.mxu0 0.0
    %170 = vmatpush2.msra.mxu0 0.0
    %171 = vmatprep.subr.mxu0 0.0
    %172 = vmatpush2.msra.mxu0 0.0
    %173 = vmatprep.subr.mxu0 0.0
    %174 = vmatpush2.msra.mxu0 0.0
    %175 = vmatprep.subr.mxu0 0.0
    %176 = vmatpush2.msra.mxu0 0.0
    %177 = vmatprep.subr.mxu0 0.0
    %178 = vmatpush2.msra.mxu0 0.0
    %179 = vmatprep.subr.mxu0 0.0
    %180 = vmatpush2.msra.mxu0 0.0
    %181 = vmatprep.subr.mxu0 0.0
    %182 = vmatpush2.msra.mxu0 0.0
    %183 = vmatprep.subr.mxu0 0.0
    %184 = vmatpush2.msra.mxu0 0.0
    %185 = vmatprep.subr.mxu0 0.0
    %186 = vmatpush2.msra.mxu0 0.0
    %187 = vmatprep.subr.mxu0 0.0
    %188 = vmatpush2.msra.mxu0 0.0
    %189 = vmatprep.mubr.f32.mxu0 0.0
    %v190 = vand.u32 %v119, 4294901760
    %v191 = vsub.f32 %v119, %v190
    %v192 = vand.u32 %v191, 4294901760
    %v193 = vsub.f32 %v191, %v192
    %v194 = vand.u32 %v193, 4294901760
    %195 = vmatmul.mubr.f32.gmra.mxu0 %v194
    %v196 = vpop.f32.mrf.mxu0
    %v197 = vadd.f32 0.0, %v196
    %v198 = vpop.f32.mrf.mxu0
    %199 = vdwg.mxu0
    %200 = vmatprep.subr.mxu0 0.0
    %201 = vmatpush1.msra.mxu0 0.0
    %202 = vmatprep.subr.mxu0 0.0
    %203 = vmatpush1.msra.mxu0 0.0
    %204 = vmatprep.subr.mxu0 0.0
    %205 = vmatpush1.msra.mxu0 0.0
    %206 = vmatprep.subr.mxu0 0.0
    %207 = vmatpush1.msra.mxu0 0.0
    %208 = vmatprep.subr.mxu0 0.0
    %209 = vmatpush1.msra.mxu0 0.0
    %210 = vmatprep.subr.mxu0 0.0
    %211 = vmatpush1.msra.mxu0 0.0
    %212 = vmatprep.subr.mxu0 0.0
    %213 = vmatpush1.msra.mxu0 0.0
    %214 = vmatprep.subr.mxu0 0.0
    %215 = vmatpush1.msra.mxu0 0.0
    %216 = vmatprep.subr.mxu0 0.0
    %217 = vmatpush1.msra.mxu0 0.0
    %218 = vmatprep.subr.mxu0 0.0
    %219 = vmatpush1.msra.mxu0 0.0
    %220 = vmatprep.subr.mxu0 0.0
    %221 = vmatpush1.msra.mxu0 0.0
    %222 = vmatprep.subr.mxu0 0.0
    %223 = vmatpush1.msra.mxu0 0.0
    %224 = vmatprep.subr.mxu0 0.0
    %v225 = vand.u32 %v106, 4294901760
    %v226 = vsub.f32 %v106, %v225
    %v227 = vand.u32 %v226, 4294901760
    %v228 = vsub.f32 %v226, %v227
    %v229 = vand.u32 %v228, 4294901760
    %230 = vmatpush1.msra.mxu0 %v229
    %231 = vmatprep.subr.mxu0 0.0
    %v232 = vand.u32 %v105, 4294901760
    %v233 = vsub.f32 %v105, %v232
    %v234 = vand.u32 %v233, 4294901760
    %v235 = vsub.f32 %v233, %v234
    %v236 = vand.u32 %v235, 4294901760
    %237 = vmatpush1.msra.mxu0 %v236
    %238 = vmatprep.subr.mxu0 0.0
    %v239 = vand.u32 %v104, 4294901760
    %v240 = vsub.f32 %v104, %v239
    %v241 = vand.u32 %v240, 4294901760
    %v242 = vsub.f32 %v240, %v241
    %v243 = vand.u32 %v242, 4294901760
    %244 = vmatpush1.msra.mxu0 %v243
    %245 = vmatprep.subr.mxu0 0.0
    %v246 = vand.u32 %v103, 4294901760
    %v247 = vsub.f32 %v103, %v246
    %v248 = vand.u32 %v247, 4294901760
    %v249 = vsub.f32 %v247, %v248
    %v250 = vand.u32 %v249, 4294901760
    %251 = vmatpush1.msra.mxu0 %v250
    %252 = vmatprep.subr.mxu0 0.0
    %253 = vmatpush2.msra.mxu0 0.0
    %254 = vmatprep.subr.mxu0 0.0
    %255 = vmatpush2.msra.mxu0 0.0
    %256 = vmatprep.subr.mxu0 0.0
    %257 = vmatpush2.msra.mxu0 0.0
    %258 = vmatprep.subr.mxu0 0.0
    %259 = vmatpush2.msra.mxu0 0.0
    %260 = vmatprep.subr.mxu0 0.0
    %261 = vmatpush2.msra.mxu0 0.0
    %262 = vmatprep.subr.mxu0 0.0
    %263 = vmatpush2.msra.mxu0 0.0
    %264 = vmatprep.subr.mxu0 0.0
    %265 = vmatpush2.msra.mxu0 0.0
    %266 = vmatprep.subr.mxu0 0.0
    %267 = vmatpush2.msra.mxu0 0.0
    %268 = vmatprep.subr.mxu0 0.0
    %269 = vmatpush2.msra.mxu0 0.0
    %270 = vmatprep.subr.mxu0 0.0
    %271 = vmatpush2.msra.mxu0 0.0
    %272 = vmatprep.subr.mxu0 0.0
    %273 = vmatpush2.msra.mxu0 0.0
    %274 = vmatprep.subr.mxu0 0.0
    %275 = vmatpush2.msra.mxu0 0.0
    %276 = vmatprep.subr.mxu0 0.0
    %277 = vmatpush2.msra.mxu0 0.0
    %278 = vmatprep.subr.mxu0 0.0
    %279 = vmatpush2.msra.mxu0 0.0
    %280 = vmatprep.subr.mxu0 0.0
    %281 = vmatpush2.msra.mxu0 0.0
    %282 = vmatprep.subr.mxu0 0.0
    %283 = vmatpush2.msra.mxu0 0.0
    %284 = vmatprep.mubr.f32.mxu0 0.0
    %v285 = vand.u32 %v119, 4294901760
    %286 = vmatmul.mubr.f32.gmra.mxu0 %v285
    %v287 = vpop.f32.mrf.mxu0
    %v288 = vadd.f32 %v197, %v287
    %v289 = vpop.f32.mrf.mxu0
    %290 = vdwg.mxu0
    %291 = vmatprep.subr.mxu0 0.0
    %292 = vmatpush1.msra.mxu0 0.0
    %293 = vmatprep.subr.mxu0 0.0
    %294 = vmatpush1.msra.mxu0 0.0
    %295 = vmatprep.subr.mxu0 0.0
    %296 = vmatpush1.msra.mxu0 0.0
    %297 = vmatprep.subr.mxu0 0.0
    %298 = vmatpush1.msra.mxu0 0.0
    %299 = vmatprep.subr.mxu0 0.0
    %300 = vmatpush1.msra.mxu0 0.0
    %301 = vmatprep.subr.mxu0 0.0
    %302 = vmatpush1.msra.mxu0 0.0
    %303 = vmatprep.subr.mxu0 0.0
    %304 = vmatpush1.msra.mxu0 0.0
    %305 = vmatprep.subr.mxu0 0.0
    %306 = vmatpush1.msra.mxu0 0.0
    %307 = vmatprep.subr.mxu0 0.0
    %308 = vmatpush1.msra.mxu0 0.0
    %309 = vmatprep.subr.mxu0 0.0
    %310 = vmatpush1.msra.mxu0 0.0
    %311 = vmatprep.subr.mxu0 0.0
    %312 = vmatpush1.msra.mxu0 0.0
    %313 = vmatprep.subr.mxu0 0.0
    %314 = vmatpush1.msra.mxu0 0.0
    %315 = vmatprep.subr.mxu0 0.0
    %v316 = vand.u32 %v106, 4294901760
    %v317 = vsub.f32 %v106, %v316
    %318 = vmatpush1.msra.mxu0 %v317
    %319 = vmatprep.subr.mxu0 0.0
    %v320 = vand.u32 %v105, 4294901760
    %v321 = vsub.f32 %v105, %v320
    %322 = vmatpush1.msra.mxu0 %v321
    %323 = vmatprep.subr.mxu0 0.0
    %v324 = vand.u32 %v104, 4294901760
    %v325 = vsub.f32 %v104, %v324
    %326 = vmatpush1.msra.mxu0 %v325
    %327 = vmatprep.subr.mxu0 0.0
    %v328 = vand.u32 %v103, 4294901760
    %v329 = vsub.f32 %v103, %v328
    %330 = vmatpush1.msra.mxu0 %v329
    %331 = vmatprep.subr.mxu0 0.0
    %332 = vmatpush2.msra.mxu0 0.0
    %333 = vmatprep.subr.mxu0 0.0
    %334 = vmatpush2.msra.mxu0 0.0
    %335 = vmatprep.subr.mxu0 0.0
    %336 = vmatpush2.msra.mxu0 0.0
    %337 = vmatprep.subr.mxu0 0.0
    %338 = vmatpush2.msra.mxu0 0.0
    %339 = vmatprep.subr.mxu0 0.0
    %340 = vmatpush2.msra.mxu0 0.0
    %341 = vmatprep.subr.mxu0 0.0
    %342 = vmatpush2.msra.mxu0 0.0
    %343 = vmatprep.subr.mxu0 0.0
    %344 = vmatpush2.msra.mxu0 0.0
    %345 = vmatprep.subr.mxu0 0.0
    %346 = vmatpush2.msra.mxu0 0.0
    %347 = vmatprep.subr.mxu0 0.0
    %348 = vmatpush2.msra.mxu0 0.0
    %349 = vmatprep.subr.mxu0 0.0
    %350 = vmatpush2.msra.mxu0 0.0
    %351 = vmatprep.subr.mxu0 0.0
    %352 = vmatpush2.msra.mxu0 0.0
    %353 = vmatprep.subr.mxu0 0.0
    %354 = vmatpush2.msra.mxu0 0.0
    %355 = vmatprep.subr.mxu0 0.0
    %356 = vmatpush2.msra.mxu0 0.0
    %357 = vmatprep.subr.mxu0 0.0
    %358 = vmatpush2.msra.mxu0 0.0
    %359 = vmatprep.subr.mxu0 0.0
    %360 = vmatpush2.msra.mxu0 0.0
    %361 = vmatprep.subr.mxu0 0.0
    %362 = vmatpush2.msra.mxu0 0.0
    %363 = vmatprep.mubr.f32.mxu0 0.0
    %v364 = vand.u32 %v119, 4294901760
    %v365 = vsub.f32 %v119, %v364
    %366 = vmatmul.mubr.f32.gmra.mxu0 %v365
    %v367 = vpop.f32.mrf.mxu0
    %v368 = vadd.f32 %v288, %v367
    %v369 = vpop.f32.mrf.mxu0
    %370 = vdwg.mxu0
    %371 = vmatprep.subr.mxu0 0.0
    %372 = vmatpush1.msra.mxu0 0.0
    %373 = vmatprep.subr.mxu0 0.0
    %374 = vmatpush1.msra.mxu0 0.0
    %375 = vmatprep.subr.mxu0 0.0
    %376 = vmatpush1.msra.mxu0 0.0
    %377 = vmatprep.subr.mxu0 0.0
    %378 = vmatpush1.msra.mxu0 0.0
    %379 = vmatprep.subr.mxu0 0.0
    %380 = vmatpush1.msra.mxu0 0.0
    %381 = vmatprep.subr.mxu0 0.0
    %382 = vmatpush1.msra.mxu0 0.0
    %383 = vmatprep.subr.mxu0 0.0
    %384 = vmatpush1.msra.mxu0 0.0
    %385 = vmatprep.subr.mxu0 0.0
    %386 = vmatpush1.msra.mxu0 0.0
    %387 = vmatprep.subr.mxu0 0.0
    %388 = vmatpush1.msra.mxu0 0.0
    %389 = vmatprep.subr.mxu0 0.0
    %390 = vmatpush1.msra.mxu0 0.0
    %391 = vmatprep.subr.mxu0 0.0
    %392 = vmatpush1.msra.mxu0 0.0
    %393 = vmatprep.subr.mxu0 0.0
    %394 = vmatpush1.msra.mxu0 0.0
    %395 = vmatprep.subr.mxu0 0.0
    %v396 = vand.u32 %v106, 4294901760
    %397 = vmatpush1.msra.mxu0 %v396
    %398 = vmatprep.subr.mxu0 0.0
    %v399 = vand.u32 %v105, 4294901760
    %400 = vmatpush1.msra.mxu0 %v399
    %401 = vmatprep.subr.mxu0 0.0
    %v402 = vand.u32 %v104, 4294901760
    %403 = vmatpush1.msra.mxu0 %v402
    %404 = vmatprep.subr.mxu0 0.0
    %v405 = vand.u32 %v103, 4294901760
    %406 = vmatpush1.msra.mxu0 %v405
    %407 = vmatprep.subr.mxu0 0.0
    %408 = vmatpush2.msra.mxu0 0.0
    %409 = vmatprep.subr.mxu0 0.0
    %410 = vmatpush2.msra.mxu0 0.0
    %411 = vmatprep.subr.mxu0 0.0
    %412 = vmatpush2.msra.mxu0 0.0
    %413 = vmatprep.subr.mxu0 0.0
    %414 = vmatpush2.msra.mxu0 0.0
    %415 = vmatprep.subr.mxu0 0.0
    %416 = vmatpush2.msra.mxu0 0.0
    %417 = vmatprep.subr.mxu0 0.0
    %418 = vmatpush2.msra.mxu0 0.0
    %419 = vmatprep.subr.mxu0 0.0
    %420 = vmatpush2.msra.mxu0 0.0
    %421 = vmatprep.subr.mxu0 0.0
    %422 = vmatpush2.msra.mxu0 0.0
    %423 = vmatprep.subr.mxu0 0.0
    %424 = vmatpush2.msra.mxu0 0.0
    %425 = vmatprep.subr.mxu0 0.0
    %426 = vmatpush2.msra.mxu0 0.0
    %427 = vmatprep.subr.mxu0 0.0
    %428 = vmatpush2.msra.mxu0 0.0
    %429 = vmatprep.subr.mxu0 0.0
    %430 = vmatpush2.msra.mxu0 0.0
    %431 = vmatprep.subr.mxu0 0.0
    %432 = vmatpush2.msra.mxu0 0.0
    %433 = vmatprep.subr.mxu0 0.0
    %434 = vmatpush2.msra.mxu0 0.0
    %435 = vmatprep.subr.mxu0 0.0
    %436 = vmatpush2.msra.mxu0 0.0
    %437 = vmatprep.subr.mxu0 0.0
    %438 = vmatpush2.msra.mxu0 0.0
    %439 = vmatprep.mubr.f32.mxu0 0.0
    %v440 = vand.u32 %v119, 4294901760
    %v441 = vsub.f32 %v119, %v440
    %v442 = vand.u32 %v441, 4294901760
    %443 = vmatmul.mubr.f32.gmra.mxu0 %v442
    %v444 = vpop.f32.mrf.mxu0
    %v445 = vadd.f32 %v368, %v444
    %v446 = vpop.f32.mrf.mxu0
    %447 = vdwg.mxu0
    %448 = vmatprep.subr.mxu0 0.0
    %449 = vmatpush1.msra.mxu0 0.0
    %450 = vmatprep.subr.mxu0 0.0
    %451 = vmatpush1.msra.mxu0 0.0
    %452 = vmatprep.subr.mxu0 0.0
    %453 = vmatpush1.msra.mxu0 0.0
    %454 = vmatprep.subr.mxu0 0.0
    %455 = vmatpush1.msra.mxu0 0.0
    %456 = vmatprep.subr.mxu0 0.0
    %457 = vmatpush1.msra.mxu0 0.0
    %458 = vmatprep.subr.mxu0 0.0
    %459 = vmatpush1.msra.mxu0 0.0
    %460 = vmatprep.subr.mxu0 0.0
    %461 = vmatpush1.msra.mxu0 0.0
    %462 = vmatprep.subr.mxu0 0.0
    %463 = vmatpush1.msra.mxu0 0.0
    %464 = vmatprep.subr.mxu0 0.0
    %465 = vmatpush1.msra.mxu0 0.0
    %466 = vmatprep.subr.mxu0 0.0
    %467 = vmatpush1.msra.mxu0 0.0
    %468 = vmatprep.subr.mxu0 0.0
    %469 = vmatpush1.msra.mxu0 0.0
    %470 = vmatprep.subr.mxu0 0.0
    %471 = vmatpush1.msra.mxu0 0.0
    %472 = vmatprep.subr.mxu0 0.0
    %v473 = vand.u32 %v106, 4294901760
    %v474 = vsub.f32 %v106, %v473
    %v475 = vand.u32 %v474, 4294901760
    %476 = vmatpush1.msra.mxu0 %v475
    %477 = vmatprep.subr.mxu0 0.0
    %v478 = vand.u32 %v105, 4294901760
    %v479 = vsub.f32 %v105, %v478
    %v480 = vand.u32 %v479, 4294901760
    %481 = vmatpush1.msra.mxu0 %v480
    %482 = vmatprep.subr.mxu0 0.0
    %v483 = vand.u32 %v104, 4294901760
    %v484 = vsub.f32 %v104, %v483
    %v485 = vand.u32 %v484, 4294901760
    %486 = vmatpush1.msra.mxu0 %v485
    %487 = vmatprep.subr.mxu0 0.0
    %v488 = vand.u32 %v103, 4294901760
    %v489 = vsub.f32 %v103, %v488
    %v490 = vand.u32 %v489, 4294901760
    %491 = vmatpush1.msra.mxu0 %v490
    %492 = vmatprep.subr.mxu0 0.0
    %493 = vmatpush2.msra.mxu0 0.0
    %494 = vmatprep.subr.mxu0 0.0
    %495 = vmatpush2.msra.mxu0 0.0
    %496 = vmatprep.subr.mxu0 0.0
    %497 = vmatpush2.msra.mxu0 0.0
    %498 = vmatprep.subr.mxu0 0.0
    %499 = vmatpush2.msra.mxu0 0.0
    %500 = vmatprep.subr.mxu0 0.0
    %501 = vmatpush2.msra.mxu0 0.0
    %502 = vmatprep.subr.mxu0 0.0
    %503 = vmatpush2.msra.mxu0 0.0
    %504 = vmatprep.subr.mxu0 0.0
    %505 = vmatpush2.msra.mxu0 0.0
    %506 = vmatprep.subr.mxu0 0.0
    %507 = vmatpush2.msra.mxu0 0.0
    %508 = vmatprep.subr.mxu0 0.0
    %509 = vmatpush2.msra.mxu0 0.0
    %510 = vmatprep.subr.mxu0 0.0
    %511 = vmatpush2.msra.mxu0 0.0
    %512 = vmatprep.subr.mxu0 0.0
    %513 = vmatpush2.msra.mxu0 0.0
    %514 = vmatprep.subr.mxu0 0.0
    %515 = vmatpush2.msra.mxu0 0.0
    %516 = vmatprep.subr.mxu0 0.0
    %517 = vmatpush2.msra.mxu0 0.0
    %518 = vmatprep.subr.mxu0 0.0
    %519 = vmatpush2.msra.mxu0 0.0
    %520 = vmatprep.subr.mxu0 0.0
    %521 = vmatpush2.msra.mxu0 0.0
    %522 = vmatprep.subr.mxu0 0.0
    %523 = vmatpush2.msra.mxu0 0.0
    %524 = vmatprep.mubr.f32.mxu0 0.0
    %v525 = vand.u32 %v119, 4294901760
    %526 = vmatmul.mubr.f32.gmra.mxu0 %v525
    %v527 = vpop.f32.mrf.mxu0
    %v528 = vadd.f32 %v445, %v527
    %v529 = vpop.f32.mrf.mxu0
    %530 = vdwg.mxu0
    %531 = vmatprep.subr.mxu0 0.0
    %532 = vmatpush1.msra.mxu0 0.0
    %533 = vmatprep.subr.mxu0 0.0
    %534 = vmatpush1.msra.mxu0 0.0
    %535 = vmatprep.subr.mxu0 0.0
    %536 = vmatpush1.msra.mxu0 0.0
    %537 = vmatprep.subr.mxu0 0.0
    %538 = vmatpush1.msra.mxu0 0.0
    %539 = vmatprep.subr.mxu0 0.0
    %540 = vmatpush1.msra.mxu0 0.0
    %541 = vmatprep.subr.mxu0 0.0
    %542 = vmatpush1.msra.mxu0 0.0
    %543 = vmatprep.subr.mxu0 0.0
    %544 = vmatpush1.msra.mxu0 0.0
    %545 = vmatprep.subr.mxu0 0.0
    %546 = vmatpush1.msra.mxu0 0.0
    %547 = vmatprep.subr.mxu0 0.0
    %548 = vmatpush1.msra.mxu0 0.0
    %549 = vmatprep.subr.mxu0 0.0
    %550 = vmatpush1.msra.mxu0 0.0
    %551 = vmatprep.subr.mxu0 0.0
    %552 = vmatpush1.msra.mxu0 0.0
    %553 = vmatprep.subr.mxu0 0.0
    %554 = vmatpush1.msra.mxu0 0.0
    %555 = vmatprep.subr.mxu0 0.0
    %v556 = vand.u32 %v106, 4294901760
    %557 = vmatpush1.msra.mxu0 %v556
    %558 = vmatprep.subr.mxu0 0.0
    %v559 = vand.u32 %v105, 4294901760
    %560 = vmatpush1.msra.mxu0 %v559
    %561 = vmatprep.subr.mxu0 0.0
    %v562 = vand.u32 %v104, 4294901760
    %563 = vmatpush1.msra.mxu0 %v562
    %564 = vmatprep.subr.mxu0 0.0
    %v565 = vand.u32 %v103, 4294901760
    %566 = vmatpush1.msra.mxu0 %v565
    %567 = vmatprep.subr.mxu0 0.0
    %568 = vmatpush2.msra.mxu0 0.0
    %569 = vmatprep.subr.mxu0 0.0
    %570 = vmatpush2.msra.mxu0 0.0
    %571 = vmatprep.subr.mxu0 0.0
    %572 = vmatpush2.msra.mxu0 0.0
    %573 = vmatprep.subr.mxu0 0.0
    %574 = vmatpush2.msra.mxu0 0.0
    %575 = vmatprep.subr.mxu0 0.0
    %576 = vmatpush2.msra.mxu0 0.0
    %577 = vmatprep.subr.mxu0 0.0
    %578 = vmatpush2.msra.mxu0 0.0
    %579 = vmatprep.subr.mxu0 0.0
    %580 = vmatpush2.msra.mxu0 0.0
    %581 = vmatprep.subr.mxu0 0.0
    %582 = vmatpush2.msra.mxu0 0.0
    %583 = vmatprep.subr.mxu0 0.0
    %584 = vmatpush2.msra.mxu0 0.0
    %585 = vmatprep.subr.mxu0 0.0
    %586 = vmatpush2.msra.mxu0 0.0
    %587 = vmatprep.subr.mxu0 0.0
    %588 = vmatpush2.msra.mxu0 0.0
    %589 = vmatprep.subr.mxu0 0.0
    %590 = vmatpush2.msra.mxu0 0.0
    %591 = vmatprep.subr.mxu0 0.0
    %592 = vmatpush2.msra.mxu0 0.0
    %593 = vmatprep.subr.mxu0 0.0
    %594 = vmatpush2.msra.mxu0 0.0
    %595 = vmatprep.subr.mxu0 0.0
    %596 = vmatpush2.msra.mxu0 0.0
    %597 = vmatprep.subr.mxu0 0.0
    %598 = vmatpush2.msra.mxu0 0.0
    %599 = vmatprep.mubr.f32.mxu0 0.0
    %v600 = vand.u32 %v119, 4294901760
    %601 = vmatmul.mubr.f32.gmra.mxu0 %v600
    %v602 = vpop.f32.mrf.mxu0
    %v603 = vadd.f32 %v528, %v602
    %v604 = vpop.f32.mrf.mxu0
    %605 = vdwg.mxu0
    %v607 = vsel %vm117, %v95, 0
    %609 = vmatprep.subr.mxu0 0.0
    %610 = vmatpush1.msra.mxu0 0.0
    %611 = vmatprep.subr.mxu0 0.0
    %612 = vmatpush1.msra.mxu0 0.0
    %613 = vmatprep.subr.mxu0 0.0
    %614 = vmatpush1.msra.mxu0 0.0
    %615 = vmatprep.subr.mxu0 0.0
    %616 = vmatpush1.msra.mxu0 0.0
    %617 = vmatprep.subr.mxu0 0.0
    %618 = vmatpush1.msra.mxu0 0.0
    %619 = vmatprep.subr.mxu0 0.0
    %620 = vmatpush1.msra.mxu0 0.0
    %621 = vmatprep.subr.mxu0 0.0
    %622 = vmatpush1.msra.mxu0 0.0
    %623 = vmatprep.subr.mxu0 0.0
    %624 = vmatpush1.msra.mxu0 0.0
    %625 = vmatprep.subr.mxu0 0.0
    %626 = vmatpush1.msra.mxu0 0.0
    %627 = vmatprep.subr.mxu0 0.0
    %628 = vmatpush1.msra.mxu0 0.0
    %629 = vmatprep.subr.mxu0 0.0
    %630 = vmatpush1.msra.mxu0 0.0
    %631 = vmatprep.subr.mxu0 0.0
    %632 = vmatpush1.msra.mxu0 0.0
    %633 = vmatprep.subr.mxu0 0.0
    %v634 = vand.u32 %v102, 4294901760
    %635 = vmatpush1.msra.mxu0 %v634
    %636 = vmatprep.subr.mxu0 0.0
    %v637 = vand.u32 %v101, 4294901760
    %638 = vmatpush1.msra.mxu0 %v637
    %639 = vmatprep.subr.mxu0 0.0
    %v640 = vand.u32 %v100, 4294901760
    %641 = vmatpush1.msra.mxu0 %v640
    %642 = vmatprep.subr.mxu0 0.0
    %v643 = vand.u32 %v99, 4294901760
    %644 = vmatpush1.msra.mxu0 %v643
    %645 = vmatprep.subr.mxu0 0.0
    %646 = vmatpush2.msra.mxu0 0.0
    %647 = vmatprep.subr.mxu0 0.0
    %648 = vmatpush2.msra.mxu0 0.0
    %649 = vmatprep.subr.mxu0 0.0
    %650 = vmatpush2.msra.mxu0 0.0
    %651 = vmatprep.subr.mxu0 0.0
    %652 = vmatpush2.msra.mxu0 0.0
    %653 = vmatprep.subr.mxu0 0.0
    %654 = vmatpush2.msra.mxu0 0.0
    %655 = vmatprep.subr.mxu0 0.0
    %656 = vmatpush2.msra.mxu0 0.0
    %657 = vmatprep.subr.mxu0 0.0
    %658 = vmatpush2.msra.mxu0 0.0
    %659 = vmatprep.subr.mxu0 0.0
    %660 = vmatpush2.msra.mxu0 0.0
    %661 = vmatprep.subr.mxu0 0.0
    %662 = vmatpush2.msra.mxu0 0.0
    %663 = vmatprep.subr.mxu0 0.0
    %664 = vmatpush2.msra.mxu0 0.0
    %665 = vmatprep.subr.mxu0 0.0
    %666 = vmatpush2.msra.mxu0 0.0
    %667 = vmatprep.subr.mxu0 0.0
    %668 = vmatpush2.msra.mxu0 0.0
    %669 = vmatprep.subr.mxu0 0.0
    %670 = vmatpush2.msra.mxu0 0.0
    %671 = vmatprep.subr.mxu0 0.0
    %672 = vmatpush2.msra.mxu0 0.0
    %673 = vmatprep.subr.mxu0 0.0
    %674 = vmatpush2.msra.mxu0 0.0
    %675 = vmatprep.subr.mxu0 0.0
    %676 = vmatpush2.msra.mxu0 0.0
    %677 = vmatprep.mubr.f32.mxu0 0.0
    %v678 = vand.u32 %v607, 4294901760
    %v679 = vsub.f32 %v607, %v678
    %v680 = vand.u32 %v679, 4294901760
    %v681 = vsub.f32 %v679, %v680
    %v682 = vand.u32 %v681, 4294901760
    %683 = vmatmul.mubr.f32.gmra.mxu0 %v682
    %v684 = vpop.f32.mrf.mxu0
    %v685 = vadd.f32 %v603, %v684
    %v686 = vpop.f32.mrf.mxu0
    %687 = vdwg.mxu0
    %688 = vmatprep.subr.mxu0 0.0
    %689 = vmatpush1.msra.mxu0 0.0
    %690 = vmatprep.subr.mxu0 0.0
    %691 = vmatpush1.msra.mxu0 0.0
    %692 = vmatprep.subr.mxu0 0.0
    %693 = vmatpush1.msra.mxu0 0.0
    %694 = vmatprep.subr.mxu0 0.0
    %695 = vmatpush1.msra.mxu0 0.0
    %696 = vmatprep.subr.mxu0 0.0
    %697 = vmatpush1.msra.mxu0 0.0
    %698 = vmatprep.subr.mxu0 0.0
    %699 = vmatpush1.msra.mxu0 0.0
    %700 = vmatprep.subr.mxu0 0.0
    %701 = vmatpush1.msra.mxu0 0.0
    %702 = vmatprep.subr.mxu0 0.0
    %703 = vmatpush1.msra.mxu0 0.0
    %704 = vmatprep.subr.mxu0 0.0
    %705 = vmatpush1.msra.mxu0 0.0
    %706 = vmatprep.subr.mxu0 0.0
    %707 = vmatpush1.msra.mxu0 0.0
    %708 = vmatprep.subr.mxu0 0.0
    %709 = vmatpush1.msra.mxu0 0.0
    %710 = vmatprep.subr.mxu0 0.0
    %711 = vmatpush1.msra.mxu0 0.0
    %712 = vmatprep.subr.mxu0 0.0
    %v713 = vand.u32 %v102, 4294901760
    %v714 = vsub.f32 %v102, %v713
    %v715 = vand.u32 %v714, 4294901760
    %v716 = vsub.f32 %v714, %v715
    %v717 = vand.u32 %v716, 4294901760
    %718 = vmatpush1.msra.mxu0 %v717
    %719 = vmatprep.subr.mxu0 0.0
    %v720 = vand.u32 %v101, 4294901760
    %v721 = vsub.f32 %v101, %v720
    %v722 = vand.u32 %v721, 4294901760
    %v723 = vsub.f32 %v721, %v722
    %v724 = vand.u32 %v723, 4294901760
    %725 = vmatpush1.msra.mxu0 %v724
    %726 = vmatprep.subr.mxu0 0.0
    %v727 = vand.u32 %v100, 4294901760
    %v728 = vsub.f32 %v100, %v727
    %v729 = vand.u32 %v728, 4294901760
    %v730 = vsub.f32 %v728, %v729
    %v731 = vand.u32 %v730, 4294901760
    %732 = vmatpush1.msra.mxu0 %v731
    %733 = vmatprep.subr.mxu0 0.0
    %v734 = vand.u32 %v99, 4294901760
    %v735 = vsub.f32 %v99, %v734
    %v736 = vand.u32 %v735, 4294901760
    %v737 = vsub.f32 %v735, %v736
    %v738 = vand.u32 %v737, 4294901760
    %739 = vmatpush1.msra.mxu0 %v738
    %740 = vmatprep.subr.mxu0 0.0
    %741 = vmatpush2.msra.mxu0 0.0
    %742 = vmatprep.subr.mxu0 0.0
    %743 = vmatpush2.msra.mxu0 0.0
    %744 = vmatprep.subr.mxu0 0.0
    %745 = vmatpush2.msra.mxu0 0.0
    %746 = vmatprep.subr.mxu0 0.0
    %747 = vmatpush2.msra.mxu0 0.0
    %748 = vmatprep.subr.mxu0 0.0
    %749 = vmatpush2.msra.mxu0 0.0
    %750 = vmatprep.subr.mxu0 0.0
    %751 = vmatpush2.msra.mxu0 0.0
    %752 = vmatprep.subr.mxu0 0.0
    %753 = vmatpush2.msra.mxu0 0.0
    %754 = vmatprep.subr.mxu0 0.0
    %755 = vmatpush2.msra.mxu0 0.0
    %756 = vmatprep.subr.mxu0 0.0
    %757 = vmatpush2.msra.mxu0 0.0
    %758 = vmatprep.subr.mxu0 0.0
    %759 = vmatpush2.msra.mxu0 0.0
    %760 = vmatprep.subr.mxu0 0.0
    %761 = vmatpush2.msra.mxu0 0.0
    %762 = vmatprep.subr.mxu0 0.0
    %763 = vmatpush2.msra.mxu0 0.0
    %764 = vmatprep.subr.mxu0 0.0
    %765 = vmatpush2.msra.mxu0 0.0
    %766 = vmatprep.subr.mxu0 0.0
    %767 = vmatpush2.msra.mxu0 0.0
    %768 = vmatprep.subr.mxu0 0.0
    %769 = vmatpush2.msra.mxu0 0.0
    %770 = vmatprep.subr.mxu0 0.0
    %771 = vmatpush2.msra.mxu0 0.0
    %772 = vmatprep.mubr.f32.mxu0 0.0
    %v773 = vand.u32 %v607, 4294901760
    %774 = vmatmul.mubr.f32.gmra.mxu0 %v773
    %v775 = vpop.f32.mrf.mxu0
    %v776 = vadd.f32 %v685, %v775
    %v777 = vpop.f32.mrf.mxu0
    %778 = vdwg.mxu0
    %779 = vmatprep.subr.mxu0 0.0
    %780 = vmatpush1.msra.mxu0 0.0
    %781 = vmatprep.subr.mxu0 0.0
    %782 = vmatpush1.msra.mxu0 0.0
    %783 = vmatprep.subr.mxu0 0.0
    %784 = vmatpush1.msra.mxu0 0.0
    %785 = vmatprep.subr.mxu0 0.0
    %786 = vmatpush1.msra.mxu0 0.0
    %787 = vmatprep.subr.mxu0 0.0
    %788 = vmatpush1.msra.mxu0 0.0
    %789 = vmatprep.subr.mxu0 0.0
    %790 = vmatpush1.msra.mxu0 0.0
    %791 = vmatprep.subr.mxu0 0.0
    %792 = vmatpush1.msra.mxu0 0.0
    %793 = vmatprep.subr.mxu0 0.0
    %794 = vmatpush1.msra.mxu0 0.0
    %795 = vmatprep.subr.mxu0 0.0
    %796 = vmatpush1.msra.mxu0 0.0
    %797 = vmatprep.subr.mxu0 0.0
    %798 = vmatpush1.msra.mxu0 0.0
    %799 = vmatprep.subr.mxu0 0.0
    %800 = vmatpush1.msra.mxu0 0.0
    %801 = vmatprep.subr.mxu0 0.0
    %802 = vmatpush1.msra.mxu0 0.0
    %803 = vmatprep.subr.mxu0 0.0
    %v804 = vand.u32 %v102, 4294901760
    %v805 = vsub.f32 %v102, %v804
    %806 = vmatpush1.msra.mxu0 %v805
    %807 = vmatprep.subr.mxu0 0.0
    %v808 = vand.u32 %v101, 4294901760
    %v809 = vsub.f32 %v101, %v808
    %810 = vmatpush1.msra.mxu0 %v809
    %811 = vmatprep.subr.mxu0 0.0
    %v812 = vand.u32 %v100, 4294901760
    %v813 = vsub.f32 %v100, %v812
    %814 = vmatpush1.msra.mxu0 %v813
    %815 = vmatprep.subr.mxu0 0.0
    %v816 = vand.u32 %v99, 4294901760
    %v817 = vsub.f32 %v99, %v816
    %818 = vmatpush1.msra.mxu0 %v817
    %819 = vmatprep.subr.mxu0 0.0
    %820 = vmatpush2.msra.mxu0 0.0
    %821 = vmatprep.subr.mxu0 0.0
    %822 = vmatpush2.msra.mxu0 0.0
    %823 = vmatprep.subr.mxu0 0.0
    %824 = vmatpush2.msra.mxu0 0.0
    %825 = vmatprep.subr.mxu0 0.0
    %826 = vmatpush2.msra.mxu0 0.0
    %827 = vmatprep.subr.mxu0 0.0
    %828 = vmatpush2.msra.mxu0 0.0
    %829 = vmatprep.subr.mxu0 0.0
    %830 = vmatpush2.msra.mxu0 0.0
    %831 = vmatprep.subr.mxu0 0.0
    %832 = vmatpush2.msra.mxu0 0.0
    %833 = vmatprep.subr.mxu0 0.0
    %834 = vmatpush2.msra.mxu0 0.0
    %835 = vmatprep.subr.mxu0 0.0
    %836 = vmatpush2.msra.mxu0 0.0
    %837 = vmatprep.subr.mxu0 0.0
    %838 = vmatpush2.msra.mxu0 0.0
    %839 = vmatprep.subr.mxu0 0.0
    %840 = vmatpush2.msra.mxu0 0.0
    %841 = vmatprep.subr.mxu0 0.0
    %842 = vmatpush2.msra.mxu0 0.0
    %843 = vmatprep.subr.mxu0 0.0
    %844 = vmatpush2.msra.mxu0 0.0
    %845 = vmatprep.subr.mxu0 0.0
    %846 = vmatpush2.msra.mxu0 0.0
    %847 = vmatprep.subr.mxu0 0.0
    %848 = vmatpush2.msra.mxu0 0.0
    %849 = vmatprep.subr.mxu0 0.0
    %850 = vmatpush2.msra.mxu0 0.0
    %851 = vmatprep.mubr.f32.mxu0 0.0
    %v852 = vand.u32 %v607, 4294901760
    %v853 = vsub.f32 %v607, %v852
    %854 = vmatmul.mubr.f32.gmra.mxu0 %v853
    %v855 = vpop.f32.mrf.mxu0
    %v856 = vadd.f32 %v776, %v855
    %v857 = vpop.f32.mrf.mxu0
    %858 = vdwg.mxu0
    %859 = vmatprep.subr.mxu0 0.0
    %860 = vmatpush1.msra.mxu0 0.0
    %861 = vmatprep.subr.mxu0 0.0
    %862 = vmatpush1.msra.mxu0 0.0
    %863 = vmatprep.subr.mxu0 0.0
    %864 = vmatpush1.msra.mxu0 0.0
    %865 = vmatprep.subr.mxu0 0.0
    %866 = vmatpush1.msra.mxu0 0.0
    %867 = vmatprep.subr.mxu0 0.0
    %868 = vmatpush1.msra.mxu0 0.0
    %869 = vmatprep.subr.mxu0 0.0
    %870 = vmatpush1.msra.mxu0 0.0
    %871 = vmatprep.subr.mxu0 0.0
    %872 = vmatpush1.msra.mxu0 0.0
    %873 = vmatprep.subr.mxu0 0.0
    %874 = vmatpush1.msra.mxu0 0.0
    %875 = vmatprep.subr.mxu0 0.0
    %876 = vmatpush1.msra.mxu0 0.0
    %877 = vmatprep.subr.mxu0 0.0
    %878 = vmatpush1.msra.mxu0 0.0
    %879 = vmatprep.subr.mxu0 0.0
    %880 = vmatpush1.msra.mxu0 0.0
    %881 = vmatprep.subr.mxu0 0.0
    %882 = vmatpush1.msra.mxu0 0.0
    %883 = vmatprep.subr.mxu0 0.0
    %v884 = vand.u32 %v102, 4294901760
    %885 = vmatpush1.msra.mxu0 %v884
    %886 = vmatprep.subr.mxu0 0.0
    %v887 = vand.u32 %v101, 4294901760
    %888 = vmatpush1.msra.mxu0 %v887
    %889 = vmatprep.subr.mxu0 0.0
    %v890 = vand.u32 %v100, 4294901760
    %891 = vmatpush1.msra.mxu0 %v890
    %892 = vmatprep.subr.mxu0 0.0
    %v893 = vand.u32 %v99, 4294901760
    %894 = vmatpush1.msra.mxu0 %v893
    %895 = vmatprep.subr.mxu0 0.0
    %896 = vmatpush2.msra.mxu0 0.0
    %897 = vmatprep.subr.mxu0 0.0
    %898 = vmatpush2.msra.mxu0 0.0
    %899 = vmatprep.subr.mxu0 0.0
    %900 = vmatpush2.msra.mxu0 0.0
    %901 = vmatprep.subr.mxu0 0.0
    %902 = vmatpush2.msra.mxu0 0.0
    %903 = vmatprep.subr.mxu0 0.0
    %904 = vmatpush2.msra.mxu0 0.0
    %905 = vmatprep.subr.mxu0 0.0
    %906 = vmatpush2.msra.mxu0 0.0
    %907 = vmatprep.subr.mxu0 0.0
    %908 = vmatpush2.msra.mxu0 0.0
    %909 = vmatprep.subr.mxu0 0.0
    %910 = vmatpush2.msra.mxu0 0.0
    %911 = vmatprep.subr.mxu0 0.0
    %912 = vmatpush2.msra.mxu0 0.0
    %913 = vmatprep.subr.mxu0 0.0
    %914 = vmatpush2.msra.mxu0 0.0
    %915 = vmatprep.subr.mxu0 0.0
    %916 = vmatpush2.msra.mxu0 0.0
    %917 = vmatprep.subr.mxu0 0.0
    %918 = vmatpush2.msra.mxu0 0.0
    %919 = vmatprep.subr.mxu0 0.0
    %920 = vmatpush2.msra.mxu0 0.0
    %921 = vmatprep.subr.mxu0 0.0
    %922 = vmatpush2.msra.mxu0 0.0
    %923 = vmatprep.subr.mxu0 0.0
    %924 = vmatpush2.msra.mxu0 0.0
    %925 = vmatprep.subr.mxu0 0.0
    %926 = vmatpush2.msra.mxu0 0.0
    %927 = vmatprep.mubr.f32.mxu0 0.0
    %v928 = vand.u32 %v607, 4294901760
    %v929 = vsub.f32 %v607, %v928
    %v930 = vand.u32 %v929, 4294901760
    %931 = vmatmul.mubr.f32.gmra.mxu0 %v930
    %v932 = vpop.f32.mrf.mxu0
    %v933 = vadd.f32 %v856, %v932
    %v934 = vpop.f32.mrf.mxu0
    %935 = vdwg.mxu0
    %936 = vmatprep.subr.mxu0 0.0
    %937 = vmatpush1.msra.mxu0 0.0
    %938 = vmatprep.subr.mxu0 0.0
    %939 = vmatpush1.msra.mxu0 0.0
    %940 = vmatprep.subr.mxu0 0.0
    %941 = vmatpush1.msra.mxu0 0.0
    %942 = vmatprep.subr.mxu0 0.0
    %943 = vmatpush1.msra.mxu0 0.0
    %944 = vmatprep.subr.mxu0 0.0
    %945 = vmatpush1.msra.mxu0 0.0
    %946 = vmatprep.subr.mxu0 0.0
    %947 = vmatpush1.msra.mxu0 0.0
    %948 = vmatprep.subr.mxu0 0.0
    %949 = vmatpush1.msra.mxu0 0.0
    %950 = vmatprep.subr.mxu0 0.0
    %951 = vmatpush1.msra.mxu0 0.0
    %952 = vmatprep.subr.mxu0 0.0
    %953 = vmatpush1.msra.mxu0 0.0
    %954 = vmatprep.subr.mxu0 0.0
    %955 = vmatpush1.msra.mxu0 0.0
    %956 = vmatprep.subr.mxu0 0.0
    %957 = vmatpush1.msra.mxu0 0.0
    %958 = vmatprep.subr.mxu0 0.0
    %959 = vmatpush1.msra.mxu0 0.0
    %960 = vmatprep.subr.mxu0 0.0
    %v961 = vand.u32 %v102, 4294901760
    %v962 = vsub.f32 %v102, %v961
    %v963 = vand.u32 %v962, 4294901760
    %964 = vmatpush1.msra.mxu0 %v963
    %965 = vmatprep.subr.mxu0 0.0
    %v966 = vand.u32 %v101, 4294901760
    %v967 = vsub.f32 %v101, %v966
    %v968 = vand.u32 %v967, 4294901760
    %969 = vmatpush1.msra.mxu0 %v968
    %970 = vmatprep.subr.mxu0 0.0
    %v971 = vand.u32 %v100, 4294901760
    %v972 = vsub.f32 %v100, %v971
    %v973 = vand.u32 %v972, 4294901760
    %974 = vmatpush1.msra.mxu0 %v973
    %975 = vmatprep.subr.mxu0 0.0
    %v976 = vand.u32 %v99, 4294901760
    %v977 = vsub.f32 %v99, %v976
    %v978 = vand.u32 %v977, 4294901760
    %979 = vmatpush1.msra.mxu0 %v978
    %980 = vmatprep.subr.mxu0 0.0
    %981 = vmatpush2.msra.mxu0 0.0
    %982 = vmatprep.subr.mxu0 0.0
    %983 = vmatpush2.msra.mxu0 0.0
    %984 = vmatprep.subr.mxu0 0.0
    %985 = vmatpush2.msra.mxu0 0.0
    %986 = vmatprep.subr.mxu0 0.0
    %987 = vmatpush2.msra.mxu0 0.0
    %988 = vmatprep.subr.mxu0 0.0
    %989 = vmatpush2.msra.mxu0 0.0
    %990 = vmatprep.subr.mxu0 0.0
    %991 = vmatpush2.msra.mxu0 0.0
    %992 = vmatprep.subr.mxu0 0.0
    %993 = vmatpush2.msra.mxu0 0.0
    %994 = vmatprep.subr.mxu0 0.0
    %995 = vmatpush2.msra.mxu0 0.0
    %996 = vmatprep.subr.mxu0 0.0
    %997 = vmatpush2.msra.mxu0 0.0
    %998 = vmatprep.subr.mxu0 0.0
    %999 = vmatpush2.msra.mxu0 0.0
    %1000 = vmatprep.subr.mxu0 0.0
    %1001 = vmatpush2.msra.mxu0 0.0
    %1002 = vmatprep.subr.mxu0 0.0
    %1003 = vmatpush2.msra.mxu0 0.0
    %1004 = vmatprep.subr.mxu0 0.0
    %1005 = vmatpush2.msra.mxu0 0.0
    %1006 = vmatprep.subr.mxu0 0.0
    %1007 = vmatpush2.msra.mxu0 0.0
    %1008 = vmatprep.subr.mxu0 0.0
    %1009 = vmatpush2.msra.mxu0 0.0
    %1010 = vmatprep.subr.mxu0 0.0
    %1011 = vmatpush2.msra.mxu0 0.0
    %1012 = vmatprep.mubr.f32.mxu0 0.0
    %v1013 = vand.u32 %v607, 4294901760
    %1014 = vmatmul.mubr.f32.gmra.mxu0 %v1013
    %v1015 = vpop.f32.mrf.mxu0
    %v1016 = vadd.f32 %v933, %v1015
    %v1017 = vpop.f32.mrf.mxu0
    %1018 = vdwg.mxu0
    %1019 = vmatprep.subr.mxu0 0.0
    %1020 = vmatpush1.msra.mxu0 0.0
    %1021 = vmatprep.subr.mxu0 0.0
    %1022 = vmatpush1.msra.mxu0 0.0
    %1023 = vmatprep.subr.mxu0 0.0
    %1024 = vmatpush1.msra.mxu0 0.0
    %1025 = vmatprep.subr.mxu0 0.0
    %1026 = vmatpush1.msra.mxu0 0.0
    %1027 = vmatprep.subr.mxu0 0.0
    %1028 = vmatpush1.msra.mxu0 0.0
    %1029 = vmatprep.subr.mxu0 0.0
    %1030 = vmatpush1.msra.mxu0 0.0
    %1031 = vmatprep.subr.mxu0 0.0
    %1032 = vmatpush1.msra.mxu0 0.0
    %1033 = vmatprep.subr.mxu0 0.0
    %1034 = vmatpush1.msra.mxu0 0.0
    %1035 = vmatprep.subr.mxu0 0.0
    %1036 = vmatpush1.msra.mxu0 0.0
    %1037 = vmatprep.subr.mxu0 0.0
    %1038 = vmatpush1.msra.mxu0 0.0
    %1039 = vmatprep.subr.mxu0 0.0
    %1040 = vmatpush1.msra.mxu0 0.0
    %1041 = vmatprep.subr.mxu0 0.0
    %1042 = vmatpush1.msra.mxu0 0.0
    %1043 = vmatprep.subr.mxu0 0.0
    %v1044 = vand.u32 %v102, 4294901760
    %1045 = vmatpush1.msra.mxu0 %v1044
    %1046 = vmatprep.subr.mxu0 0.0
    %v1047 = vand.u32 %v101, 4294901760
    %1048 = vmatpush1.msra.mxu0 %v1047
    %1049 = vmatprep.subr.mxu0 0.0
    %v1050 = vand.u32 %v100, 4294901760
    %1051 = vmatpush1.msra.mxu0 %v1050
    %1052 = vmatprep.subr.mxu0 0.0
    %v1053 = vand.u32 %v99, 4294901760
    %1054 = vmatpush1.msra.mxu0 %v1053
    %1055 = vmatprep.subr.mxu0 0.0
    %1056 = vmatpush2.msra.mxu0 0.0
    %1057 = vmatprep.subr.mxu0 0.0
    %1058 = vmatpush2.msra.mxu0 0.0
    %1059 = vmatprep.subr.mxu0 0.0
    %1060 = vmatpush2.msra.mxu0 0.0
    %1061 = vmatprep.subr.mxu0 0.0
    %1062 = vmatpush2.msra.mxu0 0.0
    %1063 = vmatprep.subr.mxu0 0.0
    %1064 = vmatpush2.msra.mxu0 0.0
    %1065 = vmatprep.subr.mxu0 0.0
    %1066 = vmatpush2.msra.mxu0 0.0
    %1067 = vmatprep.subr.mxu0 0.0
    %1068 = vmatpush2.msra.mxu0 0.0
    %1069 = vmatprep.subr.mxu0 0.0
    %1070 = vmatpush2.msra.mxu0 0.0
    %1071 = vmatprep.subr.mxu0 0.0
    %1072 = vmatpush2.msra.mxu0 0.0
    %1073 = vmatprep.subr.mxu0 0.0
    %1074 = vmatpush2.msra.mxu0 0.0
    %1075 = vmatprep.subr.mxu0 0.0
    %1076 = vmatpush2.msra.mxu0 0.0
    %1077 = vmatprep.subr.mxu0 0.0
    %1078 = vmatpush2.msra.mxu0 0.0
    %1079 = vmatprep.subr.mxu0 0.0
    %1080 = vmatpush2.msra.mxu0 0.0
    %1081 = vmatprep.subr.mxu0 0.0
    %1082 = vmatpush2.msra.mxu0 0.0
    %1083 = vmatprep.subr.mxu0 0.0
    %1084 = vmatpush2.msra.mxu0 0.0
    %1085 = vmatprep.subr.mxu0 0.0
    %1086 = vmatpush2.msra.mxu0 0.0
    %1087 = vmatprep.mubr.f32.mxu0 0.0
    %v1088 = vand.u32 %v607, 4294901760
    %1089 = vmatmul.mubr.f32.gmra.mxu0 %v1088
    %v1090 = vpop.f32.mrf.mxu0
    %v1091 = vadd.f32 %v1016, %v1090
    %v1092 = vpop.f32.mrf.mxu0
    %1093 = vdwg.mxu0
    %v1095 = vlaneseq
    %v1096 = vshrl.u32 %v1095, 7
    %v1097 = vsub.s32 0, %v1096
    %v1098 = vrot.slane %v107, %v1097
    %v1100 = vadd.f32 %v1091, %v1098
    %v1101 = vxor.u32 %v1100, 2147483648
    %v1102 = vmul.f32 %v1101, 1.442695
    %v1103 = vpow.pop %v1102
    %v1104 = vadd.f32 %v1103, 1.0
    %v1105 = vrcp.pop %v1104
    %v1106 = vmul.f32 1.0, %v1105
    %v1107 = vtanh.pop %v1100
    %v1108 = vmul.f32 %v1106, 0.0
    %1110 = vrot.lane.b32.xlu0 %v1107, 64
    %v1111 = vpop.permute.xlu0 %1110
    %v1113 = vmul.f32 %v1106, %v1111
    %1115 = vrot.lane.b32.xlu0 %v1113, 32
    %v1116 = vpop.permute.xlu0 %1115
    %v1118 = vadd.f32 %v1108, %v1116
    %v1119 = vtanh.pop %v1118
    %1121 = vrot.lane.b32.xlu0 %v1119, 64
    %v1122 = vpop.permute.xlu0 %1121
    %v1124 = vmul.f32 %v1106, %v1122
    %1125 = vmatprep.subr.mxu0 0.0
    %1126 = vmatpush1.msra.mxu0 0.0
    %1127 = vmatprep.subr.mxu0 0.0
    %1128 = vmatpush1.msra.mxu0 0.0
    %1129 = vmatprep.subr.mxu0 0.0
    %1130 = vmatpush1.msra.mxu0 0.0
    %1131 = vmatprep.subr.mxu0 0.0
    %1132 = vmatpush1.msra.mxu0 0.0
    %1133 = vmatprep.subr.mxu0 0.0
    %1134 = vmatpush1.msra.mxu0 0.0
    %1135 = vmatprep.subr.mxu0 0.0
    %1136 = vmatpush1.msra.mxu0 0.0
    %1137 = vmatprep.subr.mxu0 0.0
    %1138 = vmatpush1.msra.mxu0 0.0
    %1139 = vmatprep.subr.mxu0 0.0
    %1140 = vmatpush1.msra.mxu0 0.0
    %1141 = vmatprep.subr.mxu0 0.0
    %1142 = vmatpush1.msra.mxu0 0.0
    %1143 = vmatprep.subr.mxu0 0.0
    %1144 = vmatpush1.msra.mxu0 0.0
    %1145 = vmatprep.subr.mxu0 0.0
    %1146 = vmatpush1.msra.mxu0 0.0
    %1147 = vmatprep.subr.mxu0 0.0
    %1148 = vmatpush1.msra.mxu0 0.0
    %1149 = vmatprep.subr.mxu0 0.0
    %v1150 = vand.u32 %v115, 4294901760
    %1151 = vmatpush1.msra.mxu0 %v1150
    %1152 = vmatprep.subr.mxu0 0.0
    %v1153 = vand.u32 %v114, 4294901760
    %1154 = vmatpush1.msra.mxu0 %v1153
    %1155 = vmatprep.subr.mxu0 0.0
    %v1156 = vand.u32 %v113, 4294901760
    %1157 = vmatpush1.msra.mxu0 %v1156
    %1158 = vmatprep.subr.mxu0 0.0
    %v1159 = vand.u32 %v112, 4294901760
    %1160 = vmatpush1.msra.mxu0 %v1159
    %1161 = vmatprep.subr.mxu0 0.0
    %1162 = vmatpush2.msra.mxu0 0.0
    %1163 = vmatprep.subr.mxu0 0.0
    %1164 = vmatpush2.msra.mxu0 0.0
    %1165 = vmatprep.subr.mxu0 0.0
    %1166 = vmatpush2.msra.mxu0 0.0
    %1167 = vmatprep.subr.mxu0 0.0
    %1168 = vmatpush2.msra.mxu0 0.0
    %1169 = vmatprep.subr.mxu0 0.0
    %1170 = vmatpush2.msra.mxu0 0.0
    %1171 = vmatprep.subr.mxu0 0.0
    %1172 = vmatpush2.msra.mxu0 0.0
    %1173 = vmatprep.subr.mxu0 0.0
    %1174 = vmatpush2.msra.mxu0 0.0
    %1175 = vmatprep.subr.mxu0 0.0
    %1176 = vmatpush2.msra.mxu0 0.0
    %1177 = vmatprep.subr.mxu0 0.0
    %1178 = vmatpush2.msra.mxu0 0.0
    %1179 = vmatprep.subr.mxu0 0.0
    %1180 = vmatpush2.msra.mxu0 0.0
    %1181 = vmatprep.subr.mxu0 0.0
    %1182 = vmatpush2.msra.mxu0 0.0
    %1183 = vmatprep.subr.mxu0 0.0
    %1184 = vmatpush2.msra.mxu0 0.0
    %1185 = vmatprep.subr.mxu0 0.0
    %1186 = vmatpush2.msra.mxu0 0.0
    %1187 = vmatprep.subr.mxu0 0.0
    %1188 = vmatpush2.msra.mxu0 0.0
    %1189 = vmatprep.subr.mxu0 0.0
    %1190 = vmatpush2.msra.mxu0 0.0
    %1191 = vmatprep.subr.mxu0 0.0
    %1192 = vmatpush2.msra.mxu0 0.0
    %1193 = vmatprep.mubr.f32.mxu0 0.0
    %v1194 = vand.u32 %v119, 4294901760
    %v1195 = vsub.f32 %v119, %v1194
    %v1196 = vand.u32 %v1195, 4294901760
    %v1197 = vsub.f32 %v1195, %v1196
    %v1198 = vand.u32 %v1197, 4294901760
    %1199 = vmatmul.mubr.f32.gmra.mxu0 %v1198
    %v1200 = vpop.f32.mrf.mxu0
    %v1201 = vadd.f32 0.0, %v1200
    %v1202 = vpop.f32.mrf.mxu0
    %1203 = vdwg.mxu0
    %1204 = vmatprep.subr.mxu0 0.0
    %1205 = vmatpush1.msra.mxu0 0.0
    %1206 = vmatprep.subr.mxu0 0.0
    %1207 = vmatpush1.msra.mxu0 0.0
    %1208 = vmatprep.subr.mxu0 0.0
    %1209 = vmatpush1.msra.mxu0 0.0
    %1210 = vmatprep.subr.mxu0 0.0
    %1211 = vmatpush1.msra.mxu0 0.0
    %1212 = vmatprep.subr.mxu0 0.0
    %1213 = vmatpush1.msra.mxu0 0.0
    %1214 = vmatprep.subr.mxu0 0.0
    %1215 = vmatpush1.msra.mxu0 0.0
    %1216 = vmatprep.subr.mxu0 0.0
    %1217 = vmatpush1.msra.mxu0 0.0
    %1218 = vmatprep.subr.mxu0 0.0
    %1219 = vmatpush1.msra.mxu0 0.0
    %1220 = vmatprep.subr.mxu0 0.0
    %1221 = vmatpush1.msra.mxu0 0.0
    %1222 = vmatprep.subr.mxu0 0.0
    %1223 = vmatpush1.msra.mxu0 0.0
    %1224 = vmatprep.subr.mxu0 0.0
    %1225 = vmatpush1.msra.mxu0 0.0
    %1226 = vmatprep.subr.mxu0 0.0
    %1227 = vmatpush1.msra.mxu0 0.0
    %1228 = vmatprep.subr.mxu0 0.0
    %v1229 = vand.u32 %v115, 4294901760
    %v1230 = vsub.f32 %v115, %v1229
    %v1231 = vand.u32 %v1230, 4294901760
    %v1232 = vsub.f32 %v1230, %v1231
    %v1233 = vand.u32 %v1232, 4294901760
    %1234 = vmatpush1.msra.mxu0 %v1233
    %1235 = vmatprep.subr.mxu0 0.0
    %v1236 = vand.u32 %v114, 4294901760
    %v1237 = vsub.f32 %v114, %v1236
    %v1238 = vand.u32 %v1237, 4294901760
    %v1239 = vsub.f32 %v1237, %v1238
    %v1240 = vand.u32 %v1239, 4294901760
    %1241 = vmatpush1.msra.mxu0 %v1240
    %1242 = vmatprep.subr.mxu0 0.0
    %v1243 = vand.u32 %v113, 4294901760
    %v1244 = vsub.f32 %v113, %v1243
    %v1245 = vand.u32 %v1244, 4294901760
    %v1246 = vsub.f32 %v1244, %v1245
    %v1247 = vand.u32 %v1246, 4294901760
    %1248 = vmatpush1.msra.mxu0 %v1247
    %1249 = vmatprep.subr.mxu0 0.0
    %v1250 = vand.u32 %v112, 4294901760
    %v1251 = vsub.f32 %v112, %v1250
    %v1252 = vand.u32 %v1251, 4294901760
    %v1253 = vsub.f32 %v1251, %v1252
    %v1254 = vand.u32 %v1253, 4294901760
    %1255 = vmatpush1.msra.mxu0 %v1254
    %1256 = vmatprep.subr.mxu0 0.0
    %1257 = vmatpush2.msra.mxu0 0.0
    %1258 = vmatprep.subr.mxu0 0.0
    %1259 = vmatpush2.msra.mxu0 0.0
    %1260 = vmatprep.subr.mxu0 0.0
    %1261 = vmatpush2.msra.mxu0 0.0
    %1262 = vmatprep.subr.mxu0 0.0
    %1263 = vmatpush2.msra.mxu0 0.0
    %1264 = vmatprep.subr.mxu0 0.0
    %1265 = vmatpush2.msra.mxu0 0.0
    %1266 = vmatprep.subr.mxu0 0.0
    %1267 = vmatpush2.msra.mxu0 0.0
    %1268 = vmatprep.subr.mxu0 0.0
    %1269 = vmatpush2.msra.mxu0 0.0
    %1270 = vmatprep.subr.mxu0 0.0
    %1271 = vmatpush2.msra.mxu0 0.0
    %1272 = vmatprep.subr.mxu0 0.0
    %1273 = vmatpush2.msra.mxu0 0.0
    %1274 = vmatprep.subr.mxu0 0.0
    %1275 = vmatpush2.msra.mxu0 0.0
    %1276 = vmatprep.subr.mxu0 0.0
    %1277 = vmatpush2.msra.mxu0 0.0
    %1278 = vmatprep.subr.mxu0 0.0
    %1279 = vmatpush2.msra.mxu0 0.0
    %1280 = vmatprep.subr.mxu0 0.0
    %1281 = vmatpush2.msra.mxu0 0.0
    %1282 = vmatprep.subr.mxu0 0.0
    %1283 = vmatpush2.msra.mxu0 0.0
    %1284 = vmatprep.subr.mxu0 0.0
    %1285 = vmatpush2.msra.mxu0 0.0
    %1286 = vmatprep.subr.mxu0 0.0
    %1287 = vmatpush2.msra.mxu0 0.0
    %1288 = vmatprep.mubr.f32.mxu0 0.0
    %v1289 = vand.u32 %v119, 4294901760
    %1290 = vmatmul.mubr.f32.gmra.mxu0 %v1289
    %v1291 = vpop.f32.mrf.mxu0
    %v1292 = vadd.f32 %v1201, %v1291
    %v1293 = vpop.f32.mrf.mxu0
    %1294 = vdwg.mxu0
    %1295 = vmatprep.subr.mxu0 0.0
    %1296 = vmatpush1.msra.mxu0 0.0
    %1297 = vmatprep.subr.mxu0 0.0
    %1298 = vmatpush1.msra.mxu0 0.0
    %1299 = vmatprep.subr.mxu0 0.0
    %1300 = vmatpush1.msra.mxu0 0.0
    %1301 = vmatprep.subr.mxu0 0.0
    %1302 = vmatpush1.msra.mxu0 0.0
    %1303 = vmatprep.subr.mxu0 0.0
    %1304 = vmatpush1.msra.mxu0 0.0
    %1305 = vmatprep.subr.mxu0 0.0
    %1306 = vmatpush1.msra.mxu0 0.0
    %1307 = vmatprep.subr.mxu0 0.0
    %1308 = vmatpush1.msra.mxu0 0.0
    %1309 = vmatprep.subr.mxu0 0.0
    %1310 = vmatpush1.msra.mxu0 0.0
    %1311 = vmatprep.subr.mxu0 0.0
    %1312 = vmatpush1.msra.mxu0 0.0
    %1313 = vmatprep.subr.mxu0 0.0
    %1314 = vmatpush1.msra.mxu0 0.0
    %1315 = vmatprep.subr.mxu0 0.0
    %1316 = vmatpush1.msra.mxu0 0.0
    %1317 = vmatprep.subr.mxu0 0.0
    %1318 = vmatpush1.msra.mxu0 0.0
    %1319 = vmatprep.subr.mxu0 0.0
    %v1320 = vand.u32 %v115, 4294901760
    %v1321 = vsub.f32 %v115, %v1320
    %1322 = vmatpush1.msra.mxu0 %v1321
    %1323 = vmatprep.subr.mxu0 0.0
    %v1324 = vand.u32 %v114, 4294901760
    %v1325 = vsub.f32 %v114, %v1324
    %1326 = vmatpush1.msra.mxu0 %v1325
    %1327 = vmatprep.subr.mxu0 0.0
    %v1328 = vand.u32 %v113, 4294901760
    %v1329 = vsub.f32 %v113, %v1328
    %1330 = vmatpush1.msra.mxu0 %v1329
    %1331 = vmatprep.subr.mxu0 0.0
    %v1332 = vand.u32 %v112, 4294901760
    %v1333 = vsub.f32 %v112, %v1332
    %1334 = vmatpush1.msra.mxu0 %v1333
    %1335 = vmatprep.subr.mxu0 0.0
    %1336 = vmatpush2.msra.mxu0 0.0
    %1337 = vmatprep.subr.mxu0 0.0
    %1338 = vmatpush2.msra.mxu0 0.0
    %1339 = vmatprep.subr.mxu0 0.0
    %1340 = vmatpush2.msra.mxu0 0.0
    %1341 = vmatprep.subr.mxu0 0.0
    %1342 = vmatpush2.msra.mxu0 0.0
    %1343 = vmatprep.subr.mxu0 0.0
    %1344 = vmatpush2.msra.mxu0 0.0
    %1345 = vmatprep.subr.mxu0 0.0
    %1346 = vmatpush2.msra.mxu0 0.0
    %1347 = vmatprep.subr.mxu0 0.0
    %1348 = vmatpush2.msra.mxu0 0.0
    %1349 = vmatprep.subr.mxu0 0.0
    %1350 = vmatpush2.msra.mxu0 0.0
    %1351 = vmatprep.subr.mxu0 0.0
    %1352 = vmatpush2.msra.mxu0 0.0
    %1353 = vmatprep.subr.mxu0 0.0
    %1354 = vmatpush2.msra.mxu0 0.0
    %1355 = vmatprep.subr.mxu0 0.0
    %1356 = vmatpush2.msra.mxu0 0.0
    %1357 = vmatprep.subr.mxu0 0.0
    %1358 = vmatpush2.msra.mxu0 0.0
    %1359 = vmatprep.subr.mxu0 0.0
    %1360 = vmatpush2.msra.mxu0 0.0
    %1361 = vmatprep.subr.mxu0 0.0
    %1362 = vmatpush2.msra.mxu0 0.0
    %1363 = vmatprep.subr.mxu0 0.0
    %1364 = vmatpush2.msra.mxu0 0.0
    %1365 = vmatprep.subr.mxu0 0.0
    %1366 = vmatpush2.msra.mxu0 0.0
    %1367 = vmatprep.mubr.f32.mxu0 0.0
    %v1368 = vand.u32 %v119, 4294901760
    %v1369 = vsub.f32 %v119, %v1368
    %1370 = vmatmul.mubr.f32.gmra.mxu0 %v1369
    %v1371 = vpop.f32.mrf.mxu0
    %v1372 = vadd.f32 %v1292, %v1371
    %v1373 = vpop.f32.mrf.mxu0
    %1374 = vdwg.mxu0
    %1375 = vmatprep.subr.mxu0 0.0
    %1376 = vmatpush1.msra.mxu0 0.0
    %1377 = vmatprep.subr.mxu0 0.0
    %1378 = vmatpush1.msra.mxu0 0.0
    %1379 = vmatprep.subr.mxu0 0.0
    %1380 = vmatpush1.msra.mxu0 0.0
    %1381 = vmatprep.subr.mxu0 0.0
    %1382 = vmatpush1.msra.mxu0 0.0
    %1383 = vmatprep.subr.mxu0 0.0
    %1384 = vmatpush1.msra.mxu0 0.0
    %1385 = vmatprep.subr.mxu0 0.0
    %1386 = vmatpush1.msra.mxu0 0.0
    %1387 = vmatprep.subr.mxu0 0.0
    %1388 = vmatpush1.msra.mxu0 0.0
    %1389 = vmatprep.subr.mxu0 0.0
    %1390 = vmatpush1.msra.mxu0 0.0
    %1391 = vmatprep.subr.mxu0 0.0
    %1392 = vmatpush1.msra.mxu0 0.0
    %1393 = vmatprep.subr.mxu0 0.0
    %1394 = vmatpush1.msra.mxu0 0.0
    %1395 = vmatprep.subr.mxu0 0.0
    %1396 = vmatpush1.msra.mxu0 0.0
    %1397 = vmatprep.subr.mxu0 0.0
    %1398 = vmatpush1.msra.mxu0 0.0
    %1399 = vmatprep.subr.mxu0 0.0
    %v1400 = vand.u32 %v115, 4294901760
    %1401 = vmatpush1.msra.mxu0 %v1400
    %1402 = vmatprep.subr.mxu0 0.0
    %v1403 = vand.u32 %v114, 4294901760
    %1404 = vmatpush1.msra.mxu0 %v1403
    %1405 = vmatprep.subr.mxu0 0.0
    %v1406 = vand.u32 %v113, 4294901760
    %1407 = vmatpush1.msra.mxu0 %v1406
    %1408 = vmatprep.subr.mxu0 0.0
    %v1409 = vand.u32 %v112, 4294901760
    %1410 = vmatpush1.msra.mxu0 %v1409
    %1411 = vmatprep.subr.mxu0 0.0
    %1412 = vmatpush2.msra.mxu0 0.0
    %1413 = vmatprep.subr.mxu0 0.0
    %1414 = vmatpush2.msra.mxu0 0.0
    %1415 = vmatprep.subr.mxu0 0.0
    %1416 = vmatpush2.msra.mxu0 0.0
    %1417 = vmatprep.subr.mxu0 0.0
    %1418 = vmatpush2.msra.mxu0 0.0
    %1419 = vmatprep.subr.mxu0 0.0
    %1420 = vmatpush2.msra.mxu0 0.0
    %1421 = vmatprep.subr.mxu0 0.0
    %1422 = vmatpush2.msra.mxu0 0.0
    %1423 = vmatprep.subr.mxu0 0.0
    %1424 = vmatpush2.msra.mxu0 0.0
    %1425 = vmatprep.subr.mxu0 0.0
    %1426 = vmatpush2.msra.mxu0 0.0
    %1427 = vmatprep.subr.mxu0 0.0
    %1428 = vmatpush2.msra.mxu0 0.0
    %1429 = vmatprep.subr.mxu0 0.0
    %1430 = vmatpush2.msra.mxu0 0.0
    %1431 = vmatprep.subr.mxu0 0.0
    %1432 = vmatpush2.msra.mxu0 0.0
    %1433 = vmatprep.subr.mxu0 0.0
    %1434 = vmatpush2.msra.mxu0 0.0
    %1435 = vmatprep.subr.mxu0 0.0
    %1436 = vmatpush2.msra.mxu0 0.0
    %1437 = vmatprep.subr.mxu0 0.0
    %1438 = vmatpush2.msra.mxu0 0.0
    %1439 = vmatprep.subr.mxu0 0.0
    %1440 = vmatpush2.msra.mxu0 0.0
    %1441 = vmatprep.subr.mxu0 0.0
    %1442 = vmatpush2.msra.mxu0 0.0
    %1443 = vmatprep.mubr.f32.mxu0 0.0
    %v1444 = vand.u32 %v119, 4294901760
    %v1445 = vsub.f32 %v119, %v1444
    %v1446 = vand.u32 %v1445, 4294901760
    %1447 = vmatmul.mubr.f32.gmra.mxu0 %v1446
    %v1448 = vpop.f32.mrf.mxu0
    %v1449 = vadd.f32 %v1372, %v1448
    %v1450 = vpop.f32.mrf.mxu0
    %1451 = vdwg.mxu0
    %1452 = vmatprep.subr.mxu0 0.0
    %1453 = vmatpush1.msra.mxu0 0.0
    %1454 = vmatprep.subr.mxu0 0.0
    %1455 = vmatpush1.msra.mxu0 0.0
    %1456 = vmatprep.subr.mxu0 0.0
    %1457 = vmatpush1.msra.mxu0 0.0
    %1458 = vmatprep.subr.mxu0 0.0
    %1459 = vmatpush1.msra.mxu0 0.0
    %1460 = vmatprep.subr.mxu0 0.0
    %1461 = vmatpush1.msra.mxu0 0.0
    %1462 = vmatprep.subr.mxu0 0.0
    %1463 = vmatpush1.msra.mxu0 0.0
    %1464 = vmatprep.subr.mxu0 0.0
    %1465 = vmatpush1.msra.mxu0 0.0
    %1466 = vmatprep.subr.mxu0 0.0
    %1467 = vmatpush1.msra.mxu0 0.0
    %1468 = vmatprep.subr.mxu0 0.0
    %1469 = vmatpush1.msra.mxu0 0.0
    %1470 = vmatprep.subr.mxu0 0.0
    %1471 = vmatpush1.msra.mxu0 0.0
    %1472 = vmatprep.subr.mxu0 0.0
    %1473 = vmatpush1.msra.mxu0 0.0
    %1474 = vmatprep.subr.mxu0 0.0
    %1475 = vmatpush1.msra.mxu0 0.0
    %1476 = vmatprep.subr.mxu0 0.0
    %v1477 = vand.u32 %v115, 4294901760
    %v1478 = vsub.f32 %v115, %v1477
    %v1479 = vand.u32 %v1478, 4294901760
    %1480 = vmatpush1.msra.mxu0 %v1479
    %1481 = vmatprep.subr.mxu0 0.0
    %v1482 = vand.u32 %v114, 4294901760
    %v1483 = vsub.f32 %v114, %v1482
    %v1484 = vand.u32 %v1483, 4294901760
    %1485 = vmatpush1.msra.mxu0 %v1484
    %1486 = vmatprep.subr.mxu0 0.0
    %v1487 = vand.u32 %v113, 4294901760
    %v1488 = vsub.f32 %v113, %v1487
    %v1489 = vand.u32 %v1488, 4294901760
    %1490 = vmatpush1.msra.mxu0 %v1489
    %1491 = vmatprep.subr.mxu0 0.0
    %v1492 = vand.u32 %v112, 4294901760
    %v1493 = vsub.f32 %v112, %v1492
    %v1494 = vand.u32 %v1493, 4294901760
    %1495 = vmatpush1.msra.mxu0 %v1494
    %1496 = vmatprep.subr.mxu0 0.0
    %1497 = vmatpush2.msra.mxu0 0.0
    %1498 = vmatprep.subr.mxu0 0.0
    %1499 = vmatpush2.msra.mxu0 0.0
    %1500 = vmatprep.subr.mxu0 0.0
    %1501 = vmatpush2.msra.mxu0 0.0
    %1502 = vmatprep.subr.mxu0 0.0
    %1503 = vmatpush2.msra.mxu0 0.0
    %1504 = vmatprep.subr.mxu0 0.0
    %1505 = vmatpush2.msra.mxu0 0.0
    %1506 = vmatprep.subr.mxu0 0.0
    %1507 = vmatpush2.msra.mxu0 0.0
    %1508 = vmatprep.subr.mxu0 0.0
    %1509 = vmatpush2.msra.mxu0 0.0
    %1510 = vmatprep.subr.mxu0 0.0
    %1511 = vmatpush2.msra.mxu0 0.0
    %1512 = vmatprep.subr.mxu0 0.0
    %1513 = vmatpush2.msra.mxu0 0.0
    %1514 = vmatprep.subr.mxu0 0.0
    %1515 = vmatpush2.msra.mxu0 0.0
    %1516 = vmatprep.subr.mxu0 0.0
    %1517 = vmatpush2.msra.mxu0 0.0
    %1518 = vmatprep.subr.mxu0 0.0
    %1519 = vmatpush2.msra.mxu0 0.0
    %1520 = vmatprep.subr.mxu0 0.0
    %1521 = vmatpush2.msra.mxu0 0.0
    %1522 = vmatprep.subr.mxu0 0.0
    %1523 = vmatpush2.msra.mxu0 0.0
    %1524 = vmatprep.subr.mxu0 0.0
    %1525 = vmatpush2.msra.mxu0 0.0
    %1526 = vmatprep.subr.mxu0 0.0
    %1527 = vmatpush2.msra.mxu0 0.0
    %1528 = vmatprep.mubr.f32.mxu0 0.0
    %v1529 = vand.u32 %v119, 4294901760
    %1530 = vmatmul.mubr.f32.gmra.mxu0 %v1529
    %v1531 = vpop.f32.mrf.mxu0
    %v1532 = vadd.f32 %v1449, %v1531
    %v1533 = vpop.f32.mrf.mxu0
    %1534 = vdwg.mxu0
    %1535 = vmatprep.subr.mxu0 0.0
    %1536 = vmatpush1.msra.mxu0 0.0
    %1537 = vmatprep.subr.mxu0 0.0
    %1538 = vmatpush1.msra.mxu0 0.0
    %1539 = vmatprep.subr.mxu0 0.0
    %1540 = vmatpush1.msra.mxu0 0.0
    %1541 = vmatprep.subr.mxu0 0.0
    %1542 = vmatpush1.msra.mxu0 0.0
    %1543 = vmatprep.subr.mxu0 0.0
    %1544 = vmatpush1.msra.mxu0 0.0
    %1545 = vmatprep.subr.mxu0 0.0
    %1546 = vmatpush1.msra.mxu0 0.0
    %1547 = vmatprep.subr.mxu0 0.0
    %1548 = vmatpush1.msra.mxu0 0.0
    %1549 = vmatprep.subr.mxu0 0.0
    %1550 = vmatpush1.msra.mxu0 0.0
    %1551 = vmatprep.subr.mxu0 0.0
    %1552 = vmatpush1.msra.mxu0 0.0
    %1553 = vmatprep.subr.mxu0 0.0
    %1554 = vmatpush1.msra.mxu0 0.0
    %1555 = vmatprep.subr.mxu0 0.0
    %1556 = vmatpush1.msra.mxu0 0.0
    %1557 = vmatprep.subr.mxu0 0.0
    %1558 = vmatpush1.msra.mxu0 0.0
    %1559 = vmatprep.subr.mxu0 0.0
    %v1560 = vand.u32 %v115, 4294901760
    %1561 = vmatpush1.msra.mxu0 %v1560
    %1562 = vmatprep.subr.mxu0 0.0
    %v1563 = vand.u32 %v114, 4294901760
    %1564 = vmatpush1.msra.mxu0 %v1563
    %1565 = vmatprep.subr.mxu0 0.0
    %v1566 = vand.u32 %v113, 4294901760
    %1567 = vmatpush1.msra.mxu0 %v1566
    %1568 = vmatprep.subr.mxu0 0.0
    %v1569 = vand.u32 %v112, 4294901760
    %1570 = vmatpush1.msra.mxu0 %v1569
    %1571 = vmatprep.subr.mxu0 0.0
    %1572 = vmatpush2.msra.mxu0 0.0
    %1573 = vmatprep.subr.mxu0 0.0
    %1574 = vmatpush2.msra.mxu0 0.0
    %1575 = vmatprep.subr.mxu0 0.0
    %1576 = vmatpush2.msra.mxu0 0.0
    %1577 = vmatprep.subr.mxu0 0.0
    %1578 = vmatpush2.msra.mxu0 0.0
    %1579 = vmatprep.subr.mxu0 0.0
    %1580 = vmatpush2.msra.mxu0 0.0
    %1581 = vmatprep.subr.mxu0 0.0
    %1582 = vmatpush2.msra.mxu0 0.0
    %1583 = vmatprep.subr.mxu0 0.0
    %1584 = vmatpush2.msra.mxu0 0.0
    %1585 = vmatprep.subr.mxu0 0.0
    %1586 = vmatpush2.msra.mxu0 0.0
    %1587 = vmatprep.subr.mxu0 0.0
    %1588 = vmatpush2.msra.mxu0 0.0
    %1589 = vmatprep.subr.mxu0 0.0
    %1590 = vmatpush2.msra.mxu0 0.0
    %1591 = vmatprep.subr.mxu0 0.0
    %1592 = vmatpush2.msra.mxu0 0.0
    %1593 = vmatprep.subr.mxu0 0.0
    %1594 = vmatpush2.msra.mxu0 0.0
    %1595 = vmatprep.subr.mxu0 0.0
    %1596 = vmatpush2.msra.mxu0 0.0
    %1597 = vmatprep.subr.mxu0 0.0
    %1598 = vmatpush2.msra.mxu0 0.0
    %1599 = vmatprep.subr.mxu0 0.0
    %1600 = vmatpush2.msra.mxu0 0.0
    %1601 = vmatprep.subr.mxu0 0.0
    %1602 = vmatpush2.msra.mxu0 0.0
    %1603 = vmatprep.mubr.f32.mxu0 0.0
    %v1604 = vand.u32 %v119, 4294901760
    %1605 = vmatmul.mubr.f32.gmra.mxu0 %v1604
    %v1606 = vpop.f32.mrf.mxu0
    %v1607 = vadd.f32 %v1532, %v1606
    %v1608 = vpop.f32.mrf.mxu0
    %1609 = vdwg.mxu0
    %1611 = vrot.lane.b32.xlu0 %v1124, 32
    %v1612 = vpop.permute.xlu0 %1611
    %v1613 = vsel %vm117, %v1612, 0
    %1615 = vmatprep.subr.mxu0 0.0
    %1616 = vmatpush1.msra.mxu0 0.0
    %1617 = vmatprep.subr.mxu0 0.0
    %1618 = vmatpush1.msra.mxu0 0.0
    %1619 = vmatprep.subr.mxu0 0.0
    %1620 = vmatpush1.msra.mxu0 0.0
    %1621 = vmatprep.subr.mxu0 0.0
    %1622 = vmatpush1.msra.mxu0 0.0
    %1623 = vmatprep.subr.mxu0 0.0
    %1624 = vmatpush1.msra.mxu0 0.0
    %1625 = vmatprep.subr.mxu0 0.0
    %1626 = vmatpush1.msra.mxu0 0.0
    %1627 = vmatprep.subr.mxu0 0.0
    %1628 = vmatpush1.msra.mxu0 0.0
    %1629 = vmatprep.subr.mxu0 0.0
    %1630 = vmatpush1.msra.mxu0 0.0
    %1631 = vmatprep.subr.mxu0 0.0
    %1632 = vmatpush1.msra.mxu0 0.0
    %1633 = vmatprep.subr.mxu0 0.0
    %1634 = vmatpush1.msra.mxu0 0.0
    %1635 = vmatprep.subr.mxu0 0.0
    %1636 = vmatpush1.msra.mxu0 0.0
    %1637 = vmatprep.subr.mxu0 0.0
    %1638 = vmatpush1.msra.mxu0 0.0
    %1639 = vmatprep.subr.mxu0 0.0
    %v1640 = vand.u32 %v111, 4294901760
    %1641 = vmatpush1.msra.mxu0 %v1640
    %1642 = vmatprep.subr.mxu0 0.0
    %v1643 = vand.u32 %v110, 4294901760
    %1644 = vmatpush1.msra.mxu0 %v1643
    %1645 = vmatprep.subr.mxu0 0.0
    %v1646 = vand.u32 %v109, 4294901760
    %1647 = vmatpush1.msra.mxu0 %v1646
    %1648 = vmatprep.subr.mxu0 0.0
    %v1649 = vand.u32 %v108, 4294901760
    %1650 = vmatpush1.msra.mxu0 %v1649
    %1651 = vmatprep.subr.mxu0 0.0
    %1652 = vmatpush2.msra.mxu0 0.0
    %1653 = vmatprep.subr.mxu0 0.0
    %1654 = vmatpush2.msra.mxu0 0.0
    %1655 = vmatprep.subr.mxu0 0.0
    %1656 = vmatpush2.msra.mxu0 0.0
    %1657 = vmatprep.subr.mxu0 0.0
    %1658 = vmatpush2.msra.mxu0 0.0
    %1659 = vmatprep.subr.mxu0 0.0
    %1660 = vmatpush2.msra.mxu0 0.0
    %1661 = vmatprep.subr.mxu0 0.0
    %1662 = vmatpush2.msra.mxu0 0.0
    %1663 = vmatprep.subr.mxu0 0.0
    %1664 = vmatpush2.msra.mxu0 0.0
    %1665 = vmatprep.subr.mxu0 0.0
    %1666 = vmatpush2.msra.mxu0 0.0
    %1667 = vmatprep.subr.mxu0 0.0
    %1668 = vmatpush2.msra.mxu0 0.0
    %1669 = vmatprep.subr.mxu0 0.0
    %1670 = vmatpush2.msra.mxu0 0.0
    %1671 = vmatprep.subr.mxu0 0.0
    %1672 = vmatpush2.msra.mxu0 0.0
    %1673 = vmatprep.subr.mxu0 0.0
    %1674 = vmatpush2.msra.mxu0 0.0
    %1675 = vmatprep.subr.mxu0 0.0
    %1676 = vmatpush2.msra.mxu0 0.0
    %1677 = vmatprep.subr.mxu0 0.0
    %1678 = vmatpush2.msra.mxu0 0.0
    %1679 = vmatprep.subr.mxu0 0.0
    %1680 = vmatpush2.msra.mxu0 0.0
    %1681 = vmatprep.subr.mxu0 0.0
    %1682 = vmatpush2.msra.mxu0 0.0
    %1683 = vmatprep.mubr.f32.mxu0 0.0
    %v1684 = vand.u32 %v1613, 4294901760
    %v1685 = vsub.f32 %v1613, %v1684
    %v1686 = vand.u32 %v1685, 4294901760
    %v1687 = vsub.f32 %v1685, %v1686
    %v1688 = vand.u32 %v1687, 4294901760
    %1689 = vmatmul.mubr.f32.gmra.mxu0 %v1688
    %v1690 = vpop.f32.mrf.mxu0
    %v1691 = vadd.f32 %v1607, %v1690
    %v1692 = vpop.f32.mrf.mxu0
    %1693 = vdwg.mxu0
    %1694 = vmatprep.subr.mxu0 0.0
    %1695 = vmatpush1.msra.mxu0 0.0
    %1696 = vmatprep.subr.mxu0 0.0
    %1697 = vmatpush1.msra.mxu0 0.0
    %1698 = vmatprep.subr.mxu0 0.0
    %1699 = vmatpush1.msra.mxu0 0.0
    %1700 = vmatprep.subr.mxu0 0.0
    %1701 = vmatpush1.msra.mxu0 0.0
    %1702 = vmatprep.subr.mxu0 0.0
    %1703 = vmatpush1.msra.mxu0 0.0
    %1704 = vmatprep.subr.mxu0 0.0
    %1705 = vmatpush1.msra.mxu0 0.0
    %1706 = vmatprep.subr.mxu0 0.0
    %1707 = vmatpush1.msra.mxu0 0.0
    %1708 = vmatprep.subr.mxu0 0.0
    %1709 = vmatpush1.msra.mxu0 0.0
    %1710 = vmatprep.subr.mxu0 0.0
    %1711 = vmatpush1.msra.mxu0 0.0
    %1712 = vmatprep.subr.mxu0 0.0
    %1713 = vmatpush1.msra.mxu0 0.0
    %1714 = vmatprep.subr.mxu0 0.0
    %1715 = vmatpush1.msra.mxu0 0.0
    %1716 = vmatprep.subr.mxu0 0.0
    %1717 = vmatpush1.msra.mxu0 0.0
    %1718 = vmatprep.subr.mxu0 0.0
    %v1719 = vand.u32 %v111, 4294901760
    %v1720 = vsub.f32 %v111, %v1719
    %v1721 = vand.u32 %v1720, 4294901760
    %v1722 = vsub.f32 %v1720, %v1721
    %v1723 = vand.u32 %v1722, 4294901760
    %1724 = vmatpush1.msra.mxu0 %v1723
    %1725 = vmatprep.subr.mxu0 0.0
    %v1726 = vand.u32 %v110, 4294901760
    %v1727 = vsub.f32 %v110, %v1726
    %v1728 = vand.u32 %v1727, 4294901760
    %v1729 = vsub.f32 %v1727, %v1728
    %v1730 = vand.u32 %v1729, 4294901760
    %1731 = vmatpush1.msra.mxu0 %v1730
    %1732 = vmatprep.subr.mxu0 0.0
    %v1733 = vand.u32 %v109, 4294901760
    %v1734 = vsub.f32 %v109, %v1733
    %v1735 = vand.u32 %v1734, 4294901760
    %v1736 = vsub.f32 %v1734, %v1735
    %v1737 = vand.u32 %v1736, 4294901760
    %1738 = vmatpush1.msra.mxu0 %v1737
    %1739 = vmatprep.subr.mxu0 0.0
    %v1740 = vand.u32 %v108, 4294901760
    %v1741 = vsub.f32 %v108, %v1740
    %v1742 = vand.u32 %v1741, 4294901760
    %v1743 = vsub.f32 %v1741, %v1742
    %v1744 = vand.u32 %v1743, 4294901760
    %1745 = vmatpush1.msra.mxu0 %v1744
    %1746 = vmatprep.subr.mxu0 0.0
    %1747 = vmatpush2.msra.mxu0 0.0
    %1748 = vmatprep.subr.mxu0 0.0
    %1749 = vmatpush2.msra.mxu0 0.0
    %1750 = vmatprep.subr.mxu0 0.0
    %1751 = vmatpush2.msra.mxu0 0.0
    %1752 = vmatprep.subr.mxu0 0.0
    %1753 = vmatpush2.msra.mxu0 0.0
    %1754 = vmatprep.subr.mxu0 0.0
    %1755 = vmatpush2.msra.mxu0 0.0
    %1756 = vmatprep.subr.mxu0 0.0
    %1757 = vmatpush2.msra.mxu0 0.0
    %1758 = vmatprep.subr.mxu0 0.0
    %1759 = vmatpush2.msra.mxu0 0.0
    %1760 = vmatprep.subr.mxu0 0.0
    %1761 = vmatpush2.msra.mxu0 0.0
    %1762 = vmatprep.subr.mxu0 0.0
    %1763 = vmatpush2.msra.mxu0 0.0
    %1764 = vmatprep.subr.mxu0 0.0
    %1765 = vmatpush2.msra.mxu0 0.0
    %1766 = vmatprep.subr.mxu0 0.0
    %1767 = vmatpush2.msra.mxu0 0.0
    %1768 = vmatprep.subr.mxu0 0.0
    %1769 = vmatpush2.msra.mxu0 0.0
    %1770 = vmatprep.subr.mxu0 0.0
    %1771 = vmatpush2.msra.mxu0 0.0
    %1772 = vmatprep.subr.mxu0 0.0
    %1773 = vmatpush2.msra.mxu0 0.0
    %1774 = vmatprep.subr.mxu0 0.0
    %1775 = vmatpush2.msra.mxu0 0.0
    %1776 = vmatprep.subr.mxu0 0.0
    %1777 = vmatpush2.msra.mxu0 0.0
    %1778 = vmatprep.mubr.f32.mxu0 0.0
    %v1779 = vand.u32 %v1613, 4294901760
    %1780 = vmatmul.mubr.f32.gmra.mxu0 %v1779
    %v1781 = vpop.f32.mrf.mxu0
    %v1782 = vadd.f32 %v1691, %v1781
    %v1783 = vpop.f32.mrf.mxu0
    %1784 = vdwg.mxu0
    %1785 = vmatprep.subr.mxu0 0.0
    %1786 = vmatpush1.msra.mxu0 0.0
    %1787 = vmatprep.subr.mxu0 0.0
    %1788 = vmatpush1.msra.mxu0 0.0
    %1789 = vmatprep.subr.mxu0 0.0
    %1790 = vmatpush1.msra.mxu0 0.0
    %1791 = vmatprep.subr.mxu0 0.0
    %1792 = vmatpush1.msra.mxu0 0.0
    %1793 = vmatprep.subr.mxu0 0.0
    %1794 = vmatpush1.msra.mxu0 0.0
    %1795 = vmatprep.subr.mxu0 0.0
    %1796 = vmatpush1.msra.mxu0 0.0
    %1797 = vmatprep.subr.mxu0 0.0
    %1798 = vmatpush1.msra.mxu0 0.0
    %1799 = vmatprep.subr.mxu0 0.0
    %1800 = vmatpush1.msra.mxu0 0.0
    %1801 = vmatprep.subr.mxu0 0.0
    %1802 = vmatpush1.msra.mxu0 0.0
    %1803 = vmatprep.subr.mxu0 0.0
    %1804 = vmatpush1.msra.mxu0 0.0
    %1805 = vmatprep.subr.mxu0 0.0
    %1806 = vmatpush1.msra.mxu0 0.0
    %1807 = vmatprep.subr.mxu0 0.0
    %1808 = vmatpush1.msra.mxu0 0.0
    %1809 = vmatprep.subr.mxu0 0.0
    %v1810 = vand.u32 %v111, 4294901760
    %v1811 = vsub.f32 %v111, %v1810
    %1812 = vmatpush1.msra.mxu0 %v1811
    %1813 = vmatprep.subr.mxu0 0.0
    %v1814 = vand.u32 %v110, 4294901760
    %v1815 = vsub.f32 %v110, %v1814
    %1816 = vmatpush1.msra.mxu0 %v1815
    %1817 = vmatprep.subr.mxu0 0.0
    %v1818 = vand.u32 %v109, 4294901760
    %v1819 = vsub.f32 %v109, %v1818
    %1820 = vmatpush1.msra.mxu0 %v1819
    %1821 = vmatprep.subr.mxu0 0.0
    %v1822 = vand.u32 %v108, 4294901760
    %v1823 = vsub.f32 %v108, %v1822
    %1824 = vmatpush1.msra.mxu0 %v1823
    %1825 = vmatprep.subr.mxu0 0.0
    %1826 = vmatpush2.msra.mxu0 0.0
    %1827 = vmatprep.subr.mxu0 0.0
    %1828 = vmatpush2.msra.mxu0 0.0
    %1829 = vmatprep.subr.mxu0 0.0
    %1830 = vmatpush2.msra.mxu0 0.0
    %1831 = vmatprep.subr.mxu0 0.0
    %1832 = vmatpush2.msra.mxu0 0.0
    %1833 = vmatprep.subr.mxu0 0.0
    %1834 = vmatpush2.msra.mxu0 0.0
    %1835 = vmatprep.subr.mxu0 0.0
    %1836 = vmatpush2.msra.mxu0 0.0
    %1837 = vmatprep.subr.mxu0 0.0
    %1838 = vmatpush2.msra.mxu0 0.0
    %1839 = vmatprep.subr.mxu0 0.0
    %1840 = vmatpush2.msra.mxu0 0.0
    %1841 = vmatprep.subr.mxu0 0.0
    %1842 = vmatpush2.msra.mxu0 0.0
    %1843 = vmatprep.subr.mxu0 0.0
    %1844 = vmatpush2.msra.mxu0 0.0
    %1845 = vmatprep.subr.mxu0 0.0
    %1846 = vmatpush2.msra.mxu0 0.0
    %1847 = vmatprep.subr.mxu0 0.0
    %1848 = vmatpush2.msra.mxu0 0.0
    %1849 = vmatprep.subr.mxu0 0.0
    %1850 = vmatpush2.msra.mxu0 0.0
    %1851 = vmatprep.subr.mxu0 0.0
    %1852 = vmatpush2.msra.mxu0 0.0
    %1853 = vmatprep.subr.mxu0 0.0
    %1854 = vmatpush2.msra.mxu0 0.0
    %1855 = vmatprep.subr.mxu0 0.0
    %1856 = vmatpush2.msra.mxu0 0.0
    %1857 = vmatprep.mubr.f32.mxu0 0.0
    %v1858 = vand.u32 %v1613, 4294901760
    %v1859 = vsub.f32 %v1613, %v1858
    %1860 = vmatmul.mubr.f32.gmra.mxu0 %v1859
    %v1861 = vpop.f32.mrf.mxu0
    %v1862 = vadd.f32 %v1782, %v1861
    %v1863 = vpop.f32.mrf.mxu0
    %1864 = vdwg.mxu0
    %1865 = vmatprep.subr.mxu0 0.0
    %1866 = vmatpush1.msra.mxu0 0.0
    %1867 = vmatprep.subr.mxu0 0.0
    %1868 = vmatpush1.msra.mxu0 0.0
    %1869 = vmatprep.subr.mxu0 0.0
    %1870 = vmatpush1.msra.mxu0 0.0
    %1871 = vmatprep.subr.mxu0 0.0
    %1872 = vmatpush1.msra.mxu0 0.0
    %1873 = vmatprep.subr.mxu0 0.0
    %1874 = vmatpush1.msra.mxu0 0.0
    %1875 = vmatprep.subr.mxu0 0.0
    %1876 = vmatpush1.msra.mxu0 0.0
    %1877 = vmatprep.subr.mxu0 0.0
    %1878 = vmatpush1.msra.mxu0 0.0
    %1879 = vmatprep.subr.mxu0 0.0
    %1880 = vmatpush1.msra.mxu0 0.0
    %1881 = vmatprep.subr.mxu0 0.0
    %1882 = vmatpush1.msra.mxu0 0.0
    %1883 = vmatprep.subr.mxu0 0.0
    %1884 = vmatpush1.msra.mxu0 0.0
    %1885 = vmatprep.subr.mxu0 0.0
    %1886 = vmatpush1.msra.mxu0 0.0
    %1887 = vmatprep.subr.mxu0 0.0
    %1888 = vmatpush1.msra.mxu0 0.0
    %1889 = vmatprep.subr.mxu0 0.0
    %v1890 = vand.u32 %v111, 4294901760
    %1891 = vmatpush1.msra.mxu0 %v1890
    %1892 = vmatprep.subr.mxu0 0.0
    %v1893 = vand.u32 %v110, 4294901760
    %1894 = vmatpush1.msra.mxu0 %v1893
    %1895 = vmatprep.subr.mxu0 0.0
    %v1896 = vand.u32 %v109, 4294901760
    %1897 = vmatpush1.msra.mxu0 %v1896
    %1898 = vmatprep.subr.mxu0 0.0
    %v1899 = vand.u32 %v108, 4294901760
    %1900 = vmatpush1.msra.mxu0 %v1899
    %1901 = vmatprep.subr.mxu0 0.0
    %1902 = vmatpush2.msra.mxu0 0.0
    %1903 = vmatprep.subr.mxu0 0.0
    %1904 = vmatpush2.msra.mxu0 0.0
    %1905 = vmatprep.subr.mxu0 0.0
    %1906 = vmatpush2.msra.mxu0 0.0
    %1907 = vmatprep.subr.mxu0 0.0
    %1908 = vmatpush2.msra.mxu0 0.0
    %1909 = vmatprep.subr.mxu0 0.0
    %1910 = vmatpush2.msra.mxu0 0.0
    %1911 = vmatprep.subr.mxu0 0.0
    %1912 = vmatpush2.msra.mxu0 0.0
    %1913 = vmatprep.subr.mxu0 0.0
    %1914 = vmatpush2.msra.mxu0 0.0
    %1915 = vmatprep.subr.mxu0 0.0
    %1916 = vmatpush2.msra.mxu0 0.0
    %1917 = vmatprep.subr.mxu0 0.0
    %1918 = vmatpush2.msra.mxu0 0.0
    %1919 = vmatprep.subr.mxu0 0.0
    %1920 = vmatpush2.msra.mxu0 0.0
    %1921 = vmatprep.subr.mxu0 0.0
    %1922 = vmatpush2.msra.mxu0 0.0
    %1923 = vmatprep.subr.mxu0 0.0
    %1924 = vmatpush2.msra.mxu0 0.0
    %1925 = vmatprep.subr.mxu0 0.0
    %1926 = vmatpush2.msra.mxu0 0.0
    %1927 = vmatprep.subr.mxu0 0.0
    %1928 = vmatpush2.msra.mxu0 0.0
    %1929 = vmatprep.subr.mxu0 0.0
    %1930 = vmatpush2.msra.mxu0 0.0
    %1931 = vmatprep.subr.mxu0 0.0
    %1932 = vmatpush2.msra.mxu0 0.0
    %1933 = vmatprep.mubr.f32.mxu0 0.0
    %v1934 = vand.u32 %v1613, 4294901760
    %v1935 = vsub.f32 %v1613, %v1934
    %v1936 = vand.u32 %v1935, 4294901760
    %1937 = vmatmul.mubr.f32.gmra.mxu0 %v1936
    %v1938 = vpop.f32.mrf.mxu0
    %v1939 = vadd.f32 %v1862, %v1938
    %v1940 = vpop.f32.mrf.mxu0
    %1941 = vdwg.mxu0
    %1942 = vmatprep.subr.mxu0 0.0
    %1943 = vmatpush1.msra.mxu0 0.0
    %1944 = vmatprep.subr.mxu0 0.0
    %1945 = vmatpush1.msra.mxu0 0.0
    %1946 = vmatprep.subr.mxu0 0.0
    %1947 = vmatpush1.msra.mxu0 0.0
    %1948 = vmatprep.subr.mxu0 0.0
    %1949 = vmatpush1.msra.mxu0 0.0
    %1950 = vmatprep.subr.mxu0 0.0
    %1951 = vmatpush1.msra.mxu0 0.0
    %1952 = vmatprep.subr.mxu0 0.0
    %1953 = vmatpush1.msra.mxu0 0.0
    %1954 = vmatprep.subr.mxu0 0.0
    %1955 = vmatpush1.msra.mxu0 0.0
    %1956 = vmatprep.subr.mxu0 0.0
    %1957 = vmatpush1.msra.mxu0 0.0
    %1958 = vmatprep.subr.mxu0 0.0
    %1959 = vmatpush1.msra.mxu0 0.0
    %1960 = vmatprep.subr.mxu0 0.0
    %1961 = vmatpush1.msra.mxu0 0.0
    %1962 = vmatprep.subr.mxu0 0.0
    %1963 = vmatpush1.msra.mxu0 0.0
    %1964 = vmatprep.subr.mxu0 0.0
    %1965 = vmatpush1.msra.mxu0 0.0
    %1966 = vmatprep.subr.mxu0 0.0
    %v1967 = vand.u32 %v111, 4294901760
    %v1968 = vsub.f32 %v111, %v1967
    %v1969 = vand.u32 %v1968, 4294901760
    %1970 = vmatpush1.msra.mxu0 %v1969
    %1971 = vmatprep.subr.mxu0 0.0
    %v1972 = vand.u32 %v110, 4294901760
    %v1973 = vsub.f32 %v110, %v1972
    %v1974 = vand.u32 %v1973, 4294901760
    %1975 = vmatpush1.msra.mxu0 %v1974
    %1976 = vmatprep.subr.mxu0 0.0
    %v1977 = vand.u32 %v109, 4294901760
    %v1978 = vsub.f32 %v109, %v1977
    %v1979 = vand.u32 %v1978, 4294901760
    %1980 = vmatpush1.msra.mxu0 %v1979
    %1981 = vmatprep.subr.mxu0 0.0
    %v1982 = vand.u32 %v108, 4294901760
    %v1983 = vsub.f32 %v108, %v1982
    %v1984 = vand.u32 %v1983, 4294901760
    %1985 = vmatpush1.msra.mxu0 %v1984
    %1986 = vmatprep.subr.mxu0 0.0
    %1987 = vmatpush2.msra.mxu0 0.0
    %1988 = vmatprep.subr.mxu0 0.0
    %1989 = vmatpush2.msra.mxu0 0.0
    %1990 = vmatprep.subr.mxu0 0.0
    %1991 = vmatpush2.msra.mxu0 0.0
    %1992 = vmatprep.subr.mxu0 0.0
    %1993 = vmatpush2.msra.mxu0 0.0
    %1994 = vmatprep.subr.mxu0 0.0
    %1995 = vmatpush2.msra.mxu0 0.0
    %1996 = vmatprep.subr.mxu0 0.0
    %1997 = vmatpush2.msra.mxu0 0.0
    %1998 = vmatprep.subr.mxu0 0.0
    %1999 = vmatpush2.msra.mxu0 0.0
    %2000 = vmatprep.subr.mxu0 0.0
    %2001 = vmatpush2.msra.mxu0 0.0
    %2002 = vmatprep.subr.mxu0 0.0
    %2003 = vmatpush2.msra.mxu0 0.0
    %2004 = vmatprep.subr.mxu0 0.0
    %2005 = vmatpush2.msra.mxu0 0.0
    %2006 = vmatprep.subr.mxu0 0.0
    %2007 = vmatpush2.msra.mxu0 0.0
    %2008 = vmatprep.subr.mxu0 0.0
    %2009 = vmatpush2.msra.mxu0 0.0
    %2010 = vmatprep.subr.mxu0 0.0
    %2011 = vmatpush2.msra.mxu0 0.0
    %2012 = vmatprep.subr.mxu0 0.0
    %2013 = vmatpush2.msra.mxu0 0.0
    %2014 = vmatprep.subr.mxu0 0.0
    %2015 = vmatpush2.msra.mxu0 0.0
    %2016 = vmatprep.subr.mxu0 0.0
    %2017 = vmatpush2.msra.mxu0 0.0
    %2018 = vmatprep.mubr.f32.mxu0 0.0
    %v2019 = vand.u32 %v1613, 4294901760
    %2020 = vmatmul.mubr.f32.gmra.mxu0 %v2019
    %v2021 = vpop.f32.mrf.mxu0
    %v2022 = vadd.f32 %v1939, %v2021
    %v2023 = vpop.f32.mrf.mxu0
    %2024 = vdwg.mxu0
    %2025 = vmatprep.subr.mxu0 0.0
    %2026 = vmatpush1.msra.mxu0 0.0
    %2027 = vmatprep.subr.mxu0 0.0
    %2028 = vmatpush1.msra.mxu0 0.0
    %2029 = vmatprep.subr.mxu0 0.0
    %2030 = vmatpush1.msra.mxu0 0.0
    %2031 = vmatprep.subr.mxu0 0.0
    %2032 = vmatpush1.msra.mxu0 0.0
    %2033 = vmatprep.subr.mxu0 0.0
    %2034 = vmatpush1.msra.mxu0 0.0
    %2035 = vmatprep.subr.mxu0 0.0
    %2036 = vmatpush1.msra.mxu0 0.0
    %2037 = vmatprep.subr.mxu0 0.0
    %2038 = vmatpush1.msra.mxu0 0.0
    %2039 = vmatprep.subr.mxu0 0.0
    %2040 = vmatpush1.msra.mxu0 0.0
    %2041 = vmatprep.subr.mxu0 0.0
    %2042 = vmatpush1.msra.mxu0 0.0
    %2043 = vmatprep.subr.mxu0 0.0
    %2044 = vmatpush1.msra.mxu0 0.0
    %2045 = vmatprep.subr.mxu0 0.0
    %2046 = vmatpush1.msra.mxu0 0.0
    %2047 = vmatprep.subr.mxu0 0.0
    %2048 = vmatpush1.msra.mxu0 0.0
    %2049 = vmatprep.subr.mxu0 0.0
    %v2050 = vand.u32 %v111, 4294901760
    %2051 = vmatpush1.msra.mxu0 %v2050
    %2052 = vmatprep.subr.mxu0 0.0
    %v2053 = vand.u32 %v110, 4294901760
    %2054 = vmatpush1.msra.mxu0 %v2053
    %2055 = vmatprep.subr.mxu0 0.0
    %v2056 = vand.u32 %v109, 4294901760
    %2057 = vmatpush1.msra.mxu0 %v2056
    %2058 = vmatprep.subr.mxu0 0.0
    %v2059 = vand.u32 %v108, 4294901760
    %2060 = vmatpush1.msra.mxu0 %v2059
    %2061 = vmatprep.subr.mxu0 0.0
    %2062 = vmatpush2.msra.mxu0 0.0
    %2063 = vmatprep.subr.mxu0 0.0
    %2064 = vmatpush2.msra.mxu0 0.0
    %2065 = vmatprep.subr.mxu0 0.0
    %2066 = vmatpush2.msra.mxu0 0.0
    %2067 = vmatprep.subr.mxu0 0.0
    %2068 = vmatpush2.msra.mxu0 0.0
    %2069 = vmatprep.subr.mxu0 0.0
    %2070 = vmatpush2.msra.mxu0 0.0
    %2071 = vmatprep.subr.mxu0 0.0
    %2072 = vmatpush2.msra.mxu0 0.0
    %2073 = vmatprep.subr.mxu0 0.0
    %2074 = vmatpush2.msra.mxu0 0.0
    %2075 = vmatprep.subr.mxu0 0.0
    %2076 = vmatpush2.msra.mxu0 0.0
    %2077 = vmatprep.subr.mxu0 0.0
    %2078 = vmatpush2.msra.mxu0 0.0
    %2079 = vmatprep.subr.mxu0 0.0
    %2080 = vmatpush2.msra.mxu0 0.0
    %2081 = vmatprep.subr.mxu0 0.0
    %2082 = vmatpush2.msra.mxu0 0.0
    %2083 = vmatprep.subr.mxu0 0.0
    %2084 = vmatpush2.msra.mxu0 0.0
    %2085 = vmatprep.subr.mxu0 0.0
    %2086 = vmatpush2.msra.mxu0 0.0
    %2087 = vmatprep.subr.mxu0 0.0
    %2088 = vmatpush2.msra.mxu0 0.0
    %2089 = vmatprep.subr.mxu0 0.0
    %2090 = vmatpush2.msra.mxu0 0.0
    %2091 = vmatprep.subr.mxu0 0.0
    %2092 = vmatpush2.msra.mxu0 0.0
    %2093 = vmatprep.mubr.f32.mxu0 0.0
    %v2094 = vand.u32 %v1613, 4294901760
    %2095 = vmatmul.mubr.f32.gmra.mxu0 %v2094
    %v2096 = vpop.f32.mrf.mxu0
    %v2097 = vadd.f32 %v2022, %v2096
    %v2098 = vpop.f32.mrf.mxu0
    %2099 = vdwg.mxu0
    %v2101 = vlaneseq
    %v2102 = vshrl.u32 %v2101, 7
    %v2103 = vsub.s32 0, %v2102
    %v2104 = vrot.slane %v116, %v2103
    %v2106 = vadd.f32 %v2097, %v2104
    %v2107 = vxor.u32 %v2106, 2147483648
    %v2108 = vmul.f32 %v2107, 1.442695
    %v2109 = vpow.pop %v2108
    %v2110 = vadd.f32 %v2109, 1.0
    %v2111 = vrcp.pop %v2110
    %v2112 = vmul.f32 1.0, %v2111
    %v2113 = vtanh.pop %v2106
    %v2114 = vmul.f32 %v2112, 0.0
    %2116 = vrot.lane.b32.xlu0 %v2113, 64
    %v2117 = vpop.permute.xlu0 %2116
    %v2119 = vmul.f32 %v2112, %v2117
    %2121 = vrot.lane.b32.xlu0 %v2119, 32
    %v2122 = vpop.permute.xlu0 %2121
    %v2124 = vadd.f32 %v2114, %v2122
    %v2125 = vtanh.pop %v2124
    %2127 = vrot.lane.b32.xlu0 %v2125, 64
    %v2128 = vpop.permute.xlu0 %2127
    %v2130 = vmul.f32 %v2112, %v2128
    %2131 = vmatprep.subr.mxu0 0.0
    %2132 = vmatpush1.msra.mxu0 0.0
    %2133 = vmatprep.subr.mxu0 0.0
    %2134 = vmatpush1.msra.mxu0 0.0
    %2135 = vmatprep.subr.mxu0 0.0
    %2136 = vmatpush1.msra.mxu0 0.0
    %2137 = vmatprep.subr.mxu0 0.0
    %2138 = vmatpush1.msra.mxu0 0.0
    %2139 = vmatprep.subr.mxu0 0.0
    %2140 = vmatpush1.msra.mxu0 0.0
    %2141 = vmatprep.subr.mxu0 0.0
    %2142 = vmatpush1.msra.mxu0 0.0
    %2143 = vmatprep.subr.mxu0 0.0
    %2144 = vmatpush1.msra.mxu0 0.0
    %2145 = vmatprep.subr.mxu0 0.0
    %2146 = vmatpush1.msra.mxu0 0.0
    %2147 = vmatprep.subr.mxu0 0.0
    %2148 = vmatpush1.msra.mxu0 0.0
    %2149 = vmatprep.subr.mxu0 0.0
    %2150 = vmatpush1.msra.mxu0 0.0
    %2151 = vmatprep.subr.mxu0 0.0
    %2152 = vmatpush1.msra.mxu0 0.0
    %2153 = vmatprep.subr.mxu0 0.0
    %2154 = vmatpush1.msra.mxu0 0.0
    %2155 = vmatprep.subr.mxu0 0.0
    %v2156 = vand.u32 %v106, 4294901760
    %2157 = vmatpush1.msra.mxu0 %v2156
    %2158 = vmatprep.subr.mxu0 0.0
    %v2159 = vand.u32 %v105, 4294901760
    %2160 = vmatpush1.msra.mxu0 %v2159
    %2161 = vmatprep.subr.mxu0 0.0
    %v2162 = vand.u32 %v104, 4294901760
    %2163 = vmatpush1.msra.mxu0 %v2162
    %2164 = vmatprep.subr.mxu0 0.0
    %v2165 = vand.u32 %v103, 4294901760
    %2166 = vmatpush1.msra.mxu0 %v2165
    %2167 = vmatprep.subr.mxu0 0.0
    %2168 = vmatpush2.msra.mxu0 0.0
    %2169 = vmatprep.subr.mxu0 0.0
    %2170 = vmatpush2.msra.mxu0 0.0
    %2171 = vmatprep.subr.mxu0 0.0
    %2172 = vmatpush2.msra.mxu0 0.0
    %2173 = vmatprep.subr.mxu0 0.0
    %2174 = vmatpush2.msra.mxu0 0.0
    %2175 = vmatprep.subr.mxu0 0.0
    %2176 = vmatpush2.msra.mxu0 0.0
    %2177 = vmatprep.subr.mxu0 0.0
    %2178 = vmatpush2.msra.mxu0 0.0
    %2179 = vmatprep.subr.mxu0 0.0
    %2180 = vmatpush2.msra.mxu0 0.0
    %2181 = vmatprep.subr.mxu0 0.0
    %2182 = vmatpush2.msra.mxu0 0.0
    %2183 = vmatprep.subr.mxu0 0.0
    %2184 = vmatpush2.msra.mxu0 0.0
    %2185 = vmatprep.subr.mxu0 0.0
    %2186 = vmatpush2.msra.mxu0 0.0
    %2187 = vmatprep.subr.mxu0 0.0
    %2188 = vmatpush2.msra.mxu0 0.0
    %2189 = vmatprep.subr.mxu0 0.0
    %2190 = vmatpush2.msra.mxu0 0.0
    %2191 = vmatprep.subr.mxu0 0.0
    %2192 = vmatpush2.msra.mxu0 0.0
    %2193 = vmatprep.subr.mxu0 0.0
    %2194 = vmatpush2.msra.mxu0 0.0
    %2195 = vmatprep.subr.mxu0 0.0
    %2196 = vmatpush2.msra.mxu0 0.0
    %2197 = vmatprep.subr.mxu0 0.0
    %2198 = vmatpush2.msra.mxu0 0.0
    %2199 = vmatprep.mubr.f32.mxu0 0.0
    %v2200 = vand.u32 %v1613, 4294901760
    %v2201 = vsub.f32 %v1613, %v2200
    %v2202 = vand.u32 %v2201, 4294901760
    %v2203 = vsub.f32 %v2201, %v2202
    %v2204 = vand.u32 %v2203, 4294901760
    %2205 = vmatmul.mubr.f32.gmra.mxu0 %v2204
    %v2206 = vpop.f32.mrf.mxu0
    %v2207 = vadd.f32 0.0, %v2206
    %v2208 = vpop.f32.mrf.mxu0
    %2209 = vdwg.mxu0
    %2210 = vmatprep.subr.mxu0 0.0
    %2211 = vmatpush1.msra.mxu0 0.0
    %2212 = vmatprep.subr.mxu0 0.0
    %2213 = vmatpush1.msra.mxu0 0.0
    %2214 = vmatprep.subr.mxu0 0.0
    %2215 = vmatpush1.msra.mxu0 0.0
    %2216 = vmatprep.subr.mxu0 0.0
    %2217 = vmatpush1.msra.mxu0 0.0
    %2218 = vmatprep.subr.mxu0 0.0
    %2219 = vmatpush1.msra.mxu0 0.0
    %2220 = vmatprep.subr.mxu0 0.0
    %2221 = vmatpush1.msra.mxu0 0.0
    %2222 = vmatprep.subr.mxu0 0.0
    %2223 = vmatpush1.msra.mxu0 0.0
    %2224 = vmatprep.subr.mxu0 0.0
    %2225 = vmatpush1.msra.mxu0 0.0
    %2226 = vmatprep.subr.mxu0 0.0
    %2227 = vmatpush1.msra.mxu0 0.0
    %2228 = vmatprep.subr.mxu0 0.0
    %2229 = vmatpush1.msra.mxu0 0.0
    %2230 = vmatprep.subr.mxu0 0.0
    %2231 = vmatpush1.msra.mxu0 0.0
    %2232 = vmatprep.subr.mxu0 0.0
    %2233 = vmatpush1.msra.mxu0 0.0
    %2234 = vmatprep.subr.mxu0 0.0
    %v2235 = vand.u32 %v106, 4294901760
    %v2236 = vsub.f32 %v106, %v2235
    %v2237 = vand.u32 %v2236, 4294901760
    %v2238 = vsub.f32 %v2236, %v2237
    %v2239 = vand.u32 %v2238, 4294901760
    %2240 = vmatpush1.msra.mxu0 %v2239
    %2241 = vmatprep.subr.mxu0 0.0
    %v2242 = vand.u32 %v105, 4294901760
    %v2243 = vsub.f32 %v105, %v2242
    %v2244 = vand.u32 %v2243, 4294901760
    %v2245 = vsub.f32 %v2243, %v2244
    %v2246 = vand.u32 %v2245, 4294901760
    %2247 = vmatpush1.msra.mxu0 %v2246
    %2248 = vmatprep.subr.mxu0 0.0
    %v2249 = vand.u32 %v104, 4294901760
    %v2250 = vsub.f32 %v104, %v2249
    %v2251 = vand.u32 %v2250, 4294901760
    %v2252 = vsub.f32 %v2250, %v2251
    %v2253 = vand.u32 %v2252, 4294901760
    %2254 = vmatpush1.msra.mxu0 %v2253
    %2255 = vmatprep.subr.mxu0 0.0
    %v2256 = vand.u32 %v103, 4294901760
    %v2257 = vsub.f32 %v103, %v2256
    %v2258 = vand.u32 %v2257, 4294901760
    %v2259 = vsub.f32 %v2257, %v2258
    %v2260 = vand.u32 %v2259, 4294901760
    %2261 = vmatpush1.msra.mxu0 %v2260
    %2262 = vmatprep.subr.mxu0 0.0
    %2263 = vmatpush2.msra.mxu0 0.0
    %2264 = vmatprep.subr.mxu0 0.0
    %2265 = vmatpush2.msra.mxu0 0.0
    %2266 = vmatprep.subr.mxu0 0.0
    %2267 = vmatpush2.msra.mxu0 0.0
    %2268 = vmatprep.subr.mxu0 0.0
    %2269 = vmatpush2.msra.mxu0 0.0
    %2270 = vmatprep.subr.mxu0 0.0
    %2271 = vmatpush2.msra.mxu0 0.0
    %2272 = vmatprep.subr.mxu0 0.0
    %2273 = vmatpush2.msra.mxu0 0.0
    %2274 = vmatprep.subr.mxu0 0.0
    %2275 = vmatpush2.msra.mxu0 0.0
    %2276 = vmatprep.subr.mxu0 0.0
    %2277 = vmatpush2.msra.mxu0 0.0
    %2278 = vmatprep.subr.mxu0 0.0
    %2279 = vmatpush2.msra.mxu0 0.0
    %2280 = vmatprep.subr.mxu0 0.0
    %2281 = vmatpush2.msra.mxu0 0.0
    %2282 = vmatprep.subr.mxu0 0.0
    %2283 = vmatpush2.msra.mxu0 0.0
    %2284 = vmatprep.subr.mxu0 0.0
    %2285 = vmatpush2.msra.mxu0 0.0
    %2286 = vmatprep.subr.mxu0 0.0
    %2287 = vmatpush2.msra.mxu0 0.0
    %2288 = vmatprep.subr.mxu0 0.0
    %2289 = vmatpush2.msra.mxu0 0.0
    %2290 = vmatprep.subr.mxu0 0.0
    %2291 = vmatpush2.msra.mxu0 0.0
    %2292 = vmatprep.subr.mxu0 0.0
    %2293 = vmatpush2.msra.mxu0 0.0
    %2294 = vmatprep.mubr.f32.mxu0 0.0
    %v2295 = vand.u32 %v1613, 4294901760
    %2296 = vmatmul.mubr.f32.gmra.mxu0 %v2295
    %v2297 = vpop.f32.mrf.mxu0
    %v2298 = vadd.f32 %v2207, %v2297
    %v2299 = vpop.f32.mrf.mxu0
    %2300 = vdwg.mxu0
    %2301 = vmatprep.subr.mxu0 0.0
    %2302 = vmatpush1.msra.mxu0 0.0
    %2303 = vmatprep.subr.mxu0 0.0
    %2304 = vmatpush1.msra.mxu0 0.0
    %2305 = vmatprep.subr.mxu0 0.0
    %2306 = vmatpush1.msra.mxu0 0.0
    %2307 = vmatprep.subr.mxu0 0.0
    %2308 = vmatpush1.msra.mxu0 0.0
    %2309 = vmatprep.subr.mxu0 0.0
    %2310 = vmatpush1.msra.mxu0 0.0
    %2311 = vmatprep.subr.mxu0 0.0
    %2312 = vmatpush1.msra.mxu0 0.0
    %2313 = vmatprep.subr.mxu0 0.0
    %2314 = vmatpush1.msra.mxu0 0.0
    %2315 = vmatprep.subr.mxu0 0.0
    %2316 = vmatpush1.msra.mxu0 0.0
    %2317 = vmatprep.subr.mxu0 0.0
    %2318 = vmatpush1.msra.mxu0 0.0
    %2319 = vmatprep.subr.mxu0 0.0
    %2320 = vmatpush1.msra.mxu0 0.0
    %2321 = vmatprep.subr.mxu0 0.0
    %2322 = vmatpush1.msra.mxu0 0.0
    %2323 = vmatprep.subr.mxu0 0.0
    %2324 = vmatpush1.msra.mxu0 0.0
    %2325 = vmatprep.subr.mxu0 0.0
    %v2326 = vand.u32 %v106, 4294901760
    %v2327 = vsub.f32 %v106, %v2326
    %2328 = vmatpush1.msra.mxu0 %v2327
    %2329 = vmatprep.subr.mxu0 0.0
    %v2330 = vand.u32 %v105, 4294901760
    %v2331 = vsub.f32 %v105, %v2330
    %2332 = vmatpush1.msra.mxu0 %v2331
    %2333 = vmatprep.subr.mxu0 0.0
    %v2334 = vand.u32 %v104, 4294901760
    %v2335 = vsub.f32 %v104, %v2334
    %2336 = vmatpush1.msra.mxu0 %v2335
    %2337 = vmatprep.subr.mxu0 0.0
    %v2338 = vand.u32 %v103, 4294901760
    %v2339 = vsub.f32 %v103, %v2338
    %2340 = vmatpush1.msra.mxu0 %v2339
    %2341 = vmatprep.subr.mxu0 0.0
    %2342 = vmatpush2.msra.mxu0 0.0
    %2343 = vmatprep.subr.mxu0 0.0
    %2344 = vmatpush2.msra.mxu0 0.0
    %2345 = vmatprep.subr.mxu0 0.0
    %2346 = vmatpush2.msra.mxu0 0.0
    %2347 = vmatprep.subr.mxu0 0.0
    %2348 = vmatpush2.msra.mxu0 0.0
    %2349 = vmatprep.subr.mxu0 0.0
    %2350 = vmatpush2.msra.mxu0 0.0
    %2351 = vmatprep.subr.mxu0 0.0
    %2352 = vmatpush2.msra.mxu0 0.0
    %2353 = vmatprep.subr.mxu0 0.0
    %2354 = vmatpush2.msra.mxu0 0.0
    %2355 = vmatprep.subr.mxu0 0.0
    %2356 = vmatpush2.msra.mxu0 0.0
    %2357 = vmatprep.subr.mxu0 0.0
    %2358 = vmatpush2.msra.mxu0 0.0
    %2359 = vmatprep.subr.mxu0 0.0
    %2360 = vmatpush2.msra.mxu0 0.0
    %2361 = vmatprep.subr.mxu0 0.0
    %2362 = vmatpush2.msra.mxu0 0.0
    %2363 = vmatprep.subr.mxu0 0.0
    %2364 = vmatpush2.msra.mxu0 0.0
    %2365 = vmatprep.subr.mxu0 0.0
    %2366 = vmatpush2.msra.mxu0 0.0
    %2367 = vmatprep.subr.mxu0 0.0
    %2368 = vmatpush2.msra.mxu0 0.0
    %2369 = vmatprep.subr.mxu0 0.0
    %2370 = vmatpush2.msra.mxu0 0.0
    %2371 = vmatprep.subr.mxu0 0.0
    %2372 = vmatpush2.msra.mxu0 0.0
    %2373 = vmatprep.mubr.f32.mxu0 0.0
    %v2374 = vand.u32 %v1613, 4294901760
    %v2375 = vsub.f32 %v1613, %v2374
    %2376 = vmatmul.mubr.f32.gmra.mxu0 %v2375
    %v2377 = vpop.f32.mrf.mxu0
    %v2378 = vadd.f32 %v2298, %v2377
    %v2379 = vpop.f32.mrf.mxu0
    %2380 = vdwg.mxu0
    %2381 = vmatprep.subr.mxu0 0.0
    %2382 = vmatpush1.msra.mxu0 0.0
    %2383 = vmatprep.subr.mxu0 0.0
    %2384 = vmatpush1.msra.mxu0 0.0
    %2385 = vmatprep.subr.mxu0 0.0
    %2386 = vmatpush1.msra.mxu0 0.0
    %2387 = vmatprep.subr.mxu0 0.0
    %2388 = vmatpush1.msra.mxu0 0.0
    %2389 = vmatprep.subr.mxu0 0.0
    %2390 = vmatpush1.msra.mxu0 0.0
    %2391 = vmatprep.subr.mxu0 0.0
    %2392 = vmatpush1.msra.mxu0 0.0
    %2393 = vmatprep.subr.mxu0 0.0
    %2394 = vmatpush1.msra.mxu0 0.0
    %2395 = vmatprep.subr.mxu0 0.0
    %2396 = vmatpush1.msra.mxu0 0.0
    %2397 = vmatprep.subr.mxu0 0.0
    %2398 = vmatpush1.msra.mxu0 0.0
    %2399 = vmatprep.subr.mxu0 0.0
    %2400 = vmatpush1.msra.mxu0 0.0
    %2401 = vmatprep.subr.mxu0 0.0
    %2402 = vmatpush1.msra.mxu0 0.0
    %2403 = vmatprep.subr.mxu0 0.0
    %2404 = vmatpush1.msra.mxu0 0.0
    %2405 = vmatprep.subr.mxu0 0.0
    %v2406 = vand.u32 %v106, 4294901760
    %2407 = vmatpush1.msra.mxu0 %v2406
    %2408 = vmatprep.subr.mxu0 0.0
    %v2409 = vand.u32 %v105, 4294901760
    %2410 = vmatpush1.msra.mxu0 %v2409
    %2411 = vmatprep.subr.mxu0 0.0
    %v2412 = vand.u32 %v104, 4294901760
    %2413 = vmatpush1.msra.mxu0 %v2412
    %2414 = vmatprep.subr.mxu0 0.0
    %v2415 = vand.u32 %v103, 4294901760
    %2416 = vmatpush1.msra.mxu0 %v2415
    %2417 = vmatprep.subr.mxu0 0.0
    %2418 = vmatpush2.msra.mxu0 0.0
    %2419 = vmatprep.subr.mxu0 0.0
    %2420 = vmatpush2.msra.mxu0 0.0
    %2421 = vmatprep.subr.mxu0 0.0
    %2422 = vmatpush2.msra.mxu0 0.0
    %2423 = vmatprep.subr.mxu0 0.0
    %2424 = vmatpush2.msra.mxu0 0.0
    %2425 = vmatprep.subr.mxu0 0.0
    %2426 = vmatpush2.msra.mxu0 0.0
    %2427 = vmatprep.subr.mxu0 0.0
    %2428 = vmatpush2.msra.mxu0 0.0
    %2429 = vmatprep.subr.mxu0 0.0
    %2430 = vmatpush2.msra.mxu0 0.0
    %2431 = vmatprep.subr.mxu0 0.0
    %2432 = vmatpush2.msra.mxu0 0.0
    %2433 = vmatprep.subr.mxu0 0.0
    %2434 = vmatpush2.msra.mxu0 0.0
    %2435 = vmatprep.subr.mxu0 0.0
    %2436 = vmatpush2.msra.mxu0 0.0
    %2437 = vmatprep.subr.mxu0 0.0
    %2438 = vmatpush2.msra.mxu0 0.0
    %2439 = vmatprep.subr.mxu0 0.0
    %2440 = vmatpush2.msra.mxu0 0.0
    %2441 = vmatprep.subr.mxu0 0.0
    %2442 = vmatpush2.msra.mxu0 0.0
    %2443 = vmatprep.subr.mxu0 0.0
    %2444 = vmatpush2.msra.mxu0 0.0
    %2445 = vmatprep.subr.mxu0 0.0
    %2446 = vmatpush2.msra.mxu0 0.0
    %2447 = vmatprep.subr.mxu0 0.0
    %2448 = vmatpush2.msra.mxu0 0.0
    %2449 = vmatprep.mubr.f32.mxu0 0.0
    %v2450 = vand.u32 %v1613, 4294901760
    %v2451 = vsub.f32 %v1613, %v2450
    %v2452 = vand.u32 %v2451, 4294901760
    %2453 = vmatmul.mubr.f32.gmra.mxu0 %v2452
    %v2454 = vpop.f32.mrf.mxu0
    %v2455 = vadd.f32 %v2378, %v2454
    %v2456 = vpop.f32.mrf.mxu0
    %2457 = vdwg.mxu0
    %2458 = vmatprep.subr.mxu0 0.0
    %2459 = vmatpush1.msra.mxu0 0.0
    %2460 = vmatprep.subr.mxu0 0.0
    %2461 = vmatpush1.msra.mxu0 0.0
    %2462 = vmatprep.subr.mxu0 0.0
    %2463 = vmatpush1.msra.mxu0 0.0
    %2464 = vmatprep.subr.mxu0 0.0
    %2465 = vmatpush1.msra.mxu0 0.0
    %2466 = vmatprep.subr.mxu0 0.0
    %2467 = vmatpush1.msra.mxu0 0.0
    %2468 = vmatprep.subr.mxu0 0.0
    %2469 = vmatpush1.msra.mxu0 0.0
    %2470 = vmatprep.subr.mxu0 0.0
    %2471 = vmatpush1.msra.mxu0 0.0
    %2472 = vmatprep.subr.mxu0 0.0
    %2473 = vmatpush1.msra.mxu0 0.0
    %2474 = vmatprep.subr.mxu0 0.0
    %2475 = vmatpush1.msra.mxu0 0.0
    %2476 = vmatprep.subr.mxu0 0.0
    %2477 = vmatpush1.msra.mxu0 0.0
    %2478 = vmatprep.subr.mxu0 0.0
    %2479 = vmatpush1.msra.mxu0 0.0
    %2480 = vmatprep.subr.mxu0 0.0
    %2481 = vmatpush1.msra.mxu0 0.0
    %2482 = vmatprep.subr.mxu0 0.0
    %v2483 = vand.u32 %v106, 4294901760
    %v2484 = vsub.f32 %v106, %v2483
    %v2485 = vand.u32 %v2484, 4294901760
    %2486 = vmatpush1.msra.mxu0 %v2485
    %2487 = vmatprep.subr.mxu0 0.0
    %v2488 = vand.u32 %v105, 4294901760
    %v2489 = vsub.f32 %v105, %v2488
    %v2490 = vand.u32 %v2489, 4294901760
    %2491 = vmatpush1.msra.mxu0 %v2490
    %2492 = vmatprep.subr.mxu0 0.0
    %v2493 = vand.u32 %v104, 4294901760
    %v2494 = vsub.f32 %v104, %v2493
    %v2495 = vand.u32 %v2494, 4294901760
    %2496 = vmatpush1.msra.mxu0 %v2495
    %2497 = vmatprep.subr.mxu0 0.0
    %v2498 = vand.u32 %v103, 4294901760
    %v2499 = vsub.f32 %v103, %v2498
    %v2500 = vand.u32 %v2499, 4294901760
    %2501 = vmatpush1.msra.mxu0 %v2500
    %2502 = vmatprep.subr.mxu0 0.0
    %2503 = vmatpush2.msra.mxu0 0.0
    %2504 = vmatprep.subr.mxu0 0.0
    %2505 = vmatpush2.msra.mxu0 0.0
    %2506 = vmatprep.subr.mxu0 0.0
    %2507 = vmatpush2.msra.mxu0 0.0
    %2508 = vmatprep.subr.mxu0 0.0
    %2509 = vmatpush2.msra.mxu0 0.0
    %2510 = vmatprep.subr.mxu0 0.0
    %2511 = vmatpush2.msra.mxu0 0.0
    %2512 = vmatprep.subr.mxu0 0.0
    %2513 = vmatpush2.msra.mxu0 0.0
    %2514 = vmatprep.subr.mxu0 0.0
    %2515 = vmatpush2.msra.mxu0 0.0
    %2516 = vmatprep.subr.mxu0 0.0
    %2517 = vmatpush2.msra.mxu0 0.0
    %2518 = vmatprep.subr.mxu0 0.0
    %2519 = vmatpush2.msra.mxu0 0.0
    %2520 = vmatprep.subr.mxu0 0.0
    %2521 = vmatpush2.msra.mxu0 0.0
    %2522 = vmatprep.subr.mxu0 0.0
    %2523 = vmatpush2.msra.mxu0 0.0
    %2524 = vmatprep.subr.mxu0 0.0
    %2525 = vmatpush2.msra.mxu0 0.0
    %2526 = vmatprep.subr.mxu0 0.0
    %2527 = vmatpush2.msra.mxu0 0.0
    %2528 = vmatprep.subr.mxu0 0.0
    %2529 = vmatpush2.msra.mxu0 0.0
    %2530 = vmatprep.subr.mxu0 0.0
    %2531 = vmatpush2.msra.mxu0 0.0
    %2532 = vmatprep.subr.mxu0 0.0
    %2533 = vmatpush2.msra.mxu0 0.0
    %2534 = vmatprep.mubr.f32.mxu0 0.0
    %v2535 = vand.u32 %v1613, 4294901760
    %2536 = vmatmul.mubr.f32.gmra.mxu0 %v2535
    %v2537 = vpop.f32.mrf.mxu0
    %v2538 = vadd.f32 %v2455, %v2537
    %v2539 = vpop.f32.mrf.mxu0
    %2540 = vdwg.mxu0
    %2541 = vmatprep.subr.mxu0 0.0
    %2542 = vmatpush1.msra.mxu0 0.0
    %2543 = vmatprep.subr.mxu0 0.0
    %2544 = vmatpush1.msra.mxu0 0.0
    %2545 = vmatprep.subr.mxu0 0.0
    %2546 = vmatpush1.msra.mxu0 0.0
    %2547 = vmatprep.subr.mxu0 0.0
    %2548 = vmatpush1.msra.mxu0 0.0
    %2549 = vmatprep.subr.mxu0 0.0
    %2550 = vmatpush1.msra.mxu0 0.0
    %2551 = vmatprep.subr.mxu0 0.0
    %2552 = vmatpush1.msra.mxu0 0.0
    %2553 = vmatprep.subr.mxu0 0.0
    %2554 = vmatpush1.msra.mxu0 0.0
    %2555 = vmatprep.subr.mxu0 0.0
    %2556 = vmatpush1.msra.mxu0 0.0
    %2557 = vmatprep.subr.mxu0 0.0
    %2558 = vmatpush1.msra.mxu0 0.0
    %2559 = vmatprep.subr.mxu0 0.0
    %2560 = vmatpush1.msra.mxu0 0.0
    %2561 = vmatprep.subr.mxu0 0.0
    %2562 = vmatpush1.msra.mxu0 0.0
    %2563 = vmatprep.subr.mxu0 0.0
    %2564 = vmatpush1.msra.mxu0 0.0
    %2565 = vmatprep.subr.mxu0 0.0
    %v2566 = vand.u32 %v106, 4294901760
    %2567 = vmatpush1.msra.mxu0 %v2566
    %2568 = vmatprep.subr.mxu0 0.0
    %v2569 = vand.u32 %v105, 4294901760
    %2570 = vmatpush1.msra.mxu0 %v2569
    %2571 = vmatprep.subr.mxu0 0.0
    %v2572 = vand.u32 %v104, 4294901760
    %2573 = vmatpush1.msra.mxu0 %v2572
    %2574 = vmatprep.subr.mxu0 0.0
    %v2575 = vand.u32 %v103, 4294901760
    %2576 = vmatpush1.msra.mxu0 %v2575
    %2577 = vmatprep.subr.mxu0 0.0
    %2578 = vmatpush2.msra.mxu0 0.0
    %2579 = vmatprep.subr.mxu0 0.0
    %2580 = vmatpush2.msra.mxu0 0.0
    %2581 = vmatprep.subr.mxu0 0.0
    %2582 = vmatpush2.msra.mxu0 0.0
    %2583 = vmatprep.subr.mxu0 0.0
    %2584 = vmatpush2.msra.mxu0 0.0
    %2585 = vmatprep.subr.mxu0 0.0
    %2586 = vmatpush2.msra.mxu0 0.0
    %2587 = vmatprep.subr.mxu0 0.0
    %2588 = vmatpush2.msra.mxu0 0.0
    %2589 = vmatprep.subr.mxu0 0.0
    %2590 = vmatpush2.msra.mxu0 0.0
    %2591 = vmatprep.subr.mxu0 0.0
    %2592 = vmatpush2.msra.mxu0 0.0
    %2593 = vmatprep.subr.mxu0 0.0
    %2594 = vmatpush2.msra.mxu0 0.0
    %2595 = vmatprep.subr.mxu0 0.0
    %2596 = vmatpush2.msra.mxu0 0.0
    %2597 = vmatprep.subr.mxu0 0.0
    %2598 = vmatpush2.msra.mxu0 0.0
    %2599 = vmatprep.subr.mxu0 0.0
    %2600 = vmatpush2.msra.mxu0 0.0
    %2601 = vmatprep.subr.mxu0 0.0
    %2602 = vmatpush2.msra.mxu0 0.0
    %2603 = vmatprep.subr.mxu0 0.0
    %2604 = vmatpush2.msra.mxu0 0.0
    %2605 = vmatprep.subr.mxu0 0.0
    %2606 = vmatpush2.msra.mxu0 0.0
    %2607 = vmatprep.subr.mxu0 0.0
    %2608 = vmatpush2.msra.mxu0 0.0
    %2609 = vmatprep.mubr.f32.mxu0 0.0
    %v2610 = vand.u32 %v1613, 4294901760
    %2611 = vmatmul.mubr.f32.gmra.mxu0 %v2610
    %v2612 = vpop.f32.mrf.mxu0
    %v2613 = vadd.f32 %v2538, %v2612
    %v2614 = vpop.f32.mrf.mxu0
    %2615 = vdwg.mxu0
    %v2617 = vsel %vm117, %v96, 0
    %2619 = vmatprep.subr.mxu0 0.0
    %2620 = vmatpush1.msra.mxu0 0.0
    %2621 = vmatprep.subr.mxu0 0.0
    %2622 = vmatpush1.msra.mxu0 0.0
    %2623 = vmatprep.subr.mxu0 0.0
    %2624 = vmatpush1.msra.mxu0 0.0
    %2625 = vmatprep.subr.mxu0 0.0
    %2626 = vmatpush1.msra.mxu0 0.0
    %2627 = vmatprep.subr.mxu0 0.0
    %2628 = vmatpush1.msra.mxu0 0.0
    %2629 = vmatprep.subr.mxu0 0.0
    %2630 = vmatpush1.msra.mxu0 0.0
    %2631 = vmatprep.subr.mxu0 0.0
    %2632 = vmatpush1.msra.mxu0 0.0
    %2633 = vmatprep.subr.mxu0 0.0
    %2634 = vmatpush1.msra.mxu0 0.0
    %2635 = vmatprep.subr.mxu0 0.0
    %2636 = vmatpush1.msra.mxu0 0.0
    %2637 = vmatprep.subr.mxu0 0.0
    %2638 = vmatpush1.msra.mxu0 0.0
    %2639 = vmatprep.subr.mxu0 0.0
    %2640 = vmatpush1.msra.mxu0 0.0
    %2641 = vmatprep.subr.mxu0 0.0
    %2642 = vmatpush1.msra.mxu0 0.0
    %2643 = vmatprep.subr.mxu0 0.0
    %v2644 = vand.u32 %v102, 4294901760
    %2645 = vmatpush1.msra.mxu0 %v2644
    %2646 = vmatprep.subr.mxu0 0.0
    %v2647 = vand.u32 %v101, 4294901760
    %2648 = vmatpush1.msra.mxu0 %v2647
    %2649 = vmatprep.subr.mxu0 0.0
    %v2650 = vand.u32 %v100, 4294901760
    %2651 = vmatpush1.msra.mxu0 %v2650
    %2652 = vmatprep.subr.mxu0 0.0
    %v2653 = vand.u32 %v99, 4294901760
    %2654 = vmatpush1.msra.mxu0 %v2653
    %2655 = vmatprep.subr.mxu0 0.0
    %2656 = vmatpush2.msra.mxu0 0.0
    %2657 = vmatprep.subr.mxu0 0.0
    %2658 = vmatpush2.msra.mxu0 0.0
    %2659 = vmatprep.subr.mxu0 0.0
    %2660 = vmatpush2.msra.mxu0 0.0
    %2661 = vmatprep.subr.mxu0 0.0
    %2662 = vmatpush2.msra.mxu0 0.0
    %2663 = vmatprep.subr.mxu0 0.0
    %2664 = vmatpush2.msra.mxu0 0.0
    %2665 = vmatprep.subr.mxu0 0.0
    %2666 = vmatpush2.msra.mxu0 0.0
    %2667 = vmatprep.subr.mxu0 0.0
    %2668 = vmatpush2.msra.mxu0 0.0
    %2669 = vmatprep.subr.mxu0 0.0
    %2670 = vmatpush2.msra.mxu0 0.0
    %2671 = vmatprep.subr.mxu0 0.0
    %2672 = vmatpush2.msra.mxu0 0.0
    %2673 = vmatprep.subr.mxu0 0.0
    %2674 = vmatpush2.msra.mxu0 0.0
    %2675 = vmatprep.subr.mxu0 0.0
    %2676 = vmatpush2.msra.mxu0 0.0
    %2677 = vmatprep.subr.mxu0 0.0
    %2678 = vmatpush2.msra.mxu0 0.0
    %2679 = vmatprep.subr.mxu0 0.0
    %2680 = vmatpush2.msra.mxu0 0.0
    %2681 = vmatprep.subr.mxu0 0.0
    %2682 = vmatpush2.msra.mxu0 0.0
    %2683 = vmatprep.subr.mxu0 0.0
    %2684 = vmatpush2.msra.mxu0 0.0
    %2685 = vmatprep.subr.mxu0 0.0
    %2686 = vmatpush2.msra.mxu0 0.0
    %2687 = vmatprep.mubr.f32.mxu0 0.0
    %v2688 = vand.u32 %v2617, 4294901760
    %v2689 = vsub.f32 %v2617, %v2688
    %v2690 = vand.u32 %v2689, 4294901760
    %v2691 = vsub.f32 %v2689, %v2690
    %v2692 = vand.u32 %v2691, 4294901760
    %2693 = vmatmul.mubr.f32.gmra.mxu0 %v2692
    %v2694 = vpop.f32.mrf.mxu0
    %v2695 = vadd.f32 %v2613, %v2694
    %v2696 = vpop.f32.mrf.mxu0
    %2697 = vdwg.mxu0
    %2698 = vmatprep.subr.mxu0 0.0
    %2699 = vmatpush1.msra.mxu0 0.0
    %2700 = vmatprep.subr.mxu0 0.0
    %2701 = vmatpush1.msra.mxu0 0.0
    %2702 = vmatprep.subr.mxu0 0.0
    %2703 = vmatpush1.msra.mxu0 0.0
    %2704 = vmatprep.subr.mxu0 0.0
    %2705 = vmatpush1.msra.mxu0 0.0
    %2706 = vmatprep.subr.mxu0 0.0
    %2707 = vmatpush1.msra.mxu0 0.0
    %2708 = vmatprep.subr.mxu0 0.0
    %2709 = vmatpush1.msra.mxu0 0.0
    %2710 = vmatprep.subr.mxu0 0.0
    %2711 = vmatpush1.msra.mxu0 0.0
    %2712 = vmatprep.subr.mxu0 0.0
    %2713 = vmatpush1.msra.mxu0 0.0
    %2714 = vmatprep.subr.mxu0 0.0
    %2715 = vmatpush1.msra.mxu0 0.0
    %2716 = vmatprep.subr.mxu0 0.0
    %2717 = vmatpush1.msra.mxu0 0.0
    %2718 = vmatprep.subr.mxu0 0.0
    %2719 = vmatpush1.msra.mxu0 0.0
    %2720 = vmatprep.subr.mxu0 0.0
    %2721 = vmatpush1.msra.mxu0 0.0
    %2722 = vmatprep.subr.mxu0 0.0
    %v2723 = vand.u32 %v102, 4294901760
    %v2724 = vsub.f32 %v102, %v2723
    %v2725 = vand.u32 %v2724, 4294901760
    %v2726 = vsub.f32 %v2724, %v2725
    %v2727 = vand.u32 %v2726, 4294901760
    %2728 = vmatpush1.msra.mxu0 %v2727
    %2729 = vmatprep.subr.mxu0 0.0
    %v2730 = vand.u32 %v101, 4294901760
    %v2731 = vsub.f32 %v101, %v2730
    %v2732 = vand.u32 %v2731, 4294901760
    %v2733 = vsub.f32 %v2731, %v2732
    %v2734 = vand.u32 %v2733, 4294901760
    %2735 = vmatpush1.msra.mxu0 %v2734
    %2736 = vmatprep.subr.mxu0 0.0
    %v2737 = vand.u32 %v100, 4294901760
    %v2738 = vsub.f32 %v100, %v2737
    %v2739 = vand.u32 %v2738, 4294901760
    %v2740 = vsub.f32 %v2738, %v2739
    %v2741 = vand.u32 %v2740, 4294901760
    %2742 = vmatpush1.msra.mxu0 %v2741
    %2743 = vmatprep.subr.mxu0 0.0
    %v2744 = vand.u32 %v99, 4294901760
    %v2745 = vsub.f32 %v99, %v2744
    %v2746 = vand.u32 %v2745, 4294901760
    %v2747 = vsub.f32 %v2745, %v2746
    %v2748 = vand.u32 %v2747, 4294901760
    %2749 = vmatpush1.msra.mxu0 %v2748
    %2750 = vmatprep.subr.mxu0 0.0
    %2751 = vmatpush2.msra.mxu0 0.0
    %2752 = vmatprep.subr.mxu0 0.0
    %2753 = vmatpush2.msra.mxu0 0.0
    %2754 = vmatprep.subr.mxu0 0.0
    %2755 = vmatpush2.msra.mxu0 0.0
    %2756 = vmatprep.subr.mxu0 0.0
    %2757 = vmatpush2.msra.mxu0 0.0
    %2758 = vmatprep.subr.mxu0 0.0
    %2759 = vmatpush2.msra.mxu0 0.0
    %2760 = vmatprep.subr.mxu0 0.0
    %2761 = vmatpush2.msra.mxu0 0.0
    %2762 = vmatprep.subr.mxu0 0.0
    %2763 = vmatpush2.msra.mxu0 0.0
    %2764 = vmatprep.subr.mxu0 0.0
    %2765 = vmatpush2.msra.mxu0 0.0
    %2766 = vmatprep.subr.mxu0 0.0
    %2767 = vmatpush2.msra.mxu0 0.0
    %2768 = vmatprep.subr.mxu0 0.0
    %2769 = vmatpush2.msra.mxu0 0.0
    %2770 = vmatprep.subr.mxu0 0.0
    %2771 = vmatpush2.msra.mxu0 0.0
    %2772 = vmatprep.subr.mxu0 0.0
    %2773 = vmatpush2.msra.mxu0 0.0
    %2774 = vmatprep.subr.mxu0 0.0
    %2775 = vmatpush2.msra.mxu0 0.0
    %2776 = vmatprep.subr.mxu0 0.0
    %2777 = vmatpush2.msra.mxu0 0.0
    %2778 = vmatprep.subr.mxu0 0.0
    %2779 = vmatpush2.msra.mxu0 0.0
    %2780 = vmatprep.subr.mxu0 0.0
    %2781 = vmatpush2.msra.mxu0 0.0
    %2782 = vmatprep.mubr.f32.mxu0 0.0
    %v2783 = vand.u32 %v2617, 4294901760
    %2784 = vmatmul.mubr.f32.gmra.mxu0 %v2783
    %v2785 = vpop.f32.mrf.mxu0
    %v2786 = vadd.f32 %v2695, %v2785
    %v2787 = vpop.f32.mrf.mxu0
    %2788 = vdwg.mxu0
    %2789 = vmatprep.subr.mxu0 0.0
    %2790 = vmatpush1.msra.mxu0 0.0
    %2791 = vmatprep.subr.mxu0 0.0
    %2792 = vmatpush1.msra.mxu0 0.0
    %2793 = vmatprep.subr.mxu0 0.0
    %2794 = vmatpush1.msra.mxu0 0.0
    %2795 = vmatprep.subr.mxu0 0.0
    %2796 = vmatpush1.msra.mxu0 0.0
    %2797 = vmatprep.subr.mxu0 0.0
    %2798 = vmatpush1.msra.mxu0 0.0
    %2799 = vmatprep.subr.mxu0 0.0
    %2800 = vmatpush1.msra.mxu0 0.0
    %2801 = vmatprep.subr.mxu0 0.0
    %2802 = vmatpush1.msra.mxu0 0.0
    %2803 = vmatprep.subr.mxu0 0.0
    %2804 = vmatpush1.msra.mxu0 0.0
    %2805 = vmatprep.subr.mxu0 0.0
    %2806 = vmatpush1.msra.mxu0 0.0
    %2807 = vmatprep.subr.mxu0 0.0
    %2808 = vmatpush1.msra.mxu0 0.0
    %2809 = vmatprep.subr.mxu0 0.0
    %2810 = vmatpush1.msra.mxu0 0.0
    %2811 = vmatprep.subr.mxu0 0.0
    %2812 = vmatpush1.msra.mxu0 0.0
    %2813 = vmatprep.subr.mxu0 0.0
    %v2814 = vand.u32 %v102, 4294901760
    %v2815 = vsub.f32 %v102, %v2814
    %2816 = vmatpush1.msra.mxu0 %v2815
    %2817 = vmatprep.subr.mxu0 0.0
    %v2818 = vand.u32 %v101, 4294901760
    %v2819 = vsub.f32 %v101, %v2818
    %2820 = vmatpush1.msra.mxu0 %v2819
    %2821 = vmatprep.subr.mxu0 0.0
    %v2822 = vand.u32 %v100, 4294901760
    %v2823 = vsub.f32 %v100, %v2822
    %2824 = vmatpush1.msra.mxu0 %v2823
    %2825 = vmatprep.subr.mxu0 0.0
    %v2826 = vand.u32 %v99, 4294901760
    %v2827 = vsub.f32 %v99, %v2826
    %2828 = vmatpush1.msra.mxu0 %v2827
    %2829 = vmatprep.subr.mxu0 0.0
    %2830 = vmatpush2.msra.mxu0 0.0
    %2831 = vmatprep.subr.mxu0 0.0
    %2832 = vmatpush2.msra.mxu0 0.0
    %2833 = vmatprep.subr.mxu0 0.0
    %2834 = vmatpush2.msra.mxu0 0.0
    %2835 = vmatprep.subr.mxu0 0.0
    %2836 = vmatpush2.msra.mxu0 0.0
    %2837 = vmatprep.subr.mxu0 0.0
    %2838 = vmatpush2.msra.mxu0 0.0
    %2839 = vmatprep.subr.mxu0 0.0
    %2840 = vmatpush2.msra.mxu0 0.0
    %2841 = vmatprep.subr.mxu0 0.0
    %2842 = vmatpush2.msra.mxu0 0.0
    %2843 = vmatprep.subr.mxu0 0.0
    %2844 = vmatpush2.msra.mxu0 0.0
    %2845 = vmatprep.subr.mxu0 0.0
    %2846 = vmatpush2.msra.mxu0 0.0
    %2847 = vmatprep.subr.mxu0 0.0
    %2848 = vmatpush2.msra.mxu0 0.0
    %2849 = vmatprep.subr.mxu0 0.0
    %2850 = vmatpush2.msra.mxu0 0.0
    %2851 = vmatprep.subr.mxu0 0.0
    %2852 = vmatpush2.msra.mxu0 0.0
    %2853 = vmatprep.subr.mxu0 0.0
    %2854 = vmatpush2.msra.mxu0 0.0
    %2855 = vmatprep.subr.mxu0 0.0
    %2856 = vmatpush2.msra.mxu0 0.0
    %2857 = vmatprep.subr.mxu0 0.0
    %2858 = vmatpush2.msra.mxu0 0.0
    %2859 = vmatprep.subr.mxu0 0.0
    %2860 = vmatpush2.msra.mxu0 0.0
    %2861 = vmatprep.mubr.f32.mxu0 0.0
    %v2862 = vand.u32 %v2617, 4294901760
    %v2863 = vsub.f32 %v2617, %v2862
    %2864 = vmatmul.mubr.f32.gmra.mxu0 %v2863
    %v2865 = vpop.f32.mrf.mxu0
    %v2866 = vadd.f32 %v2786, %v2865
    %v2867 = vpop.f32.mrf.mxu0
    %2868 = vdwg.mxu0
    %2869 = vmatprep.subr.mxu0 0.0
    %2870 = vmatpush1.msra.mxu0 0.0
    %2871 = vmatprep.subr.mxu0 0.0
    %2872 = vmatpush1.msra.mxu0 0.0
    %2873 = vmatprep.subr.mxu0 0.0
    %2874 = vmatpush1.msra.mxu0 0.0
    %2875 = vmatprep.subr.mxu0 0.0
    %2876 = vmatpush1.msra.mxu0 0.0
    %2877 = vmatprep.subr.mxu0 0.0
    %2878 = vmatpush1.msra.mxu0 0.0
    %2879 = vmatprep.subr.mxu0 0.0
    %2880 = vmatpush1.msra.mxu0 0.0
    %2881 = vmatprep.subr.mxu0 0.0
    %2882 = vmatpush1.msra.mxu0 0.0
    %2883 = vmatprep.subr.mxu0 0.0
    %2884 = vmatpush1.msra.mxu0 0.0
    %2885 = vmatprep.subr.mxu0 0.0
    %2886 = vmatpush1.msra.mxu0 0.0
    %2887 = vmatprep.subr.mxu0 0.0
    %2888 = vmatpush1.msra.mxu0 0.0
    %2889 = vmatprep.subr.mxu0 0.0
    %2890 = vmatpush1.msra.mxu0 0.0
    %2891 = vmatprep.subr.mxu0 0.0
    %2892 = vmatpush1.msra.mxu0 0.0
    %2893 = vmatprep.subr.mxu0 0.0
    %v2894 = vand.u32 %v102, 4294901760
    %2895 = vmatpush1.msra.mxu0 %v2894
    %2896 = vmatprep.subr.mxu0 0.0
    %v2897 = vand.u32 %v101, 4294901760
    %2898 = vmatpush1.msra.mxu0 %v2897
    %2899 = vmatprep.subr.mxu0 0.0
    %v2900 = vand.u32 %v100, 4294901760
    %2901 = vmatpush1.msra.mxu0 %v2900
    %2902 = vmatprep.subr.mxu0 0.0
    %v2903 = vand.u32 %v99, 4294901760
    %2904 = vmatpush1.msra.mxu0 %v2903
    %2905 = vmatprep.subr.mxu0 0.0
    %2906 = vmatpush2.msra.mxu0 0.0
    %2907 = vmatprep.subr.mxu0 0.0
    %2908 = vmatpush2.msra.mxu0 0.0
    %2909 = vmatprep.subr.mxu0 0.0
    %2910 = vmatpush2.msra.mxu0 0.0
    %2911 = vmatprep.subr.mxu0 0.0
    %2912 = vmatpush2.msra.mxu0 0.0
    %2913 = vmatprep.subr.mxu0 0.0
    %2914 = vmatpush2.msra.mxu0 0.0
    %2915 = vmatprep.subr.mxu0 0.0
    %2916 = vmatpush2.msra.mxu0 0.0
    %2917 = vmatprep.subr.mxu0 0.0
    %2918 = vmatpush2.msra.mxu0 0.0
    %2919 = vmatprep.subr.mxu0 0.0
    %2920 = vmatpush2.msra.mxu0 0.0
    %2921 = vmatprep.subr.mxu0 0.0
    %2922 = vmatpush2.msra.mxu0 0.0
    %2923 = vmatprep.subr.mxu0 0.0
    %2924 = vmatpush2.msra.mxu0 0.0
    %2925 = vmatprep.subr.mxu0 0.0
    %2926 = vmatpush2.msra.mxu0 0.0
    %2927 = vmatprep.subr.mxu0 0.0
    %2928 = vmatpush2.msra.mxu0 0.0
    %2929 = vmatprep.subr.mxu0 0.0
    %2930 = vmatpush2.msra.mxu0 0.0
    %2931 = vmatprep.subr.mxu0 0.0
    %2932 = vmatpush2.msra.mxu0 0.0
    %2933 = vmatprep.subr.mxu0 0.0
    %2934 = vmatpush2.msra.mxu0 0.0
    %2935 = vmatprep.subr.mxu0 0.0
    %2936 = vmatpush2.msra.mxu0 0.0
    %2937 = vmatprep.mubr.f32.mxu0 0.0
    %v2938 = vand.u32 %v2617, 4294901760
    %v2939 = vsub.f32 %v2617, %v2938
    %v2940 = vand.u32 %v2939, 4294901760
    %2941 = vmatmul.mubr.f32.gmra.mxu0 %v2940
    %v2942 = vpop.f32.mrf.mxu0
    %v2943 = vadd.f32 %v2866, %v2942
    %v2944 = vpop.f32.mrf.mxu0
    %2945 = vdwg.mxu0
    %2946 = vmatprep.subr.mxu0 0.0
    %2947 = vmatpush1.msra.mxu0 0.0
    %2948 = vmatprep.subr.mxu0 0.0
    %2949 = vmatpush1.msra.mxu0 0.0
    %2950 = vmatprep.subr.mxu0 0.0
    %2951 = vmatpush1.msra.mxu0 0.0
    %2952 = vmatprep.subr.mxu0 0.0
    %2953 = vmatpush1.msra.mxu0 0.0
    %2954 = vmatprep.subr.mxu0 0.0
    %2955 = vmatpush1.msra.mxu0 0.0
    %2956 = vmatprep.subr.mxu0 0.0
    %2957 = vmatpush1.msra.mxu0 0.0
    %2958 = vmatprep.subr.mxu0 0.0
    %2959 = vmatpush1.msra.mxu0 0.0
    %2960 = vmatprep.subr.mxu0 0.0
    %2961 = vmatpush1.msra.mxu0 0.0
    %2962 = vmatprep.subr.mxu0 0.0
    %2963 = vmatpush1.msra.mxu0 0.0
    %2964 = vmatprep.subr.mxu0 0.0
    %2965 = vmatpush1.msra.mxu0 0.0
    %2966 = vmatprep.subr.mxu0 0.0
    %2967 = vmatpush1.msra.mxu0 0.0
    %2968 = vmatprep.subr.mxu0 0.0
    %2969 = vmatpush1.msra.mxu0 0.0
    %2970 = vmatprep.subr.mxu0 0.0
    %v2971 = vand.u32 %v102, 4294901760
    %v2972 = vsub.f32 %v102, %v2971
    %v2973 = vand.u32 %v2972, 4294901760
    %2974 = vmatpush1.msra.mxu0 %v2973
    %2975 = vmatprep.subr.mxu0 0.0
    %v2976 = vand.u32 %v101, 4294901760
    %v2977 = vsub.f32 %v101, %v2976
    %v2978 = vand.u32 %v2977, 4294901760
    %2979 = vmatpush1.msra.mxu0 %v2978
    %2980 = vmatprep.subr.mxu0 0.0
    %v2981 = vand.u32 %v100, 4294901760
    %v2982 = vsub.f32 %v100, %v2981
    %v2983 = vand.u32 %v2982, 4294901760
    %2984 = vmatpush1.msra.mxu0 %v2983
    %2985 = vmatprep.subr.mxu0 0.0
    %v2986 = vand.u32 %v99, 4294901760
    %v2987 = vsub.f32 %v99, %v2986
    %v2988 = vand.u32 %v2987, 4294901760
    %2989 = vmatpush1.msra.mxu0 %v2988
    %2990 = vmatprep.subr.mxu0 0.0
    %2991 = vmatpush2.msra.mxu0 0.0
    %2992 = vmatprep.subr.mxu0 0.0
    %2993 = vmatpush2.msra.mxu0 0.0
    %2994 = vmatprep.subr.mxu0 0.0
    %2995 = vmatpush2.msra.mxu0 0.0
    %2996 = vmatprep.subr.mxu0 0.0
    %2997 = vmatpush2.msra.mxu0 0.0
    %2998 = vmatprep.subr.mxu0 0.0
    %2999 = vmatpush2.msra.mxu0 0.0
    %3000 = vmatprep.subr.mxu0 0.0
    %3001 = vmatpush2.msra.mxu0 0.0
    %3002 = vmatprep.subr.mxu0 0.0
    %3003 = vmatpush2.msra.mxu0 0.0
    %3004 = vmatprep.subr.mxu0 0.0
    %3005 = vmatpush2.msra.mxu0 0.0
    %3006 = vmatprep.subr.mxu0 0.0
    %3007 = vmatpush2.msra.mxu0 0.0
    %3008 = vmatprep.subr.mxu0 0.0
    %3009 = vmatpush2.msra.mxu0 0.0
    %3010 = vmatprep.subr.mxu0 0.0
    %3011 = vmatpush2.msra.mxu0 0.0
    %3012 = vmatprep.subr.mxu0 0.0
    %3013 = vmatpush2.msra.mxu0 0.0
    %3014 = vmatprep.subr.mxu0 0.0
    %3015 = vmatpush2.msra.mxu0 0.0
    %3016 = vmatprep.subr.mxu0 0.0
    %3017 = vmatpush2.msra.mxu0 0.0
    %3018 = vmatprep.subr.mxu0 0.0
    %3019 = vmatpush2.msra.mxu0 0.0
    %3020 = vmatprep.subr.mxu0 0.0
    %3021 = vmatpush2.msra.mxu0 0.0
    %3022 = vmatprep.mubr.f32.mxu0 0.0
    %v3023 = vand.u32 %v2617, 4294901760
    %3024 = vmatmul.mubr.f32.gmra.mxu0 %v3023
    %v3025 = vpop.f32.mrf.mxu0
    %v3026 = vadd.f32 %v2943, %v3025
    %v3027 = vpop.f32.mrf.mxu0
    %3028 = vdwg.mxu0
    %3029 = vmatprep.subr.mxu0 0.0
    %3030 = vmatpush1.msra.mxu0 0.0
    %3031 = vmatprep.subr.mxu0 0.0
    %3032 = vmatpush1.msra.mxu0 0.0
    %3033 = vmatprep.subr.mxu0 0.0
    %3034 = vmatpush1.msra.mxu0 0.0
    %3035 = vmatprep.subr.mxu0 0.0
    %3036 = vmatpush1.msra.mxu0 0.0
    %3037 = vmatprep.subr.mxu0 0.0
    %3038 = vmatpush1.msra.mxu0 0.0
    %3039 = vmatprep.subr.mxu0 0.0
    %3040 = vmatpush1.msra.mxu0 0.0
    %3041 = vmatprep.subr.mxu0 0.0
    %3042 = vmatpush1.msra.mxu0 0.0
    %3043 = vmatprep.subr.mxu0 0.0
    %3044 = vmatpush1.msra.mxu0 0.0
    %3045 = vmatprep.subr.mxu0 0.0
    %3046 = vmatpush1.msra.mxu0 0.0
    %3047 = vmatprep.subr.mxu0 0.0
    %3048 = vmatpush1.msra.mxu0 0.0
    %3049 = vmatprep.subr.mxu0 0.0
    %3050 = vmatpush1.msra.mxu0 0.0
    %3051 = vmatprep.subr.mxu0 0.0
    %3052 = vmatpush1.msra.mxu0 0.0
    %3053 = vmatprep.subr.mxu0 0.0
    %v3054 = vand.u32 %v102, 4294901760
    %3055 = vmatpush1.msra.mxu0 %v3054
    %3056 = vmatprep.subr.mxu0 0.0
    %v3057 = vand.u32 %v101, 4294901760
    %3058 = vmatpush1.msra.mxu0 %v3057
    %3059 = vmatprep.subr.mxu0 0.0
    %v3060 = vand.u32 %v100, 4294901760
    %3061 = vmatpush1.msra.mxu0 %v3060
    %3062 = vmatprep.subr.mxu0 0.0
    %v3063 = vand.u32 %v99, 4294901760
    %3064 = vmatpush1.msra.mxu0 %v3063
    %3065 = vmatprep.subr.mxu0 0.0
    %3066 = vmatpush2.msra.mxu0 0.0
    %3067 = vmatprep.subr.mxu0 0.0
    %3068 = vmatpush2.msra.mxu0 0.0
    %3069 = vmatprep.subr.mxu0 0.0
    %3070 = vmatpush2.msra.mxu0 0.0
    %3071 = vmatprep.subr.mxu0 0.0
    %3072 = vmatpush2.msra.mxu0 0.0
    %3073 = vmatprep.subr.mxu0 0.0
    %3074 = vmatpush2.msra.mxu0 0.0
    %3075 = vmatprep.subr.mxu0 0.0
    %3076 = vmatpush2.msra.mxu0 0.0
    %3077 = vmatprep.subr.mxu0 0.0
    %3078 = vmatpush2.msra.mxu0 0.0
    %3079 = vmatprep.subr.mxu0 0.0
    %3080 = vmatpush2.msra.mxu0 0.0
    %3081 = vmatprep.subr.mxu0 0.0
    %3082 = vmatpush2.msra.mxu0 0.0
    %3083 = vmatprep.subr.mxu0 0.0
    %3084 = vmatpush2.msra.mxu0 0.0
    %3085 = vmatprep.subr.mxu0 0.0
    %3086 = vmatpush2.msra.mxu0 0.0
    %3087 = vmatprep.subr.mxu0 0.0
    %3088 = vmatpush2.msra.mxu0 0.0
    %3089 = vmatprep.subr.mxu0 0.0
    %3090 = vmatpush2.msra.mxu0 0.0
    %3091 = vmatprep.subr.mxu0 0.0
    %3092 = vmatpush2.msra.mxu0 0.0
    %3093 = vmatprep.subr.mxu0 0.0
    %3094 = vmatpush2.msra.mxu0 0.0
    %3095 = vmatprep.subr.mxu0 0.0
    %3096 = vmatpush2.msra.mxu0 0.0
    %3097 = vmatprep.mubr.f32.mxu0 0.0
    %v3098 = vand.u32 %v2617, 4294901760
    %3099 = vmatmul.mubr.f32.gmra.mxu0 %v3098
    %v3100 = vpop.f32.mrf.mxu0
    %v3101 = vadd.f32 %v3026, %v3100
    %v3102 = vpop.f32.mrf.mxu0
    %3103 = vdwg.mxu0
    %v3104 = vadd.f32 %v3101, %v1098
    %v3105 = vxor.u32 %v3104, 2147483648
    %v3106 = vmul.f32 %v3105, 1.442695
    %v3107 = vpow.pop %v3106
    %v3108 = vadd.f32 %v3107, 1.0
    %v3109 = vrcp.pop %v3108
    %v3110 = vmul.f32 1.0, %v3109
    %v3111 = vtanh.pop %v3104
    %v3112 = vmul.f32 %v3110, %v1118
    %3114 = vrot.lane.b32.xlu0 %v3111, 64
    %v3115 = vpop.permute.xlu0 %3114
    %v3117 = vmul.f32 %v3110, %v3115
    %3119 = vrot.lane.b32.xlu0 %v3117, 32
    %v3120 = vpop.permute.xlu0 %3119
    %v3122 = vadd.f32 %v3112, %v3120
    %v3123 = vtanh.pop %v3122
    %3125 = vrot.lane.b32.xlu0 %v3123, 64
    %v3126 = vpop.permute.xlu0 %3125
    %v3128 = vmul.f32 %v3110, %v3126
    %3130 = vrot.lane.b32.xlu0 %v2130, 32
    %v3131 = vpop.permute.xlu0 %3130
    %v3132 = vsel %vm117, %v3131, 0
    %3134 = vmatprep.subr.mxu0 0.0
    %3135 = vmatpush1.msra.mxu0 0.0
    %3136 = vmatprep.subr.mxu0 0.0
    %3137 = vmatpush1.msra.mxu0 0.0
    %3138 = vmatprep.subr.mxu0 0.0
    %3139 = vmatpush1.msra.mxu0 0.0
    %3140 = vmatprep.subr.mxu0 0.0
    %3141 = vmatpush1.msra.mxu0 0.0
    %3142 = vmatprep.subr.mxu0 0.0
    %3143 = vmatpush1.msra.mxu0 0.0
    %3144 = vmatprep.subr.mxu0 0.0
    %3145 = vmatpush1.msra.mxu0 0.0
    %3146 = vmatprep.subr.mxu0 0.0
    %3147 = vmatpush1.msra.mxu0 0.0
    %3148 = vmatprep.subr.mxu0 0.0
    %3149 = vmatpush1.msra.mxu0 0.0
    %3150 = vmatprep.subr.mxu0 0.0
    %3151 = vmatpush1.msra.mxu0 0.0
    %3152 = vmatprep.subr.mxu0 0.0
    %3153 = vmatpush1.msra.mxu0 0.0
    %3154 = vmatprep.subr.mxu0 0.0
    %3155 = vmatpush1.msra.mxu0 0.0
    %3156 = vmatprep.subr.mxu0 0.0
    %3157 = vmatpush1.msra.mxu0 0.0
    %3158 = vmatprep.subr.mxu0 0.0
    %v3159 = vand.u32 %v115, 4294901760
    %3160 = vmatpush1.msra.mxu0 %v3159
    %3161 = vmatprep.subr.mxu0 0.0
    %v3162 = vand.u32 %v114, 4294901760
    %3163 = vmatpush1.msra.mxu0 %v3162
    %3164 = vmatprep.subr.mxu0 0.0
    %v3165 = vand.u32 %v113, 4294901760
    %3166 = vmatpush1.msra.mxu0 %v3165
    %3167 = vmatprep.subr.mxu0 0.0
    %v3168 = vand.u32 %v112, 4294901760
    %3169 = vmatpush1.msra.mxu0 %v3168
    %3170 = vmatprep.subr.mxu0 0.0
    %3171 = vmatpush2.msra.mxu0 0.0
    %3172 = vmatprep.subr.mxu0 0.0
    %3173 = vmatpush2.msra.mxu0 0.0
    %3174 = vmatprep.subr.mxu0 0.0
    %3175 = vmatpush2.msra.mxu0 0.0
    %3176 = vmatprep.subr.mxu0 0.0
    %3177 = vmatpush2.msra.mxu0 0.0
    %3178 = vmatprep.subr.mxu0 0.0
    %3179 = vmatpush2.msra.mxu0 0.0
    %3180 = vmatprep.subr.mxu0 0.0
    %3181 = vmatpush2.msra.mxu0 0.0
    %3182 = vmatprep.subr.mxu0 0.0
    %3183 = vmatpush2.msra.mxu0 0.0
    %3184 = vmatprep.subr.mxu0 0.0
    %3185 = vmatpush2.msra.mxu0 0.0
    %3186 = vmatprep.subr.mxu0 0.0
    %3187 = vmatpush2.msra.mxu0 0.0
    %3188 = vmatprep.subr.mxu0 0.0
    %3189 = vmatpush2.msra.mxu0 0.0
    %3190 = vmatprep.subr.mxu0 0.0
    %3191 = vmatpush2.msra.mxu0 0.0
    %3192 = vmatprep.subr.mxu0 0.0
    %3193 = vmatpush2.msra.mxu0 0.0
    %3194 = vmatprep.subr.mxu0 0.0
    %3195 = vmatpush2.msra.mxu0 0.0
    %3196 = vmatprep.subr.mxu0 0.0
    %3197 = vmatpush2.msra.mxu0 0.0
    %3198 = vmatprep.subr.mxu0 0.0
    %3199 = vmatpush2.msra.mxu0 0.0
    %3200 = vmatprep.subr.mxu0 0.0
    %3201 = vmatpush2.msra.mxu0 0.0
    %3202 = vmatprep.mubr.f32.mxu0 0.0
    %v3203 = vand.u32 %v3132, 4294901760
    %v3204 = vsub.f32 %v3132, %v3203
    %v3205 = vand.u32 %v3204, 4294901760
    %v3206 = vsub.f32 %v3204, %v3205
    %v3207 = vand.u32 %v3206, 4294901760
    %3208 = vmatmul.mubr.f32.gmra.mxu0 %v3207
    %v3209 = vpop.f32.mrf.mxu0
    %v3210 = vadd.f32 0.0, %v3209
    %v3211 = vpop.f32.mrf.mxu0
    %3212 = vdwg.mxu0
    %3213 = vmatprep.subr.mxu0 0.0
    %3214 = vmatpush1.msra.mxu0 0.0
    %3215 = vmatprep.subr.mxu0 0.0
    %3216 = vmatpush1.msra.mxu0 0.0
    %3217 = vmatprep.subr.mxu0 0.0
    %3218 = vmatpush1.msra.mxu0 0.0
    %3219 = vmatprep.subr.mxu0 0.0
    %3220 = vmatpush1.msra.mxu0 0.0
    %3221 = vmatprep.subr.mxu0 0.0
    %3222 = vmatpush1.msra.mxu0 0.0
    %3223 = vmatprep.subr.mxu0 0.0
    %3224 = vmatpush1.msra.mxu0 0.0
    %3225 = vmatprep.subr.mxu0 0.0
    %3226 = vmatpush1.msra.mxu0 0.0
    %3227 = vmatprep.subr.mxu0 0.0
    %3228 = vmatpush1.msra.mxu0 0.0
    %3229 = vmatprep.subr.mxu0 0.0
    %3230 = vmatpush1.msra.mxu0 0.0
    %3231 = vmatprep.subr.mxu0 0.0
    %3232 = vmatpush1.msra.mxu0 0.0
    %3233 = vmatprep.subr.mxu0 0.0
    %3234 = vmatpush1.msra.mxu0 0.0
    %3235 = vmatprep.subr.mxu0 0.0
    %3236 = vmatpush1.msra.mxu0 0.0
    %3237 = vmatprep.subr.mxu0 0.0
    %v3238 = vand.u32 %v115, 4294901760
    %v3239 = vsub.f32 %v115, %v3238
    %v3240 = vand.u32 %v3239, 4294901760
    %v3241 = vsub.f32 %v3239, %v3240
    %v3242 = vand.u32 %v3241, 4294901760
    %3243 = vmatpush1.msra.mxu0 %v3242
    %3244 = vmatprep.subr.mxu0 0.0
    %v3245 = vand.u32 %v114, 4294901760
    %v3246 = vsub.f32 %v114, %v3245
    %v3247 = vand.u32 %v3246, 4294901760
    %v3248 = vsub.f32 %v3246, %v3247
    %v3249 = vand.u32 %v3248, 4294901760
    %3250 = vmatpush1.msra.mxu0 %v3249
    %3251 = vmatprep.subr.mxu0 0.0
    %v3252 = vand.u32 %v113, 4294901760
    %v3253 = vsub.f32 %v113, %v3252
    %v3254 = vand.u32 %v3253, 4294901760
    %v3255 = vsub.f32 %v3253, %v3254
    %v3256 = vand.u32 %v3255, 4294901760
    %3257 = vmatpush1.msra.mxu0 %v3256
    %3258 = vmatprep.subr.mxu0 0.0
    %v3259 = vand.u32 %v112, 4294901760
    %v3260 = vsub.f32 %v112, %v3259
    %v3261 = vand.u32 %v3260, 4294901760
    %v3262 = vsub.f32 %v3260, %v3261
    %v3263 = vand.u32 %v3262, 4294901760
    %3264 = vmatpush1.msra.mxu0 %v3263
    %3265 = vmatprep.subr.mxu0 0.0
    %3266 = vmatpush2.msra.mxu0 0.0
    %3267 = vmatprep.subr.mxu0 0.0
    %3268 = vmatpush2.msra.mxu0 0.0
    %3269 = vmatprep.subr.mxu0 0.0
    %3270 = vmatpush2.msra.mxu0 0.0
    %3271 = vmatprep.subr.mxu0 0.0
    %3272 = vmatpush2.msra.mxu0 0.0
    %3273 = vmatprep.subr.mxu0 0.0
    %3274 = vmatpush2.msra.mxu0 0.0
    %3275 = vmatprep.subr.mxu0 0.0
    %3276 = vmatpush2.msra.mxu0 0.0
    %3277 = vmatprep.subr.mxu0 0.0
    %3278 = vmatpush2.msra.mxu0 0.0
    %3279 = vmatprep.subr.mxu0 0.0
    %3280 = vmatpush2.msra.mxu0 0.0
    %3281 = vmatprep.subr.mxu0 0.0
    %3282 = vmatpush2.msra.mxu0 0.0
    %3283 = vmatprep.subr.mxu0 0.0
    %3284 = vmatpush2.msra.mxu0 0.0
    %3285 = vmatprep.subr.mxu0 0.0
    %3286 = vmatpush2.msra.mxu0 0.0
    %3287 = vmatprep.subr.mxu0 0.0
    %3288 = vmatpush2.msra.mxu0 0.0
    %3289 = vmatprep.subr.mxu0 0.0
    %3290 = vmatpush2.msra.mxu0 0.0
    %3291 = vmatprep.subr.mxu0 0.0
    %3292 = vmatpush2.msra.mxu0 0.0
    %3293 = vmatprep.subr.mxu0 0.0
    %3294 = vmatpush2.msra.mxu0 0.0
    %3295 = vmatprep.subr.mxu0 0.0
    %3296 = vmatpush2.msra.mxu0 0.0
    %3297 = vmatprep.mubr.f32.mxu0 0.0
    %v3298 = vand.u32 %v3132, 4294901760
    %3299 = vmatmul.mubr.f32.gmra.mxu0 %v3298
    %v3300 = vpop.f32.mrf.mxu0
    %v3301 = vadd.f32 %v3210, %v3300
    %v3302 = vpop.f32.mrf.mxu0
    %3303 = vdwg.mxu0
    %3304 = vmatprep.subr.mxu0 0.0
    %3305 = vmatpush1.msra.mxu0 0.0
    %3306 = vmatprep.subr.mxu0 0.0
    %3307 = vmatpush1.msra.mxu0 0.0
    %3308 = vmatprep.subr.mxu0 0.0
    %3309 = vmatpush1.msra.mxu0 0.0
    %3310 = vmatprep.subr.mxu0 0.0
    %3311 = vmatpush1.msra.mxu0 0.0
    %3312 = vmatprep.subr.mxu0 0.0
    %3313 = vmatpush1.msra.mxu0 0.0
    %3314 = vmatprep.subr.mxu0 0.0
    %3315 = vmatpush1.msra.mxu0 0.0
    %3316 = vmatprep.subr.mxu0 0.0
    %3317 = vmatpush1.msra.mxu0 0.0
    %3318 = vmatprep.subr.mxu0 0.0
    %3319 = vmatpush1.msra.mxu0 0.0
    %3320 = vmatprep.subr.mxu0 0.0
    %3321 = vmatpush1.msra.mxu0 0.0
    %3322 = vmatprep.subr.mxu0 0.0
    %3323 = vmatpush1.msra.mxu0 0.0
    %3324 = vmatprep.subr.mxu0 0.0
    %3325 = vmatpush1.msra.mxu0 0.0
    %3326 = vmatprep.subr.mxu0 0.0
    %3327 = vmatpush1.msra.mxu0 0.0
    %3328 = vmatprep.subr.mxu0 0.0
    %v3329 = vand.u32 %v115, 4294901760
    %v3330 = vsub.f32 %v115, %v3329
    %3331 = vmatpush1.msra.mxu0 %v3330
    %3332 = vmatprep.subr.mxu0 0.0
    %v3333 = vand.u32 %v114, 4294901760
    %v3334 = vsub.f32 %v114, %v3333
    %3335 = vmatpush1.msra.mxu0 %v3334
    %3336 = vmatprep.subr.mxu0 0.0
    %v3337 = vand.u32 %v113, 4294901760
    %v3338 = vsub.f32 %v113, %v3337
    %3339 = vmatpush1.msra.mxu0 %v3338
    %3340 = vmatprep.subr.mxu0 0.0
    %v3341 = vand.u32 %v112, 4294901760
    %v3342 = vsub.f32 %v112, %v3341
    %3343 = vmatpush1.msra.mxu0 %v3342
    %3344 = vmatprep.subr.mxu0 0.0
    %3345 = vmatpush2.msra.mxu0 0.0
    %3346 = vmatprep.subr.mxu0 0.0
    %3347 = vmatpush2.msra.mxu0 0.0
    %3348 = vmatprep.subr.mxu0 0.0
    %3349 = vmatpush2.msra.mxu0 0.0
    %3350 = vmatprep.subr.mxu0 0.0
    %3351 = vmatpush2.msra.mxu0 0.0
    %3352 = vmatprep.subr.mxu0 0.0
    %3353 = vmatpush2.msra.mxu0 0.0
    %3354 = vmatprep.subr.mxu0 0.0
    %3355 = vmatpush2.msra.mxu0 0.0
    %3356 = vmatprep.subr.mxu0 0.0
    %3357 = vmatpush2.msra.mxu0 0.0
    %3358 = vmatprep.subr.mxu0 0.0
    %3359 = vmatpush2.msra.mxu0 0.0
    %3360 = vmatprep.subr.mxu0 0.0
    %3361 = vmatpush2.msra.mxu0 0.0
    %3362 = vmatprep.subr.mxu0 0.0
    %3363 = vmatpush2.msra.mxu0 0.0
    %3364 = vmatprep.subr.mxu0 0.0
    %3365 = vmatpush2.msra.mxu0 0.0
    %3366 = vmatprep.subr.mxu0 0.0
    %3367 = vmatpush2.msra.mxu0 0.0
    %3368 = vmatprep.subr.mxu0 0.0
    %3369 = vmatpush2.msra.mxu0 0.0
    %3370 = vmatprep.subr.mxu0 0.0
    %3371 = vmatpush2.msra.mxu0 0.0
    %3372 = vmatprep.subr.mxu0 0.0
    %3373 = vmatpush2.msra.mxu0 0.0
    %3374 = vmatprep.subr.mxu0 0.0
    %3375 = vmatpush2.msra.mxu0 0.0
    %3376 = vmatprep.mubr.f32.mxu0 0.0
    %v3377 = vand.u32 %v3132, 4294901760
    %v3378 = vsub.f32 %v3132, %v3377
    %3379 = vmatmul.mubr.f32.gmra.mxu0 %v3378
    %v3380 = vpop.f32.mrf.mxu0
    %v3381 = vadd.f32 %v3301, %v3380
    %v3382 = vpop.f32.mrf.mxu0
    %3383 = vdwg.mxu0
    %3384 = vmatprep.subr.mxu0 0.0
    %3385 = vmatpush1.msra.mxu0 0.0
    %3386 = vmatprep.subr.mxu0 0.0
    %3387 = vmatpush1.msra.mxu0 0.0
    %3388 = vmatprep.subr.mxu0 0.0
    %3389 = vmatpush1.msra.mxu0 0.0
    %3390 = vmatprep.subr.mxu0 0.0
    %3391 = vmatpush1.msra.mxu0 0.0
    %3392 = vmatprep.subr.mxu0 0.0
    %3393 = vmatpush1.msra.mxu0 0.0
    %3394 = vmatprep.subr.mxu0 0.0
    %3395 = vmatpush1.msra.mxu0 0.0
    %3396 = vmatprep.subr.mxu0 0.0
    %3397 = vmatpush1.msra.mxu0 0.0
    %3398 = vmatprep.subr.mxu0 0.0
    %3399 = vmatpush1.msra.mxu0 0.0
    %3400 = vmatprep.subr.mxu0 0.0
    %3401 = vmatpush1.msra.mxu0 0.0
    %3402 = vmatprep.subr.mxu0 0.0
    %3403 = vmatpush1.msra.mxu0 0.0
    %3404 = vmatprep.subr.mxu0 0.0
    %3405 = vmatpush1.msra.mxu0 0.0
    %3406 = vmatprep.subr.mxu0 0.0
    %3407 = vmatpush1.msra.mxu0 0.0
    %3408 = vmatprep.subr.mxu0 0.0
    %v3409 = vand.u32 %v115, 4294901760
    %3410 = vmatpush1.msra.mxu0 %v3409
    %3411 = vmatprep.subr.mxu0 0.0
    %v3412 = vand.u32 %v114, 4294901760
    %3413 = vmatpush1.msra.mxu0 %v3412
    %3414 = vmatprep.subr.mxu0 0.0
    %v3415 = vand.u32 %v113, 4294901760
    %3416 = vmatpush1.msra.mxu0 %v3415
    %3417 = vmatprep.subr.mxu0 0.0
    %v3418 = vand.u32 %v112, 4294901760
    %3419 = vmatpush1.msra.mxu0 %v3418
    %3420 = vmatprep.subr.mxu0 0.0
    %3421 = vmatpush2.msra.mxu0 0.0
    %3422 = vmatprep.subr.mxu0 0.0
    %3423 = vmatpush2.msra.mxu0 0.0
    %3424 = vmatprep.subr.mxu0 0.0
    %3425 = vmatpush2.msra.mxu0 0.0
    %3426 = vmatprep.subr.mxu0 0.0
    %3427 = vmatpush2.msra.mxu0 0.0
    %3428 = vmatprep.subr.mxu0 0.0
    %3429 = vmatpush2.msra.mxu0 0.0
    %3430 = vmatprep.subr.mxu0 0.0
    %3431 = vmatpush2.msra.mxu0 0.0
    %3432 = vmatprep.subr.mxu0 0.0
    %3433 = vmatpush2.msra.mxu0 0.0
    %3434 = vmatprep.subr.mxu0 0.0
    %3435 = vmatpush2.msra.mxu0 0.0
    %3436 = vmatprep.subr.mxu0 0.0
    %3437 = vmatpush2.msra.mxu0 0.0
    %3438 = vmatprep.subr.mxu0 0.0
    %3439 = vmatpush2.msra.mxu0 0.0
    %3440 = vmatprep.subr.mxu0 0.0
    %3441 = vmatpush2.msra.mxu0 0.0
    %3442 = vmatprep.subr.mxu0 0.0
    %3443 = vmatpush2.msra.mxu0 0.0
    %3444 = vmatprep.subr.mxu0 0.0
    %3445 = vmatpush2.msra.mxu0 0.0
    %3446 = vmatprep.subr.mxu0 0.0
    %3447 = vmatpush2.msra.mxu0 0.0
    %3448 = vmatprep.subr.mxu0 0.0
    %3449 = vmatpush2.msra.mxu0 0.0
    %3450 = vmatprep.subr.mxu0 0.0
    %3451 = vmatpush2.msra.mxu0 0.0
    %3452 = vmatprep.mubr.f32.mxu0 0.0
    %v3453 = vand.u32 %v3132, 4294901760
    %v3454 = vsub.f32 %v3132, %v3453
    %v3455 = vand.u32 %v3454, 4294901760
    %3456 = vmatmul.mubr.f32.gmra.mxu0 %v3455
    %v3457 = vpop.f32.mrf.mxu0
    %v3458 = vadd.f32 %v3381, %v3457
    %v3459 = vpop.f32.mrf.mxu0
    %3460 = vdwg.mxu0
    %3461 = vmatprep.subr.mxu0 0.0
    %3462 = vmatpush1.msra.mxu0 0.0
    %3463 = vmatprep.subr.mxu0 0.0
    %3464 = vmatpush1.msra.mxu0 0.0
    %3465 = vmatprep.subr.mxu0 0.0
    %3466 = vmatpush1.msra.mxu0 0.0
    %3467 = vmatprep.subr.mxu0 0.0
    %3468 = vmatpush1.msra.mxu0 0.0
    %3469 = vmatprep.subr.mxu0 0.0
    %3470 = vmatpush1.msra.mxu0 0.0
    %3471 = vmatprep.subr.mxu0 0.0
    %3472 = vmatpush1.msra.mxu0 0.0
    %3473 = vmatprep.subr.mxu0 0.0
    %3474 = vmatpush1.msra.mxu0 0.0
    %3475 = vmatprep.subr.mxu0 0.0
    %3476 = vmatpush1.msra.mxu0 0.0
    %3477 = vmatprep.subr.mxu0 0.0
    %3478 = vmatpush1.msra.mxu0 0.0
    %3479 = vmatprep.subr.mxu0 0.0
    %3480 = vmatpush1.msra.mxu0 0.0
    %3481 = vmatprep.subr.mxu0 0.0
    %3482 = vmatpush1.msra.mxu0 0.0
    %3483 = vmatprep.subr.mxu0 0.0
    %3484 = vmatpush1.msra.mxu0 0.0
    %3485 = vmatprep.subr.mxu0 0.0
    %v3486 = vand.u32 %v115, 4294901760
    %v3487 = vsub.f32 %v115, %v3486
    %v3488 = vand.u32 %v3487, 4294901760
    %3489 = vmatpush1.msra.mxu0 %v3488
    %3490 = vmatprep.subr.mxu0 0.0
    %v3491 = vand.u32 %v114, 4294901760
    %v3492 = vsub.f32 %v114, %v3491
    %v3493 = vand.u32 %v3492, 4294901760
    %3494 = vmatpush1.msra.mxu0 %v3493
    %3495 = vmatprep.subr.mxu0 0.0
    %v3496 = vand.u32 %v113, 4294901760
    %v3497 = vsub.f32 %v113, %v3496
    %v3498 = vand.u32 %v3497, 4294901760
    %3499 = vmatpush1.msra.mxu0 %v3498
    %3500 = vmatprep.subr.mxu0 0.0
    %v3501 = vand.u32 %v112, 4294901760
    %v3502 = vsub.f32 %v112, %v3501
    %v3503 = vand.u32 %v3502, 4294901760
    %3504 = vmatpush1.msra.mxu0 %v3503
    %3505 = vmatprep.subr.mxu0 0.0
    %3506 = vmatpush2.msra.mxu0 0.0
    %3507 = vmatprep.subr.mxu0 0.0
    %3508 = vmatpush2.msra.mxu0 0.0
    %3509 = vmatprep.subr.mxu0 0.0
    %3510 = vmatpush2.msra.mxu0 0.0
    %3511 = vmatprep.subr.mxu0 0.0
    %3512 = vmatpush2.msra.mxu0 0.0
    %3513 = vmatprep.subr.mxu0 0.0
    %3514 = vmatpush2.msra.mxu0 0.0
    %3515 = vmatprep.subr.mxu0 0.0
    %3516 = vmatpush2.msra.mxu0 0.0
    %3517 = vmatprep.subr.mxu0 0.0
    %3518 = vmatpush2.msra.mxu0 0.0
    %3519 = vmatprep.subr.mxu0 0.0
    %3520 = vmatpush2.msra.mxu0 0.0
    %3521 = vmatprep.subr.mxu0 0.0
    %3522 = vmatpush2.msra.mxu0 0.0
    %3523 = vmatprep.subr.mxu0 0.0
    %3524 = vmatpush2.msra.mxu0 0.0
    %3525 = vmatprep.subr.mxu0 0.0
    %3526 = vmatpush2.msra.mxu0 0.0
    %3527 = vmatprep.subr.mxu0 0.0
    %3528 = vmatpush2.msra.mxu0 0.0
    %3529 = vmatprep.subr.mxu0 0.0
    %3530 = vmatpush2.msra.mxu0 0.0
    %3531 = vmatprep.subr.mxu0 0.0
    %3532 = vmatpush2.msra.mxu0 0.0
    %3533 = vmatprep.subr.mxu0 0.0
    %3534 = vmatpush2.msra.mxu0 0.0
    %3535 = vmatprep.subr.mxu0 0.0
    %3536 = vmatpush2.msra.mxu0 0.0
    %3537 = vmatprep.mubr.f32.mxu0 0.0
    %v3538 = vand.u32 %v3132, 4294901760
    %3539 = vmatmul.mubr.f32.gmra.mxu0 %v3538
    %v3540 = vpop.f32.mrf.mxu0
    %v3541 = vadd.f32 %v3458, %v3540
    %v3542 = vpop.f32.mrf.mxu0
    %3543 = vdwg.mxu0
    %3544 = vmatprep.subr.mxu0 0.0
    %3545 = vmatpush1.msra.mxu0 0.0
    %3546 = vmatprep.subr.mxu0 0.0
    %3547 = vmatpush1.msra.mxu0 0.0
    %3548 = vmatprep.subr.mxu0 0.0
    %3549 = vmatpush1.msra.mxu0 0.0
    %3550 = vmatprep.subr.mxu0 0.0
    %3551 = vmatpush1.msra.mxu0 0.0
    %3552 = vmatprep.subr.mxu0 0.0
    %3553 = vmatpush1.msra.mxu0 0.0
    %3554 = vmatprep.subr.mxu0 0.0
    %3555 = vmatpush1.msra.mxu0 0.0
    %3556 = vmatprep.subr.mxu0 0.0
    %3557 = vmatpush1.msra.mxu0 0.0
    %3558 = vmatprep.subr.mxu0 0.0
    %3559 = vmatpush1.msra.mxu0 0.0
    %3560 = vmatprep.subr.mxu0 0.0
    %3561 = vmatpush1.msra.mxu0 0.0
    %3562 = vmatprep.subr.mxu0 0.0
    %3563 = vmatpush1.msra.mxu0 0.0
    %3564 = vmatprep.subr.mxu0 0.0
    %3565 = vmatpush1.msra.mxu0 0.0
    %3566 = vmatprep.subr.mxu0 0.0
    %3567 = vmatpush1.msra.mxu0 0.0
    %3568 = vmatprep.subr.mxu0 0.0
    %v3569 = vand.u32 %v115, 4294901760
    %3570 = vmatpush1.msra.mxu0 %v3569
    %3571 = vmatprep.subr.mxu0 0.0
    %v3572 = vand.u32 %v114, 4294901760
    %3573 = vmatpush1.msra.mxu0 %v3572
    %3574 = vmatprep.subr.mxu0 0.0
    %v3575 = vand.u32 %v113, 4294901760
    %3576 = vmatpush1.msra.mxu0 %v3575
    %3577 = vmatprep.subr.mxu0 0.0
    %v3578 = vand.u32 %v112, 4294901760
    %3579 = vmatpush1.msra.mxu0 %v3578
    %3580 = vmatprep.subr.mxu0 0.0
    %3581 = vmatpush2.msra.mxu0 0.0
    %3582 = vmatprep.subr.mxu0 0.0
    %3583 = vmatpush2.msra.mxu0 0.0
    %3584 = vmatprep.subr.mxu0 0.0
    %3585 = vmatpush2.msra.mxu0 0.0
    %3586 = vmatprep.subr.mxu0 0.0
    %3587 = vmatpush2.msra.mxu0 0.0
    %3588 = vmatprep.subr.mxu0 0.0
    %3589 = vmatpush2.msra.mxu0 0.0
    %3590 = vmatprep.subr.mxu0 0.0
    %3591 = vmatpush2.msra.mxu0 0.0
    %3592 = vmatprep.subr.mxu0 0.0
    %3593 = vmatpush2.msra.mxu0 0.0
    %3594 = vmatprep.subr.mxu0 0.0
    %3595 = vmatpush2.msra.mxu0 0.0
    %3596 = vmatprep.subr.mxu0 0.0
    %3597 = vmatpush2.msra.mxu0 0.0
    %3598 = vmatprep.subr.mxu0 0.0
    %3599 = vmatpush2.msra.mxu0 0.0
    %3600 = vmatprep.subr.mxu0 0.0
    %3601 = vmatpush2.msra.mxu0 0.0
    %3602 = vmatprep.subr.mxu0 0.0
    %3603 = vmatpush2.msra.mxu0 0.0
    %3604 = vmatprep.subr.mxu0 0.0
    %3605 = vmatpush2.msra.mxu0 0.0
    %3606 = vmatprep.subr.mxu0 0.0
    %3607 = vmatpush2.msra.mxu0 0.0
    %3608 = vmatprep.subr.mxu0 0.0
    %3609 = vmatpush2.msra.mxu0 0.0
    %3610 = vmatprep.subr.mxu0 0.0
    %3611 = vmatpush2.msra.mxu0 0.0
    %3612 = vmatprep.mubr.f32.mxu0 0.0
    %v3613 = vand.u32 %v3132, 4294901760
    %3614 = vmatmul.mubr.f32.gmra.mxu0 %v3613
    %v3615 = vpop.f32.mrf.mxu0
    %v3616 = vadd.f32 %v3541, %v3615
    %v3617 = vpop.f32.mrf.mxu0
    %3618 = vdwg.mxu0
    %3620 = vrot.lane.b32.xlu0 %v3128, 32
    %v3621 = vpop.permute.xlu0 %3620
    %v3622 = vsel %vm117, %v3621, 0
    %3624 = vmatprep.subr.mxu0 0.0
    %3625 = vmatpush1.msra.mxu0 0.0
    %3626 = vmatprep.subr.mxu0 0.0
    %3627 = vmatpush1.msra.mxu0 0.0
    %3628 = vmatprep.subr.mxu0 0.0
    %3629 = vmatpush1.msra.mxu0 0.0
    %3630 = vmatprep.subr.mxu0 0.0
    %3631 = vmatpush1.msra.mxu0 0.0
    %3632 = vmatprep.subr.mxu0 0.0
    %3633 = vmatpush1.msra.mxu0 0.0
    %3634 = vmatprep.subr.mxu0 0.0
    %3635 = vmatpush1.msra.mxu0 0.0
    %3636 = vmatprep.subr.mxu0 0.0
    %3637 = vmatpush1.msra.mxu0 0.0
    %3638 = vmatprep.subr.mxu0 0.0
    %3639 = vmatpush1.msra.mxu0 0.0
    %3640 = vmatprep.subr.mxu0 0.0
    %3641 = vmatpush1.msra.mxu0 0.0
    %3642 = vmatprep.subr.mxu0 0.0
    %3643 = vmatpush1.msra.mxu0 0.0
    %3644 = vmatprep.subr.mxu0 0.0
    %3645 = vmatpush1.msra.mxu0 0.0
    %3646 = vmatprep.subr.mxu0 0.0
    %3647 = vmatpush1.msra.mxu0 0.0
    %3648 = vmatprep.subr.mxu0 0.0
    %v3649 = vand.u32 %v111, 4294901760
    %3650 = vmatpush1.msra.mxu0 %v3649
    %3651 = vmatprep.subr.mxu0 0.0
    %v3652 = vand.u32 %v110, 4294901760
    %3653 = vmatpush1.msra.mxu0 %v3652
    %3654 = vmatprep.subr.mxu0 0.0
    %v3655 = vand.u32 %v109, 4294901760
    %3656 = vmatpush1.msra.mxu0 %v3655
    %3657 = vmatprep.subr.mxu0 0.0
    %v3658 = vand.u32 %v108, 4294901760
    %3659 = vmatpush1.msra.mxu0 %v3658
    %3660 = vmatprep.subr.mxu0 0.0
    %3661 = vmatpush2.msra.mxu0 0.0
    %3662 = vmatprep.subr.mxu0 0.0
    %3663 = vmatpush2.msra.mxu0 0.0
    %3664 = vmatprep.subr.mxu0 0.0
    %3665 = vmatpush2.msra.mxu0 0.0
    %3666 = vmatprep.subr.mxu0 0.0
    %3667 = vmatpush2.msra.mxu0 0.0
    %3668 = vmatprep.subr.mxu0 0.0
    %3669 = vmatpush2.msra.mxu0 0.0
    %3670 = vmatprep.subr.mxu0 0.0
    %3671 = vmatpush2.msra.mxu0 0.0
    %3672 = vmatprep.subr.mxu0 0.0
    %3673 = vmatpush2.msra.mxu0 0.0
    %3674 = vmatprep.subr.mxu0 0.0
    %3675 = vmatpush2.msra.mxu0 0.0
    %3676 = vmatprep.subr.mxu0 0.0
    %3677 = vmatpush2.msra.mxu0 0.0
    %3678 = vmatprep.subr.mxu0 0.0
    %3679 = vmatpush2.msra.mxu0 0.0
    %3680 = vmatprep.subr.mxu0 0.0
    %3681 = vmatpush2.msra.mxu0 0.0
    %3682 = vmatprep.subr.mxu0 0.0
    %3683 = vmatpush2.msra.mxu0 0.0
    %3684 = vmatprep.subr.mxu0 0.0
    %3685 = vmatpush2.msra.mxu0 0.0
    %3686 = vmatprep.subr.mxu0 0.0
    %3687 = vmatpush2.msra.mxu0 0.0
    %3688 = vmatprep.subr.mxu0 0.0
    %3689 = vmatpush2.msra.mxu0 0.0
    %3690 = vmatprep.subr.mxu0 0.0
    %3691 = vmatpush2.msra.mxu0 0.0
    %3692 = vmatprep.mubr.f32.mxu0 0.0
    %v3693 = vand.u32 %v3622, 4294901760
    %v3694 = vsub.f32 %v3622, %v3693
    %v3695 = vand.u32 %v3694, 4294901760
    %v3696 = vsub.f32 %v3694, %v3695
    %v3697 = vand.u32 %v3696, 4294901760
    %3698 = vmatmul.mubr.f32.gmra.mxu0 %v3697
    %v3699 = vpop.f32.mrf.mxu0
    %v3700 = vadd.f32 %v3616, %v3699
    %v3701 = vpop.f32.mrf.mxu0
    %3702 = vdwg.mxu0
    %3703 = vmatprep.subr.mxu0 0.0
    %3704 = vmatpush1.msra.mxu0 0.0
    %3705 = vmatprep.subr.mxu0 0.0
    %3706 = vmatpush1.msra.mxu0 0.0
    %3707 = vmatprep.subr.mxu0 0.0
    %3708 = vmatpush1.msra.mxu0 0.0
    %3709 = vmatprep.subr.mxu0 0.0
    %3710 = vmatpush1.msra.mxu0 0.0
    %3711 = vmatprep.subr.mxu0 0.0
    %3712 = vmatpush1.msra.mxu0 0.0
    %3713 = vmatprep.subr.mxu0 0.0
    %3714 = vmatpush1.msra.mxu0 0.0
    %3715 = vmatprep.subr.mxu0 0.0
    %3716 = vmatpush1.msra.mxu0 0.0
    %3717 = vmatprep.subr.mxu0 0.0
    %3718 = vmatpush1.msra.mxu0 0.0
    %3719 = vmatprep.subr.mxu0 0.0
    %3720 = vmatpush1.msra.mxu0 0.0
    %3721 = vmatprep.subr.mxu0 0.0
    %3722 = vmatpush1.msra.mxu0 0.0
    %3723 = vmatprep.subr.mxu0 0.0
    %3724 = vmatpush1.msra.mxu0 0.0
    %3725 = vmatprep.subr.mxu0 0.0
    %3726 = vmatpush1.msra.mxu0 0.0
    %3727 = vmatprep.subr.mxu0 0.0
    %v3728 = vand.u32 %v111, 4294901760
    %v3729 = vsub.f32 %v111, %v3728
    %v3730 = vand.u32 %v3729, 4294901760
    %v3731 = vsub.f32 %v3729, %v3730
    %v3732 = vand.u32 %v3731, 4294901760
    %3733 = vmatpush1.msra.mxu0 %v3732
    %3734 = vmatprep.subr.mxu0 0.0
    %v3735 = vand.u32 %v110, 4294901760
    %v3736 = vsub.f32 %v110, %v3735
    %v3737 = vand.u32 %v3736, 4294901760
    %v3738 = vsub.f32 %v3736, %v3737
    %v3739 = vand.u32 %v3738, 4294901760
    %3740 = vmatpush1.msra.mxu0 %v3739
    %3741 = vmatprep.subr.mxu0 0.0
    %v3742 = vand.u32 %v109, 4294901760
    %v3743 = vsub.f32 %v109, %v3742
    %v3744 = vand.u32 %v3743, 4294901760
    %v3745 = vsub.f32 %v3743, %v3744
    %v3746 = vand.u32 %v3745, 4294901760
    %3747 = vmatpush1.msra.mxu0 %v3746
    %3748 = vmatprep.subr.mxu0 0.0
    %v3749 = vand.u32 %v108, 4294901760
    %v3750 = vsub.f32 %v108, %v3749
    %v3751 = vand.u32 %v3750, 4294901760
    %v3752 = vsub.f32 %v3750, %v3751
    %v3753 = vand.u32 %v3752, 4294901760
    %3754 = vmatpush1.msra.mxu0 %v3753
    %3755 = vmatprep.subr.mxu0 0.0
    %3756 = vmatpush2.msra.mxu0 0.0
    %3757 = vmatprep.subr.mxu0 0.0
    %3758 = vmatpush2.msra.mxu0 0.0
    %3759 = vmatprep.subr.mxu0 0.0
    %3760 = vmatpush2.msra.mxu0 0.0
    %3761 = vmatprep.subr.mxu0 0.0
    %3762 = vmatpush2.msra.mxu0 0.0
    %3763 = vmatprep.subr.mxu0 0.0
    %3764 = vmatpush2.msra.mxu0 0.0
    %3765 = vmatprep.subr.mxu0 0.0
    %3766 = vmatpush2.msra.mxu0 0.0
    %3767 = vmatprep.subr.mxu0 0.0
    %3768 = vmatpush2.msra.mxu0 0.0
    %3769 = vmatprep.subr.mxu0 0.0
    %3770 = vmatpush2.msra.mxu0 0.0
    %3771 = vmatprep.subr.mxu0 0.0
    %3772 = vmatpush2.msra.mxu0 0.0
    %3773 = vmatprep.subr.mxu0 0.0
    %3774 = vmatpush2.msra.mxu0 0.0
    %3775 = vmatprep.subr.mxu0 0.0
    %3776 = vmatpush2.msra.mxu0 0.0
    %3777 = vmatprep.subr.mxu0 0.0
    %3778 = vmatpush2.msra.mxu0 0.0
    %3779 = vmatprep.subr.mxu0 0.0
    %3780 = vmatpush2.msra.mxu0 0.0
    %3781 = vmatprep.subr.mxu0 0.0
    %3782 = vmatpush2.msra.mxu0 0.0
    %3783 = vmatprep.subr.mxu0 0.0
    %3784 = vmatpush2.msra.mxu0 0.0
    %3785 = vmatprep.subr.mxu0 0.0
    %3786 = vmatpush2.msra.mxu0 0.0
    %3787 = vmatprep.mubr.f32.mxu0 0.0
    %v3788 = vand.u32 %v3622, 4294901760
    %3789 = vmatmul.mubr.f32.gmra.mxu0 %v3788
    %v3790 = vpop.f32.mrf.mxu0
    %v3791 = vadd.f32 %v3700, %v3790
    %v3792 = vpop.f32.mrf.mxu0
    %3793 = vdwg.mxu0
    %3794 = vmatprep.subr.mxu0 0.0
    %3795 = vmatpush1.msra.mxu0 0.0
    %3796 = vmatprep.subr.mxu0 0.0
    %3797 = vmatpush1.msra.mxu0 0.0
    %3798 = vmatprep.subr.mxu0 0.0
    %3799 = vmatpush1.msra.mxu0 0.0
    %3800 = vmatprep.subr.mxu0 0.0
    %3801 = vmatpush1.msra.mxu0 0.0
    %3802 = vmatprep.subr.mxu0 0.0
    %3803 = vmatpush1.msra.mxu0 0.0
    %3804 = vmatprep.subr.mxu0 0.0
    %3805 = vmatpush1.msra.mxu0 0.0
    %3806 = vmatprep.subr.mxu0 0.0
    %3807 = vmatpush1.msra.mxu0 0.0
    %3808 = vmatprep.subr.mxu0 0.0
    %3809 = vmatpush1.msra.mxu0 0.0
    %3810 = vmatprep.subr.mxu0 0.0
    %3811 = vmatpush1.msra.mxu0 0.0
    %3812 = vmatprep.subr.mxu0 0.0
    %3813 = vmatpush1.msra.mxu0 0.0
    %3814 = vmatprep.subr.mxu0 0.0
    %3815 = vmatpush1.msra.mxu0 0.0
    %3816 = vmatprep.subr.mxu0 0.0
    %3817 = vmatpush1.msra.mxu0 0.0
    %3818 = vmatprep.subr.mxu0 0.0
    %v3819 = vand.u32 %v111, 4294901760
    %v3820 = vsub.f32 %v111, %v3819
    %3821 = vmatpush1.msra.mxu0 %v3820
    %3822 = vmatprep.subr.mxu0 0.0
    %v3823 = vand.u32 %v110, 4294901760
    %v3824 = vsub.f32 %v110, %v3823
    %3825 = vmatpush1.msra.mxu0 %v3824
    %3826 = vmatprep.subr.mxu0 0.0
    %v3827 = vand.u32 %v109, 4294901760
    %v3828 = vsub.f32 %v109, %v3827
    %3829 = vmatpush1.msra.mxu0 %v3828
    %3830 = vmatprep.subr.mxu0 0.0
    %v3831 = vand.u32 %v108, 4294901760
    %v3832 = vsub.f32 %v108, %v3831
    %3833 = vmatpush1.msra.mxu0 %v3832
    %3834 = vmatprep.subr.mxu0 0.0
    %3835 = vmatpush2.msra.mxu0 0.0
    %3836 = vmatprep.subr.mxu0 0.0
    %3837 = vmatpush2.msra.mxu0 0.0
    %3838 = vmatprep.subr.mxu0 0.0
    %3839 = vmatpush2.msra.mxu0 0.0
    %3840 = vmatprep.subr.mxu0 0.0
    %3841 = vmatpush2.msra.mxu0 0.0
    %3842 = vmatprep.subr.mxu0 0.0
    %3843 = vmatpush2.msra.mxu0 0.0
    %3844 = vmatprep.subr.mxu0 0.0
    %3845 = vmatpush2.msra.mxu0 0.0
    %3846 = vmatprep.subr.mxu0 0.0
    %3847 = vmatpush2.msra.mxu0 0.0
    %3848 = vmatprep.subr.mxu0 0.0
    %3849 = vmatpush2.msra.mxu0 0.0
    %3850 = vmatprep.subr.mxu0 0.0
    %3851 = vmatpush2.msra.mxu0 0.0
    %3852 = vmatprep.subr.mxu0 0.0
    %3853 = vmatpush2.msra.mxu0 0.0
    %3854 = vmatprep.subr.mxu0 0.0
    %3855 = vmatpush2.msra.mxu0 0.0
    %3856 = vmatprep.subr.mxu0 0.0
    %3857 = vmatpush2.msra.mxu0 0.0
    %3858 = vmatprep.subr.mxu0 0.0
    %3859 = vmatpush2.msra.mxu0 0.0
    %3860 = vmatprep.subr.mxu0 0.0
    %3861 = vmatpush2.msra.mxu0 0.0
    %3862 = vmatprep.subr.mxu0 0.0
    %3863 = vmatpush2.msra.mxu0 0.0
    %3864 = vmatprep.subr.mxu0 0.0
    %3865 = vmatpush2.msra.mxu0 0.0
    %3866 = vmatprep.mubr.f32.mxu0 0.0
    %v3867 = vand.u32 %v3622, 4294901760
    %v3868 = vsub.f32 %v3622, %v3867
    %3869 = vmatmul.mubr.f32.gmra.mxu0 %v3868
    %v3870 = vpop.f32.mrf.mxu0
    %v3871 = vadd.f32 %v3791, %v3870
    %v3872 = vpop.f32.mrf.mxu0
    %3873 = vdwg.mxu0
    %3874 = vmatprep.subr.mxu0 0.0
    %3875 = vmatpush1.msra.mxu0 0.0
    %3876 = vmatprep.subr.mxu0 0.0
    %3877 = vmatpush1.msra.mxu0 0.0
    %3878 = vmatprep.subr.mxu0 0.0
    %3879 = vmatpush1.msra.mxu0 0.0
    %3880 = vmatprep.subr.mxu0 0.0
    %3881 = vmatpush1.msra.mxu0 0.0
    %3882 = vmatprep.subr.mxu0 0.0
    %3883 = vmatpush1.msra.mxu0 0.0
    %3884 = vmatprep.subr.mxu0 0.0
    %3885 = vmatpush1.msra.mxu0 0.0
    %3886 = vmatprep.subr.mxu0 0.0
    %3887 = vmatpush1.msra.mxu0 0.0
    %3888 = vmatprep.subr.mxu0 0.0
    %3889 = vmatpush1.msra.mxu0 0.0
    %3890 = vmatprep.subr.mxu0 0.0
    %3891 = vmatpush1.msra.mxu0 0.0
    %3892 = vmatprep.subr.mxu0 0.0
    %3893 = vmatpush1.msra.mxu0 0.0
    %3894 = vmatprep.subr.mxu0 0.0
    %3895 = vmatpush1.msra.mxu0 0.0
    %3896 = vmatprep.subr.mxu0 0.0
    %3897 = vmatpush1.msra.mxu0 0.0
    %3898 = vmatprep.subr.mxu0 0.0
    %v3899 = vand.u32 %v111, 4294901760
    %3900 = vmatpush1.msra.mxu0 %v3899
    %3901 = vmatprep.subr.mxu0 0.0
    %v3902 = vand.u32 %v110, 4294901760
    %3903 = vmatpush1.msra.mxu0 %v3902
    %3904 = vmatprep.subr.mxu0 0.0
    %v3905 = vand.u32 %v109, 4294901760
    %3906 = vmatpush1.msra.mxu0 %v3905
    %3907 = vmatprep.subr.mxu0 0.0
    %v3908 = vand.u32 %v108, 4294901760
    %3909 = vmatpush1.msra.mxu0 %v3908
    %3910 = vmatprep.subr.mxu0 0.0
    %3911 = vmatpush2.msra.mxu0 0.0
    %3912 = vmatprep.subr.mxu0 0.0
    %3913 = vmatpush2.msra.mxu0 0.0
    %3914 = vmatprep.subr.mxu0 0.0
    %3915 = vmatpush2.msra.mxu0 0.0
    %3916 = vmatprep.subr.mxu0 0.0
    %3917 = vmatpush2.msra.mxu0 0.0
    %3918 = vmatprep.subr.mxu0 0.0
    %3919 = vmatpush2.msra.mxu0 0.0
    %3920 = vmatprep.subr.mxu0 0.0
    %3921 = vmatpush2.msra.mxu0 0.0
    %3922 = vmatprep.subr.mxu0 0.0
    %3923 = vmatpush2.msra.mxu0 0.0
    %3924 = vmatprep.subr.mxu0 0.0
    %3925 = vmatpush2.msra.mxu0 0.0
    %3926 = vmatprep.subr.mxu0 0.0
    %3927 = vmatpush2.msra.mxu0 0.0
    %3928 = vmatprep.subr.mxu0 0.0
    %3929 = vmatpush2.msra.mxu0 0.0
    %3930 = vmatprep.subr.mxu0 0.0
    %3931 = vmatpush2.msra.mxu0 0.0
    %3932 = vmatprep.subr.mxu0 0.0
    %3933 = vmatpush2.msra.mxu0 0.0
    %3934 = vmatprep.subr.mxu0 0.0
    %3935 = vmatpush2.msra.mxu0 0.0
    %3936 = vmatprep.subr.mxu0 0.0
    %3937 = vmatpush2.msra.mxu0 0.0
    %3938 = vmatprep.subr.mxu0 0.0
    %3939 = vmatpush2.msra.mxu0 0.0
    %3940 = vmatprep.subr.mxu0 0.0
    %3941 = vmatpush2.msra.mxu0 0.0
    %3942 = vmatprep.mubr.f32.mxu0 0.0
    %v3943 = vand.u32 %v3622, 4294901760
    %v3944 = vsub.f32 %v3622, %v3943
    %v3945 = vand.u32 %v3944, 4294901760
    %3946 = vmatmul.mubr.f32.gmra.mxu0 %v3945
    %v3947 = vpop.f32.mrf.mxu0
    %v3948 = vadd.f32 %v3871, %v3947
    %v3949 = vpop.f32.mrf.mxu0
    %3950 = vdwg.mxu0
    %3951 = vmatprep.subr.mxu0 0.0
    %3952 = vmatpush1.msra.mxu0 0.0
    %3953 = vmatprep.subr.mxu0 0.0
    %3954 = vmatpush1.msra.mxu0 0.0
    %3955 = vmatprep.subr.mxu0 0.0
    %3956 = vmatpush1.msra.mxu0 0.0
    %3957 = vmatprep.subr.mxu0 0.0
    %3958 = vmatpush1.msra.mxu0 0.0
    %3959 = vmatprep.subr.mxu0 0.0
    %3960 = vmatpush1.msra.mxu0 0.0
    %3961 = vmatprep.subr.mxu0 0.0
    %3962 = vmatpush1.msra.mxu0 0.0
    %3963 = vmatprep.subr.mxu0 0.0
    %3964 = vmatpush1.msra.mxu0 0.0
    %3965 = vmatprep.subr.mxu0 0.0
    %3966 = vmatpush1.msra.mxu0 0.0
    %3967 = vmatprep.subr.mxu0 0.0
    %3968 = vmatpush1.msra.mxu0 0.0
    %3969 = vmatprep.subr.mxu0 0.0
    %3970 = vmatpush1.msra.mxu0 0.0
    %3971 = vmatprep.subr.mxu0 0.0
    %3972 = vmatpush1.msra.mxu0 0.0
    %3973 = vmatprep.subr.mxu0 0.0
    %3974 = vmatpush1.msra.mxu0 0.0
    %3975 = vmatprep.subr.mxu0 0.0
    %v3976 = vand.u32 %v111, 4294901760
    %v3977 = vsub.f32 %v111, %v3976
    %v3978 = vand.u32 %v3977, 4294901760
    %3979 = vmatpush1.msra.mxu0 %v3978
    %3980 = vmatprep.subr.mxu0 0.0
    %v3981 = vand.u32 %v110, 4294901760
    %v3982 = vsub.f32 %v110, %v3981
    %v3983 = vand.u32 %v3982, 4294901760
    %3984 = vmatpush1.msra.mxu0 %v3983
    %3985 = vmatprep.subr.mxu0 0.0
    %v3986 = vand.u32 %v109, 4294901760
    %v3987 = vsub.f32 %v109, %v3986
    %v3988 = vand.u32 %v3987, 4294901760
    %3989 = vmatpush1.msra.mxu0 %v3988
    %3990 = vmatprep.subr.mxu0 0.0
    %v3991 = vand.u32 %v108, 4294901760
    %v3992 = vsub.f32 %v108, %v3991
    %v3993 = vand.u32 %v3992, 4294901760
    %3994 = vmatpush1.msra.mxu0 %v3993
    %3995 = vmatprep.subr.mxu0 0.0
    %3996 = vmatpush2.msra.mxu0 0.0
    %3997 = vmatprep.subr.mxu0 0.0
    %3998 = vmatpush2.msra.mxu0 0.0
    %3999 = vmatprep.subr.mxu0 0.0
    %4000 = vmatpush2.msra.mxu0 0.0
    %4001 = vmatprep.subr.mxu0 0.0
    %4002 = vmatpush2.msra.mxu0 0.0
    %4003 = vmatprep.subr.mxu0 0.0
    %4004 = vmatpush2.msra.mxu0 0.0
    %4005 = vmatprep.subr.mxu0 0.0
    %4006 = vmatpush2.msra.mxu0 0.0
    %4007 = vmatprep.subr.mxu0 0.0
    %4008 = vmatpush2.msra.mxu0 0.0
    %4009 = vmatprep.subr.mxu0 0.0
    %4010 = vmatpush2.msra.mxu0 0.0
    %4011 = vmatprep.subr.mxu0 0.0
    %4012 = vmatpush2.msra.mxu0 0.0
    %4013 = vmatprep.subr.mxu0 0.0
    %4014 = vmatpush2.msra.mxu0 0.0
    %4015 = vmatprep.subr.mxu0 0.0
    %4016 = vmatpush2.msra.mxu0 0.0
    %4017 = vmatprep.subr.mxu0 0.0
    %4018 = vmatpush2.msra.mxu0 0.0
    %4019 = vmatprep.subr.mxu0 0.0
    %4020 = vmatpush2.msra.mxu0 0.0
    %4021 = vmatprep.subr.mxu0 0.0
    %4022 = vmatpush2.msra.mxu0 0.0
    %4023 = vmatprep.subr.mxu0 0.0
    %4024 = vmatpush2.msra.mxu0 0.0
    %4025 = vmatprep.subr.mxu0 0.0
    %4026 = vmatpush2.msra.mxu0 0.0
    %4027 = vmatprep.mubr.f32.mxu0 0.0
    %v4028 = vand.u32 %v3622, 4294901760
    %4029 = vmatmul.mubr.f32.gmra.mxu0 %v4028
    %v4030 = vpop.f32.mrf.mxu0
    %v4031 = vadd.f32 %v3948, %v4030
    %v4032 = vpop.f32.mrf.mxu0
    %4033 = vdwg.mxu0
    %4034 = vmatprep.subr.mxu0 0.0
    %4035 = vmatpush1.msra.mxu0 0.0
    %4036 = vmatprep.subr.mxu0 0.0
    %4037 = vmatpush1.msra.mxu0 0.0
    %4038 = vmatprep.subr.mxu0 0.0
    %4039 = vmatpush1.msra.mxu0 0.0
    %4040 = vmatprep.subr.mxu0 0.0
    %4041 = vmatpush1.msra.mxu0 0.0
    %4042 = vmatprep.subr.mxu0 0.0
    %4043 = vmatpush1.msra.mxu0 0.0
    %4044 = vmatprep.subr.mxu0 0.0
    %4045 = vmatpush1.msra.mxu0 0.0
    %4046 = vmatprep.subr.mxu0 0.0
    %4047 = vmatpush1.msra.mxu0 0.0
    %4048 = vmatprep.subr.mxu0 0.0
    %4049 = vmatpush1.msra.mxu0 0.0
    %4050 = vmatprep.subr.mxu0 0.0
    %4051 = vmatpush1.msra.mxu0 0.0
    %4052 = vmatprep.subr.mxu0 0.0
    %4053 = vmatpush1.msra.mxu0 0.0
    %4054 = vmatprep.subr.mxu0 0.0
    %4055 = vmatpush1.msra.mxu0 0.0
    %4056 = vmatprep.subr.mxu0 0.0
    %4057 = vmatpush1.msra.mxu0 0.0
    %4058 = vmatprep.subr.mxu0 0.0
    %v4059 = vand.u32 %v111, 4294901760
    %4060 = vmatpush1.msra.mxu0 %v4059
    %4061 = vmatprep.subr.mxu0 0.0
    %v4062 = vand.u32 %v110, 4294901760
    %4063 = vmatpush1.msra.mxu0 %v4062
    %4064 = vmatprep.subr.mxu0 0.0
    %v4065 = vand.u32 %v109, 4294901760
    %4066 = vmatpush1.msra.mxu0 %v4065
    %4067 = vmatprep.subr.mxu0 0.0
    %v4068 = vand.u32 %v108, 4294901760
    %4069 = vmatpush1.msra.mxu0 %v4068
    %4070 = vmatprep.subr.mxu0 0.0
    %4071 = vmatpush2.msra.mxu0 0.0
    %4072 = vmatprep.subr.mxu0 0.0
    %4073 = vmatpush2.msra.mxu0 0.0
    %4074 = vmatprep.subr.mxu0 0.0
    %4075 = vmatpush2.msra.mxu0 0.0
    %4076 = vmatprep.subr.mxu0 0.0
    %4077 = vmatpush2.msra.mxu0 0.0
    %4078 = vmatprep.subr.mxu0 0.0
    %4079 = vmatpush2.msra.mxu0 0.0
    %4080 = vmatprep.subr.mxu0 0.0
    %4081 = vmatpush2.msra.mxu0 0.0
    %4082 = vmatprep.subr.mxu0 0.0
    %4083 = vmatpush2.msra.mxu0 0.0
    %4084 = vmatprep.subr.mxu0 0.0
    %4085 = vmatpush2.msra.mxu0 0.0
    %4086 = vmatprep.subr.mxu0 0.0
    %4087 = vmatpush2.msra.mxu0 0.0
    %4088 = vmatprep.subr.mxu0 0.0
    %4089 = vmatpush2.msra.mxu0 0.0
    %4090 = vmatprep.subr.mxu0 0.0
    %4091 = vmatpush2.msra.mxu0 0.0
    %4092 = vmatprep.subr.mxu0 0.0
    %4093 = vmatpush2.msra.mxu0 0.0
    %4094 = vmatprep.subr.mxu0 0.0
    %4095 = vmatpush2.msra.mxu0 0.0
    %4096 = vmatprep.subr.mxu0 0.0
    %4097 = vmatpush2.msra.mxu0 0.0
    %4098 = vmatprep.subr.mxu0 0.0
    %4099 = vmatpush2.msra.mxu0 0.0
    %4100 = vmatprep.subr.mxu0 0.0
    %4101 = vmatpush2.msra.mxu0 0.0
    %4102 = vmatprep.mubr.f32.mxu0 0.0
    %v4103 = vand.u32 %v3622, 4294901760
    %4104 = vmatmul.mubr.f32.gmra.mxu0 %v4103
    %v4105 = vpop.f32.mrf.mxu0
    %v4106 = vadd.f32 %v4031, %v4105
    %v4107 = vpop.f32.mrf.mxu0
    %4108 = vdwg.mxu0
    %v4109 = vadd.f32 %v4106, %v2104
    %v4110 = vxor.u32 %v4109, 2147483648
    %v4111 = vmul.f32 %v4110, 1.442695
    %v4112 = vpow.pop %v4111
    %v4113 = vadd.f32 %v4112, 1.0
    %v4114 = vrcp.pop %v4113
    %v4115 = vmul.f32 1.0, %v4114
    %v4116 = vtanh.pop %v4109
    %v4117 = vmul.f32 %v4115, %v2124
    %4119 = vrot.lane.b32.xlu0 %v4116, 64
    %v4120 = vpop.permute.xlu0 %4119
    %v4122 = vmul.f32 %v4115, %v4120
    %4124 = vrot.lane.b32.xlu0 %v4122, 32
    %v4125 = vpop.permute.xlu0 %4124
    %v4127 = vadd.f32 %v4117, %v4125
    %v4128 = vtanh.pop %v4127
    %4130 = vrot.lane.b32.xlu0 %v4128, 64
    %v4131 = vpop.permute.xlu0 %4130
    %v4133 = vmul.f32 %v4115, %v4131
    %4134 = vmatprep.subr.mxu0 0.0
    %4135 = vmatpush1.msra.mxu0 0.0
    %4136 = vmatprep.subr.mxu0 0.0
    %4137 = vmatpush1.msra.mxu0 0.0
    %4138 = vmatprep.subr.mxu0 0.0
    %4139 = vmatpush1.msra.mxu0 0.0
    %4140 = vmatprep.subr.mxu0 0.0
    %4141 = vmatpush1.msra.mxu0 0.0
    %4142 = vmatprep.subr.mxu0 0.0
    %4143 = vmatpush1.msra.mxu0 0.0
    %4144 = vmatprep.subr.mxu0 0.0
    %4145 = vmatpush1.msra.mxu0 0.0
    %4146 = vmatprep.subr.mxu0 0.0
    %4147 = vmatpush1.msra.mxu0 0.0
    %4148 = vmatprep.subr.mxu0 0.0
    %4149 = vmatpush1.msra.mxu0 0.0
    %4150 = vmatprep.subr.mxu0 0.0
    %4151 = vmatpush1.msra.mxu0 0.0
    %4152 = vmatprep.subr.mxu0 0.0
    %4153 = vmatpush1.msra.mxu0 0.0
    %4154 = vmatprep.subr.mxu0 0.0
    %4155 = vmatpush1.msra.mxu0 0.0
    %4156 = vmatprep.subr.mxu0 0.0
    %4157 = vmatpush1.msra.mxu0 0.0
    %4158 = vmatprep.subr.mxu0 0.0
    %v4159 = vand.u32 %v106, 4294901760
    %4160 = vmatpush1.msra.mxu0 %v4159
    %4161 = vmatprep.subr.mxu0 0.0
    %v4162 = vand.u32 %v105, 4294901760
    %4163 = vmatpush1.msra.mxu0 %v4162
    %4164 = vmatprep.subr.mxu0 0.0
    %v4165 = vand.u32 %v104, 4294901760
    %4166 = vmatpush1.msra.mxu0 %v4165
    %4167 = vmatprep.subr.mxu0 0.0
    %v4168 = vand.u32 %v103, 4294901760
    %4169 = vmatpush1.msra.mxu0 %v4168
    %4170 = vmatprep.subr.mxu0 0.0
    %4171 = vmatpush2.msra.mxu0 0.0
    %4172 = vmatprep.subr.mxu0 0.0
    %4173 = vmatpush2.msra.mxu0 0.0
    %4174 = vmatprep.subr.mxu0 0.0
    %4175 = vmatpush2.msra.mxu0 0.0
    %4176 = vmatprep.subr.mxu0 0.0
    %4177 = vmatpush2.msra.mxu0 0.0
    %4178 = vmatprep.subr.mxu0 0.0
    %4179 = vmatpush2.msra.mxu0 0.0
    %4180 = vmatprep.subr.mxu0 0.0
    %4181 = vmatpush2.msra.mxu0 0.0
    %4182 = vmatprep.subr.mxu0 0.0
    %4183 = vmatpush2.msra.mxu0 0.0
    %4184 = vmatprep.subr.mxu0 0.0
    %4185 = vmatpush2.msra.mxu0 0.0
    %4186 = vmatprep.subr.mxu0 0.0
    %4187 = vmatpush2.msra.mxu0 0.0
    %4188 = vmatprep.subr.mxu0 0.0
    %4189 = vmatpush2.msra.mxu0 0.0
    %4190 = vmatprep.subr.mxu0 0.0
    %4191 = vmatpush2.msra.mxu0 0.0
    %4192 = vmatprep.subr.mxu0 0.0
    %4193 = vmatpush2.msra.mxu0 0.0
    %4194 = vmatprep.subr.mxu0 0.0
    %4195 = vmatpush2.msra.mxu0 0.0
    %4196 = vmatprep.subr.mxu0 0.0
    %4197 = vmatpush2.msra.mxu0 0.0
    %4198 = vmatprep.subr.mxu0 0.0
    %4199 = vmatpush2.msra.mxu0 0.0
    %4200 = vmatprep.subr.mxu0 0.0
    %4201 = vmatpush2.msra.mxu0 0.0
    %4202 = vmatprep.mubr.f32.mxu0 0.0
    %v4203 = vand.u32 %v3622, 4294901760
    %v4204 = vsub.f32 %v3622, %v4203
    %v4205 = vand.u32 %v4204, 4294901760
    %v4206 = vsub.f32 %v4204, %v4205
    %v4207 = vand.u32 %v4206, 4294901760
    %4208 = vmatmul.mubr.f32.gmra.mxu0 %v4207
    %v4209 = vpop.f32.mrf.mxu0
    %v4210 = vadd.f32 0.0, %v4209
    %v4211 = vpop.f32.mrf.mxu0
    %4212 = vdwg.mxu0
    %4213 = vmatprep.subr.mxu0 0.0
    %4214 = vmatpush1.msra.mxu0 0.0
    %4215 = vmatprep.subr.mxu0 0.0
    %4216 = vmatpush1.msra.mxu0 0.0
    %4217 = vmatprep.subr.mxu0 0.0
    %4218 = vmatpush1.msra.mxu0 0.0
    %4219 = vmatprep.subr.mxu0 0.0
    %4220 = vmatpush1.msra.mxu0 0.0
    %4221 = vmatprep.subr.mxu0 0.0
    %4222 = vmatpush1.msra.mxu0 0.0
    %4223 = vmatprep.subr.mxu0 0.0
    %4224 = vmatpush1.msra.mxu0 0.0
    %4225 = vmatprep.subr.mxu0 0.0
    %4226 = vmatpush1.msra.mxu0 0.0
    %4227 = vmatprep.subr.mxu0 0.0
    %4228 = vmatpush1.msra.mxu0 0.0
    %4229 = vmatprep.subr.mxu0 0.0
    %4230 = vmatpush1.msra.mxu0 0.0
    %4231 = vmatprep.subr.mxu0 0.0
    %4232 = vmatpush1.msra.mxu0 0.0
    %4233 = vmatprep.subr.mxu0 0.0
    %4234 = vmatpush1.msra.mxu0 0.0
    %4235 = vmatprep.subr.mxu0 0.0
    %4236 = vmatpush1.msra.mxu0 0.0
    %4237 = vmatprep.subr.mxu0 0.0
    %v4238 = vand.u32 %v106, 4294901760
    %v4239 = vsub.f32 %v106, %v4238
    %v4240 = vand.u32 %v4239, 4294901760
    %v4241 = vsub.f32 %v4239, %v4240
    %v4242 = vand.u32 %v4241, 4294901760
    %4243 = vmatpush1.msra.mxu0 %v4242
    %4244 = vmatprep.subr.mxu0 0.0
    %v4245 = vand.u32 %v105, 4294901760
    %v4246 = vsub.f32 %v105, %v4245
    %v4247 = vand.u32 %v4246, 4294901760
    %v4248 = vsub.f32 %v4246, %v4247
    %v4249 = vand.u32 %v4248, 4294901760
    %4250 = vmatpush1.msra.mxu0 %v4249
    %4251 = vmatprep.subr.mxu0 0.0
    %v4252 = vand.u32 %v104, 4294901760
    %v4253 = vsub.f32 %v104, %v4252
    %v4254 = vand.u32 %v4253, 4294901760
    %v4255 = vsub.f32 %v4253, %v4254
    %v4256 = vand.u32 %v4255, 4294901760
    %4257 = vmatpush1.msra.mxu0 %v4256
    %4258 = vmatprep.subr.mxu0 0.0
    %v4259 = vand.u32 %v103, 4294901760
    %v4260 = vsub.f32 %v103, %v4259
    %v4261 = vand.u32 %v4260, 4294901760
    %v4262 = vsub.f32 %v4260, %v4261
    %v4263 = vand.u32 %v4262, 4294901760
    %4264 = vmatpush1.msra.mxu0 %v4263
    %4265 = vmatprep.subr.mxu0 0.0
    %4266 = vmatpush2.msra.mxu0 0.0
    %4267 = vmatprep.subr.mxu0 0.0
    %4268 = vmatpush2.msra.mxu0 0.0
    %4269 = vmatprep.subr.mxu0 0.0
    %4270 = vmatpush2.msra.mxu0 0.0
    %4271 = vmatprep.subr.mxu0 0.0
    %4272 = vmatpush2.msra.mxu0 0.0
    %4273 = vmatprep.subr.mxu0 0.0
    %4274 = vmatpush2.msra.mxu0 0.0
    %4275 = vmatprep.subr.mxu0 0.0
    %4276 = vmatpush2.msra.mxu0 0.0
    %4277 = vmatprep.subr.mxu0 0.0
    %4278 = vmatpush2.msra.mxu0 0.0
    %4279 = vmatprep.subr.mxu0 0.0
    %4280 = vmatpush2.msra.mxu0 0.0
    %4281 = vmatprep.subr.mxu0 0.0
    %4282 = vmatpush2.msra.mxu0 0.0
    %4283 = vmatprep.subr.mxu0 0.0
    %4284 = vmatpush2.msra.mxu0 0.0
    %4285 = vmatprep.subr.mxu0 0.0
    %4286 = vmatpush2.msra.mxu0 0.0
    %4287 = vmatprep.subr.mxu0 0.0
    %4288 = vmatpush2.msra.mxu0 0.0
    %4289 = vmatprep.subr.mxu0 0.0
    %4290 = vmatpush2.msra.mxu0 0.0
    %4291 = vmatprep.subr.mxu0 0.0
    %4292 = vmatpush2.msra.mxu0 0.0
    %4293 = vmatprep.subr.mxu0 0.0
    %4294 = vmatpush2.msra.mxu0 0.0
    %4295 = vmatprep.subr.mxu0 0.0
    %4296 = vmatpush2.msra.mxu0 0.0
    %4297 = vmatprep.mubr.f32.mxu0 0.0
    %v4298 = vand.u32 %v3622, 4294901760
    %4299 = vmatmul.mubr.f32.gmra.mxu0 %v4298
    %v4300 = vpop.f32.mrf.mxu0
    %v4301 = vadd.f32 %v4210, %v4300
    %v4302 = vpop.f32.mrf.mxu0
    %4303 = vdwg.mxu0
    %4304 = vmatprep.subr.mxu0 0.0
    %4305 = vmatpush1.msra.mxu0 0.0
    %4306 = vmatprep.subr.mxu0 0.0
    %4307 = vmatpush1.msra.mxu0 0.0
    %4308 = vmatprep.subr.mxu0 0.0
    %4309 = vmatpush1.msra.mxu0 0.0
    %4310 = vmatprep.subr.mxu0 0.0
    %4311 = vmatpush1.msra.mxu0 0.0
    %4312 = vmatprep.subr.mxu0 0.0
    %4313 = vmatpush1.msra.mxu0 0.0
    %4314 = vmatprep.subr.mxu0 0.0
    %4315 = vmatpush1.msra.mxu0 0.0
    %4316 = vmatprep.subr.mxu0 0.0
    %4317 = vmatpush1.msra.mxu0 0.0
    %4318 = vmatprep.subr.mxu0 0.0
    %4319 = vmatpush1.msra.mxu0 0.0
    %4320 = vmatprep.subr.mxu0 0.0
    %4321 = vmatpush1.msra.mxu0 0.0
    %4322 = vmatprep.subr.mxu0 0.0
    %4323 = vmatpush1.msra.mxu0 0.0
    %4324 = vmatprep.subr.mxu0 0.0
    %4325 = vmatpush1.msra.mxu0 0.0
    %4326 = vmatprep.subr.mxu0 0.0
    %4327 = vmatpush1.msra.mxu0 0.0
    %4328 = vmatprep.subr.mxu0 0.0
    %v4329 = vand.u32 %v106, 4294901760
    %v4330 = vsub.f32 %v106, %v4329
    %4331 = vmatpush1.msra.mxu0 %v4330
    %4332 = vmatprep.subr.mxu0 0.0
    %v4333 = vand.u32 %v105, 4294901760
    %v4334 = vsub.f32 %v105, %v4333
    %4335 = vmatpush1.msra.mxu0 %v4334
    %4336 = vmatprep.subr.mxu0 0.0
    %v4337 = vand.u32 %v104, 4294901760
    %v4338 = vsub.f32 %v104, %v4337
    %4339 = vmatpush1.msra.mxu0 %v4338
    %4340 = vmatprep.subr.mxu0 0.0
    %v4341 = vand.u32 %v103, 4294901760
    %v4342 = vsub.f32 %v103, %v4341
    %4343 = vmatpush1.msra.mxu0 %v4342
    %4344 = vmatprep.subr.mxu0 0.0
    %4345 = vmatpush2.msra.mxu0 0.0
    %4346 = vmatprep.subr.mxu0 0.0
    %4347 = vmatpush2.msra.mxu0 0.0
    %4348 = vmatprep.subr.mxu0 0.0
    %4349 = vmatpush2.msra.mxu0 0.0
    %4350 = vmatprep.subr.mxu0 0.0
    %4351 = vmatpush2.msra.mxu0 0.0
    %4352 = vmatprep.subr.mxu0 0.0
    %4353 = vmatpush2.msra.mxu0 0.0
    %4354 = vmatprep.subr.mxu0 0.0
    %4355 = vmatpush2.msra.mxu0 0.0
    %4356 = vmatprep.subr.mxu0 0.0
    %4357 = vmatpush2.msra.mxu0 0.0
    %4358 = vmatprep.subr.mxu0 0.0
    %4359 = vmatpush2.msra.mxu0 0.0
    %4360 = vmatprep.subr.mxu0 0.0
    %4361 = vmatpush2.msra.mxu0 0.0
    %4362 = vmatprep.subr.mxu0 0.0
    %4363 = vmatpush2.msra.mxu0 0.0
    %4364 = vmatprep.subr.mxu0 0.0
    %4365 = vmatpush2.msra.mxu0 0.0
    %4366 = vmatprep.subr.mxu0 0.0
    %4367 = vmatpush2.msra.mxu0 0.0
    %4368 = vmatprep.subr.mxu0 0.0
    %4369 = vmatpush2.msra.mxu0 0.0
    %4370 = vmatprep.subr.mxu0 0.0
    %4371 = vmatpush2.msra.mxu0 0.0
    %4372 = vmatprep.subr.mxu0 0.0
    %4373 = vmatpush2.msra.mxu0 0.0
    %4374 = vmatprep.subr.mxu0 0.0
    %4375 = vmatpush2.msra.mxu0 0.0
    %4376 = vmatprep.mubr.f32.mxu0 0.0
    %v4377 = vand.u32 %v3622, 4294901760
    %v4378 = vsub.f32 %v3622, %v4377
    %4379 = vmatmul.mubr.f32.gmra.mxu0 %v4378
    %v4380 = vpop.f32.mrf.mxu0
    %v4381 = vadd.f32 %v4301, %v4380
    %v4382 = vpop.f32.mrf.mxu0
    %4383 = vdwg.mxu0
    %4384 = vmatprep.subr.mxu0 0.0
    %4385 = vmatpush1.msra.mxu0 0.0
    %4386 = vmatprep.subr.mxu0 0.0
    %4387 = vmatpush1.msra.mxu0 0.0
    %4388 = vmatprep.subr.mxu0 0.0
    %4389 = vmatpush1.msra.mxu0 0.0
    %4390 = vmatprep.subr.mxu0 0.0
    %4391 = vmatpush1.msra.mxu0 0.0
    %4392 = vmatprep.subr.mxu0 0.0
    %4393 = vmatpush1.msra.mxu0 0.0
    %4394 = vmatprep.subr.mxu0 0.0
    %4395 = vmatpush1.msra.mxu0 0.0
    %4396 = vmatprep.subr.mxu0 0.0
    %4397 = vmatpush1.msra.mxu0 0.0
    %4398 = vmatprep.subr.mxu0 0.0
    %4399 = vmatpush1.msra.mxu0 0.0
    %4400 = vmatprep.subr.mxu0 0.0
    %4401 = vmatpush1.msra.mxu0 0.0
    %4402 = vmatprep.subr.mxu0 0.0
    %4403 = vmatpush1.msra.mxu0 0.0
    %4404 = vmatprep.subr.mxu0 0.0
    %4405 = vmatpush1.msra.mxu0 0.0
    %4406 = vmatprep.subr.mxu0 0.0
    %4407 = vmatpush1.msra.mxu0 0.0
    %4408 = vmatprep.subr.mxu0 0.0
    %v4409 = vand.u32 %v106, 4294901760
    %4410 = vmatpush1.msra.mxu0 %v4409
    %4411 = vmatprep.subr.mxu0 0.0
    %v4412 = vand.u32 %v105, 4294901760
    %4413 = vmatpush1.msra.mxu0 %v4412
    %4414 = vmatprep.subr.mxu0 0.0
    %v4415 = vand.u32 %v104, 4294901760
    %4416 = vmatpush1.msra.mxu0 %v4415
    %4417 = vmatprep.subr.mxu0 0.0
    %v4418 = vand.u32 %v103, 4294901760
    %4419 = vmatpush1.msra.mxu0 %v4418
    %4420 = vmatprep.subr.mxu0 0.0
    %4421 = vmatpush2.msra.mxu0 0.0
    %4422 = vmatprep.subr.mxu0 0.0
    %4423 = vmatpush2.msra.mxu0 0.0
    %4424 = vmatprep.subr.mxu0 0.0
    %4425 = vmatpush2.msra.mxu0 0.0
    %4426 = vmatprep.subr.mxu0 0.0
    %4427 = vmatpush2.msra.mxu0 0.0
    %4428 = vmatprep.subr.mxu0 0.0
    %4429 = vmatpush2.msra.mxu0 0.0
    %4430 = vmatprep.subr.mxu0 0.0
    %4431 = vmatpush2.msra.mxu0 0.0
    %4432 = vmatprep.subr.mxu0 0.0
    %4433 = vmatpush2.msra.mxu0 0.0
    %4434 = vmatprep.subr.mxu0 0.0
    %4435 = vmatpush2.msra.mxu0 0.0
    %4436 = vmatprep.subr.mxu0 0.0
    %4437 = vmatpush2.msra.mxu0 0.0
    %4438 = vmatprep.subr.mxu0 0.0
    %4439 = vmatpush2.msra.mxu0 0.0
    %4440 = vmatprep.subr.mxu0 0.0
    %4441 = vmatpush2.msra.mxu0 0.0
    %4442 = vmatprep.subr.mxu0 0.0
    %4443 = vmatpush2.msra.mxu0 0.0
    %4444 = vmatprep.subr.mxu0 0.0
    %4445 = vmatpush2.msra.mxu0 0.0
    %4446 = vmatprep.subr.mxu0 0.0
    %4447 = vmatpush2.msra.mxu0 0.0
    %4448 = vmatprep.subr.mxu0 0.0
    %4449 = vmatpush2.msra.mxu0 0.0
    %4450 = vmatprep.subr.mxu0 0.0
    %4451 = vmatpush2.msra.mxu0 0.0
    %4452 = vmatprep.mubr.f32.mxu0 0.0
    %v4453 = vand.u32 %v3622, 4294901760
    %v4454 = vsub.f32 %v3622, %v4453
    %v4455 = vand.u32 %v4454, 4294901760
    %4456 = vmatmul.mubr.f32.gmra.mxu0 %v4455
    %v4457 = vpop.f32.mrf.mxu0
    %v4458 = vadd.f32 %v4381, %v4457
    %v4459 = vpop.f32.mrf.mxu0
    %4460 = vdwg.mxu0
    %4461 = vmatprep.subr.mxu0 0.0
    %4462 = vmatpush1.msra.mxu0 0.0
    %4463 = vmatprep.subr.mxu0 0.0
    %4464 = vmatpush1.msra.mxu0 0.0
    %4465 = vmatprep.subr.mxu0 0.0
    %4466 = vmatpush1.msra.mxu0 0.0
    %4467 = vmatprep.subr.mxu0 0.0
    %4468 = vmatpush1.msra.mxu0 0.0
    %4469 = vmatprep.subr.mxu0 0.0
    %4470 = vmatpush1.msra.mxu0 0.0
    %4471 = vmatprep.subr.mxu0 0.0
    %4472 = vmatpush1.msra.mxu0 0.0
    %4473 = vmatprep.subr.mxu0 0.0
    %4474 = vmatpush1.msra.mxu0 0.0
    %4475 = vmatprep.subr.mxu0 0.0
    %4476 = vmatpush1.msra.mxu0 0.0
    %4477 = vmatprep.subr.mxu0 0.0
    %4478 = vmatpush1.msra.mxu0 0.0
    %4479 = vmatprep.subr.mxu0 0.0
    %4480 = vmatpush1.msra.mxu0 0.0
    %4481 = vmatprep.subr.mxu0 0.0
    %4482 = vmatpush1.msra.mxu0 0.0
    %4483 = vmatprep.subr.mxu0 0.0
    %4484 = vmatpush1.msra.mxu0 0.0
    %4485 = vmatprep.subr.mxu0 0.0
    %v4486 = vand.u32 %v106, 4294901760
    %v4487 = vsub.f32 %v106, %v4486
    %v4488 = vand.u32 %v4487, 4294901760
    %4489 = vmatpush1.msra.mxu0 %v4488
    %4490 = vmatprep.subr.mxu0 0.0
    %v4491 = vand.u32 %v105, 4294901760
    %v4492 = vsub.f32 %v105, %v4491
    %v4493 = vand.u32 %v4492, 4294901760
    %4494 = vmatpush1.msra.mxu0 %v4493
    %4495 = vmatprep.subr.mxu0 0.0
    %v4496 = vand.u32 %v104, 4294901760
    %v4497 = vsub.f32 %v104, %v4496
    %v4498 = vand.u32 %v4497, 4294901760
    %4499 = vmatpush1.msra.mxu0 %v4498
    %4500 = vmatprep.subr.mxu0 0.0
    %v4501 = vand.u32 %v103, 4294901760
    %v4502 = vsub.f32 %v103, %v4501
    %v4503 = vand.u32 %v4502, 4294901760
    %4504 = vmatpush1.msra.mxu0 %v4503
    %4505 = vmatprep.subr.mxu0 0.0
    %4506 = vmatpush2.msra.mxu0 0.0
    %4507 = vmatprep.subr.mxu0 0.0
    %4508 = vmatpush2.msra.mxu0 0.0
    %4509 = vmatprep.subr.mxu0 0.0
    %4510 = vmatpush2.msra.mxu0 0.0
    %4511 = vmatprep.subr.mxu0 0.0
    %4512 = vmatpush2.msra.mxu0 0.0
    %4513 = vmatprep.subr.mxu0 0.0
    %4514 = vmatpush2.msra.mxu0 0.0
    %4515 = vmatprep.subr.mxu0 0.0
    %4516 = vmatpush2.msra.mxu0 0.0
    %4517 = vmatprep.subr.mxu0 0.0
    %4518 = vmatpush2.msra.mxu0 0.0
    %4519 = vmatprep.subr.mxu0 0.0
    %4520 = vmatpush2.msra.mxu0 0.0
    %4521 = vmatprep.subr.mxu0 0.0
    %4522 = vmatpush2.msra.mxu0 0.0
    %4523 = vmatprep.subr.mxu0 0.0
    %4524 = vmatpush2.msra.mxu0 0.0
    %4525 = vmatprep.subr.mxu0 0.0
    %4526 = vmatpush2.msra.mxu0 0.0
    %4527 = vmatprep.subr.mxu0 0.0
    %4528 = vmatpush2.msra.mxu0 0.0
    %4529 = vmatprep.subr.mxu0 0.0
    %4530 = vmatpush2.msra.mxu0 0.0
    %4531 = vmatprep.subr.mxu0 0.0
    %4532 = vmatpush2.msra.mxu0 0.0
    %4533 = vmatprep.subr.mxu0 0.0
    %4534 = vmatpush2.msra.mxu0 0.0
    %4535 = vmatprep.subr.mxu0 0.0
    %4536 = vmatpush2.msra.mxu0 0.0
    %4537 = vmatprep.mubr.f32.mxu0 0.0
    %v4538 = vand.u32 %v3622, 4294901760
    %4539 = vmatmul.mubr.f32.gmra.mxu0 %v4538
    %v4540 = vpop.f32.mrf.mxu0
    %v4541 = vadd.f32 %v4458, %v4540
    %v4542 = vpop.f32.mrf.mxu0
    %4543 = vdwg.mxu0
    %4544 = vmatprep.subr.mxu0 0.0
    %4545 = vmatpush1.msra.mxu0 0.0
    %4546 = vmatprep.subr.mxu0 0.0
    %4547 = vmatpush1.msra.mxu0 0.0
    %4548 = vmatprep.subr.mxu0 0.0
    %4549 = vmatpush1.msra.mxu0 0.0
    %4550 = vmatprep.subr.mxu0 0.0
    %4551 = vmatpush1.msra.mxu0 0.0
    %4552 = vmatprep.subr.mxu0 0.0
    %4553 = vmatpush1.msra.mxu0 0.0
    %4554 = vmatprep.subr.mxu0 0.0
    %4555 = vmatpush1.msra.mxu0 0.0
    %4556 = vmatprep.subr.mxu0 0.0
    %4557 = vmatpush1.msra.mxu0 0.0
    %4558 = vmatprep.subr.mxu0 0.0
    %4559 = vmatpush1.msra.mxu0 0.0
    %4560 = vmatprep.subr.mxu0 0.0
    %4561 = vmatpush1.msra.mxu0 0.0
    %4562 = vmatprep.subr.mxu0 0.0
    %4563 = vmatpush1.msra.mxu0 0.0
    %4564 = vmatprep.subr.mxu0 0.0
    %4565 = vmatpush1.msra.mxu0 0.0
    %4566 = vmatprep.subr.mxu0 0.0
    %4567 = vmatpush1.msra.mxu0 0.0
    %4568 = vmatprep.subr.mxu0 0.0
    %v4569 = vand.u32 %v106, 4294901760
    %4570 = vmatpush1.msra.mxu0 %v4569
    %4571 = vmatprep.subr.mxu0 0.0
    %v4572 = vand.u32 %v105, 4294901760
    %4573 = vmatpush1.msra.mxu0 %v4572
    %4574 = vmatprep.subr.mxu0 0.0
    %v4575 = vand.u32 %v104, 4294901760
    %4576 = vmatpush1.msra.mxu0 %v4575
    %4577 = vmatprep.subr.mxu0 0.0
    %v4578 = vand.u32 %v103, 4294901760
    %4579 = vmatpush1.msra.mxu0 %v4578
    %4580 = vmatprep.subr.mxu0 0.0
    %4581 = vmatpush2.msra.mxu0 0.0
    %4582 = vmatprep.subr.mxu0 0.0
    %4583 = vmatpush2.msra.mxu0 0.0
    %4584 = vmatprep.subr.mxu0 0.0
    %4585 = vmatpush2.msra.mxu0 0.0
    %4586 = vmatprep.subr.mxu0 0.0
    %4587 = vmatpush2.msra.mxu0 0.0
    %4588 = vmatprep.subr.mxu0 0.0
    %4589 = vmatpush2.msra.mxu0 0.0
    %4590 = vmatprep.subr.mxu0 0.0
    %4591 = vmatpush2.msra.mxu0 0.0
    %4592 = vmatprep.subr.mxu0 0.0
    %4593 = vmatpush2.msra.mxu0 0.0
    %4594 = vmatprep.subr.mxu0 0.0
    %4595 = vmatpush2.msra.mxu0 0.0
    %4596 = vmatprep.subr.mxu0 0.0
    %4597 = vmatpush2.msra.mxu0 0.0
    %4598 = vmatprep.subr.mxu0 0.0
    %4599 = vmatpush2.msra.mxu0 0.0
    %4600 = vmatprep.subr.mxu0 0.0
    %4601 = vmatpush2.msra.mxu0 0.0
    %4602 = vmatprep.subr.mxu0 0.0
    %4603 = vmatpush2.msra.mxu0 0.0
    %4604 = vmatprep.subr.mxu0 0.0
    %4605 = vmatpush2.msra.mxu0 0.0
    %4606 = vmatprep.subr.mxu0 0.0
    %4607 = vmatpush2.msra.mxu0 0.0
    %4608 = vmatprep.subr.mxu0 0.0
    %4609 = vmatpush2.msra.mxu0 0.0
    %4610 = vmatprep.subr.mxu0 0.0
    %4611 = vmatpush2.msra.mxu0 0.0
    %4612 = vmatprep.mubr.f32.mxu0 0.0
    %v4613 = vand.u32 %v3622, 4294901760
    %4614 = vmatmul.mubr.f32.gmra.mxu0 %v4613
    %v4615 = vpop.f32.mrf.mxu0
    %v4616 = vadd.f32 %v4541, %v4615
    %v4617 = vpop.f32.mrf.mxu0
    %4618 = vdwg.mxu0
    %v4620 = vsel %vm117, %v97, 0
    %4622 = vmatprep.subr.mxu0 0.0
    %4623 = vmatpush1.msra.mxu0 0.0
    %4624 = vmatprep.subr.mxu0 0.0
    %4625 = vmatpush1.msra.mxu0 0.0
    %4626 = vmatprep.subr.mxu0 0.0
    %4627 = vmatpush1.msra.mxu0 0.0
    %4628 = vmatprep.subr.mxu0 0.0
    %4629 = vmatpush1.msra.mxu0 0.0
    %4630 = vmatprep.subr.mxu0 0.0
    %4631 = vmatpush1.msra.mxu0 0.0
    %4632 = vmatprep.subr.mxu0 0.0
    %4633 = vmatpush1.msra.mxu0 0.0
    %4634 = vmatprep.subr.mxu0 0.0
    %4635 = vmatpush1.msra.mxu0 0.0
    %4636 = vmatprep.subr.mxu0 0.0
    %4637 = vmatpush1.msra.mxu0 0.0
    %4638 = vmatprep.subr.mxu0 0.0
    %4639 = vmatpush1.msra.mxu0 0.0
    %4640 = vmatprep.subr.mxu0 0.0
    %4641 = vmatpush1.msra.mxu0 0.0
    %4642 = vmatprep.subr.mxu0 0.0
    %4643 = vmatpush1.msra.mxu0 0.0
    %4644 = vmatprep.subr.mxu0 0.0
    %4645 = vmatpush1.msra.mxu0 0.0
    %4646 = vmatprep.subr.mxu0 0.0
    %v4647 = vand.u32 %v102, 4294901760
    %4648 = vmatpush1.msra.mxu0 %v4647
    %4649 = vmatprep.subr.mxu0 0.0
    %v4650 = vand.u32 %v101, 4294901760
    %4651 = vmatpush1.msra.mxu0 %v4650
    %4652 = vmatprep.subr.mxu0 0.0
    %v4653 = vand.u32 %v100, 4294901760
    %4654 = vmatpush1.msra.mxu0 %v4653
    %4655 = vmatprep.subr.mxu0 0.0
    %v4656 = vand.u32 %v99, 4294901760
    %4657 = vmatpush1.msra.mxu0 %v4656
    %4658 = vmatprep.subr.mxu0 0.0
    %4659 = vmatpush2.msra.mxu0 0.0
    %4660 = vmatprep.subr.mxu0 0.0
    %4661 = vmatpush2.msra.mxu0 0.0
    %4662 = vmatprep.subr.mxu0 0.0
    %4663 = vmatpush2.msra.mxu0 0.0
    %4664 = vmatprep.subr.mxu0 0.0
    %4665 = vmatpush2.msra.mxu0 0.0
    %4666 = vmatprep.subr.mxu0 0.0
    %4667 = vmatpush2.msra.mxu0 0.0
    %4668 = vmatprep.subr.mxu0 0.0
    %4669 = vmatpush2.msra.mxu0 0.0
    %4670 = vmatprep.subr.mxu0 0.0
    %4671 = vmatpush2.msra.mxu0 0.0
    %4672 = vmatprep.subr.mxu0 0.0
    %4673 = vmatpush2.msra.mxu0 0.0
    %4674 = vmatprep.subr.mxu0 0.0
    %4675 = vmatpush2.msra.mxu0 0.0
    %4676 = vmatprep.subr.mxu0 0.0
    %4677 = vmatpush2.msra.mxu0 0.0
    %4678 = vmatprep.subr.mxu0 0.0
    %4679 = vmatpush2.msra.mxu0 0.0
    %4680 = vmatprep.subr.mxu0 0.0
    %4681 = vmatpush2.msra.mxu0 0.0
    %4682 = vmatprep.subr.mxu0 0.0
    %4683 = vmatpush2.msra.mxu0 0.0
    %4684 = vmatprep.subr.mxu0 0.0
    %4685 = vmatpush2.msra.mxu0 0.0
    %4686 = vmatprep.subr.mxu0 0.0
    %4687 = vmatpush2.msra.mxu0 0.0
    %4688 = vmatprep.subr.mxu0 0.0
    %4689 = vmatpush2.msra.mxu0 0.0
    %4690 = vmatprep.mubr.f32.mxu0 0.0
    %v4691 = vand.u32 %v4620, 4294901760
    %v4692 = vsub.f32 %v4620, %v4691
    %v4693 = vand.u32 %v4692, 4294901760
    %v4694 = vsub.f32 %v4692, %v4693
    %v4695 = vand.u32 %v4694, 4294901760
    %4696 = vmatmul.mubr.f32.gmra.mxu0 %v4695
    %v4697 = vpop.f32.mrf.mxu0
    %v4698 = vadd.f32 %v4616, %v4697
    %v4699 = vpop.f32.mrf.mxu0
    %4700 = vdwg.mxu0
    %4701 = vmatprep.subr.mxu0 0.0
    %4702 = vmatpush1.msra.mxu0 0.0
    %4703 = vmatprep.subr.mxu0 0.0
    %4704 = vmatpush1.msra.mxu0 0.0
    %4705 = vmatprep.subr.mxu0 0.0
    %4706 = vmatpush1.msra.mxu0 0.0
    %4707 = vmatprep.subr.mxu0 0.0
    %4708 = vmatpush1.msra.mxu0 0.0
    %4709 = vmatprep.subr.mxu0 0.0
    %4710 = vmatpush1.msra.mxu0 0.0
    %4711 = vmatprep.subr.mxu0 0.0
    %4712 = vmatpush1.msra.mxu0 0.0
    %4713 = vmatprep.subr.mxu0 0.0
    %4714 = vmatpush1.msra.mxu0 0.0
    %4715 = vmatprep.subr.mxu0 0.0
    %4716 = vmatpush1.msra.mxu0 0.0
    %4717 = vmatprep.subr.mxu0 0.0
    %4718 = vmatpush1.msra.mxu0 0.0
    %4719 = vmatprep.subr.mxu0 0.0
    %4720 = vmatpush1.msra.mxu0 0.0
    %4721 = vmatprep.subr.mxu0 0.0
    %4722 = vmatpush1.msra.mxu0 0.0
    %4723 = vmatprep.subr.mxu0 0.0
    %4724 = vmatpush1.msra.mxu0 0.0
    %4725 = vmatprep.subr.mxu0 0.0
    %v4726 = vand.u32 %v102, 4294901760
    %v4727 = vsub.f32 %v102, %v4726
    %v4728 = vand.u32 %v4727, 4294901760
    %v4729 = vsub.f32 %v4727, %v4728
    %v4730 = vand.u32 %v4729, 4294901760
    %4731 = vmatpush1.msra.mxu0 %v4730
    %4732 = vmatprep.subr.mxu0 0.0
    %v4733 = vand.u32 %v101, 4294901760
    %v4734 = vsub.f32 %v101, %v4733
    %v4735 = vand.u32 %v4734, 4294901760
    %v4736 = vsub.f32 %v4734, %v4735
    %v4737 = vand.u32 %v4736, 4294901760
    %4738 = vmatpush1.msra.mxu0 %v4737
    %4739 = vmatprep.subr.mxu0 0.0
    %v4740 = vand.u32 %v100, 4294901760
    %v4741 = vsub.f32 %v100, %v4740
    %v4742 = vand.u32 %v4741, 4294901760
    %v4743 = vsub.f32 %v4741, %v4742
    %v4744 = vand.u32 %v4743, 4294901760
    %4745 = vmatpush1.msra.mxu0 %v4744
    %4746 = vmatprep.subr.mxu0 0.0
    %v4747 = vand.u32 %v99, 4294901760
    %v4748 = vsub.f32 %v99, %v4747
    %v4749 = vand.u32 %v4748, 4294901760
    %v4750 = vsub.f32 %v4748, %v4749
    %v4751 = vand.u32 %v4750, 4294901760
    %4752 = vmatpush1.msra.mxu0 %v4751
    %4753 = vmatprep.subr.mxu0 0.0
    %4754 = vmatpush2.msra.mxu0 0.0
    %4755 = vmatprep.subr.mxu0 0.0
    %4756 = vmatpush2.msra.mxu0 0.0
    %4757 = vmatprep.subr.mxu0 0.0
    %4758 = vmatpush2.msra.mxu0 0.0
    %4759 = vmatprep.subr.mxu0 0.0
    %4760 = vmatpush2.msra.mxu0 0.0
    %4761 = vmatprep.subr.mxu0 0.0
    %4762 = vmatpush2.msra.mxu0 0.0
    %4763 = vmatprep.subr.mxu0 0.0
    %4764 = vmatpush2.msra.mxu0 0.0
    %4765 = vmatprep.subr.mxu0 0.0
    %4766 = vmatpush2.msra.mxu0 0.0
    %4767 = vmatprep.subr.mxu0 0.0
    %4768 = vmatpush2.msra.mxu0 0.0
    %4769 = vmatprep.subr.mxu0 0.0
    %4770 = vmatpush2.msra.mxu0 0.0
    %4771 = vmatprep.subr.mxu0 0.0
    %4772 = vmatpush2.msra.mxu0 0.0
    %4773 = vmatprep.subr.mxu0 0.0
    %4774 = vmatpush2.msra.mxu0 0.0
    %4775 = vmatprep.subr.mxu0 0.0
    %4776 = vmatpush2.msra.mxu0 0.0
    %4777 = vmatprep.subr.mxu0 0.0
    %4778 = vmatpush2.msra.mxu0 0.0
    %4779 = vmatprep.subr.mxu0 0.0
    %4780 = vmatpush2.msra.mxu0 0.0
    %4781 = vmatprep.subr.mxu0 0.0
    %4782 = vmatpush2.msra.mxu0 0.0
    %4783 = vmatprep.subr.mxu0 0.0
    %4784 = vmatpush2.msra.mxu0 0.0
    %4785 = vmatprep.mubr.f32.mxu0 0.0
    %v4786 = vand.u32 %v4620, 4294901760
    %4787 = vmatmul.mubr.f32.gmra.mxu0 %v4786
    %v4788 = vpop.f32.mrf.mxu0
    %v4789 = vadd.f32 %v4698, %v4788
    %v4790 = vpop.f32.mrf.mxu0
    %4791 = vdwg.mxu0
    %4792 = vmatprep.subr.mxu0 0.0
    %4793 = vmatpush1.msra.mxu0 0.0
    %4794 = vmatprep.subr.mxu0 0.0
    %4795 = vmatpush1.msra.mxu0 0.0
    %4796 = vmatprep.subr.mxu0 0.0
    %4797 = vmatpush1.msra.mxu0 0.0
    %4798 = vmatprep.subr.mxu0 0.0
    %4799 = vmatpush1.msra.mxu0 0.0
    %4800 = vmatprep.subr.mxu0 0.0
    %4801 = vmatpush1.msra.mxu0 0.0
    %4802 = vmatprep.subr.mxu0 0.0
    %4803 = vmatpush1.msra.mxu0 0.0
    %4804 = vmatprep.subr.mxu0 0.0
    %4805 = vmatpush1.msra.mxu0 0.0
    %4806 = vmatprep.subr.mxu0 0.0
    %4807 = vmatpush1.msra.mxu0 0.0
    %4808 = vmatprep.subr.mxu0 0.0
    %4809 = vmatpush1.msra.mxu0 0.0
    %4810 = vmatprep.subr.mxu0 0.0
    %4811 = vmatpush1.msra.mxu0 0.0
    %4812 = vmatprep.subr.mxu0 0.0
    %4813 = vmatpush1.msra.mxu0 0.0
    %4814 = vmatprep.subr.mxu0 0.0
    %4815 = vmatpush1.msra.mxu0 0.0
    %4816 = vmatprep.subr.mxu0 0.0
    %v4817 = vand.u32 %v102, 4294901760
    %v4818 = vsub.f32 %v102, %v4817
    %4819 = vmatpush1.msra.mxu0 %v4818
    %4820 = vmatprep.subr.mxu0 0.0
    %v4821 = vand.u32 %v101, 4294901760
    %v4822 = vsub.f32 %v101, %v4821
    %4823 = vmatpush1.msra.mxu0 %v4822
    %4824 = vmatprep.subr.mxu0 0.0
    %v4825 = vand.u32 %v100, 4294901760
    %v4826 = vsub.f32 %v100, %v4825
    %4827 = vmatpush1.msra.mxu0 %v4826
    %4828 = vmatprep.subr.mxu0 0.0
    %v4829 = vand.u32 %v99, 4294901760
    %v4830 = vsub.f32 %v99, %v4829
    %4831 = vmatpush1.msra.mxu0 %v4830
    %4832 = vmatprep.subr.mxu0 0.0
    %4833 = vmatpush2.msra.mxu0 0.0
    %4834 = vmatprep.subr.mxu0 0.0
    %4835 = vmatpush2.msra.mxu0 0.0
    %4836 = vmatprep.subr.mxu0 0.0
    %4837 = vmatpush2.msra.mxu0 0.0
    %4838 = vmatprep.subr.mxu0 0.0
    %4839 = vmatpush2.msra.mxu0 0.0
    %4840 = vmatprep.subr.mxu0 0.0
    %4841 = vmatpush2.msra.mxu0 0.0
    %4842 = vmatprep.subr.mxu0 0.0
    %4843 = vmatpush2.msra.mxu0 0.0
    %4844 = vmatprep.subr.mxu0 0.0
    %4845 = vmatpush2.msra.mxu0 0.0
    %4846 = vmatprep.subr.mxu0 0.0
    %4847 = vmatpush2.msra.mxu0 0.0
    %4848 = vmatprep.subr.mxu0 0.0
    %4849 = vmatpush2.msra.mxu0 0.0
    %4850 = vmatprep.subr.mxu0 0.0
    %4851 = vmatpush2.msra.mxu0 0.0
    %4852 = vmatprep.subr.mxu0 0.0
    %4853 = vmatpush2.msra.mxu0 0.0
    %4854 = vmatprep.subr.mxu0 0.0
    %4855 = vmatpush2.msra.mxu0 0.0
    %4856 = vmatprep.subr.mxu0 0.0
    %4857 = vmatpush2.msra.mxu0 0.0
    %4858 = vmatprep.subr.mxu0 0.0
    %4859 = vmatpush2.msra.mxu0 0.0
    %4860 = vmatprep.subr.mxu0 0.0
    %4861 = vmatpush2.msra.mxu0 0.0
    %4862 = vmatprep.subr.mxu0 0.0
    %4863 = vmatpush2.msra.mxu0 0.0
    %4864 = vmatprep.mubr.f32.mxu0 0.0
    %v4865 = vand.u32 %v4620, 4294901760
    %v4866 = vsub.f32 %v4620, %v4865
    %4867 = vmatmul.mubr.f32.gmra.mxu0 %v4866
    %v4868 = vpop.f32.mrf.mxu0
    %v4869 = vadd.f32 %v4789, %v4868
    %v4870 = vpop.f32.mrf.mxu0
    %4871 = vdwg.mxu0
    %4872 = vmatprep.subr.mxu0 0.0
    %4873 = vmatpush1.msra.mxu0 0.0
    %4874 = vmatprep.subr.mxu0 0.0
    %4875 = vmatpush1.msra.mxu0 0.0
    %4876 = vmatprep.subr.mxu0 0.0
    %4877 = vmatpush1.msra.mxu0 0.0
    %4878 = vmatprep.subr.mxu0 0.0
    %4879 = vmatpush1.msra.mxu0 0.0
    %4880 = vmatprep.subr.mxu0 0.0
    %4881 = vmatpush1.msra.mxu0 0.0
    %4882 = vmatprep.subr.mxu0 0.0
    %4883 = vmatpush1.msra.mxu0 0.0
    %4884 = vmatprep.subr.mxu0 0.0
    %4885 = vmatpush1.msra.mxu0 0.0
    %4886 = vmatprep.subr.mxu0 0.0
    %4887 = vmatpush1.msra.mxu0 0.0
    %4888 = vmatprep.subr.mxu0 0.0
    %4889 = vmatpush1.msra.mxu0 0.0
    %4890 = vmatprep.subr.mxu0 0.0
    %4891 = vmatpush1.msra.mxu0 0.0
    %4892 = vmatprep.subr.mxu0 0.0
    %4893 = vmatpush1.msra.mxu0 0.0
    %4894 = vmatprep.subr.mxu0 0.0
    %4895 = vmatpush1.msra.mxu0 0.0
    %4896 = vmatprep.subr.mxu0 0.0
    %v4897 = vand.u32 %v102, 4294901760
    %4898 = vmatpush1.msra.mxu0 %v4897
    %4899 = vmatprep.subr.mxu0 0.0
    %v4900 = vand.u32 %v101, 4294901760
    %4901 = vmatpush1.msra.mxu0 %v4900
    %4902 = vmatprep.subr.mxu0 0.0
    %v4903 = vand.u32 %v100, 4294901760
    %4904 = vmatpush1.msra.mxu0 %v4903
    %4905 = vmatprep.subr.mxu0 0.0
    %v4906 = vand.u32 %v99, 4294901760
    %4907 = vmatpush1.msra.mxu0 %v4906
    %4908 = vmatprep.subr.mxu0 0.0
    %4909 = vmatpush2.msra.mxu0 0.0
    %4910 = vmatprep.subr.mxu0 0.0
    %4911 = vmatpush2.msra.mxu0 0.0
    %4912 = vmatprep.subr.mxu0 0.0
    %4913 = vmatpush2.msra.mxu0 0.0
    %4914 = vmatprep.subr.mxu0 0.0
    %4915 = vmatpush2.msra.mxu0 0.0
    %4916 = vmatprep.subr.mxu0 0.0
    %4917 = vmatpush2.msra.mxu0 0.0
    %4918 = vmatprep.subr.mxu0 0.0
    %4919 = vmatpush2.msra.mxu0 0.0
    %4920 = vmatprep.subr.mxu0 0.0
    %4921 = vmatpush2.msra.mxu0 0.0
    %4922 = vmatprep.subr.mxu0 0.0
    %4923 = vmatpush2.msra.mxu0 0.0
    %4924 = vmatprep.subr.mxu0 0.0
    %4925 = vmatpush2.msra.mxu0 0.0
    %4926 = vmatprep.subr.mxu0 0.0
    %4927 = vmatpush2.msra.mxu0 0.0
    %4928 = vmatprep.subr.mxu0 0.0
    %4929 = vmatpush2.msra.mxu0 0.0
    %4930 = vmatprep.subr.mxu0 0.0
    %4931 = vmatpush2.msra.mxu0 0.0
    %4932 = vmatprep.subr.mxu0 0.0
    %4933 = vmatpush2.msra.mxu0 0.0
    %4934 = vmatprep.subr.mxu0 0.0
    %4935 = vmatpush2.msra.mxu0 0.0
    %4936 = vmatprep.subr.mxu0 0.0
    %4937 = vmatpush2.msra.mxu0 0.0
    %4938 = vmatprep.subr.mxu0 0.0
    %4939 = vmatpush2.msra.mxu0 0.0
    %4940 = vmatprep.mubr.f32.mxu0 0.0
    %v4941 = vand.u32 %v4620, 4294901760
    %v4942 = vsub.f32 %v4620, %v4941
    %v4943 = vand.u32 %v4942, 4294901760
    %4944 = vmatmul.mubr.f32.gmra.mxu0 %v4943
    %v4945 = vpop.f32.mrf.mxu0
    %v4946 = vadd.f32 %v4869, %v4945
    %v4947 = vpop.f32.mrf.mxu0
    %4948 = vdwg.mxu0
    %4949 = vmatprep.subr.mxu0 0.0
    %4950 = vmatpush1.msra.mxu0 0.0
    %4951 = vmatprep.subr.mxu0 0.0
    %4952 = vmatpush1.msra.mxu0 0.0
    %4953 = vmatprep.subr.mxu0 0.0
    %4954 = vmatpush1.msra.mxu0 0.0
    %4955 = vmatprep.subr.mxu0 0.0
    %4956 = vmatpush1.msra.mxu0 0.0
    %4957 = vmatprep.subr.mxu0 0.0
    %4958 = vmatpush1.msra.mxu0 0.0
    %4959 = vmatprep.subr.mxu0 0.0
    %4960 = vmatpush1.msra.mxu0 0.0
    %4961 = vmatprep.subr.mxu0 0.0
    %4962 = vmatpush1.msra.mxu0 0.0
    %4963 = vmatprep.subr.mxu0 0.0
    %4964 = vmatpush1.msra.mxu0 0.0
    %4965 = vmatprep.subr.mxu0 0.0
    %4966 = vmatpush1.msra.mxu0 0.0
    %4967 = vmatprep.subr.mxu0 0.0
    %4968 = vmatpush1.msra.mxu0 0.0
    %4969 = vmatprep.subr.mxu0 0.0
    %4970 = vmatpush1.msra.mxu0 0.0
    %4971 = vmatprep.subr.mxu0 0.0
    %4972 = vmatpush1.msra.mxu0 0.0
    %4973 = vmatprep.subr.mxu0 0.0
    %v4974 = vand.u32 %v102, 4294901760
    %v4975 = vsub.f32 %v102, %v4974
    %v4976 = vand.u32 %v4975, 4294901760
    %4977 = vmatpush1.msra.mxu0 %v4976
    %4978 = vmatprep.subr.mxu0 0.0
    %v4979 = vand.u32 %v101, 4294901760
    %v4980 = vsub.f32 %v101, %v4979
    %v4981 = vand.u32 %v4980, 4294901760
    %4982 = vmatpush1.msra.mxu0 %v4981
    %4983 = vmatprep.subr.mxu0 0.0
    %v4984 = vand.u32 %v100, 4294901760
    %v4985 = vsub.f32 %v100, %v4984
    %v4986 = vand.u32 %v4985, 4294901760
    %4987 = vmatpush1.msra.mxu0 %v4986
    %4988 = vmatprep.subr.mxu0 0.0
    %v4989 = vand.u32 %v99, 4294901760
    %v4990 = vsub.f32 %v99, %v4989
    %v4991 = vand.u32 %v4990, 4294901760
    %4992 = vmatpush1.msra.mxu0 %v4991
    %4993 = vmatprep.subr.mxu0 0.0
    %4994 = vmatpush2.msra.mxu0 0.0
    %4995 = vmatprep.subr.mxu0 0.0
    %4996 = vmatpush2.msra.mxu0 0.0
    %4997 = vmatprep.subr.mxu0 0.0
    %4998 = vmatpush2.msra.mxu0 0.0
    %4999 = vmatprep.subr.mxu0 0.0
    %5000 = vmatpush2.msra.mxu0 0.0
    %5001 = vmatprep.subr.mxu0 0.0
    %5002 = vmatpush2.msra.mxu0 0.0
    %5003 = vmatprep.subr.mxu0 0.0
    %5004 = vmatpush2.msra.mxu0 0.0
    %5005 = vmatprep.subr.mxu0 0.0
    %5006 = vmatpush2.msra.mxu0 0.0
    %5007 = vmatprep.subr.mxu0 0.0
    %5008 = vmatpush2.msra.mxu0 0.0
    %5009 = vmatprep.subr.mxu0 0.0
    %5010 = vmatpush2.msra.mxu0 0.0
    %5011 = vmatprep.subr.mxu0 0.0
    %5012 = vmatpush2.msra.mxu0 0.0
    %5013 = vmatprep.subr.mxu0 0.0
    %5014 = vmatpush2.msra.mxu0 0.0
    %5015 = vmatprep.subr.mxu0 0.0
    %5016 = vmatpush2.msra.mxu0 0.0
    %5017 = vmatprep.subr.mxu0 0.0
    %5018 = vmatpush2.msra.mxu0 0.0
    %5019 = vmatprep.subr.mxu0 0.0
    %5020 = vmatpush2.msra.mxu0 0.0
    %5021 = vmatprep.subr.mxu0 0.0
    %5022 = vmatpush2.msra.mxu0 0.0
    %5023 = vmatprep.subr.mxu0 0.0
    %5024 = vmatpush2.msra.mxu0 0.0
    %5025 = vmatprep.mubr.f32.mxu0 0.0
    %v5026 = vand.u32 %v4620, 4294901760
    %5027 = vmatmul.mubr.f32.gmra.mxu0 %v5026
    %v5028 = vpop.f32.mrf.mxu0
    %v5029 = vadd.f32 %v4946, %v5028
    %v5030 = vpop.f32.mrf.mxu0
    %5031 = vdwg.mxu0
    %5032 = vmatprep.subr.mxu0 0.0
    %5033 = vmatpush1.msra.mxu0 0.0
    %5034 = vmatprep.subr.mxu0 0.0
    %5035 = vmatpush1.msra.mxu0 0.0
    %5036 = vmatprep.subr.mxu0 0.0
    %5037 = vmatpush1.msra.mxu0 0.0
    %5038 = vmatprep.subr.mxu0 0.0
    %5039 = vmatpush1.msra.mxu0 0.0
    %5040 = vmatprep.subr.mxu0 0.0
    %5041 = vmatpush1.msra.mxu0 0.0
    %5042 = vmatprep.subr.mxu0 0.0
    %5043 = vmatpush1.msra.mxu0 0.0
    %5044 = vmatprep.subr.mxu0 0.0
    %5045 = vmatpush1.msra.mxu0 0.0
    %5046 = vmatprep.subr.mxu0 0.0
    %5047 = vmatpush1.msra.mxu0 0.0
    %5048 = vmatprep.subr.mxu0 0.0
    %5049 = vmatpush1.msra.mxu0 0.0
    %5050 = vmatprep.subr.mxu0 0.0
    %5051 = vmatpush1.msra.mxu0 0.0
    %5052 = vmatprep.subr.mxu0 0.0
    %5053 = vmatpush1.msra.mxu0 0.0
    %5054 = vmatprep.subr.mxu0 0.0
    %5055 = vmatpush1.msra.mxu0 0.0
    %5056 = vmatprep.subr.mxu0 0.0
    %v5057 = vand.u32 %v102, 4294901760
    %5058 = vmatpush1.msra.mxu0 %v5057
    %5059 = vmatprep.subr.mxu0 0.0
    %v5060 = vand.u32 %v101, 4294901760
    %5061 = vmatpush1.msra.mxu0 %v5060
    %5062 = vmatprep.subr.mxu0 0.0
    %v5063 = vand.u32 %v100, 4294901760
    %5064 = vmatpush1.msra.mxu0 %v5063
    %5065 = vmatprep.subr.mxu0 0.0
    %v5066 = vand.u32 %v99, 4294901760
    %5067 = vmatpush1.msra.mxu0 %v5066
    %5068 = vmatprep.subr.mxu0 0.0
    %5069 = vmatpush2.msra.mxu0 0.0
    %5070 = vmatprep.subr.mxu0 0.0
    %5071 = vmatpush2.msra.mxu0 0.0
    %5072 = vmatprep.subr.mxu0 0.0
    %5073 = vmatpush2.msra.mxu0 0.0
    %5074 = vmatprep.subr.mxu0 0.0
    %5075 = vmatpush2.msra.mxu0 0.0
    %5076 = vmatprep.subr.mxu0 0.0
    %5077 = vmatpush2.msra.mxu0 0.0
    %5078 = vmatprep.subr.mxu0 0.0
    %5079 = vmatpush2.msra.mxu0 0.0
    %5080 = vmatprep.subr.mxu0 0.0
    %5081 = vmatpush2.msra.mxu0 0.0
    %5082 = vmatprep.subr.mxu0 0.0
    %5083 = vmatpush2.msra.mxu0 0.0
    %5084 = vmatprep.subr.mxu0 0.0
    %5085 = vmatpush2.msra.mxu0 0.0
    %5086 = vmatprep.subr.mxu0 0.0
    %5087 = vmatpush2.msra.mxu0 0.0
    %5088 = vmatprep.subr.mxu0 0.0
    %5089 = vmatpush2.msra.mxu0 0.0
    %5090 = vmatprep.subr.mxu0 0.0
    %5091 = vmatpush2.msra.mxu0 0.0
    %5092 = vmatprep.subr.mxu0 0.0
    %5093 = vmatpush2.msra.mxu0 0.0
    %5094 = vmatprep.subr.mxu0 0.0
    %5095 = vmatpush2.msra.mxu0 0.0
    %5096 = vmatprep.subr.mxu0 0.0
    %5097 = vmatpush2.msra.mxu0 0.0
    %5098 = vmatprep.subr.mxu0 0.0
    %5099 = vmatpush2.msra.mxu0 0.0
    %5100 = vmatprep.mubr.f32.mxu0 0.0
    %v5101 = vand.u32 %v4620, 4294901760
    %5102 = vmatmul.mubr.f32.gmra.mxu0 %v5101
    %v5103 = vpop.f32.mrf.mxu0
    %v5104 = vadd.f32 %v5029, %v5103
    %v5105 = vpop.f32.mrf.mxu0
    %5106 = vdwg.mxu0
    %v5107 = vadd.f32 %v5104, %v1098
    %v5108 = vxor.u32 %v5107, 2147483648
    %v5109 = vmul.f32 %v5108, 1.442695
    %v5110 = vpow.pop %v5109
    %v5111 = vadd.f32 %v5110, 1.0
    %v5112 = vrcp.pop %v5111
    %v5113 = vmul.f32 1.0, %v5112
    %v5114 = vtanh.pop %v5107
    %v5115 = vmul.f32 %v5113, %v3122
    %5117 = vrot.lane.b32.xlu0 %v5114, 64
    %v5118 = vpop.permute.xlu0 %5117
    %v5120 = vmul.f32 %v5113, %v5118
    %5122 = vrot.lane.b32.xlu0 %v5120, 32
    %v5123 = vpop.permute.xlu0 %5122
    %v5125 = vadd.f32 %v5115, %v5123
    %v5126 = vtanh.pop %v5125
    %5128 = vrot.lane.b32.xlu0 %v5126, 64
    %v5129 = vpop.permute.xlu0 %5128
    %v5131 = vmul.f32 %v5113, %v5129
    %5133 = vrot.lane.b32.xlu0 %v4133, 32
    %v5134 = vpop.permute.xlu0 %5133
    %v5135 = vsel %vm117, %v5134, 0
    %5137 = vmatprep.subr.mxu0 0.0
    %5138 = vmatpush1.msra.mxu0 0.0
    %5139 = vmatprep.subr.mxu0 0.0
    %5140 = vmatpush1.msra.mxu0 0.0
    %5141 = vmatprep.subr.mxu0 0.0
    %5142 = vmatpush1.msra.mxu0 0.0
    %5143 = vmatprep.subr.mxu0 0.0
    %5144 = vmatpush1.msra.mxu0 0.0
    %5145 = vmatprep.subr.mxu0 0.0
    %5146 = vmatpush1.msra.mxu0 0.0
    %5147 = vmatprep.subr.mxu0 0.0
    %5148 = vmatpush1.msra.mxu0 0.0
    %5149 = vmatprep.subr.mxu0 0.0
    %5150 = vmatpush1.msra.mxu0 0.0
    %5151 = vmatprep.subr.mxu0 0.0
    %5152 = vmatpush1.msra.mxu0 0.0
    %5153 = vmatprep.subr.mxu0 0.0
    %5154 = vmatpush1.msra.mxu0 0.0
    %5155 = vmatprep.subr.mxu0 0.0
    %5156 = vmatpush1.msra.mxu0 0.0
    %5157 = vmatprep.subr.mxu0 0.0
    %5158 = vmatpush1.msra.mxu0 0.0
    %5159 = vmatprep.subr.mxu0 0.0
    %5160 = vmatpush1.msra.mxu0 0.0
    %5161 = vmatprep.subr.mxu0 0.0
    %v5162 = vand.u32 %v115, 4294901760
    %5163 = vmatpush1.msra.mxu0 %v5162
    %5164 = vmatprep.subr.mxu0 0.0
    %v5165 = vand.u32 %v114, 4294901760
    %5166 = vmatpush1.msra.mxu0 %v5165
    %5167 = vmatprep.subr.mxu0 0.0
    %v5168 = vand.u32 %v113, 4294901760
    %5169 = vmatpush1.msra.mxu0 %v5168
    %5170 = vmatprep.subr.mxu0 0.0
    %v5171 = vand.u32 %v112, 4294901760
    %5172 = vmatpush1.msra.mxu0 %v5171
    %5173 = vmatprep.subr.mxu0 0.0
    %5174 = vmatpush2.msra.mxu0 0.0
    %5175 = vmatprep.subr.mxu0 0.0
    %5176 = vmatpush2.msra.mxu0 0.0
    %5177 = vmatprep.subr.mxu0 0.0
    %5178 = vmatpush2.msra.mxu0 0.0
    %5179 = vmatprep.subr.mxu0 0.0
    %5180 = vmatpush2.msra.mxu0 0.0
    %5181 = vmatprep.subr.mxu0 0.0
    %5182 = vmatpush2.msra.mxu0 0.0
    %5183 = vmatprep.subr.mxu0 0.0
    %5184 = vmatpush2.msra.mxu0 0.0
    %5185 = vmatprep.subr.mxu0 0.0
    %5186 = vmatpush2.msra.mxu0 0.0
    %5187 = vmatprep.subr.mxu0 0.0
    %5188 = vmatpush2.msra.mxu0 0.0
    %5189 = vmatprep.subr.mxu0 0.0
    %5190 = vmatpush2.msra.mxu0 0.0
    %5191 = vmatprep.subr.mxu0 0.0
    %5192 = vmatpush2.msra.mxu0 0.0
    %5193 = vmatprep.subr.mxu0 0.0
    %5194 = vmatpush2.msra.mxu0 0.0
    %5195 = vmatprep.subr.mxu0 0.0
    %5196 = vmatpush2.msra.mxu0 0.0
    %5197 = vmatprep.subr.mxu0 0.0
    %5198 = vmatpush2.msra.mxu0 0.0
    %5199 = vmatprep.subr.mxu0 0.0
    %5200 = vmatpush2.msra.mxu0 0.0
    %5201 = vmatprep.subr.mxu0 0.0
    %5202 = vmatpush2.msra.mxu0 0.0
    %5203 = vmatprep.subr.mxu0 0.0
    %5204 = vmatpush2.msra.mxu0 0.0
    %5205 = vmatprep.mubr.f32.mxu0 0.0
    %v5206 = vand.u32 %v5135, 4294901760
    %v5207 = vsub.f32 %v5135, %v5206
    %v5208 = vand.u32 %v5207, 4294901760
    %v5209 = vsub.f32 %v5207, %v5208
    %v5210 = vand.u32 %v5209, 4294901760
    %5211 = vmatmul.mubr.f32.gmra.mxu0 %v5210
    %v5212 = vpop.f32.mrf.mxu0
    %v5213 = vadd.f32 0.0, %v5212
    %v5214 = vpop.f32.mrf.mxu0
    %5215 = vdwg.mxu0
    %5216 = vmatprep.subr.mxu0 0.0
    %5217 = vmatpush1.msra.mxu0 0.0
    %5218 = vmatprep.subr.mxu0 0.0
    %5219 = vmatpush1.msra.mxu0 0.0
    %5220 = vmatprep.subr.mxu0 0.0
    %5221 = vmatpush1.msra.mxu0 0.0
    %5222 = vmatprep.subr.mxu0 0.0
    %5223 = vmatpush1.msra.mxu0 0.0
    %5224 = vmatprep.subr.mxu0 0.0
    %5225 = vmatpush1.msra.mxu0 0.0
    %5226 = vmatprep.subr.mxu0 0.0
    %5227 = vmatpush1.msra.mxu0 0.0
    %5228 = vmatprep.subr.mxu0 0.0
    %5229 = vmatpush1.msra.mxu0 0.0
    %5230 = vmatprep.subr.mxu0 0.0
    %5231 = vmatpush1.msra.mxu0 0.0
    %5232 = vmatprep.subr.mxu0 0.0
    %5233 = vmatpush1.msra.mxu0 0.0
    %5234 = vmatprep.subr.mxu0 0.0
    %5235 = vmatpush1.msra.mxu0 0.0
    %5236 = vmatprep.subr.mxu0 0.0
    %5237 = vmatpush1.msra.mxu0 0.0
    %5238 = vmatprep.subr.mxu0 0.0
    %5239 = vmatpush1.msra.mxu0 0.0
    %5240 = vmatprep.subr.mxu0 0.0
    %v5241 = vand.u32 %v115, 4294901760
    %v5242 = vsub.f32 %v115, %v5241
    %v5243 = vand.u32 %v5242, 4294901760
    %v5244 = vsub.f32 %v5242, %v5243
    %v5245 = vand.u32 %v5244, 4294901760
    %5246 = vmatpush1.msra.mxu0 %v5245
    %5247 = vmatprep.subr.mxu0 0.0
    %v5248 = vand.u32 %v114, 4294901760
    %v5249 = vsub.f32 %v114, %v5248
    %v5250 = vand.u32 %v5249, 4294901760
    %v5251 = vsub.f32 %v5249, %v5250
    %v5252 = vand.u32 %v5251, 4294901760
    %5253 = vmatpush1.msra.mxu0 %v5252
    %5254 = vmatprep.subr.mxu0 0.0
    %v5255 = vand.u32 %v113, 4294901760
    %v5256 = vsub.f32 %v113, %v5255
    %v5257 = vand.u32 %v5256, 4294901760
    %v5258 = vsub.f32 %v5256, %v5257
    %v5259 = vand.u32 %v5258, 4294901760
    %5260 = vmatpush1.msra.mxu0 %v5259
    %5261 = vmatprep.subr.mxu0 0.0
    %v5262 = vand.u32 %v112, 4294901760
    %v5263 = vsub.f32 %v112, %v5262
    %v5264 = vand.u32 %v5263, 4294901760
    %v5265 = vsub.f32 %v5263, %v5264
    %v5266 = vand.u32 %v5265, 4294901760
    %5267 = vmatpush1.msra.mxu0 %v5266
    %5268 = vmatprep.subr.mxu0 0.0
    %5269 = vmatpush2.msra.mxu0 0.0
    %5270 = vmatprep.subr.mxu0 0.0
    %5271 = vmatpush2.msra.mxu0 0.0
    %5272 = vmatprep.subr.mxu0 0.0
    %5273 = vmatpush2.msra.mxu0 0.0
    %5274 = vmatprep.subr.mxu0 0.0
    %5275 = vmatpush2.msra.mxu0 0.0
    %5276 = vmatprep.subr.mxu0 0.0
    %5277 = vmatpush2.msra.mxu0 0.0
    %5278 = vmatprep.subr.mxu0 0.0
    %5279 = vmatpush2.msra.mxu0 0.0
    %5280 = vmatprep.subr.mxu0 0.0
    %5281 = vmatpush2.msra.mxu0 0.0
    %5282 = vmatprep.subr.mxu0 0.0
    %5283 = vmatpush2.msra.mxu0 0.0
    %5284 = vmatprep.subr.mxu0 0.0
    %5285 = vmatpush2.msra.mxu0 0.0
    %5286 = vmatprep.subr.mxu0 0.0
    %5287 = vmatpush2.msra.mxu0 0.0
    %5288 = vmatprep.subr.mxu0 0.0
    %5289 = vmatpush2.msra.mxu0 0.0
    %5290 = vmatprep.subr.mxu0 0.0
    %5291 = vmatpush2.msra.mxu0 0.0
    %5292 = vmatprep.subr.mxu0 0.0
    %5293 = vmatpush2.msra.mxu0 0.0
    %5294 = vmatprep.subr.mxu0 0.0
    %5295 = vmatpush2.msra.mxu0 0.0
    %5296 = vmatprep.subr.mxu0 0.0
    %5297 = vmatpush2.msra.mxu0 0.0
    %5298 = vmatprep.subr.mxu0 0.0
    %5299 = vmatpush2.msra.mxu0 0.0
    %5300 = vmatprep.mubr.f32.mxu0 0.0
    %v5301 = vand.u32 %v5135, 4294901760
    %5302 = vmatmul.mubr.f32.gmra.mxu0 %v5301
    %v5303 = vpop.f32.mrf.mxu0
    %v5304 = vadd.f32 %v5213, %v5303
    %v5305 = vpop.f32.mrf.mxu0
    %5306 = vdwg.mxu0
    %5307 = vmatprep.subr.mxu0 0.0
    %5308 = vmatpush1.msra.mxu0 0.0
    %5309 = vmatprep.subr.mxu0 0.0
    %5310 = vmatpush1.msra.mxu0 0.0
    %5311 = vmatprep.subr.mxu0 0.0
    %5312 = vmatpush1.msra.mxu0 0.0
    %5313 = vmatprep.subr.mxu0 0.0
    %5314 = vmatpush1.msra.mxu0 0.0
    %5315 = vmatprep.subr.mxu0 0.0
    %5316 = vmatpush1.msra.mxu0 0.0
    %5317 = vmatprep.subr.mxu0 0.0
    %5318 = vmatpush1.msra.mxu0 0.0
    %5319 = vmatprep.subr.mxu0 0.0
    %5320 = vmatpush1.msra.mxu0 0.0
    %5321 = vmatprep.subr.mxu0 0.0
    %5322 = vmatpush1.msra.mxu0 0.0
    %5323 = vmatprep.subr.mxu0 0.0
    %5324 = vmatpush1.msra.mxu0 0.0
    %5325 = vmatprep.subr.mxu0 0.0
    %5326 = vmatpush1.msra.mxu0 0.0
    %5327 = vmatprep.subr.mxu0 0.0
    %5328 = vmatpush1.msra.mxu0 0.0
    %5329 = vmatprep.subr.mxu0 0.0
    %5330 = vmatpush1.msra.mxu0 0.0
    %5331 = vmatprep.subr.mxu0 0.0
    %v5332 = vand.u32 %v115, 4294901760
    %v5333 = vsub.f32 %v115, %v5332
    %5334 = vmatpush1.msra.mxu0 %v5333
    %5335 = vmatprep.subr.mxu0 0.0
    %v5336 = vand.u32 %v114, 4294901760
    %v5337 = vsub.f32 %v114, %v5336
    %5338 = vmatpush1.msra.mxu0 %v5337
    %5339 = vmatprep.subr.mxu0 0.0
    %v5340 = vand.u32 %v113, 4294901760
    %v5341 = vsub.f32 %v113, %v5340
    %5342 = vmatpush1.msra.mxu0 %v5341
    %5343 = vmatprep.subr.mxu0 0.0
    %v5344 = vand.u32 %v112, 4294901760
    %v5345 = vsub.f32 %v112, %v5344
    %5346 = vmatpush1.msra.mxu0 %v5345
    %5347 = vmatprep.subr.mxu0 0.0
    %5348 = vmatpush2.msra.mxu0 0.0
    %5349 = vmatprep.subr.mxu0 0.0
    %5350 = vmatpush2.msra.mxu0 0.0
    %5351 = vmatprep.subr.mxu0 0.0
    %5352 = vmatpush2.msra.mxu0 0.0
    %5353 = vmatprep.subr.mxu0 0.0
    %5354 = vmatpush2.msra.mxu0 0.0
    %5355 = vmatprep.subr.mxu0 0.0
    %5356 = vmatpush2.msra.mxu0 0.0
    %5357 = vmatprep.subr.mxu0 0.0
    %5358 = vmatpush2.msra.mxu0 0.0
    %5359 = vmatprep.subr.mxu0 0.0
    %5360 = vmatpush2.msra.mxu0 0.0
    %5361 = vmatprep.subr.mxu0 0.0
    %5362 = vmatpush2.msra.mxu0 0.0
    %5363 = vmatprep.subr.mxu0 0.0
    %5364 = vmatpush2.msra.mxu0 0.0
    %5365 = vmatprep.subr.mxu0 0.0
    %5366 = vmatpush2.msra.mxu0 0.0
    %5367 = vmatprep.subr.mxu0 0.0
    %5368 = vmatpush2.msra.mxu0 0.0
    %5369 = vmatprep.subr.mxu0 0.0
    %5370 = vmatpush2.msra.mxu0 0.0
    %5371 = vmatprep.subr.mxu0 0.0
    %5372 = vmatpush2.msra.mxu0 0.0
    %5373 = vmatprep.subr.mxu0 0.0
    %5374 = vmatpush2.msra.mxu0 0.0
    %5375 = vmatprep.subr.mxu0 0.0
    %5376 = vmatpush2.msra.mxu0 0.0
    %5377 = vmatprep.subr.mxu0 0.0
    %5378 = vmatpush2.msra.mxu0 0.0
    %5379 = vmatprep.mubr.f32.mxu0 0.0
    %v5380 = vand.u32 %v5135, 4294901760
    %v5381 = vsub.f32 %v5135, %v5380
    %5382 = vmatmul.mubr.f32.gmra.mxu0 %v5381
    %v5383 = vpop.f32.mrf.mxu0
    %v5384 = vadd.f32 %v5304, %v5383
    %v5385 = vpop.f32.mrf.mxu0
    %5386 = vdwg.mxu0
    %5387 = vmatprep.subr.mxu0 0.0
    %5388 = vmatpush1.msra.mxu0 0.0
    %5389 = vmatprep.subr.mxu0 0.0
    %5390 = vmatpush1.msra.mxu0 0.0
    %5391 = vmatprep.subr.mxu0 0.0
    %5392 = vmatpush1.msra.mxu0 0.0
    %5393 = vmatprep.subr.mxu0 0.0
    %5394 = vmatpush1.msra.mxu0 0.0
    %5395 = vmatprep.subr.mxu0 0.0
    %5396 = vmatpush1.msra.mxu0 0.0
    %5397 = vmatprep.subr.mxu0 0.0
    %5398 = vmatpush1.msra.mxu0 0.0
    %5399 = vmatprep.subr.mxu0 0.0
    %5400 = vmatpush1.msra.mxu0 0.0
    %5401 = vmatprep.subr.mxu0 0.0
    %5402 = vmatpush1.msra.mxu0 0.0
    %5403 = vmatprep.subr.mxu0 0.0
    %5404 = vmatpush1.msra.mxu0 0.0
    %5405 = vmatprep.subr.mxu0 0.0
    %5406 = vmatpush1.msra.mxu0 0.0
    %5407 = vmatprep.subr.mxu0 0.0
    %5408 = vmatpush1.msra.mxu0 0.0
    %5409 = vmatprep.subr.mxu0 0.0
    %5410 = vmatpush1.msra.mxu0 0.0
    %5411 = vmatprep.subr.mxu0 0.0
    %v5412 = vand.u32 %v115, 4294901760
    %5413 = vmatpush1.msra.mxu0 %v5412
    %5414 = vmatprep.subr.mxu0 0.0
    %v5415 = vand.u32 %v114, 4294901760
    %5416 = vmatpush1.msra.mxu0 %v5415
    %5417 = vmatprep.subr.mxu0 0.0
    %v5418 = vand.u32 %v113, 4294901760
    %5419 = vmatpush1.msra.mxu0 %v5418
    %5420 = vmatprep.subr.mxu0 0.0
    %v5421 = vand.u32 %v112, 4294901760
    %5422 = vmatpush1.msra.mxu0 %v5421
    %5423 = vmatprep.subr.mxu0 0.0
    %5424 = vmatpush2.msra.mxu0 0.0
    %5425 = vmatprep.subr.mxu0 0.0
    %5426 = vmatpush2.msra.mxu0 0.0
    %5427 = vmatprep.subr.mxu0 0.0
    %5428 = vmatpush2.msra.mxu0 0.0
    %5429 = vmatprep.subr.mxu0 0.0
    %5430 = vmatpush2.msra.mxu0 0.0
    %5431 = vmatprep.subr.mxu0 0.0
    %5432 = vmatpush2.msra.mxu0 0.0
    %5433 = vmatprep.subr.mxu0 0.0
    %5434 = vmatpush2.msra.mxu0 0.0
    %5435 = vmatprep.subr.mxu0 0.0
    %5436 = vmatpush2.msra.mxu0 0.0
    %5437 = vmatprep.subr.mxu0 0.0
    %5438 = vmatpush2.msra.mxu0 0.0
    %5439 = vmatprep.subr.mxu0 0.0
    %5440 = vmatpush2.msra.mxu0 0.0
    %5441 = vmatprep.subr.mxu0 0.0
    %5442 = vmatpush2.msra.mxu0 0.0
    %5443 = vmatprep.subr.mxu0 0.0
    %5444 = vmatpush2.msra.mxu0 0.0
    %5445 = vmatprep.subr.mxu0 0.0
    %5446 = vmatpush2.msra.mxu0 0.0
    %5447 = vmatprep.subr.mxu0 0.0
    %5448 = vmatpush2.msra.mxu0 0.0
    %5449 = vmatprep.subr.mxu0 0.0
    %5450 = vmatpush2.msra.mxu0 0.0
    %5451 = vmatprep.subr.mxu0 0.0
    %5452 = vmatpush2.msra.mxu0 0.0
    %5453 = vmatprep.subr.mxu0 0.0
    %5454 = vmatpush2.msra.mxu0 0.0
    %5455 = vmatprep.mubr.f32.mxu0 0.0
    %v5456 = vand.u32 %v5135, 4294901760
    %v5457 = vsub.f32 %v5135, %v5456
    %v5458 = vand.u32 %v5457, 4294901760
    %5459 = vmatmul.mubr.f32.gmra.mxu0 %v5458
    %v5460 = vpop.f32.mrf.mxu0
    %v5461 = vadd.f32 %v5384, %v5460
    %v5462 = vpop.f32.mrf.mxu0
    %5463 = vdwg.mxu0
    %5464 = vmatprep.subr.mxu0 0.0
    %5465 = vmatpush1.msra.mxu0 0.0
    %5466 = vmatprep.subr.mxu0 0.0
    %5467 = vmatpush1.msra.mxu0 0.0
    %5468 = vmatprep.subr.mxu0 0.0
    %5469 = vmatpush1.msra.mxu0 0.0
    %5470 = vmatprep.subr.mxu0 0.0
    %5471 = vmatpush1.msra.mxu0 0.0
    %5472 = vmatprep.subr.mxu0 0.0
    %5473 = vmatpush1.msra.mxu0 0.0
    %5474 = vmatprep.subr.mxu0 0.0
    %5475 = vmatpush1.msra.mxu0 0.0
    %5476 = vmatprep.subr.mxu0 0.0
    %5477 = vmatpush1.msra.mxu0 0.0
    %5478 = vmatprep.subr.mxu0 0.0
    %5479 = vmatpush1.msra.mxu0 0.0
    %5480 = vmatprep.subr.mxu0 0.0
    %5481 = vmatpush1.msra.mxu0 0.0
    %5482 = vmatprep.subr.mxu0 0.0
    %5483 = vmatpush1.msra.mxu0 0.0
    %5484 = vmatprep.subr.mxu0 0.0
    %5485 = vmatpush1.msra.mxu0 0.0
    %5486 = vmatprep.subr.mxu0 0.0
    %5487 = vmatpush1.msra.mxu0 0.0
    %5488 = vmatprep.subr.mxu0 0.0
    %v5489 = vand.u32 %v115, 4294901760
    %v5490 = vsub.f32 %v115, %v5489
    %v5491 = vand.u32 %v5490, 4294901760
    %5492 = vmatpush1.msra.mxu0 %v5491
    %5493 = vmatprep.subr.mxu0 0.0
    %v5494 = vand.u32 %v114, 4294901760
    %v5495 = vsub.f32 %v114, %v5494
    %v5496 = vand.u32 %v5495, 4294901760
    %5497 = vmatpush1.msra.mxu0 %v5496
    %5498 = vmatprep.subr.mxu0 0.0
    %v5499 = vand.u32 %v113, 4294901760
    %v5500 = vsub.f32 %v113, %v5499
    %v5501 = vand.u32 %v5500, 4294901760
    %5502 = vmatpush1.msra.mxu0 %v5501
    %5503 = vmatprep.subr.mxu0 0.0
    %v5504 = vand.u32 %v112, 4294901760
    %v5505 = vsub.f32 %v112, %v5504
    %v5506 = vand.u32 %v5505, 4294901760
    %5507 = vmatpush1.msra.mxu0 %v5506
    %5508 = vmatprep.subr.mxu0 0.0
    %5509 = vmatpush2.msra.mxu0 0.0
    %5510 = vmatprep.subr.mxu0 0.0
    %5511 = vmatpush2.msra.mxu0 0.0
    %5512 = vmatprep.subr.mxu0 0.0
    %5513 = vmatpush2.msra.mxu0 0.0
    %5514 = vmatprep.subr.mxu0 0.0
    %5515 = vmatpush2.msra.mxu0 0.0
    %5516 = vmatprep.subr.mxu0 0.0
    %5517 = vmatpush2.msra.mxu0 0.0
    %5518 = vmatprep.subr.mxu0 0.0
    %5519 = vmatpush2.msra.mxu0 0.0
    %5520 = vmatprep.subr.mxu0 0.0
    %5521 = vmatpush2.msra.mxu0 0.0
    %5522 = vmatprep.subr.mxu0 0.0
    %5523 = vmatpush2.msra.mxu0 0.0
    %5524 = vmatprep.subr.mxu0 0.0
    %5525 = vmatpush2.msra.mxu0 0.0
    %5526 = vmatprep.subr.mxu0 0.0
    %5527 = vmatpush2.msra.mxu0 0.0
    %5528 = vmatprep.subr.mxu0 0.0
    %5529 = vmatpush2.msra.mxu0 0.0
    %5530 = vmatprep.subr.mxu0 0.0
    %5531 = vmatpush2.msra.mxu0 0.0
    %5532 = vmatprep.subr.mxu0 0.0
    %5533 = vmatpush2.msra.mxu0 0.0
    %5534 = vmatprep.subr.mxu0 0.0
    %5535 = vmatpush2.msra.mxu0 0.0
    %5536 = vmatprep.subr.mxu0 0.0
    %5537 = vmatpush2.msra.mxu0 0.0
    %5538 = vmatprep.subr.mxu0 0.0
    %5539 = vmatpush2.msra.mxu0 0.0
    %5540 = vmatprep.mubr.f32.mxu0 0.0
    %v5541 = vand.u32 %v5135, 4294901760
    %5542 = vmatmul.mubr.f32.gmra.mxu0 %v5541
    %v5543 = vpop.f32.mrf.mxu0
    %v5544 = vadd.f32 %v5461, %v5543
    %v5545 = vpop.f32.mrf.mxu0
    %5546 = vdwg.mxu0
    %5547 = vmatprep.subr.mxu0 0.0
    %5548 = vmatpush1.msra.mxu0 0.0
    %5549 = vmatprep.subr.mxu0 0.0
    %5550 = vmatpush1.msra.mxu0 0.0
    %5551 = vmatprep.subr.mxu0 0.0
    %5552 = vmatpush1.msra.mxu0 0.0
    %5553 = vmatprep.subr.mxu0 0.0
    %5554 = vmatpush1.msra.mxu0 0.0
    %5555 = vmatprep.subr.mxu0 0.0
    %5556 = vmatpush1.msra.mxu0 0.0
    %5557 = vmatprep.subr.mxu0 0.0
    %5558 = vmatpush1.msra.mxu0 0.0
    %5559 = vmatprep.subr.mxu0 0.0
    %5560 = vmatpush1.msra.mxu0 0.0
    %5561 = vmatprep.subr.mxu0 0.0
    %5562 = vmatpush1.msra.mxu0 0.0
    %5563 = vmatprep.subr.mxu0 0.0
    %5564 = vmatpush1.msra.mxu0 0.0
    %5565 = vmatprep.subr.mxu0 0.0
    %5566 = vmatpush1.msra.mxu0 0.0
    %5567 = vmatprep.subr.mxu0 0.0
    %5568 = vmatpush1.msra.mxu0 0.0
    %5569 = vmatprep.subr.mxu0 0.0
    %5570 = vmatpush1.msra.mxu0 0.0
    %5571 = vmatprep.subr.mxu0 0.0
    %v5572 = vand.u32 %v115, 4294901760
    %5573 = vmatpush1.msra.mxu0 %v5572
    %5574 = vmatprep.subr.mxu0 0.0
    %v5575 = vand.u32 %v114, 4294901760
    %5576 = vmatpush1.msra.mxu0 %v5575
    %5577 = vmatprep.subr.mxu0 0.0
    %v5578 = vand.u32 %v113, 4294901760
    %5579 = vmatpush1.msra.mxu0 %v5578
    %5580 = vmatprep.subr.mxu0 0.0
    %v5581 = vand.u32 %v112, 4294901760
    %5582 = vmatpush1.msra.mxu0 %v5581
    %5583 = vmatprep.subr.mxu0 0.0
    %5584 = vmatpush2.msra.mxu0 0.0
    %5585 = vmatprep.subr.mxu0 0.0
    %5586 = vmatpush2.msra.mxu0 0.0
    %5587 = vmatprep.subr.mxu0 0.0
    %5588 = vmatpush2.msra.mxu0 0.0
    %5589 = vmatprep.subr.mxu0 0.0
    %5590 = vmatpush2.msra.mxu0 0.0
    %5591 = vmatprep.subr.mxu0 0.0
    %5592 = vmatpush2.msra.mxu0 0.0
    %5593 = vmatprep.subr.mxu0 0.0
    %5594 = vmatpush2.msra.mxu0 0.0
    %5595 = vmatprep.subr.mxu0 0.0
    %5596 = vmatpush2.msra.mxu0 0.0
    %5597 = vmatprep.subr.mxu0 0.0
    %5598 = vmatpush2.msra.mxu0 0.0
    %5599 = vmatprep.subr.mxu0 0.0
    %5600 = vmatpush2.msra.mxu0 0.0
    %5601 = vmatprep.subr.mxu0 0.0
    %5602 = vmatpush2.msra.mxu0 0.0
    %5603 = vmatprep.subr.mxu0 0.0
    %5604 = vmatpush2.msra.mxu0 0.0
    %5605 = vmatprep.subr.mxu0 0.0
    %5606 = vmatpush2.msra.mxu0 0.0
    %5607 = vmatprep.subr.mxu0 0.0
    %5608 = vmatpush2.msra.mxu0 0.0
    %5609 = vmatprep.subr.mxu0 0.0
    %5610 = vmatpush2.msra.mxu0 0.0
    %5611 = vmatprep.subr.mxu0 0.0
    %5612 = vmatpush2.msra.mxu0 0.0
    %5613 = vmatprep.subr.mxu0 0.0
    %5614 = vmatpush2.msra.mxu0 0.0
    %5615 = vmatprep.mubr.f32.mxu0 0.0
    %v5616 = vand.u32 %v5135, 4294901760
    %5617 = vmatmul.mubr.f32.gmra.mxu0 %v5616
    %v5618 = vpop.f32.mrf.mxu0
    %v5619 = vadd.f32 %v5544, %v5618
    %v5620 = vpop.f32.mrf.mxu0
    %5621 = vdwg.mxu0
    %5623 = vrot.lane.b32.xlu0 %v5131, 32
    %v5624 = vpop.permute.xlu0 %5623
    %v5625 = vsel %vm117, %v5624, 0
    %5627 = vmatprep.subr.mxu0 0.0
    %5628 = vmatpush1.msra.mxu0 0.0
    %5629 = vmatprep.subr.mxu0 0.0
    %5630 = vmatpush1.msra.mxu0 0.0
    %5631 = vmatprep.subr.mxu0 0.0
    %5632 = vmatpush1.msra.mxu0 0.0
    %5633 = vmatprep.subr.mxu0 0.0
    %5634 = vmatpush1.msra.mxu0 0.0
    %5635 = vmatprep.subr.mxu0 0.0
    %5636 = vmatpush1.msra.mxu0 0.0
    %5637 = vmatprep.subr.mxu0 0.0
    %5638 = vmatpush1.msra.mxu0 0.0
    %5639 = vmatprep.subr.mxu0 0.0
    %5640 = vmatpush1.msra.mxu0 0.0
    %5641 = vmatprep.subr.mxu0 0.0
    %5642 = vmatpush1.msra.mxu0 0.0
    %5643 = vmatprep.subr.mxu0 0.0
    %5644 = vmatpush1.msra.mxu0 0.0
    %5645 = vmatprep.subr.mxu0 0.0
    %5646 = vmatpush1.msra.mxu0 0.0
    %5647 = vmatprep.subr.mxu0 0.0
    %5648 = vmatpush1.msra.mxu0 0.0
    %5649 = vmatprep.subr.mxu0 0.0
    %5650 = vmatpush1.msra.mxu0 0.0
    %5651 = vmatprep.subr.mxu0 0.0
    %v5652 = vand.u32 %v111, 4294901760
    %5653 = vmatpush1.msra.mxu0 %v5652
    %5654 = vmatprep.subr.mxu0 0.0
    %v5655 = vand.u32 %v110, 4294901760
    %5656 = vmatpush1.msra.mxu0 %v5655
    %5657 = vmatprep.subr.mxu0 0.0
    %v5658 = vand.u32 %v109, 4294901760
    %5659 = vmatpush1.msra.mxu0 %v5658
    %5660 = vmatprep.subr.mxu0 0.0
    %v5661 = vand.u32 %v108, 4294901760
    %5662 = vmatpush1.msra.mxu0 %v5661
    %5663 = vmatprep.subr.mxu0 0.0
    %5664 = vmatpush2.msra.mxu0 0.0
    %5665 = vmatprep.subr.mxu0 0.0
    %5666 = vmatpush2.msra.mxu0 0.0
    %5667 = vmatprep.subr.mxu0 0.0
    %5668 = vmatpush2.msra.mxu0 0.0
    %5669 = vmatprep.subr.mxu0 0.0
    %5670 = vmatpush2.msra.mxu0 0.0
    %5671 = vmatprep.subr.mxu0 0.0
    %5672 = vmatpush2.msra.mxu0 0.0
    %5673 = vmatprep.subr.mxu0 0.0
    %5674 = vmatpush2.msra.mxu0 0.0
    %5675 = vmatprep.subr.mxu0 0.0
    %5676 = vmatpush2.msra.mxu0 0.0
    %5677 = vmatprep.subr.mxu0 0.0
    %5678 = vmatpush2.msra.mxu0 0.0
    %5679 = vmatprep.subr.mxu0 0.0
    %5680 = vmatpush2.msra.mxu0 0.0
    %5681 = vmatprep.subr.mxu0 0.0
    %5682 = vmatpush2.msra.mxu0 0.0
    %5683 = vmatprep.subr.mxu0 0.0
    %5684 = vmatpush2.msra.mxu0 0.0
    %5685 = vmatprep.subr.mxu0 0.0
    %5686 = vmatpush2.msra.mxu0 0.0
    %5687 = vmatprep.subr.mxu0 0.0
    %5688 = vmatpush2.msra.mxu0 0.0
    %5689 = vmatprep.subr.mxu0 0.0
    %5690 = vmatpush2.msra.mxu0 0.0
    %5691 = vmatprep.subr.mxu0 0.0
    %5692 = vmatpush2.msra.mxu0 0.0
    %5693 = vmatprep.subr.mxu0 0.0
    %5694 = vmatpush2.msra.mxu0 0.0
    %5695 = vmatprep.mubr.f32.mxu0 0.0
    %v5696 = vand.u32 %v5625, 4294901760
    %v5697 = vsub.f32 %v5625, %v5696
    %v5698 = vand.u32 %v5697, 4294901760
    %v5699 = vsub.f32 %v5697, %v5698
    %v5700 = vand.u32 %v5699, 4294901760
    %5701 = vmatmul.mubr.f32.gmra.mxu0 %v5700
    %v5702 = vpop.f32.mrf.mxu0
    %v5703 = vadd.f32 %v5619, %v5702
    %v5704 = vpop.f32.mrf.mxu0
    %5705 = vdwg.mxu0
    %5706 = vmatprep.subr.mxu0 0.0
    %5707 = vmatpush1.msra.mxu0 0.0
    %5708 = vmatprep.subr.mxu0 0.0
    %5709 = vmatpush1.msra.mxu0 0.0
    %5710 = vmatprep.subr.mxu0 0.0
    %5711 = vmatpush1.msra.mxu0 0.0
    %5712 = vmatprep.subr.mxu0 0.0
    %5713 = vmatpush1.msra.mxu0 0.0
    %5714 = vmatprep.subr.mxu0 0.0
    %5715 = vmatpush1.msra.mxu0 0.0
    %5716 = vmatprep.subr.mxu0 0.0
    %5717 = vmatpush1.msra.mxu0 0.0
    %5718 = vmatprep.subr.mxu0 0.0
    %5719 = vmatpush1.msra.mxu0 0.0
    %5720 = vmatprep.subr.mxu0 0.0
    %5721 = vmatpush1.msra.mxu0 0.0
    %5722 = vmatprep.subr.mxu0 0.0
    %5723 = vmatpush1.msra.mxu0 0.0
    %5724 = vmatprep.subr.mxu0 0.0
    %5725 = vmatpush1.msra.mxu0 0.0
    %5726 = vmatprep.subr.mxu0 0.0
    %5727 = vmatpush1.msra.mxu0 0.0
    %5728 = vmatprep.subr.mxu0 0.0
    %5729 = vmatpush1.msra.mxu0 0.0
    %5730 = vmatprep.subr.mxu0 0.0
    %v5731 = vand.u32 %v111, 4294901760
    %v5732 = vsub.f32 %v111, %v5731
    %v5733 = vand.u32 %v5732, 4294901760
    %v5734 = vsub.f32 %v5732, %v5733
    %v5735 = vand.u32 %v5734, 4294901760
    %5736 = vmatpush1.msra.mxu0 %v5735
    %5737 = vmatprep.subr.mxu0 0.0
    %v5738 = vand.u32 %v110, 4294901760
    %v5739 = vsub.f32 %v110, %v5738
    %v5740 = vand.u32 %v5739, 4294901760
    %v5741 = vsub.f32 %v5739, %v5740
    %v5742 = vand.u32 %v5741, 4294901760
    %5743 = vmatpush1.msra.mxu0 %v5742
    %5744 = vmatprep.subr.mxu0 0.0
    %v5745 = vand.u32 %v109, 4294901760
    %v5746 = vsub.f32 %v109, %v5745
    %v5747 = vand.u32 %v5746, 4294901760
    %v5748 = vsub.f32 %v5746, %v5747
    %v5749 = vand.u32 %v5748, 4294901760
    %5750 = vmatpush1.msra.mxu0 %v5749
    %5751 = vmatprep.subr.mxu0 0.0
    %v5752 = vand.u32 %v108, 4294901760
    %v5753 = vsub.f32 %v108, %v5752
    %v5754 = vand.u32 %v5753, 4294901760
    %v5755 = vsub.f32 %v5753, %v5754
    %v5756 = vand.u32 %v5755, 4294901760
    %5757 = vmatpush1.msra.mxu0 %v5756
    %5758 = vmatprep.subr.mxu0 0.0
    %5759 = vmatpush2.msra.mxu0 0.0
    %5760 = vmatprep.subr.mxu0 0.0
    %5761 = vmatpush2.msra.mxu0 0.0
    %5762 = vmatprep.subr.mxu0 0.0
    %5763 = vmatpush2.msra.mxu0 0.0
    %5764 = vmatprep.subr.mxu0 0.0
    %5765 = vmatpush2.msra.mxu0 0.0
    %5766 = vmatprep.subr.mxu0 0.0
    %5767 = vmatpush2.msra.mxu0 0.0
    %5768 = vmatprep.subr.mxu0 0.0
    %5769 = vmatpush2.msra.mxu0 0.0
    %5770 = vmatprep.subr.mxu0 0.0
    %5771 = vmatpush2.msra.mxu0 0.0
    %5772 = vmatprep.subr.mxu0 0.0
    %5773 = vmatpush2.msra.mxu0 0.0
    %5774 = vmatprep.subr.mxu0 0.0
    %5775 = vmatpush2.msra.mxu0 0.0
    %5776 = vmatprep.subr.mxu0 0.0
    %5777 = vmatpush2.msra.mxu0 0.0
    %5778 = vmatprep.subr.mxu0 0.0
    %5779 = vmatpush2.msra.mxu0 0.0
    %5780 = vmatprep.subr.mxu0 0.0
    %5781 = vmatpush2.msra.mxu0 0.0
    %5782 = vmatprep.subr.mxu0 0.0
    %5783 = vmatpush2.msra.mxu0 0.0
    %5784 = vmatprep.subr.mxu0 0.0
    %5785 = vmatpush2.msra.mxu0 0.0
    %5786 = vmatprep.subr.mxu0 0.0
    %5787 = vmatpush2.msra.mxu0 0.0
    %5788 = vmatprep.subr.mxu0 0.0
    %5789 = vmatpush2.msra.mxu0 0.0
    %5790 = vmatprep.mubr.f32.mxu0 0.0
    %v5791 = vand.u32 %v5625, 4294901760
    %5792 = vmatmul.mubr.f32.gmra.mxu0 %v5791
    %v5793 = vpop.f32.mrf.mxu0
    %v5794 = vadd.f32 %v5703, %v5793
    %v5795 = vpop.f32.mrf.mxu0
    %5796 = vdwg.mxu0
    %5797 = vmatprep.subr.mxu0 0.0
    %5798 = vmatpush1.msra.mxu0 0.0
    %5799 = vmatprep.subr.mxu0 0.0
    %5800 = vmatpush1.msra.mxu0 0.0
    %5801 = vmatprep.subr.mxu0 0.0
    %5802 = vmatpush1.msra.mxu0 0.0
    %5803 = vmatprep.subr.mxu0 0.0
    %5804 = vmatpush1.msra.mxu0 0.0
    %5805 = vmatprep.subr.mxu0 0.0
    %5806 = vmatpush1.msra.mxu0 0.0
    %5807 = vmatprep.subr.mxu0 0.0
    %5808 = vmatpush1.msra.mxu0 0.0
    %5809 = vmatprep.subr.mxu0 0.0
    %5810 = vmatpush1.msra.mxu0 0.0
    %5811 = vmatprep.subr.mxu0 0.0
    %5812 = vmatpush1.msra.mxu0 0.0
    %5813 = vmatprep.subr.mxu0 0.0
    %5814 = vmatpush1.msra.mxu0 0.0
    %5815 = vmatprep.subr.mxu0 0.0
    %5816 = vmatpush1.msra.mxu0 0.0
    %5817 = vmatprep.subr.mxu0 0.0
    %5818 = vmatpush1.msra.mxu0 0.0
    %5819 = vmatprep.subr.mxu0 0.0
    %5820 = vmatpush1.msra.mxu0 0.0
    %5821 = vmatprep.subr.mxu0 0.0
    %v5822 = vand.u32 %v111, 4294901760
    %v5823 = vsub.f32 %v111, %v5822
    %5824 = vmatpush1.msra.mxu0 %v5823
    %5825 = vmatprep.subr.mxu0 0.0
    %v5826 = vand.u32 %v110, 4294901760
    %v5827 = vsub.f32 %v110, %v5826
    %5828 = vmatpush1.msra.mxu0 %v5827
    %5829 = vmatprep.subr.mxu0 0.0
    %v5830 = vand.u32 %v109, 4294901760
    %v5831 = vsub.f32 %v109, %v5830
    %5832 = vmatpush1.msra.mxu0 %v5831
    %5833 = vmatprep.subr.mxu0 0.0
    %v5834 = vand.u32 %v108, 4294901760
    %v5835 = vsub.f32 %v108, %v5834
    %5836 = vmatpush1.msra.mxu0 %v5835
    %5837 = vmatprep.subr.mxu0 0.0
    %5838 = vmatpush2.msra.mxu0 0.0
    %5839 = vmatprep.subr.mxu0 0.0
    %5840 = vmatpush2.msra.mxu0 0.0
    %5841 = vmatprep.subr.mxu0 0.0
    %5842 = vmatpush2.msra.mxu0 0.0
    %5843 = vmatprep.subr.mxu0 0.0
    %5844 = vmatpush2.msra.mxu0 0.0
    %5845 = vmatprep.subr.mxu0 0.0
    %5846 = vmatpush2.msra.mxu0 0.0
    %5847 = vmatprep.subr.mxu0 0.0
    %5848 = vmatpush2.msra.mxu0 0.0
    %5849 = vmatprep.subr.mxu0 0.0
    %5850 = vmatpush2.msra.mxu0 0.0
    %5851 = vmatprep.subr.mxu0 0.0
    %5852 = vmatpush2.msra.mxu0 0.0
    %5853 = vmatprep.subr.mxu0 0.0
    %5854 = vmatpush2.msra.mxu0 0.0
    %5855 = vmatprep.subr.mxu0 0.0
    %5856 = vmatpush2.msra.mxu0 0.0
    %5857 = vmatprep.subr.mxu0 0.0
    %5858 = vmatpush2.msra.mxu0 0.0
    %5859 = vmatprep.subr.mxu0 0.0
    %5860 = vmatpush2.msra.mxu0 0.0
    %5861 = vmatprep.subr.mxu0 0.0
    %5862 = vmatpush2.msra.mxu0 0.0
    %5863 = vmatprep.subr.mxu0 0.0
    %5864 = vmatpush2.msra.mxu0 0.0
    %5865 = vmatprep.subr.mxu0 0.0
    %5866 = vmatpush2.msra.mxu0 0.0
    %5867 = vmatprep.subr.mxu0 0.0
    %5868 = vmatpush2.msra.mxu0 0.0
    %5869 = vmatprep.mubr.f32.mxu0 0.0
    %v5870 = vand.u32 %v5625, 4294901760
    %v5871 = vsub.f32 %v5625, %v5870
    %5872 = vmatmul.mubr.f32.gmra.mxu0 %v5871
    %v5873 = vpop.f32.mrf.mxu0
    %v5874 = vadd.f32 %v5794, %v5873
    %v5875 = vpop.f32.mrf.mxu0
    %5876 = vdwg.mxu0
    %5877 = vmatprep.subr.mxu0 0.0
    %5878 = vmatpush1.msra.mxu0 0.0
    %5879 = vmatprep.subr.mxu0 0.0
    %5880 = vmatpush1.msra.mxu0 0.0
    %5881 = vmatprep.subr.mxu0 0.0
    %5882 = vmatpush1.msra.mxu0 0.0
    %5883 = vmatprep.subr.mxu0 0.0
    %5884 = vmatpush1.msra.mxu0 0.0
    %5885 = vmatprep.subr.mxu0 0.0
    %5886 = vmatpush1.msra.mxu0 0.0
    %5887 = vmatprep.subr.mxu0 0.0
    %5888 = vmatpush1.msra.mxu0 0.0
    %5889 = vmatprep.subr.mxu0 0.0
    %5890 = vmatpush1.msra.mxu0 0.0
    %5891 = vmatprep.subr.mxu0 0.0
    %5892 = vmatpush1.msra.mxu0 0.0
    %5893 = vmatprep.subr.mxu0 0.0
    %5894 = vmatpush1.msra.mxu0 0.0
    %5895 = vmatprep.subr.mxu0 0.0
    %5896 = vmatpush1.msra.mxu0 0.0
    %5897 = vmatprep.subr.mxu0 0.0
    %5898 = vmatpush1.msra.mxu0 0.0
    %5899 = vmatprep.subr.mxu0 0.0
    %5900 = vmatpush1.msra.mxu0 0.0
    %5901 = vmatprep.subr.mxu0 0.0
    %v5902 = vand.u32 %v111, 4294901760
    %5903 = vmatpush1.msra.mxu0 %v5902
    %5904 = vmatprep.subr.mxu0 0.0
    %v5905 = vand.u32 %v110, 4294901760
    %5906 = vmatpush1.msra.mxu0 %v5905
    %5907 = vmatprep.subr.mxu0 0.0
    %v5908 = vand.u32 %v109, 4294901760
    %5909 = vmatpush1.msra.mxu0 %v5908
    %5910 = vmatprep.subr.mxu0 0.0
    %v5911 = vand.u32 %v108, 4294901760
    %5912 = vmatpush1.msra.mxu0 %v5911
    %5913 = vmatprep.subr.mxu0 0.0
    %5914 = vmatpush2.msra.mxu0 0.0
    %5915 = vmatprep.subr.mxu0 0.0
    %5916 = vmatpush2.msra.mxu0 0.0
    %5917 = vmatprep.subr.mxu0 0.0
    %5918 = vmatpush2.msra.mxu0 0.0
    %5919 = vmatprep.subr.mxu0 0.0
    %5920 = vmatpush2.msra.mxu0 0.0
    %5921 = vmatprep.subr.mxu0 0.0
    %5922 = vmatpush2.msra.mxu0 0.0
    %5923 = vmatprep.subr.mxu0 0.0
    %5924 = vmatpush2.msra.mxu0 0.0
    %5925 = vmatprep.subr.mxu0 0.0
    %5926 = vmatpush2.msra.mxu0 0.0
    %5927 = vmatprep.subr.mxu0 0.0
    %5928 = vmatpush2.msra.mxu0 0.0
    %5929 = vmatprep.subr.mxu0 0.0
    %5930 = vmatpush2.msra.mxu0 0.0
    %5931 = vmatprep.subr.mxu0 0.0
    %5932 = vmatpush2.msra.mxu0 0.0
    %5933 = vmatprep.subr.mxu0 0.0
    %5934 = vmatpush2.msra.mxu0 0.0
    %5935 = vmatprep.subr.mxu0 0.0
    %5936 = vmatpush2.msra.mxu0 0.0
    %5937 = vmatprep.subr.mxu0 0.0
    %5938 = vmatpush2.msra.mxu0 0.0
    %5939 = vmatprep.subr.mxu0 0.0
    %5940 = vmatpush2.msra.mxu0 0.0
    %5941 = vmatprep.subr.mxu0 0.0
    %5942 = vmatpush2.msra.mxu0 0.0
    %5943 = vmatprep.subr.mxu0 0.0
    %5944 = vmatpush2.msra.mxu0 0.0
    %5945 = vmatprep.mubr.f32.mxu0 0.0
    %v5946 = vand.u32 %v5625, 4294901760
    %v5947 = vsub.f32 %v5625, %v5946
    %v5948 = vand.u32 %v5947, 4294901760
    %5949 = vmatmul.mubr.f32.gmra.mxu0 %v5948
    %v5950 = vpop.f32.mrf.mxu0
    %v5951 = vadd.f32 %v5874, %v5950
    %v5952 = vpop.f32.mrf.mxu0
    %5953 = vdwg.mxu0
    %5954 = vmatprep.subr.mxu0 0.0
    %5955 = vmatpush1.msra.mxu0 0.0
    %5956 = vmatprep.subr.mxu0 0.0
    %5957 = vmatpush1.msra.mxu0 0.0
    %5958 = vmatprep.subr.mxu0 0.0
    %5959 = vmatpush1.msra.mxu0 0.0
    %5960 = vmatprep.subr.mxu0 0.0
    %5961 = vmatpush1.msra.mxu0 0.0
    %5962 = vmatprep.subr.mxu0 0.0
    %5963 = vmatpush1.msra.mxu0 0.0
    %5964 = vmatprep.subr.mxu0 0.0
    %5965 = vmatpush1.msra.mxu0 0.0
    %5966 = vmatprep.subr.mxu0 0.0
    %5967 = vmatpush1.msra.mxu0 0.0
    %5968 = vmatprep.subr.mxu0 0.0
    %5969 = vmatpush1.msra.mxu0 0.0
    %5970 = vmatprep.subr.mxu0 0.0
    %5971 = vmatpush1.msra.mxu0 0.0
    %5972 = vmatprep.subr.mxu0 0.0
    %5973 = vmatpush1.msra.mxu0 0.0
    %5974 = vmatprep.subr.mxu0 0.0
    %5975 = vmatpush1.msra.mxu0 0.0
    %5976 = vmatprep.subr.mxu0 0.0
    %5977 = vmatpush1.msra.mxu0 0.0
    %5978 = vmatprep.subr.mxu0 0.0
    %v5979 = vand.u32 %v111, 4294901760
    %v5980 = vsub.f32 %v111, %v5979
    %v5981 = vand.u32 %v5980, 4294901760
    %5982 = vmatpush1.msra.mxu0 %v5981
    %5983 = vmatprep.subr.mxu0 0.0
    %v5984 = vand.u32 %v110, 4294901760
    %v5985 = vsub.f32 %v110, %v5984
    %v5986 = vand.u32 %v5985, 4294901760
    %5987 = vmatpush1.msra.mxu0 %v5986
    %5988 = vmatprep.subr.mxu0 0.0
    %v5989 = vand.u32 %v109, 4294901760
    %v5990 = vsub.f32 %v109, %v5989
    %v5991 = vand.u32 %v5990, 4294901760
    %5992 = vmatpush1.msra.mxu0 %v5991
    %5993 = vmatprep.subr.mxu0 0.0
    %v5994 = vand.u32 %v108, 4294901760
    %v5995 = vsub.f32 %v108, %v5994
    %v5996 = vand.u32 %v5995, 4294901760
    %5997 = vmatpush1.msra.mxu0 %v5996
    %5998 = vmatprep.subr.mxu0 0.0
    %5999 = vmatpush2.msra.mxu0 0.0
    %6000 = vmatprep.subr.mxu0 0.0
    %6001 = vmatpush2.msra.mxu0 0.0
    %6002 = vmatprep.subr.mxu0 0.0
    %6003 = vmatpush2.msra.mxu0 0.0
    %6004 = vmatprep.subr.mxu0 0.0
    %6005 = vmatpush2.msra.mxu0 0.0
    %6006 = vmatprep.subr.mxu0 0.0
    %6007 = vmatpush2.msra.mxu0 0.0
    %6008 = vmatprep.subr.mxu0 0.0
    %6009 = vmatpush2.msra.mxu0 0.0
    %6010 = vmatprep.subr.mxu0 0.0
    %6011 = vmatpush2.msra.mxu0 0.0
    %6012 = vmatprep.subr.mxu0 0.0
    %6013 = vmatpush2.msra.mxu0 0.0
    %6014 = vmatprep.subr.mxu0 0.0
    %6015 = vmatpush2.msra.mxu0 0.0
    %6016 = vmatprep.subr.mxu0 0.0
    %6017 = vmatpush2.msra.mxu0 0.0
    %6018 = vmatprep.subr.mxu0 0.0
    %6019 = vmatpush2.msra.mxu0 0.0
    %6020 = vmatprep.subr.mxu0 0.0
    %6021 = vmatpush2.msra.mxu0 0.0
    %6022 = vmatprep.subr.mxu0 0.0
    %6023 = vmatpush2.msra.mxu0 0.0
    %6024 = vmatprep.subr.mxu0 0.0
    %6025 = vmatpush2.msra.mxu0 0.0
    %6026 = vmatprep.subr.mxu0 0.0
    %6027 = vmatpush2.msra.mxu0 0.0
    %6028 = vmatprep.subr.mxu0 0.0
    %6029 = vmatpush2.msra.mxu0 0.0
    %6030 = vmatprep.mubr.f32.mxu0 0.0
    %v6031 = vand.u32 %v5625, 4294901760
    %6032 = vmatmul.mubr.f32.gmra.mxu0 %v6031
    %v6033 = vpop.f32.mrf.mxu0
    %v6034 = vadd.f32 %v5951, %v6033
    %v6035 = vpop.f32.mrf.mxu0
    %6036 = vdwg.mxu0
    %6037 = vmatprep.subr.mxu0 0.0
    %6038 = vmatpush1.msra.mxu0 0.0
    %6039 = vmatprep.subr.mxu0 0.0
    %6040 = vmatpush1.msra.mxu0 0.0
    %6041 = vmatprep.subr.mxu0 0.0
    %6042 = vmatpush1.msra.mxu0 0.0
    %6043 = vmatprep.subr.mxu0 0.0
    %6044 = vmatpush1.msra.mxu0 0.0
    %6045 = vmatprep.subr.mxu0 0.0
    %6046 = vmatpush1.msra.mxu0 0.0
    %6047 = vmatprep.subr.mxu0 0.0
    %6048 = vmatpush1.msra.mxu0 0.0
    %6049 = vmatprep.subr.mxu0 0.0
    %6050 = vmatpush1.msra.mxu0 0.0
    %6051 = vmatprep.subr.mxu0 0.0
    %6052 = vmatpush1.msra.mxu0 0.0
    %6053 = vmatprep.subr.mxu0 0.0
    %6054 = vmatpush1.msra.mxu0 0.0
    %6055 = vmatprep.subr.mxu0 0.0
    %6056 = vmatpush1.msra.mxu0 0.0
    %6057 = vmatprep.subr.mxu0 0.0
    %6058 = vmatpush1.msra.mxu0 0.0
    %6059 = vmatprep.subr.mxu0 0.0
    %6060 = vmatpush1.msra.mxu0 0.0
    %6061 = vmatprep.subr.mxu0 0.0
    %v6062 = vand.u32 %v111, 4294901760
    %6063 = vmatpush1.msra.mxu0 %v6062
    %6064 = vmatprep.subr.mxu0 0.0
    %v6065 = vand.u32 %v110, 4294901760
    %6066 = vmatpush1.msra.mxu0 %v6065
    %6067 = vmatprep.subr.mxu0 0.0
    %v6068 = vand.u32 %v109, 4294901760
    %6069 = vmatpush1.msra.mxu0 %v6068
    %6070 = vmatprep.subr.mxu0 0.0
    %v6071 = vand.u32 %v108, 4294901760
    %6072 = vmatpush1.msra.mxu0 %v6071
    %6073 = vmatprep.subr.mxu0 0.0
    %6074 = vmatpush2.msra.mxu0 0.0
    %6075 = vmatprep.subr.mxu0 0.0
    %6076 = vmatpush2.msra.mxu0 0.0
    %6077 = vmatprep.subr.mxu0 0.0
    %6078 = vmatpush2.msra.mxu0 0.0
    %6079 = vmatprep.subr.mxu0 0.0
    %6080 = vmatpush2.msra.mxu0 0.0
    %6081 = vmatprep.subr.mxu0 0.0
    %6082 = vmatpush2.msra.mxu0 0.0
    %6083 = vmatprep.subr.mxu0 0.0
    %6084 = vmatpush2.msra.mxu0 0.0
    %6085 = vmatprep.subr.mxu0 0.0
    %6086 = vmatpush2.msra.mxu0 0.0
    %6087 = vmatprep.subr.mxu0 0.0
    %6088 = vmatpush2.msra.mxu0 0.0
    %6089 = vmatprep.subr.mxu0 0.0
    %6090 = vmatpush2.msra.mxu0 0.0
    %6091 = vmatprep.subr.mxu0 0.0
    %6092 = vmatpush2.msra.mxu0 0.0
    %6093 = vmatprep.subr.mxu0 0.0
    %6094 = vmatpush2.msra.mxu0 0.0
    %6095 = vmatprep.subr.mxu0 0.0
    %6096 = vmatpush2.msra.mxu0 0.0
    %6097 = vmatprep.subr.mxu0 0.0
    %6098 = vmatpush2.msra.mxu0 0.0
    %6099 = vmatprep.subr.mxu0 0.0
    %6100 = vmatpush2.msra.mxu0 0.0
    %6101 = vmatprep.subr.mxu0 0.0
    %6102 = vmatpush2.msra.mxu0 0.0
    %6103 = vmatprep.subr.mxu0 0.0
    %6104 = vmatpush2.msra.mxu0 0.0
    %6105 = vmatprep.mubr.f32.mxu0 0.0
    %v6106 = vand.u32 %v5625, 4294901760
    %6107 = vmatmul.mubr.f32.gmra.mxu0 %v6106
    %v6108 = vpop.f32.mrf.mxu0
    %v6109 = vadd.f32 %v6034, %v6108
    %v6110 = vpop.f32.mrf.mxu0
    %6111 = vdwg.mxu0
    %v6112 = vadd.f32 %v6109, %v2104
    %v6113 = vxor.u32 %v6112, 2147483648
    %v6114 = vmul.f32 %v6113, 1.442695
    %v6115 = vpow.pop %v6114
    %v6116 = vadd.f32 %v6115, 1.0
    %v6117 = vrcp.pop %v6116
    %v6118 = vmul.f32 1.0, %v6117
    %v6119 = vtanh.pop %v6112
    %v6120 = vmul.f32 %v6118, %v4127
    %6122 = vrot.lane.b32.xlu0 %v6119, 64
    %v6123 = vpop.permute.xlu0 %6122
    %v6125 = vmul.f32 %v6118, %v6123
    %6127 = vrot.lane.b32.xlu0 %v6125, 32
    %v6128 = vpop.permute.xlu0 %6127
    %v6130 = vadd.f32 %v6120, %v6128
    %v6131 = vtanh.pop %v6130
    %6133 = vrot.lane.b32.xlu0 %v6131, 64
    %v6134 = vpop.permute.xlu0 %6133
    %v6136 = vmul.f32 %v6118, %v6134
    %6137 = vmatprep.subr.mxu0 0.0
    %6138 = vmatpush1.msra.mxu0 0.0
    %6139 = vmatprep.subr.mxu0 0.0
    %6140 = vmatpush1.msra.mxu0 0.0
    %6141 = vmatprep.subr.mxu0 0.0
    %6142 = vmatpush1.msra.mxu0 0.0
    %6143 = vmatprep.subr.mxu0 0.0
    %6144 = vmatpush1.msra.mxu0 0.0
    %6145 = vmatprep.subr.mxu0 0.0
    %6146 = vmatpush1.msra.mxu0 0.0
    %6147 = vmatprep.subr.mxu0 0.0
    %6148 = vmatpush1.msra.mxu0 0.0
    %6149 = vmatprep.subr.mxu0 0.0
    %6150 = vmatpush1.msra.mxu0 0.0
    %6151 = vmatprep.subr.mxu0 0.0
    %6152 = vmatpush1.msra.mxu0 0.0
    %6153 = vmatprep.subr.mxu0 0.0
    %6154 = vmatpush1.msra.mxu0 0.0
    %6155 = vmatprep.subr.mxu0 0.0
    %6156 = vmatpush1.msra.mxu0 0.0
    %6157 = vmatprep.subr.mxu0 0.0
    %6158 = vmatpush1.msra.mxu0 0.0
    %6159 = vmatprep.subr.mxu0 0.0
    %6160 = vmatpush1.msra.mxu0 0.0
    %6161 = vmatprep.subr.mxu0 0.0
    %v6162 = vand.u32 %v106, 4294901760
    %6163 = vmatpush1.msra.mxu0 %v6162
    %6164 = vmatprep.subr.mxu0 0.0
    %v6165 = vand.u32 %v105, 4294901760
    %6166 = vmatpush1.msra.mxu0 %v6165
    %6167 = vmatprep.subr.mxu0 0.0
    %v6168 = vand.u32 %v104, 4294901760
    %6169 = vmatpush1.msra.mxu0 %v6168
    %6170 = vmatprep.subr.mxu0 0.0
    %v6171 = vand.u32 %v103, 4294901760
    %6172 = vmatpush1.msra.mxu0 %v6171
    %6173 = vmatprep.subr.mxu0 0.0
    %6174 = vmatpush2.msra.mxu0 0.0
    %6175 = vmatprep.subr.mxu0 0.0
    %6176 = vmatpush2.msra.mxu0 0.0
    %6177 = vmatprep.subr.mxu0 0.0
    %6178 = vmatpush2.msra.mxu0 0.0
    %6179 = vmatprep.subr.mxu0 0.0
    %6180 = vmatpush2.msra.mxu0 0.0
    %6181 = vmatprep.subr.mxu0 0.0
    %6182 = vmatpush2.msra.mxu0 0.0
    %6183 = vmatprep.subr.mxu0 0.0
    %6184 = vmatpush2.msra.mxu0 0.0
    %6185 = vmatprep.subr.mxu0 0.0
    %6186 = vmatpush2.msra.mxu0 0.0
    %6187 = vmatprep.subr.mxu0 0.0
    %6188 = vmatpush2.msra.mxu0 0.0
    %6189 = vmatprep.subr.mxu0 0.0
    %6190 = vmatpush2.msra.mxu0 0.0
    %6191 = vmatprep.subr.mxu0 0.0
    %6192 = vmatpush2.msra.mxu0 0.0
    %6193 = vmatprep.subr.mxu0 0.0
    %6194 = vmatpush2.msra.mxu0 0.0
    %6195 = vmatprep.subr.mxu0 0.0
    %6196 = vmatpush2.msra.mxu0 0.0
    %6197 = vmatprep.subr.mxu0 0.0
    %6198 = vmatpush2.msra.mxu0 0.0
    %6199 = vmatprep.subr.mxu0 0.0
    %6200 = vmatpush2.msra.mxu0 0.0
    %6201 = vmatprep.subr.mxu0 0.0
    %6202 = vmatpush2.msra.mxu0 0.0
    %6203 = vmatprep.subr.mxu0 0.0
    %6204 = vmatpush2.msra.mxu0 0.0
    %6205 = vmatprep.mubr.f32.mxu0 0.0
    %v6206 = vand.u32 %v5625, 4294901760
    %v6207 = vsub.f32 %v5625, %v6206
    %v6208 = vand.u32 %v6207, 4294901760
    %v6209 = vsub.f32 %v6207, %v6208
    %v6210 = vand.u32 %v6209, 4294901760
    %6211 = vmatmul.mubr.f32.gmra.mxu0 %v6210
    %v6212 = vpop.f32.mrf.mxu0
    %v6213 = vadd.f32 0.0, %v6212
    %v6214 = vpop.f32.mrf.mxu0
    %6215 = vdwg.mxu0
    %6216 = vmatprep.subr.mxu0 0.0
    %6217 = vmatpush1.msra.mxu0 0.0
    %6218 = vmatprep.subr.mxu0 0.0
    %6219 = vmatpush1.msra.mxu0 0.0
    %6220 = vmatprep.subr.mxu0 0.0
    %6221 = vmatpush1.msra.mxu0 0.0
    %6222 = vmatprep.subr.mxu0 0.0
    %6223 = vmatpush1.msra.mxu0 0.0
    %6224 = vmatprep.subr.mxu0 0.0
    %6225 = vmatpush1.msra.mxu0 0.0
    %6226 = vmatprep.subr.mxu0 0.0
    %6227 = vmatpush1.msra.mxu0 0.0
    %6228 = vmatprep.subr.mxu0 0.0
    %6229 = vmatpush1.msra.mxu0 0.0
    %6230 = vmatprep.subr.mxu0 0.0
    %6231 = vmatpush1.msra.mxu0 0.0
    %6232 = vmatprep.subr.mxu0 0.0
    %6233 = vmatpush1.msra.mxu0 0.0
    %6234 = vmatprep.subr.mxu0 0.0
    %6235 = vmatpush1.msra.mxu0 0.0
    %6236 = vmatprep.subr.mxu0 0.0
    %6237 = vmatpush1.msra.mxu0 0.0
    %6238 = vmatprep.subr.mxu0 0.0
    %6239 = vmatpush1.msra.mxu0 0.0
    %6240 = vmatprep.subr.mxu0 0.0
    %v6241 = vand.u32 %v106, 4294901760
    %v6242 = vsub.f32 %v106, %v6241
    %v6243 = vand.u32 %v6242, 4294901760
    %v6244 = vsub.f32 %v6242, %v6243
    %v6245 = vand.u32 %v6244, 4294901760
    %6246 = vmatpush1.msra.mxu0 %v6245
    %6247 = vmatprep.subr.mxu0 0.0
    %v6248 = vand.u32 %v105, 4294901760
    %v6249 = vsub.f32 %v105, %v6248
    %v6250 = vand.u32 %v6249, 4294901760
    %v6251 = vsub.f32 %v6249, %v6250
    %v6252 = vand.u32 %v6251, 4294901760
    %6253 = vmatpush1.msra.mxu0 %v6252
    %6254 = vmatprep.subr.mxu0 0.0
    %v6255 = vand.u32 %v104, 4294901760
    %v6256 = vsub.f32 %v104, %v6255
    %v6257 = vand.u32 %v6256, 4294901760
    %v6258 = vsub.f32 %v6256, %v6257
    %v6259 = vand.u32 %v6258, 4294901760
    %6260 = vmatpush1.msra.mxu0 %v6259
    %6261 = vmatprep.subr.mxu0 0.0
    %v6262 = vand.u32 %v103, 4294901760
    %v6263 = vsub.f32 %v103, %v6262
    %v6264 = vand.u32 %v6263, 4294901760
    %v6265 = vsub.f32 %v6263, %v6264
    %v6266 = vand.u32 %v6265, 4294901760
    %6267 = vmatpush1.msra.mxu0 %v6266
    %6268 = vmatprep.subr.mxu0 0.0
    %6269 = vmatpush2.msra.mxu0 0.0
    %6270 = vmatprep.subr.mxu0 0.0
    %6271 = vmatpush2.msra.mxu0 0.0
    %6272 = vmatprep.subr.mxu0 0.0
    %6273 = vmatpush2.msra.mxu0 0.0
    %6274 = vmatprep.subr.mxu0 0.0
    %6275 = vmatpush2.msra.mxu0 0.0
    %6276 = vmatprep.subr.mxu0 0.0
    %6277 = vmatpush2.msra.mxu0 0.0
    %6278 = vmatprep.subr.mxu0 0.0
    %6279 = vmatpush2.msra.mxu0 0.0
    %6280 = vmatprep.subr.mxu0 0.0
    %6281 = vmatpush2.msra.mxu0 0.0
    %6282 = vmatprep.subr.mxu0 0.0
    %6283 = vmatpush2.msra.mxu0 0.0
    %6284 = vmatprep.subr.mxu0 0.0
    %6285 = vmatpush2.msra.mxu0 0.0
    %6286 = vmatprep.subr.mxu0 0.0
    %6287 = vmatpush2.msra.mxu0 0.0
    %6288 = vmatprep.subr.mxu0 0.0
    %6289 = vmatpush2.msra.mxu0 0.0
    %6290 = vmatprep.subr.mxu0 0.0
    %6291 = vmatpush2.msra.mxu0 0.0
    %6292 = vmatprep.subr.mxu0 0.0
    %6293 = vmatpush2.msra.mxu0 0.0
    %6294 = vmatprep.subr.mxu0 0.0
    %6295 = vmatpush2.msra.mxu0 0.0
    %6296 = vmatprep.subr.mxu0 0.0
    %6297 = vmatpush2.msra.mxu0 0.0
    %6298 = vmatprep.subr.mxu0 0.0
    %6299 = vmatpush2.msra.mxu0 0.0
    %6300 = vmatprep.mubr.f32.mxu0 0.0
    %v6301 = vand.u32 %v5625, 4294901760
    %6302 = vmatmul.mubr.f32.gmra.mxu0 %v6301
    %v6303 = vpop.f32.mrf.mxu0
    %v6304 = vadd.f32 %v6213, %v6303
    %v6305 = vpop.f32.mrf.mxu0
    %6306 = vdwg.mxu0
    %6307 = vmatprep.subr.mxu0 0.0
    %6308 = vmatpush1.msra.mxu0 0.0
    %6309 = vmatprep.subr.mxu0 0.0
    %6310 = vmatpush1.msra.mxu0 0.0
    %6311 = vmatprep.subr.mxu0 0.0
    %6312 = vmatpush1.msra.mxu0 0.0
    %6313 = vmatprep.subr.mxu0 0.0
    %6314 = vmatpush1.msra.mxu0 0.0
    %6315 = vmatprep.subr.mxu0 0.0
    %6316 = vmatpush1.msra.mxu0 0.0
    %6317 = vmatprep.subr.mxu0 0.0
    %6318 = vmatpush1.msra.mxu0 0.0
    %6319 = vmatprep.subr.mxu0 0.0
    %6320 = vmatpush1.msra.mxu0 0.0
    %6321 = vmatprep.subr.mxu0 0.0
    %6322 = vmatpush1.msra.mxu0 0.0
    %6323 = vmatprep.subr.mxu0 0.0
    %6324 = vmatpush1.msra.mxu0 0.0
    %6325 = vmatprep.subr.mxu0 0.0
    %6326 = vmatpush1.msra.mxu0 0.0
    %6327 = vmatprep.subr.mxu0 0.0
    %6328 = vmatpush1.msra.mxu0 0.0
    %6329 = vmatprep.subr.mxu0 0.0
    %6330 = vmatpush1.msra.mxu0 0.0
    %6331 = vmatprep.subr.mxu0 0.0
    %v6332 = vand.u32 %v106, 4294901760
    %v6333 = vsub.f32 %v106, %v6332
    %6334 = vmatpush1.msra.mxu0 %v6333
    %6335 = vmatprep.subr.mxu0 0.0
    %v6336 = vand.u32 %v105, 4294901760
    %v6337 = vsub.f32 %v105, %v6336
    %6338 = vmatpush1.msra.mxu0 %v6337
    %6339 = vmatprep.subr.mxu0 0.0
    %v6340 = vand.u32 %v104, 4294901760
    %v6341 = vsub.f32 %v104, %v6340
    %6342 = vmatpush1.msra.mxu0 %v6341
    %6343 = vmatprep.subr.mxu0 0.0
    %v6344 = vand.u32 %v103, 4294901760
    %v6345 = vsub.f32 %v103, %v6344
    %6346 = vmatpush1.msra.mxu0 %v6345
    %6347 = vmatprep.subr.mxu0 0.0
    %6348 = vmatpush2.msra.mxu0 0.0
    %6349 = vmatprep.subr.mxu0 0.0
    %6350 = vmatpush2.msra.mxu0 0.0
    %6351 = vmatprep.subr.mxu0 0.0
    %6352 = vmatpush2.msra.mxu0 0.0
    %6353 = vmatprep.subr.mxu0 0.0
    %6354 = vmatpush2.msra.mxu0 0.0
    %6355 = vmatprep.subr.mxu0 0.0
    %6356 = vmatpush2.msra.mxu0 0.0
    %6357 = vmatprep.subr.mxu0 0.0
    %6358 = vmatpush2.msra.mxu0 0.0
    %6359 = vmatprep.subr.mxu0 0.0
    %6360 = vmatpush2.msra.mxu0 0.0
    %6361 = vmatprep.subr.mxu0 0.0
    %6362 = vmatpush2.msra.mxu0 0.0
    %6363 = vmatprep.subr.mxu0 0.0
    %6364 = vmatpush2.msra.mxu0 0.0
    %6365 = vmatprep.subr.mxu0 0.0
    %6366 = vmatpush2.msra.mxu0 0.0
    %6367 = vmatprep.subr.mxu0 0.0
    %6368 = vmatpush2.msra.mxu0 0.0
    %6369 = vmatprep.subr.mxu0 0.0
    %6370 = vmatpush2.msra.mxu0 0.0
    %6371 = vmatprep.subr.mxu0 0.0
    %6372 = vmatpush2.msra.mxu0 0.0
    %6373 = vmatprep.subr.mxu0 0.0
    %6374 = vmatpush2.msra.mxu0 0.0
    %6375 = vmatprep.subr.mxu0 0.0
    %6376 = vmatpush2.msra.mxu0 0.0
    %6377 = vmatprep.subr.mxu0 0.0
    %6378 = vmatpush2.msra.mxu0 0.0
    %6379 = vmatprep.mubr.f32.mxu0 0.0
    %v6380 = vand.u32 %v5625, 4294901760
    %v6381 = vsub.f32 %v5625, %v6380
    %6382 = vmatmul.mubr.f32.gmra.mxu0 %v6381
    %v6383 = vpop.f32.mrf.mxu0
    %v6384 = vadd.f32 %v6304, %v6383
    %v6385 = vpop.f32.mrf.mxu0
    %6386 = vdwg.mxu0
    %6387 = vmatprep.subr.mxu0 0.0
    %6388 = vmatpush1.msra.mxu0 0.0
    %6389 = vmatprep.subr.mxu0 0.0
    %6390 = vmatpush1.msra.mxu0 0.0
    %6391 = vmatprep.subr.mxu0 0.0
    %6392 = vmatpush1.msra.mxu0 0.0
    %6393 = vmatprep.subr.mxu0 0.0
    %6394 = vmatpush1.msra.mxu0 0.0
    %6395 = vmatprep.subr.mxu0 0.0
    %6396 = vmatpush1.msra.mxu0 0.0
    %6397 = vmatprep.subr.mxu0 0.0
    %6398 = vmatpush1.msra.mxu0 0.0
    %6399 = vmatprep.subr.mxu0 0.0
    %6400 = vmatpush1.msra.mxu0 0.0
    %6401 = vmatprep.subr.mxu0 0.0
    %6402 = vmatpush1.msra.mxu0 0.0
    %6403 = vmatprep.subr.mxu0 0.0
    %6404 = vmatpush1.msra.mxu0 0.0
    %6405 = vmatprep.subr.mxu0 0.0
    %6406 = vmatpush1.msra.mxu0 0.0
    %6407 = vmatprep.subr.mxu0 0.0
    %6408 = vmatpush1.msra.mxu0 0.0
    %6409 = vmatprep.subr.mxu0 0.0
    %6410 = vmatpush1.msra.mxu0 0.0
    %6411 = vmatprep.subr.mxu0 0.0
    %v6412 = vand.u32 %v106, 4294901760
    %6413 = vmatpush1.msra.mxu0 %v6412
    %6414 = vmatprep.subr.mxu0 0.0
    %v6415 = vand.u32 %v105, 4294901760
    %6416 = vmatpush1.msra.mxu0 %v6415
    %6417 = vmatprep.subr.mxu0 0.0
    %v6418 = vand.u32 %v104, 4294901760
    %6419 = vmatpush1.msra.mxu0 %v6418
    %6420 = vmatprep.subr.mxu0 0.0
    %v6421 = vand.u32 %v103, 4294901760
    %6422 = vmatpush1.msra.mxu0 %v6421
    %6423 = vmatprep.subr.mxu0 0.0
    %6424 = vmatpush2.msra.mxu0 0.0
    %6425 = vmatprep.subr.mxu0 0.0
    %6426 = vmatpush2.msra.mxu0 0.0
    %6427 = vmatprep.subr.mxu0 0.0
    %6428 = vmatpush2.msra.mxu0 0.0
    %6429 = vmatprep.subr.mxu0 0.0
    %6430 = vmatpush2.msra.mxu0 0.0
    %6431 = vmatprep.subr.mxu0 0.0
    %6432 = vmatpush2.msra.mxu0 0.0
    %6433 = vmatprep.subr.mxu0 0.0
    %6434 = vmatpush2.msra.mxu0 0.0
    %6435 = vmatprep.subr.mxu0 0.0
    %6436 = vmatpush2.msra.mxu0 0.0
    %6437 = vmatprep.subr.mxu0 0.0
    %6438 = vmatpush2.msra.mxu0 0.0
    %6439 = vmatprep.subr.mxu0 0.0
    %6440 = vmatpush2.msra.mxu0 0.0
    %6441 = vmatprep.subr.mxu0 0.0
    %6442 = vmatpush2.msra.mxu0 0.0
    %6443 = vmatprep.subr.mxu0 0.0
    %6444 = vmatpush2.msra.mxu0 0.0
    %6445 = vmatprep.subr.mxu0 0.0
    %6446 = vmatpush2.msra.mxu0 0.0
    %6447 = vmatprep.subr.mxu0 0.0
    %6448 = vmatpush2.msra.mxu0 0.0
    %6449 = vmatprep.subr.mxu0 0.0
    %6450 = vmatpush2.msra.mxu0 0.0
    %6451 = vmatprep.subr.mxu0 0.0
    %6452 = vmatpush2.msra.mxu0 0.0
    %6453 = vmatprep.subr.mxu0 0.0
    %6454 = vmatpush2.msra.mxu0 0.0
    %6455 = vmatprep.mubr.f32.mxu0 0.0
    %v6456 = vand.u32 %v5625, 4294901760
    %v6457 = vsub.f32 %v5625, %v6456
    %v6458 = vand.u32 %v6457, 4294901760
    %6459 = vmatmul.mubr.f32.gmra.mxu0 %v6458
    %v6460 = vpop.f32.mrf.mxu0
    %v6461 = vadd.f32 %v6384, %v6460
    %v6462 = vpop.f32.mrf.mxu0
    %6463 = vdwg.mxu0
    %6464 = vmatprep.subr.mxu0 0.0
    %6465 = vmatpush1.msra.mxu0 0.0
    %6466 = vmatprep.subr.mxu0 0.0
    %6467 = vmatpush1.msra.mxu0 0.0
    %6468 = vmatprep.subr.mxu0 0.0
    %6469 = vmatpush1.msra.mxu0 0.0
    %6470 = vmatprep.subr.mxu0 0.0
    %6471 = vmatpush1.msra.mxu0 0.0
    %6472 = vmatprep.subr.mxu0 0.0
    %6473 = vmatpush1.msra.mxu0 0.0
    %6474 = vmatprep.subr.mxu0 0.0
    %6475 = vmatpush1.msra.mxu0 0.0
    %6476 = vmatprep.subr.mxu0 0.0
    %6477 = vmatpush1.msra.mxu0 0.0
    %6478 = vmatprep.subr.mxu0 0.0
    %6479 = vmatpush1.msra.mxu0 0.0
    %6480 = vmatprep.subr.mxu0 0.0
    %6481 = vmatpush1.msra.mxu0 0.0
    %6482 = vmatprep.subr.mxu0 0.0
    %6483 = vmatpush1.msra.mxu0 0.0
    %6484 = vmatprep.subr.mxu0 0.0
    %6485 = vmatpush1.msra.mxu0 0.0
    %6486 = vmatprep.subr.mxu0 0.0
    %6487 = vmatpush1.msra.mxu0 0.0
    %6488 = vmatprep.subr.mxu0 0.0
    %v6489 = vand.u32 %v106, 4294901760
    %v6490 = vsub.f32 %v106, %v6489
    %v6491 = vand.u32 %v6490, 4294901760
    %6492 = vmatpush1.msra.mxu0 %v6491
    %6493 = vmatprep.subr.mxu0 0.0
    %v6494 = vand.u32 %v105, 4294901760
    %v6495 = vsub.f32 %v105, %v6494
    %v6496 = vand.u32 %v6495, 4294901760
    %6497 = vmatpush1.msra.mxu0 %v6496
    %6498 = vmatprep.subr.mxu0 0.0
    %v6499 = vand.u32 %v104, 4294901760
    %v6500 = vsub.f32 %v104, %v6499
    %v6501 = vand.u32 %v6500, 4294901760
    %6502 = vmatpush1.msra.mxu0 %v6501
    %6503 = vmatprep.subr.mxu0 0.0
    %v6504 = vand.u32 %v103, 4294901760
    %v6505 = vsub.f32 %v103, %v6504
    %v6506 = vand.u32 %v6505, 4294901760
    %6507 = vmatpush1.msra.mxu0 %v6506
    %6508 = vmatprep.subr.mxu0 0.0
    %6509 = vmatpush2.msra.mxu0 0.0
    %6510 = vmatprep.subr.mxu0 0.0
    %6511 = vmatpush2.msra.mxu0 0.0
    %6512 = vmatprep.subr.mxu0 0.0
    %6513 = vmatpush2.msra.mxu0 0.0
    %6514 = vmatprep.subr.mxu0 0.0
    %6515 = vmatpush2.msra.mxu0 0.0
    %6516 = vmatprep.subr.mxu0 0.0
    %6517 = vmatpush2.msra.mxu0 0.0
    %6518 = vmatprep.subr.mxu0 0.0
    %6519 = vmatpush2.msra.mxu0 0.0
    %6520 = vmatprep.subr.mxu0 0.0
    %6521 = vmatpush2.msra.mxu0 0.0
    %6522 = vmatprep.subr.mxu0 0.0
    %6523 = vmatpush2.msra.mxu0 0.0
    %6524 = vmatprep.subr.mxu0 0.0
    %6525 = vmatpush2.msra.mxu0 0.0
    %6526 = vmatprep.subr.mxu0 0.0
    %6527 = vmatpush2.msra.mxu0 0.0
    %6528 = vmatprep.subr.mxu0 0.0
    %6529 = vmatpush2.msra.mxu0 0.0
    %6530 = vmatprep.subr.mxu0 0.0
    %6531 = vmatpush2.msra.mxu0 0.0
    %6532 = vmatprep.subr.mxu0 0.0
    %6533 = vmatpush2.msra.mxu0 0.0
    %6534 = vmatprep.subr.mxu0 0.0
    %6535 = vmatpush2.msra.mxu0 0.0
    %6536 = vmatprep.subr.mxu0 0.0
    %6537 = vmatpush2.msra.mxu0 0.0
    %6538 = vmatprep.subr.mxu0 0.0
    %6539 = vmatpush2.msra.mxu0 0.0
    %6540 = vmatprep.mubr.f32.mxu0 0.0
    %v6541 = vand.u32 %v5625, 4294901760
    %6542 = vmatmul.mubr.f32.gmra.mxu0 %v6541
    %v6543 = vpop.f32.mrf.mxu0
    %v6544 = vadd.f32 %v6461, %v6543
    %v6545 = vpop.f32.mrf.mxu0
    %6546 = vdwg.mxu0
    %6547 = vmatprep.subr.mxu0 0.0
    %6548 = vmatpush1.msra.mxu0 0.0
    %6549 = vmatprep.subr.mxu0 0.0
    %6550 = vmatpush1.msra.mxu0 0.0
    %6551 = vmatprep.subr.mxu0 0.0
    %6552 = vmatpush1.msra.mxu0 0.0
    %6553 = vmatprep.subr.mxu0 0.0
    %6554 = vmatpush1.msra.mxu0 0.0
    %6555 = vmatprep.subr.mxu0 0.0
    %6556 = vmatpush1.msra.mxu0 0.0
    %6557 = vmatprep.subr.mxu0 0.0
    %6558 = vmatpush1.msra.mxu0 0.0
    %6559 = vmatprep.subr.mxu0 0.0
    %6560 = vmatpush1.msra.mxu0 0.0
    %6561 = vmatprep.subr.mxu0 0.0
    %6562 = vmatpush1.msra.mxu0 0.0
    %6563 = vmatprep.subr.mxu0 0.0
    %6564 = vmatpush1.msra.mxu0 0.0
    %6565 = vmatprep.subr.mxu0 0.0
    %6566 = vmatpush1.msra.mxu0 0.0
    %6567 = vmatprep.subr.mxu0 0.0
    %6568 = vmatpush1.msra.mxu0 0.0
    %6569 = vmatprep.subr.mxu0 0.0
    %6570 = vmatpush1.msra.mxu0 0.0
    %6571 = vmatprep.subr.mxu0 0.0
    %v6572 = vand.u32 %v106, 4294901760
    %6573 = vmatpush1.msra.mxu0 %v6572
    %6574 = vmatprep.subr.mxu0 0.0
    %v6575 = vand.u32 %v105, 4294901760
    %6576 = vmatpush1.msra.mxu0 %v6575
    %6577 = vmatprep.subr.mxu0 0.0
    %v6578 = vand.u32 %v104, 4294901760
    %6579 = vmatpush1.msra.mxu0 %v6578
    %6580 = vmatprep.subr.mxu0 0.0
    %v6581 = vand.u32 %v103, 4294901760
    %6582 = vmatpush1.msra.mxu0 %v6581
    %6583 = vmatprep.subr.mxu0 0.0
    %6584 = vmatpush2.msra.mxu0 0.0
    %6585 = vmatprep.subr.mxu0 0.0
    %6586 = vmatpush2.msra.mxu0 0.0
    %6587 = vmatprep.subr.mxu0 0.0
    %6588 = vmatpush2.msra.mxu0 0.0
    %6589 = vmatprep.subr.mxu0 0.0
    %6590 = vmatpush2.msra.mxu0 0.0
    %6591 = vmatprep.subr.mxu0 0.0
    %6592 = vmatpush2.msra.mxu0 0.0
    %6593 = vmatprep.subr.mxu0 0.0
    %6594 = vmatpush2.msra.mxu0 0.0
    %6595 = vmatprep.subr.mxu0 0.0
    %6596 = vmatpush2.msra.mxu0 0.0
    %6597 = vmatprep.subr.mxu0 0.0
    %6598 = vmatpush2.msra.mxu0 0.0
    %6599 = vmatprep.subr.mxu0 0.0
    %6600 = vmatpush2.msra.mxu0 0.0
    %6601 = vmatprep.subr.mxu0 0.0
    %6602 = vmatpush2.msra.mxu0 0.0
    %6603 = vmatprep.subr.mxu0 0.0
    %6604 = vmatpush2.msra.mxu0 0.0
    %6605 = vmatprep.subr.mxu0 0.0
    %6606 = vmatpush2.msra.mxu0 0.0
    %6607 = vmatprep.subr.mxu0 0.0
    %6608 = vmatpush2.msra.mxu0 0.0
    %6609 = vmatprep.subr.mxu0 0.0
    %6610 = vmatpush2.msra.mxu0 0.0
    %6611 = vmatprep.subr.mxu0 0.0
    %6612 = vmatpush2.msra.mxu0 0.0
    %6613 = vmatprep.subr.mxu0 0.0
    %6614 = vmatpush2.msra.mxu0 0.0
    %6615 = vmatprep.mubr.f32.mxu0 0.0
    %v6616 = vand.u32 %v5625, 4294901760
    %6617 = vmatmul.mubr.f32.gmra.mxu0 %v6616
    %v6618 = vpop.f32.mrf.mxu0
    %v6619 = vadd.f32 %v6544, %v6618
    %v6620 = vpop.f32.mrf.mxu0
    %6621 = vdwg.mxu0
    %v6623 = vsel %vm117, %v98, 0
    %6625 = vmatprep.subr.mxu0 0.0
    %6626 = vmatpush1.msra.mxu0 0.0
    %6627 = vmatprep.subr.mxu0 0.0
    %6628 = vmatpush1.msra.mxu0 0.0
    %6629 = vmatprep.subr.mxu0 0.0
    %6630 = vmatpush1.msra.mxu0 0.0
    %6631 = vmatprep.subr.mxu0 0.0
    %6632 = vmatpush1.msra.mxu0 0.0
    %6633 = vmatprep.subr.mxu0 0.0
    %6634 = vmatpush1.msra.mxu0 0.0
    %6635 = vmatprep.subr.mxu0 0.0
    %6636 = vmatpush1.msra.mxu0 0.0
    %6637 = vmatprep.subr.mxu0 0.0
    %6638 = vmatpush1.msra.mxu0 0.0
    %6639 = vmatprep.subr.mxu0 0.0
    %6640 = vmatpush1.msra.mxu0 0.0
    %6641 = vmatprep.subr.mxu0 0.0
    %6642 = vmatpush1.msra.mxu0 0.0
    %6643 = vmatprep.subr.mxu0 0.0
    %6644 = vmatpush1.msra.mxu0 0.0
    %6645 = vmatprep.subr.mxu0 0.0
    %6646 = vmatpush1.msra.mxu0 0.0
    %6647 = vmatprep.subr.mxu0 0.0
    %6648 = vmatpush1.msra.mxu0 0.0
    %6649 = vmatprep.subr.mxu0 0.0
    %v6650 = vand.u32 %v102, 4294901760
    %6651 = vmatpush1.msra.mxu0 %v6650
    %6652 = vmatprep.subr.mxu0 0.0
    %v6653 = vand.u32 %v101, 4294901760
    %6654 = vmatpush1.msra.mxu0 %v6653
    %6655 = vmatprep.subr.mxu0 0.0
    %v6656 = vand.u32 %v100, 4294901760
    %6657 = vmatpush1.msra.mxu0 %v6656
    %6658 = vmatprep.subr.mxu0 0.0
    %v6659 = vand.u32 %v99, 4294901760
    %6660 = vmatpush1.msra.mxu0 %v6659
    %6661 = vmatprep.subr.mxu0 0.0
    %6662 = vmatpush2.msra.mxu0 0.0
    %6663 = vmatprep.subr.mxu0 0.0
    %6664 = vmatpush2.msra.mxu0 0.0
    %6665 = vmatprep.subr.mxu0 0.0
    %6666 = vmatpush2.msra.mxu0 0.0
    %6667 = vmatprep.subr.mxu0 0.0
    %6668 = vmatpush2.msra.mxu0 0.0
    %6669 = vmatprep.subr.mxu0 0.0
    %6670 = vmatpush2.msra.mxu0 0.0
    %6671 = vmatprep.subr.mxu0 0.0
    %6672 = vmatpush2.msra.mxu0 0.0
    %6673 = vmatprep.subr.mxu0 0.0
    %6674 = vmatpush2.msra.mxu0 0.0
    %6675 = vmatprep.subr.mxu0 0.0
    %6676 = vmatpush2.msra.mxu0 0.0
    %6677 = vmatprep.subr.mxu0 0.0
    %6678 = vmatpush2.msra.mxu0 0.0
    %6679 = vmatprep.subr.mxu0 0.0
    %6680 = vmatpush2.msra.mxu0 0.0
    %6681 = vmatprep.subr.mxu0 0.0
    %6682 = vmatpush2.msra.mxu0 0.0
    %6683 = vmatprep.subr.mxu0 0.0
    %6684 = vmatpush2.msra.mxu0 0.0
    %6685 = vmatprep.subr.mxu0 0.0
    %6686 = vmatpush2.msra.mxu0 0.0
    %6687 = vmatprep.subr.mxu0 0.0
    %6688 = vmatpush2.msra.mxu0 0.0
    %6689 = vmatprep.subr.mxu0 0.0
    %6690 = vmatpush2.msra.mxu0 0.0
    %6691 = vmatprep.subr.mxu0 0.0
    %6692 = vmatpush2.msra.mxu0 0.0
    %6693 = vmatprep.mubr.f32.mxu0 0.0
    %v6694 = vand.u32 %v6623, 4294901760
    %v6695 = vsub.f32 %v6623, %v6694
    %v6696 = vand.u32 %v6695, 4294901760
    %v6697 = vsub.f32 %v6695, %v6696
    %v6698 = vand.u32 %v6697, 4294901760
    %6699 = vmatmul.mubr.f32.gmra.mxu0 %v6698
    %v6700 = vpop.f32.mrf.mxu0
    %v6701 = vadd.f32 %v6619, %v6700
    %v6702 = vpop.f32.mrf.mxu0
    %6703 = vdwg.mxu0
    %6704 = vmatprep.subr.mxu0 0.0
    %6705 = vmatpush1.msra.mxu0 0.0
    %6706 = vmatprep.subr.mxu0 0.0
    %6707 = vmatpush1.msra.mxu0 0.0
    %6708 = vmatprep.subr.mxu0 0.0
    %6709 = vmatpush1.msra.mxu0 0.0
    %6710 = vmatprep.subr.mxu0 0.0
    %6711 = vmatpush1.msra.mxu0 0.0
    %6712 = vmatprep.subr.mxu0 0.0
    %6713 = vmatpush1.msra.mxu0 0.0
    %6714 = vmatprep.subr.mxu0 0.0
    %6715 = vmatpush1.msra.mxu0 0.0
    %6716 = vmatprep.subr.mxu0 0.0
    %6717 = vmatpush1.msra.mxu0 0.0
    %6718 = vmatprep.subr.mxu0 0.0
    %6719 = vmatpush1.msra.mxu0 0.0
    %6720 = vmatprep.subr.mxu0 0.0
    %6721 = vmatpush1.msra.mxu0 0.0
    %6722 = vmatprep.subr.mxu0 0.0
    %6723 = vmatpush1.msra.mxu0 0.0
    %6724 = vmatprep.subr.mxu0 0.0
    %6725 = vmatpush1.msra.mxu0 0.0
    %6726 = vmatprep.subr.mxu0 0.0
    %6727 = vmatpush1.msra.mxu0 0.0
    %6728 = vmatprep.subr.mxu0 0.0
    %v6729 = vand.u32 %v102, 4294901760
    %v6730 = vsub.f32 %v102, %v6729
    %v6731 = vand.u32 %v6730, 4294901760
    %v6732 = vsub.f32 %v6730, %v6731
    %v6733 = vand.u32 %v6732, 4294901760
    %6734 = vmatpush1.msra.mxu0 %v6733
    %6735 = vmatprep.subr.mxu0 0.0
    %v6736 = vand.u32 %v101, 4294901760
    %v6737 = vsub.f32 %v101, %v6736
    %v6738 = vand.u32 %v6737, 4294901760
    %v6739 = vsub.f32 %v6737, %v6738
    %v6740 = vand.u32 %v6739, 4294901760
    %6741 = vmatpush1.msra.mxu0 %v6740
    %6742 = vmatprep.subr.mxu0 0.0
    %v6743 = vand.u32 %v100, 4294901760
    %v6744 = vsub.f32 %v100, %v6743
    %v6745 = vand.u32 %v6744, 4294901760
    %v6746 = vsub.f32 %v6744, %v6745
    %v6747 = vand.u32 %v6746, 4294901760
    %6748 = vmatpush1.msra.mxu0 %v6747
    %6749 = vmatprep.subr.mxu0 0.0
    %v6750 = vand.u32 %v99, 4294901760
    %v6751 = vsub.f32 %v99, %v6750
    %v6752 = vand.u32 %v6751, 4294901760
    %v6753 = vsub.f32 %v6751, %v6752
    %v6754 = vand.u32 %v6753, 4294901760
    %6755 = vmatpush1.msra.mxu0 %v6754
    %6756 = vmatprep.subr.mxu0 0.0
    %6757 = vmatpush2.msra.mxu0 0.0
    %6758 = vmatprep.subr.mxu0 0.0
    %6759 = vmatpush2.msra.mxu0 0.0
    %6760 = vmatprep.subr.mxu0 0.0
    %6761 = vmatpush2.msra.mxu0 0.0
    %6762 = vmatprep.subr.mxu0 0.0
    %6763 = vmatpush2.msra.mxu0 0.0
    %6764 = vmatprep.subr.mxu0 0.0
    %6765 = vmatpush2.msra.mxu0 0.0
    %6766 = vmatprep.subr.mxu0 0.0
    %6767 = vmatpush2.msra.mxu0 0.0
    %6768 = vmatprep.subr.mxu0 0.0
    %6769 = vmatpush2.msra.mxu0 0.0
    %6770 = vmatprep.subr.mxu0 0.0
    %6771 = vmatpush2.msra.mxu0 0.0
    %6772 = vmatprep.subr.mxu0 0.0
    %6773 = vmatpush2.msra.mxu0 0.0
    %6774 = vmatprep.subr.mxu0 0.0
    %6775 = vmatpush2.msra.mxu0 0.0
    %6776 = vmatprep.subr.mxu0 0.0
    %6777 = vmatpush2.msra.mxu0 0.0
    %6778 = vmatprep.subr.mxu0 0.0
    %6779 = vmatpush2.msra.mxu0 0.0
    %6780 = vmatprep.subr.mxu0 0.0
    %6781 = vmatpush2.msra.mxu0 0.0
    %6782 = vmatprep.subr.mxu0 0.0
    %6783 = vmatpush2.msra.mxu0 0.0
    %6784 = vmatprep.subr.mxu0 0.0
    %6785 = vmatpush2.msra.mxu0 0.0
    %6786 = vmatprep.subr.mxu0 0.0
    %6787 = vmatpush2.msra.mxu0 0.0
    %6788 = vmatprep.mubr.f32.mxu0 0.0
    %v6789 = vand.u32 %v6623, 4294901760
    %6790 = vmatmul.mubr.f32.gmra.mxu0 %v6789
    %v6791 = vpop.f32.mrf.mxu0
    %v6792 = vadd.f32 %v6701, %v6791
    %v6793 = vpop.f32.mrf.mxu0
    %6794 = vdwg.mxu0
    %6795 = vmatprep.subr.mxu0 0.0
    %6796 = vmatpush1.msra.mxu0 0.0
    %6797 = vmatprep.subr.mxu0 0.0
    %6798 = vmatpush1.msra.mxu0 0.0
    %6799 = vmatprep.subr.mxu0 0.0
    %6800 = vmatpush1.msra.mxu0 0.0
    %6801 = vmatprep.subr.mxu0 0.0
    %6802 = vmatpush1.msra.mxu0 0.0
    %6803 = vmatprep.subr.mxu0 0.0
    %6804 = vmatpush1.msra.mxu0 0.0
    %6805 = vmatprep.subr.mxu0 0.0
    %6806 = vmatpush1.msra.mxu0 0.0
    %6807 = vmatprep.subr.mxu0 0.0
    %6808 = vmatpush1.msra.mxu0 0.0
    %6809 = vmatprep.subr.mxu0 0.0
    %6810 = vmatpush1.msra.mxu0 0.0
    %6811 = vmatprep.subr.mxu0 0.0
    %6812 = vmatpush1.msra.mxu0 0.0
    %6813 = vmatprep.subr.mxu0 0.0
    %6814 = vmatpush1.msra.mxu0 0.0
    %6815 = vmatprep.subr.mxu0 0.0
    %6816 = vmatpush1.msra.mxu0 0.0
    %6817 = vmatprep.subr.mxu0 0.0
    %6818 = vmatpush1.msra.mxu0 0.0
    %6819 = vmatprep.subr.mxu0 0.0
    %v6820 = vand.u32 %v102, 4294901760
    %v6821 = vsub.f32 %v102, %v6820
    %6822 = vmatpush1.msra.mxu0 %v6821
    %6823 = vmatprep.subr.mxu0 0.0
    %v6824 = vand.u32 %v101, 4294901760
    %v6825 = vsub.f32 %v101, %v6824
    %6826 = vmatpush1.msra.mxu0 %v6825
    %6827 = vmatprep.subr.mxu0 0.0
    %v6828 = vand.u32 %v100, 4294901760
    %v6829 = vsub.f32 %v100, %v6828
    %6830 = vmatpush1.msra.mxu0 %v6829
    %6831 = vmatprep.subr.mxu0 0.0
    %v6832 = vand.u32 %v99, 4294901760
    %v6833 = vsub.f32 %v99, %v6832
    %6834 = vmatpush1.msra.mxu0 %v6833
    %6835 = vmatprep.subr.mxu0 0.0
    %6836 = vmatpush2.msra.mxu0 0.0
    %6837 = vmatprep.subr.mxu0 0.0
    %6838 = vmatpush2.msra.mxu0 0.0
    %6839 = vmatprep.subr.mxu0 0.0
    %6840 = vmatpush2.msra.mxu0 0.0
    %6841 = vmatprep.subr.mxu0 0.0
    %6842 = vmatpush2.msra.mxu0 0.0
    %6843 = vmatprep.subr.mxu0 0.0
    %6844 = vmatpush2.msra.mxu0 0.0
    %6845 = vmatprep.subr.mxu0 0.0
    %6846 = vmatpush2.msra.mxu0 0.0
    %6847 = vmatprep.subr.mxu0 0.0
    %6848 = vmatpush2.msra.mxu0 0.0
    %6849 = vmatprep.subr.mxu0 0.0
    %6850 = vmatpush2.msra.mxu0 0.0
    %6851 = vmatprep.subr.mxu0 0.0
    %6852 = vmatpush2.msra.mxu0 0.0
    %6853 = vmatprep.subr.mxu0 0.0
    %6854 = vmatpush2.msra.mxu0 0.0
    %6855 = vmatprep.subr.mxu0 0.0
    %6856 = vmatpush2.msra.mxu0 0.0
    %6857 = vmatprep.subr.mxu0 0.0
    %6858 = vmatpush2.msra.mxu0 0.0
    %6859 = vmatprep.subr.mxu0 0.0
    %6860 = vmatpush2.msra.mxu0 0.0
    %6861 = vmatprep.subr.mxu0 0.0
    %6862 = vmatpush2.msra.mxu0 0.0
    %6863 = vmatprep.subr.mxu0 0.0
    %6864 = vmatpush2.msra.mxu0 0.0
    %6865 = vmatprep.subr.mxu0 0.0
    %6866 = vmatpush2.msra.mxu0 0.0
    %6867 = vmatprep.mubr.f32.mxu0 0.0
    %v6868 = vand.u32 %v6623, 4294901760
    %v6869 = vsub.f32 %v6623, %v6868
    %6870 = vmatmul.mubr.f32.gmra.mxu0 %v6869
    %v6871 = vpop.f32.mrf.mxu0
    %v6872 = vadd.f32 %v6792, %v6871
    %v6873 = vpop.f32.mrf.mxu0
    %6874 = vdwg.mxu0
    %6875 = vmatprep.subr.mxu0 0.0
    %6876 = vmatpush1.msra.mxu0 0.0
    %6877 = vmatprep.subr.mxu0 0.0
    %6878 = vmatpush1.msra.mxu0 0.0
    %6879 = vmatprep.subr.mxu0 0.0
    %6880 = vmatpush1.msra.mxu0 0.0
    %6881 = vmatprep.subr.mxu0 0.0
    %6882 = vmatpush1.msra.mxu0 0.0
    %6883 = vmatprep.subr.mxu0 0.0
    %6884 = vmatpush1.msra.mxu0 0.0
    %6885 = vmatprep.subr.mxu0 0.0
    %6886 = vmatpush1.msra.mxu0 0.0
    %6887 = vmatprep.subr.mxu0 0.0
    %6888 = vmatpush1.msra.mxu0 0.0
    %6889 = vmatprep.subr.mxu0 0.0
    %6890 = vmatpush1.msra.mxu0 0.0
    %6891 = vmatprep.subr.mxu0 0.0
    %6892 = vmatpush1.msra.mxu0 0.0
    %6893 = vmatprep.subr.mxu0 0.0
    %6894 = vmatpush1.msra.mxu0 0.0
    %6895 = vmatprep.subr.mxu0 0.0
    %6896 = vmatpush1.msra.mxu0 0.0
    %6897 = vmatprep.subr.mxu0 0.0
    %6898 = vmatpush1.msra.mxu0 0.0
    %6899 = vmatprep.subr.mxu0 0.0
    %v6900 = vand.u32 %v102, 4294901760
    %6901 = vmatpush1.msra.mxu0 %v6900
    %6902 = vmatprep.subr.mxu0 0.0
    %v6903 = vand.u32 %v101, 4294901760
    %6904 = vmatpush1.msra.mxu0 %v6903
    %6905 = vmatprep.subr.mxu0 0.0
    %v6906 = vand.u32 %v100, 4294901760
    %6907 = vmatpush1.msra.mxu0 %v6906
    %6908 = vmatprep.subr.mxu0 0.0
    %v6909 = vand.u32 %v99, 4294901760
    %6910 = vmatpush1.msra.mxu0 %v6909
    %6911 = vmatprep.subr.mxu0 0.0
    %6912 = vmatpush2.msra.mxu0 0.0
    %6913 = vmatprep.subr.mxu0 0.0
    %6914 = vmatpush2.msra.mxu0 0.0
    %6915 = vmatprep.subr.mxu0 0.0
    %6916 = vmatpush2.msra.mxu0 0.0
    %6917 = vmatprep.subr.mxu0 0.0
    %6918 = vmatpush2.msra.mxu0 0.0
    %6919 = vmatprep.subr.mxu0 0.0
    %6920 = vmatpush2.msra.mxu0 0.0
    %6921 = vmatprep.subr.mxu0 0.0
    %6922 = vmatpush2.msra.mxu0 0.0
    %6923 = vmatprep.subr.mxu0 0.0
    %6924 = vmatpush2.msra.mxu0 0.0
    %6925 = vmatprep.subr.mxu0 0.0
    %6926 = vmatpush2.msra.mxu0 0.0
    %6927 = vmatprep.subr.mxu0 0.0
    %6928 = vmatpush2.msra.mxu0 0.0
    %6929 = vmatprep.subr.mxu0 0.0
    %6930 = vmatpush2.msra.mxu0 0.0
    %6931 = vmatprep.subr.mxu0 0.0
    %6932 = vmatpush2.msra.mxu0 0.0
    %6933 = vmatprep.subr.mxu0 0.0
    %6934 = vmatpush2.msra.mxu0 0.0
    %6935 = vmatprep.subr.mxu0 0.0
    %6936 = vmatpush2.msra.mxu0 0.0
    %6937 = vmatprep.subr.mxu0 0.0
    %6938 = vmatpush2.msra.mxu0 0.0
    %6939 = vmatprep.subr.mxu0 0.0
    %6940 = vmatpush2.msra.mxu0 0.0
    %6941 = vmatprep.subr.mxu0 0.0
    %6942 = vmatpush2.msra.mxu0 0.0
    %6943 = vmatprep.mubr.f32.mxu0 0.0
    %v6944 = vand.u32 %v6623, 4294901760
    %v6945 = vsub.f32 %v6623, %v6944
    %v6946 = vand.u32 %v6945, 4294901760
    %6947 = vmatmul.mubr.f32.gmra.mxu0 %v6946
    %v6948 = vpop.f32.mrf.mxu0
    %v6949 = vadd.f32 %v6872, %v6948
    %v6950 = vpop.f32.mrf.mxu0
    %6951 = vdwg.mxu0
    %6952 = vmatprep.subr.mxu0 0.0
    %6953 = vmatpush1.msra.mxu0 0.0
    %6954 = vmatprep.subr.mxu0 0.0
    %6955 = vmatpush1.msra.mxu0 0.0
    %6956 = vmatprep.subr.mxu0 0.0
    %6957 = vmatpush1.msra.mxu0 0.0
    %6958 = vmatprep.subr.mxu0 0.0
    %6959 = vmatpush1.msra.mxu0 0.0
    %6960 = vmatprep.subr.mxu0 0.0
    %6961 = vmatpush1.msra.mxu0 0.0
    %6962 = vmatprep.subr.mxu0 0.0
    %6963 = vmatpush1.msra.mxu0 0.0
    %6964 = vmatprep.subr.mxu0 0.0
    %6965 = vmatpush1.msra.mxu0 0.0
    %6966 = vmatprep.subr.mxu0 0.0
    %6967 = vmatpush1.msra.mxu0 0.0
    %6968 = vmatprep.subr.mxu0 0.0
    %6969 = vmatpush1.msra.mxu0 0.0
    %6970 = vmatprep.subr.mxu0 0.0
    %6971 = vmatpush1.msra.mxu0 0.0
    %6972 = vmatprep.subr.mxu0 0.0
    %6973 = vmatpush1.msra.mxu0 0.0
    %6974 = vmatprep.subr.mxu0 0.0
    %6975 = vmatpush1.msra.mxu0 0.0
    %6976 = vmatprep.subr.mxu0 0.0
    %v6977 = vand.u32 %v102, 4294901760
    %v6978 = vsub.f32 %v102, %v6977
    %v6979 = vand.u32 %v6978, 4294901760
    %6980 = vmatpush1.msra.mxu0 %v6979
    %6981 = vmatprep.subr.mxu0 0.0
    %v6982 = vand.u32 %v101, 4294901760
    %v6983 = vsub.f32 %v101, %v6982
    %v6984 = vand.u32 %v6983, 4294901760
    %6985 = vmatpush1.msra.mxu0 %v6984
    %6986 = vmatprep.subr.mxu0 0.0
    %v6987 = vand.u32 %v100, 4294901760
    %v6988 = vsub.f32 %v100, %v6987
    %v6989 = vand.u32 %v6988, 4294901760
    %6990 = vmatpush1.msra.mxu0 %v6989
    %6991 = vmatprep.subr.mxu0 0.0
    %v6992 = vand.u32 %v99, 4294901760
    %v6993 = vsub.f32 %v99, %v6992
    %v6994 = vand.u32 %v6993, 4294901760
    %6995 = vmatpush1.msra.mxu0 %v6994
    %6996 = vmatprep.subr.mxu0 0.0
    %6997 = vmatpush2.msra.mxu0 0.0
    %6998 = vmatprep.subr.mxu0 0.0
    %6999 = vmatpush2.msra.mxu0 0.0
    %7000 = vmatprep.subr.mxu0 0.0
    %7001 = vmatpush2.msra.mxu0 0.0
    %7002 = vmatprep.subr.mxu0 0.0
    %7003 = vmatpush2.msra.mxu0 0.0
    %7004 = vmatprep.subr.mxu0 0.0
    %7005 = vmatpush2.msra.mxu0 0.0
    %7006 = vmatprep.subr.mxu0 0.0
    %7007 = vmatpush2.msra.mxu0 0.0
    %7008 = vmatprep.subr.mxu0 0.0
    %7009 = vmatpush2.msra.mxu0 0.0
    %7010 = vmatprep.subr.mxu0 0.0
    %7011 = vmatpush2.msra.mxu0 0.0
    %7012 = vmatprep.subr.mxu0 0.0
    %7013 = vmatpush2.msra.mxu0 0.0
    %7014 = vmatprep.subr.mxu0 0.0
    %7015 = vmatpush2.msra.mxu0 0.0
    %7016 = vmatprep.subr.mxu0 0.0
    %7017 = vmatpush2.msra.mxu0 0.0
    %7018 = vmatprep.subr.mxu0 0.0
    %7019 = vmatpush2.msra.mxu0 0.0
    %7020 = vmatprep.subr.mxu0 0.0
    %7021 = vmatpush2.msra.mxu0 0.0
    %7022 = vmatprep.subr.mxu0 0.0
    %7023 = vmatpush2.msra.mxu0 0.0
    %7024 = vmatprep.subr.mxu0 0.0
    %7025 = vmatpush2.msra.mxu0 0.0
    %7026 = vmatprep.subr.mxu0 0.0
    %7027 = vmatpush2.msra.mxu0 0.0
    %7028 = vmatprep.mubr.f32.mxu0 0.0
    %v7029 = vand.u32 %v6623, 4294901760
    %7030 = vmatmul.mubr.f32.gmra.mxu0 %v7029
    %v7031 = vpop.f32.mrf.mxu0
    %v7032 = vadd.f32 %v6949, %v7031
    %v7033 = vpop.f32.mrf.mxu0
    %7034 = vdwg.mxu0
    %7035 = vmatprep.subr.mxu0 0.0
    %7036 = vmatpush1.msra.mxu0 0.0
    %7037 = vmatprep.subr.mxu0 0.0
    %7038 = vmatpush1.msra.mxu0 0.0
    %7039 = vmatprep.subr.mxu0 0.0
    %7040 = vmatpush1.msra.mxu0 0.0
    %7041 = vmatprep.subr.mxu0 0.0
    %7042 = vmatpush1.msra.mxu0 0.0
    %7043 = vmatprep.subr.mxu0 0.0
    %7044 = vmatpush1.msra.mxu0 0.0
    %7045 = vmatprep.subr.mxu0 0.0
    %7046 = vmatpush1.msra.mxu0 0.0
    %7047 = vmatprep.subr.mxu0 0.0
    %7048 = vmatpush1.msra.mxu0 0.0
    %7049 = vmatprep.subr.mxu0 0.0
    %7050 = vmatpush1.msra.mxu0 0.0
    %7051 = vmatprep.subr.mxu0 0.0
    %7052 = vmatpush1.msra.mxu0 0.0
    %7053 = vmatprep.subr.mxu0 0.0
    %7054 = vmatpush1.msra.mxu0 0.0
    %7055 = vmatprep.subr.mxu0 0.0
    %7056 = vmatpush1.msra.mxu0 0.0
    %7057 = vmatprep.subr.mxu0 0.0
    %7058 = vmatpush1.msra.mxu0 0.0
    %7059 = vmatprep.subr.mxu0 0.0
    %v7060 = vand.u32 %v102, 4294901760
    %7061 = vmatpush1.msra.mxu0 %v7060
    %7062 = vmatprep.subr.mxu0 0.0
    %v7063 = vand.u32 %v101, 4294901760
    %7064 = vmatpush1.msra.mxu0 %v7063
    %7065 = vmatprep.subr.mxu0 0.0
    %v7066 = vand.u32 %v100, 4294901760
    %7067 = vmatpush1.msra.mxu0 %v7066
    %7068 = vmatprep.subr.mxu0 0.0
    %v7069 = vand.u32 %v99, 4294901760
    %7070 = vmatpush1.msra.mxu0 %v7069
    %7071 = vmatprep.subr.mxu0 0.0
    %7072 = vmatpush2.msra.mxu0 0.0
    %7073 = vmatprep.subr.mxu0 0.0
    %7074 = vmatpush2.msra.mxu0 0.0
    %7075 = vmatprep.subr.mxu0 0.0
    %7076 = vmatpush2.msra.mxu0 0.0
    %7077 = vmatprep.subr.mxu0 0.0
    %7078 = vmatpush2.msra.mxu0 0.0
    %7079 = vmatprep.subr.mxu0 0.0
    %7080 = vmatpush2.msra.mxu0 0.0
    %7081 = vmatprep.subr.mxu0 0.0
    %7082 = vmatpush2.msra.mxu0 0.0
    %7083 = vmatprep.subr.mxu0 0.0
    %7084 = vmatpush2.msra.mxu0 0.0
    %7085 = vmatprep.subr.mxu0 0.0
    %7086 = vmatpush2.msra.mxu0 0.0
    %7087 = vmatprep.subr.mxu0 0.0
    %7088 = vmatpush2.msra.mxu0 0.0
    %7089 = vmatprep.subr.mxu0 0.0
    %7090 = vmatpush2.msra.mxu0 0.0
    %7091 = vmatprep.subr.mxu0 0.0
    %7092 = vmatpush2.msra.mxu0 0.0
    %7093 = vmatprep.subr.mxu0 0.0
    %7094 = vmatpush2.msra.mxu0 0.0
    %7095 = vmatprep.subr.mxu0 0.0
    %7096 = vmatpush2.msra.mxu0 0.0
    %7097 = vmatprep.subr.mxu0 0.0
    %7098 = vmatpush2.msra.mxu0 0.0
    %7099 = vmatprep.subr.mxu0 0.0
    %7100 = vmatpush2.msra.mxu0 0.0
    %7101 = vmatprep.subr.mxu0 0.0
    %7102 = vmatpush2.msra.mxu0 0.0
    %7103 = vmatprep.mubr.f32.mxu0 0.0
    %v7104 = vand.u32 %v6623, 4294901760
    %7105 = vmatmul.mubr.f32.gmra.mxu0 %v7104
    %v7106 = vpop.f32.mrf.mxu0
    %v7107 = vadd.f32 %v7032, %v7106
    %v7108 = vpop.f32.mrf.mxu0
    %7109 = vdwg.mxu0
    %v7110 = vadd.f32 %v7107, %v1098
    %v7111 = vxor.u32 %v7110, 2147483648
    %v7112 = vmul.f32 %v7111, 1.442695
    %v7113 = vpow.pop %v7112
    %v7114 = vadd.f32 %v7113, 1.0
    %v7115 = vrcp.pop %v7114
    %v7116 = vmul.f32 1.0, %v7115
    %v7117 = vtanh.pop %v7110
    %v7118 = vmul.f32 %v7116, %v5125
    %7120 = vrot.lane.b32.xlu0 %v7117, 64
    %v7121 = vpop.permute.xlu0 %7120
    %v7123 = vmul.f32 %v7116, %v7121
    %7125 = vrot.lane.b32.xlu0 %v7123, 32
    %v7126 = vpop.permute.xlu0 %7125
    %v7128 = vadd.f32 %v7118, %v7126
    %v7129 = vtanh.pop %v7128
    %7131 = vrot.lane.b32.xlu0 %v7129, 64
    %v7132 = vpop.permute.xlu0 %7131
    %v7134 = vmul.f32 %v7116, %v7132
    %7136 = vrot.lane.b32.xlu0 %v6136, 32
    %v7137 = vpop.permute.xlu0 %7136
    %v7138 = vsel %vm117, %v7137, 0
    %7140 = vmatprep.subr.mxu0 0.0
    %7141 = vmatpush1.msra.mxu0 0.0
    %7142 = vmatprep.subr.mxu0 0.0
    %7143 = vmatpush1.msra.mxu0 0.0
    %7144 = vmatprep.subr.mxu0 0.0
    %7145 = vmatpush1.msra.mxu0 0.0
    %7146 = vmatprep.subr.mxu0 0.0
    %7147 = vmatpush1.msra.mxu0 0.0
    %7148 = vmatprep.subr.mxu0 0.0
    %7149 = vmatpush1.msra.mxu0 0.0
    %7150 = vmatprep.subr.mxu0 0.0
    %7151 = vmatpush1.msra.mxu0 0.0
    %7152 = vmatprep.subr.mxu0 0.0
    %7153 = vmatpush1.msra.mxu0 0.0
    %7154 = vmatprep.subr.mxu0 0.0
    %7155 = vmatpush1.msra.mxu0 0.0
    %7156 = vmatprep.subr.mxu0 0.0
    %7157 = vmatpush1.msra.mxu0 0.0
    %7158 = vmatprep.subr.mxu0 0.0
    %7159 = vmatpush1.msra.mxu0 0.0
    %7160 = vmatprep.subr.mxu0 0.0
    %7161 = vmatpush1.msra.mxu0 0.0
    %7162 = vmatprep.subr.mxu0 0.0
    %7163 = vmatpush1.msra.mxu0 0.0
    %7164 = vmatprep.subr.mxu0 0.0
    %v7165 = vand.u32 %v115, 4294901760
    %7166 = vmatpush1.msra.mxu0 %v7165
    %7167 = vmatprep.subr.mxu0 0.0
    %v7168 = vand.u32 %v114, 4294901760
    %7169 = vmatpush1.msra.mxu0 %v7168
    %7170 = vmatprep.subr.mxu0 0.0
    %v7171 = vand.u32 %v113, 4294901760
    %7172 = vmatpush1.msra.mxu0 %v7171
    %7173 = vmatprep.subr.mxu0 0.0
    %v7174 = vand.u32 %v112, 4294901760
    %7175 = vmatpush1.msra.mxu0 %v7174
    %7176 = vmatprep.subr.mxu0 0.0
    %7177 = vmatpush2.msra.mxu0 0.0
    %7178 = vmatprep.subr.mxu0 0.0
    %7179 = vmatpush2.msra.mxu0 0.0
    %7180 = vmatprep.subr.mxu0 0.0
    %7181 = vmatpush2.msra.mxu0 0.0
    %7182 = vmatprep.subr.mxu0 0.0
    %7183 = vmatpush2.msra.mxu0 0.0
    %7184 = vmatprep.subr.mxu0 0.0
    %7185 = vmatpush2.msra.mxu0 0.0
    %7186 = vmatprep.subr.mxu0 0.0
    %7187 = vmatpush2.msra.mxu0 0.0
    %7188 = vmatprep.subr.mxu0 0.0
    %7189 = vmatpush2.msra.mxu0 0.0
    %7190 = vmatprep.subr.mxu0 0.0
    %7191 = vmatpush2.msra.mxu0 0.0
    %7192 = vmatprep.subr.mxu0 0.0
    %7193 = vmatpush2.msra.mxu0 0.0
    %7194 = vmatprep.subr.mxu0 0.0
    %7195 = vmatpush2.msra.mxu0 0.0
    %7196 = vmatprep.subr.mxu0 0.0
    %7197 = vmatpush2.msra.mxu0 0.0
    %7198 = vmatprep.subr.mxu0 0.0
    %7199 = vmatpush2.msra.mxu0 0.0
    %7200 = vmatprep.subr.mxu0 0.0
    %7201 = vmatpush2.msra.mxu0 0.0
    %7202 = vmatprep.subr.mxu0 0.0
    %7203 = vmatpush2.msra.mxu0 0.0
    %7204 = vmatprep.subr.mxu0 0.0
    %7205 = vmatpush2.msra.mxu0 0.0
    %7206 = vmatprep.subr.mxu0 0.0
    %7207 = vmatpush2.msra.mxu0 0.0
    %7208 = vmatprep.mubr.f32.mxu0 0.0
    %v7209 = vand.u32 %v7138, 4294901760
    %v7210 = vsub.f32 %v7138, %v7209
    %v7211 = vand.u32 %v7210, 4294901760
    %v7212 = vsub.f32 %v7210, %v7211
    %v7213 = vand.u32 %v7212, 4294901760
    %7214 = vmatmul.mubr.f32.gmra.mxu0 %v7213
    %v7215 = vpop.f32.mrf.mxu0
    %v7216 = vadd.f32 0.0, %v7215
    %v7217 = vpop.f32.mrf.mxu0
    %7218 = vdwg.mxu0
    %7219 = vmatprep.subr.mxu0 0.0
    %7220 = vmatpush1.msra.mxu0 0.0
    %7221 = vmatprep.subr.mxu0 0.0
    %7222 = vmatpush1.msra.mxu0 0.0
    %7223 = vmatprep.subr.mxu0 0.0
    %7224 = vmatpush1.msra.mxu0 0.0
    %7225 = vmatprep.subr.mxu0 0.0
    %7226 = vmatpush1.msra.mxu0 0.0
    %7227 = vmatprep.subr.mxu0 0.0
    %7228 = vmatpush1.msra.mxu0 0.0
    %7229 = vmatprep.subr.mxu0 0.0
    %7230 = vmatpush1.msra.mxu0 0.0
    %7231 = vmatprep.subr.mxu0 0.0
    %7232 = vmatpush1.msra.mxu0 0.0
    %7233 = vmatprep.subr.mxu0 0.0
    %7234 = vmatpush1.msra.mxu0 0.0
    %7235 = vmatprep.subr.mxu0 0.0
    %7236 = vmatpush1.msra.mxu0 0.0
    %7237 = vmatprep.subr.mxu0 0.0
    %7238 = vmatpush1.msra.mxu0 0.0
    %7239 = vmatprep.subr.mxu0 0.0
    %7240 = vmatpush1.msra.mxu0 0.0
    %7241 = vmatprep.subr.mxu0 0.0
    %7242 = vmatpush1.msra.mxu0 0.0
    %7243 = vmatprep.subr.mxu0 0.0
    %v7244 = vand.u32 %v115, 4294901760
    %v7245 = vsub.f32 %v115, %v7244
    %v7246 = vand.u32 %v7245, 4294901760
    %v7247 = vsub.f32 %v7245, %v7246
    %v7248 = vand.u32 %v7247, 4294901760
    %7249 = vmatpush1.msra.mxu0 %v7248
    %7250 = vmatprep.subr.mxu0 0.0
    %v7251 = vand.u32 %v114, 4294901760
    %v7252 = vsub.f32 %v114, %v7251
    %v7253 = vand.u32 %v7252, 4294901760
    %v7254 = vsub.f32 %v7252, %v7253
    %v7255 = vand.u32 %v7254, 4294901760
    %7256 = vmatpush1.msra.mxu0 %v7255
    %7257 = vmatprep.subr.mxu0 0.0
    %v7258 = vand.u32 %v113, 4294901760
    %v7259 = vsub.f32 %v113, %v7258
    %v7260 = vand.u32 %v7259, 4294901760
    %v7261 = vsub.f32 %v7259, %v7260
    %v7262 = vand.u32 %v7261, 4294901760
    %7263 = vmatpush1.msra.mxu0 %v7262
    %7264 = vmatprep.subr.mxu0 0.0
    %v7265 = vand.u32 %v112, 4294901760
    %v7266 = vsub.f32 %v112, %v7265
    %v7267 = vand.u32 %v7266, 4294901760
    %v7268 = vsub.f32 %v7266, %v7267
    %v7269 = vand.u32 %v7268, 4294901760
    %7270 = vmatpush1.msra.mxu0 %v7269
    %7271 = vmatprep.subr.mxu0 0.0
    %7272 = vmatpush2.msra.mxu0 0.0
    %7273 = vmatprep.subr.mxu0 0.0
    %7274 = vmatpush2.msra.mxu0 0.0
    %7275 = vmatprep.subr.mxu0 0.0
    %7276 = vmatpush2.msra.mxu0 0.0
    %7277 = vmatprep.subr.mxu0 0.0
    %7278 = vmatpush2.msra.mxu0 0.0
    %7279 = vmatprep.subr.mxu0 0.0
    %7280 = vmatpush2.msra.mxu0 0.0
    %7281 = vmatprep.subr.mxu0 0.0
    %7282 = vmatpush2.msra.mxu0 0.0
    %7283 = vmatprep.subr.mxu0 0.0
    %7284 = vmatpush2.msra.mxu0 0.0
    %7285 = vmatprep.subr.mxu0 0.0
    %7286 = vmatpush2.msra.mxu0 0.0
    %7287 = vmatprep.subr.mxu0 0.0
    %7288 = vmatpush2.msra.mxu0 0.0
    %7289 = vmatprep.subr.mxu0 0.0
    %7290 = vmatpush2.msra.mxu0 0.0
    %7291 = vmatprep.subr.mxu0 0.0
    %7292 = vmatpush2.msra.mxu0 0.0
    %7293 = vmatprep.subr.mxu0 0.0
    %7294 = vmatpush2.msra.mxu0 0.0
    %7295 = vmatprep.subr.mxu0 0.0
    %7296 = vmatpush2.msra.mxu0 0.0
    %7297 = vmatprep.subr.mxu0 0.0
    %7298 = vmatpush2.msra.mxu0 0.0
    %7299 = vmatprep.subr.mxu0 0.0
    %7300 = vmatpush2.msra.mxu0 0.0
    %7301 = vmatprep.subr.mxu0 0.0
    %7302 = vmatpush2.msra.mxu0 0.0
    %7303 = vmatprep.mubr.f32.mxu0 0.0
    %v7304 = vand.u32 %v7138, 4294901760
    %7305 = vmatmul.mubr.f32.gmra.mxu0 %v7304
    %v7306 = vpop.f32.mrf.mxu0
    %v7307 = vadd.f32 %v7216, %v7306
    %v7308 = vpop.f32.mrf.mxu0
    %7309 = vdwg.mxu0
    %7310 = vmatprep.subr.mxu0 0.0
    %7311 = vmatpush1.msra.mxu0 0.0
    %7312 = vmatprep.subr.mxu0 0.0
    %7313 = vmatpush1.msra.mxu0 0.0
    %7314 = vmatprep.subr.mxu0 0.0
    %7315 = vmatpush1.msra.mxu0 0.0
    %7316 = vmatprep.subr.mxu0 0.0
    %7317 = vmatpush1.msra.mxu0 0.0
    %7318 = vmatprep.subr.mxu0 0.0
    %7319 = vmatpush1.msra.mxu0 0.0
    %7320 = vmatprep.subr.mxu0 0.0
    %7321 = vmatpush1.msra.mxu0 0.0
    %7322 = vmatprep.subr.mxu0 0.0
    %7323 = vmatpush1.msra.mxu0 0.0
    %7324 = vmatprep.subr.mxu0 0.0
    %7325 = vmatpush1.msra.mxu0 0.0
    %7326 = vmatprep.subr.mxu0 0.0
    %7327 = vmatpush1.msra.mxu0 0.0
    %7328 = vmatprep.subr.mxu0 0.0
    %7329 = vmatpush1.msra.mxu0 0.0
    %7330 = vmatprep.subr.mxu0 0.0
    %7331 = vmatpush1.msra.mxu0 0.0
    %7332 = vmatprep.subr.mxu0 0.0
    %7333 = vmatpush1.msra.mxu0 0.0
    %7334 = vmatprep.subr.mxu0 0.0
    %v7335 = vand.u32 %v115, 4294901760
    %v7336 = vsub.f32 %v115, %v7335
    %7337 = vmatpush1.msra.mxu0 %v7336
    %7338 = vmatprep.subr.mxu0 0.0
    %v7339 = vand.u32 %v114, 4294901760
    %v7340 = vsub.f32 %v114, %v7339
    %7341 = vmatpush1.msra.mxu0 %v7340
    %7342 = vmatprep.subr.mxu0 0.0
    %v7343 = vand.u32 %v113, 4294901760
    %v7344 = vsub.f32 %v113, %v7343
    %7345 = vmatpush1.msra.mxu0 %v7344
    %7346 = vmatprep.subr.mxu0 0.0
    %v7347 = vand.u32 %v112, 4294901760
    %v7348 = vsub.f32 %v112, %v7347
    %7349 = vmatpush1.msra.mxu0 %v7348
    %7350 = vmatprep.subr.mxu0 0.0
    %7351 = vmatpush2.msra.mxu0 0.0
    %7352 = vmatprep.subr.mxu0 0.0
    %7353 = vmatpush2.msra.mxu0 0.0
    %7354 = vmatprep.subr.mxu0 0.0
    %7355 = vmatpush2.msra.mxu0 0.0
    %7356 = vmatprep.subr.mxu0 0.0
    %7357 = vmatpush2.msra.mxu0 0.0
    %7358 = vmatprep.subr.mxu0 0.0
    %7359 = vmatpush2.msra.mxu0 0.0
    %7360 = vmatprep.subr.mxu0 0.0
    %7361 = vmatpush2.msra.mxu0 0.0
    %7362 = vmatprep.subr.mxu0 0.0
    %7363 = vmatpush2.msra.mxu0 0.0
    %7364 = vmatprep.subr.mxu0 0.0
    %7365 = vmatpush2.msra.mxu0 0.0
    %7366 = vmatprep.subr.mxu0 0.0
    %7367 = vmatpush2.msra.mxu0 0.0
    %7368 = vmatprep.subr.mxu0 0.0
    %7369 = vmatpush2.msra.mxu0 0.0
    %7370 = vmatprep.subr.mxu0 0.0
    %7371 = vmatpush2.msra.mxu0 0.0
    %7372 = vmatprep.subr.mxu0 0.0
    %7373 = vmatpush2.msra.mxu0 0.0
    %7374 = vmatprep.subr.mxu0 0.0
    %7375 = vmatpush2.msra.mxu0 0.0
    %7376 = vmatprep.subr.mxu0 0.0
    %7377 = vmatpush2.msra.mxu0 0.0
    %7378 = vmatprep.subr.mxu0 0.0
    %7379 = vmatpush2.msra.mxu0 0.0
    %7380 = vmatprep.subr.mxu0 0.0
    %7381 = vmatpush2.msra.mxu0 0.0
    %7382 = vmatprep.mubr.f32.mxu0 0.0
    %v7383 = vand.u32 %v7138, 4294901760
    %v7384 = vsub.f32 %v7138, %v7383
    %7385 = vmatmul.mubr.f32.gmra.mxu0 %v7384
    %v7386 = vpop.f32.mrf.mxu0
    %v7387 = vadd.f32 %v7307, %v7386
    %v7388 = vpop.f32.mrf.mxu0
    %7389 = vdwg.mxu0
    %7390 = vmatprep.subr.mxu0 0.0
    %7391 = vmatpush1.msra.mxu0 0.0
    %7392 = vmatprep.subr.mxu0 0.0
    %7393 = vmatpush1.msra.mxu0 0.0
    %7394 = vmatprep.subr.mxu0 0.0
    %7395 = vmatpush1.msra.mxu0 0.0
    %7396 = vmatprep.subr.mxu0 0.0
    %7397 = vmatpush1.msra.mxu0 0.0
    %7398 = vmatprep.subr.mxu0 0.0
    %7399 = vmatpush1.msra.mxu0 0.0
    %7400 = vmatprep.subr.mxu0 0.0
    %7401 = vmatpush1.msra.mxu0 0.0
    %7402 = vmatprep.subr.mxu0 0.0
    %7403 = vmatpush1.msra.mxu0 0.0
    %7404 = vmatprep.subr.mxu0 0.0
    %7405 = vmatpush1.msra.mxu0 0.0
    %7406 = vmatprep.subr.mxu0 0.0
    %7407 = vmatpush1.msra.mxu0 0.0
    %7408 = vmatprep.subr.mxu0 0.0
    %7409 = vmatpush1.msra.mxu0 0.0
    %7410 = vmatprep.subr.mxu0 0.0
    %7411 = vmatpush1.msra.mxu0 0.0
    %7412 = vmatprep.subr.mxu0 0.0
    %7413 = vmatpush1.msra.mxu0 0.0
    %7414 = vmatprep.subr.mxu0 0.0
    %v7415 = vand.u32 %v115, 4294901760
    %7416 = vmatpush1.msra.mxu0 %v7415
    %7417 = vmatprep.subr.mxu0 0.0
    %v7418 = vand.u32 %v114, 4294901760
    %7419 = vmatpush1.msra.mxu0 %v7418
    %7420 = vmatprep.subr.mxu0 0.0
    %v7421 = vand.u32 %v113, 4294901760
    %7422 = vmatpush1.msra.mxu0 %v7421
    %7423 = vmatprep.subr.mxu0 0.0
    %v7424 = vand.u32 %v112, 4294901760
    %7425 = vmatpush1.msra.mxu0 %v7424
    %7426 = vmatprep.subr.mxu0 0.0
    %7427 = vmatpush2.msra.mxu0 0.0
    %7428 = vmatprep.subr.mxu0 0.0
    %7429 = vmatpush2.msra.mxu0 0.0
    %7430 = vmatprep.subr.mxu0 0.0
    %7431 = vmatpush2.msra.mxu0 0.0
    %7432 = vmatprep.subr.mxu0 0.0
    %7433 = vmatpush2.msra.mxu0 0.0
    %7434 = vmatprep.subr.mxu0 0.0
    %7435 = vmatpush2.msra.mxu0 0.0
    %7436 = vmatprep.subr.mxu0 0.0
    %7437 = vmatpush2.msra.mxu0 0.0
    %7438 = vmatprep.subr.mxu0 0.0
    %7439 = vmatpush2.msra.mxu0 0.0
    %7440 = vmatprep.subr.mxu0 0.0
    %7441 = vmatpush2.msra.mxu0 0.0
    %7442 = vmatprep.subr.mxu0 0.0
    %7443 = vmatpush2.msra.mxu0 0.0
    %7444 = vmatprep.subr.mxu0 0.0
    %7445 = vmatpush2.msra.mxu0 0.0
    %7446 = vmatprep.subr.mxu0 0.0
    %7447 = vmatpush2.msra.mxu0 0.0
    %7448 = vmatprep.subr.mxu0 0.0
    %7449 = vmatpush2.msra.mxu0 0.0
    %7450 = vmatprep.subr.mxu0 0.0
    %7451 = vmatpush2.msra.mxu0 0.0
    %7452 = vmatprep.subr.mxu0 0.0
    %7453 = vmatpush2.msra.mxu0 0.0
    %7454 = vmatprep.subr.mxu0 0.0
    %7455 = vmatpush2.msra.mxu0 0.0
    %7456 = vmatprep.subr.mxu0 0.0
    %7457 = vmatpush2.msra.mxu0 0.0
    %7458 = vmatprep.mubr.f32.mxu0 0.0
    %v7459 = vand.u32 %v7138, 4294901760
    %v7460 = vsub.f32 %v7138, %v7459
    %v7461 = vand.u32 %v7460, 4294901760
    %7462 = vmatmul.mubr.f32.gmra.mxu0 %v7461
    %v7463 = vpop.f32.mrf.mxu0
    %v7464 = vadd.f32 %v7387, %v7463
    %v7465 = vpop.f32.mrf.mxu0
    %7466 = vdwg.mxu0
    %7467 = vmatprep.subr.mxu0 0.0
    %7468 = vmatpush1.msra.mxu0 0.0
    %7469 = vmatprep.subr.mxu0 0.0
    %7470 = vmatpush1.msra.mxu0 0.0
    %7471 = vmatprep.subr.mxu0 0.0
    %7472 = vmatpush1.msra.mxu0 0.0
    %7473 = vmatprep.subr.mxu0 0.0
    %7474 = vmatpush1.msra.mxu0 0.0
    %7475 = vmatprep.subr.mxu0 0.0
    %7476 = vmatpush1.msra.mxu0 0.0
    %7477 = vmatprep.subr.mxu0 0.0
    %7478 = vmatpush1.msra.mxu0 0.0
    %7479 = vmatprep.subr.mxu0 0.0
    %7480 = vmatpush1.msra.mxu0 0.0
    %7481 = vmatprep.subr.mxu0 0.0
    %7482 = vmatpush1.msra.mxu0 0.0
    %7483 = vmatprep.subr.mxu0 0.0
    %7484 = vmatpush1.msra.mxu0 0.0
    %7485 = vmatprep.subr.mxu0 0.0
    %7486 = vmatpush1.msra.mxu0 0.0
    %7487 = vmatprep.subr.mxu0 0.0
    %7488 = vmatpush1.msra.mxu0 0.0
    %7489 = vmatprep.subr.mxu0 0.0
    %7490 = vmatpush1.msra.mxu0 0.0
    %7491 = vmatprep.subr.mxu0 0.0
    %v7492 = vand.u32 %v115, 4294901760
    %v7493 = vsub.f32 %v115, %v7492
    %v7494 = vand.u32 %v7493, 4294901760
    %7495 = vmatpush1.msra.mxu0 %v7494
    %7496 = vmatprep.subr.mxu0 0.0
    %v7497 = vand.u32 %v114, 4294901760
    %v7498 = vsub.f32 %v114, %v7497
    %v7499 = vand.u32 %v7498, 4294901760
    %7500 = vmatpush1.msra.mxu0 %v7499
    %7501 = vmatprep.subr.mxu0 0.0
    %v7502 = vand.u32 %v113, 4294901760
    %v7503 = vsub.f32 %v113, %v7502
    %v7504 = vand.u32 %v7503, 4294901760
    %7505 = vmatpush1.msra.mxu0 %v7504
    %7506 = vmatprep.subr.mxu0 0.0
    %v7507 = vand.u32 %v112, 4294901760
    %v7508 = vsub.f32 %v112, %v7507
    %v7509 = vand.u32 %v7508, 4294901760
    %7510 = vmatpush1.msra.mxu0 %v7509
    %7511 = vmatprep.subr.mxu0 0.0
    %7512 = vmatpush2.msra.mxu0 0.0
    %7513 = vmatprep.subr.mxu0 0.0
    %7514 = vmatpush2.msra.mxu0 0.0
    %7515 = vmatprep.subr.mxu0 0.0
    %7516 = vmatpush2.msra.mxu0 0.0
    %7517 = vmatprep.subr.mxu0 0.0
    %7518 = vmatpush2.msra.mxu0 0.0
    %7519 = vmatprep.subr.mxu0 0.0
    %7520 = vmatpush2.msra.mxu0 0.0
    %7521 = vmatprep.subr.mxu0 0.0
    %7522 = vmatpush2.msra.mxu0 0.0
    %7523 = vmatprep.subr.mxu0 0.0
    %7524 = vmatpush2.msra.mxu0 0.0
    %7525 = vmatprep.subr.mxu0 0.0
    %7526 = vmatpush2.msra.mxu0 0.0
    %7527 = vmatprep.subr.mxu0 0.0
    %7528 = vmatpush2.msra.mxu0 0.0
    %7529 = vmatprep.subr.mxu0 0.0
    %7530 = vmatpush2.msra.mxu0 0.0
    %7531 = vmatprep.subr.mxu0 0.0
    %7532 = vmatpush2.msra.mxu0 0.0
    %7533 = vmatprep.subr.mxu0 0.0
    %7534 = vmatpush2.msra.mxu0 0.0
    %7535 = vmatprep.subr.mxu0 0.0
    %7536 = vmatpush2.msra.mxu0 0.0
    %7537 = vmatprep.subr.mxu0 0.0
    %7538 = vmatpush2.msra.mxu0 0.0
    %7539 = vmatprep.subr.mxu0 0.0
    %7540 = vmatpush2.msra.mxu0 0.0
    %7541 = vmatprep.subr.mxu0 0.0
    %7542 = vmatpush2.msra.mxu0 0.0
    %7543 = vmatprep.mubr.f32.mxu0 0.0
    %v7544 = vand.u32 %v7138, 4294901760
    %7545 = vmatmul.mubr.f32.gmra.mxu0 %v7544
    %v7546 = vpop.f32.mrf.mxu0
    %v7547 = vadd.f32 %v7464, %v7546
    %v7548 = vpop.f32.mrf.mxu0
    %7549 = vdwg.mxu0
    %7550 = vmatprep.subr.mxu0 0.0
    %7551 = vmatpush1.msra.mxu0 0.0
    %7552 = vmatprep.subr.mxu0 0.0
    %7553 = vmatpush1.msra.mxu0 0.0
    %7554 = vmatprep.subr.mxu0 0.0
    %7555 = vmatpush1.msra.mxu0 0.0
    %7556 = vmatprep.subr.mxu0 0.0
    %7557 = vmatpush1.msra.mxu0 0.0
    %7558 = vmatprep.subr.mxu0 0.0
    %7559 = vmatpush1.msra.mxu0 0.0
    %7560 = vmatprep.subr.mxu0 0.0
    %7561 = vmatpush1.msra.mxu0 0.0
    %7562 = vmatprep.subr.mxu0 0.0
    %7563 = vmatpush1.msra.mxu0 0.0
    %7564 = vmatprep.subr.mxu0 0.0
    %7565 = vmatpush1.msra.mxu0 0.0
    %7566 = vmatprep.subr.mxu0 0.0
    %7567 = vmatpush1.msra.mxu0 0.0
    %7568 = vmatprep.subr.mxu0 0.0
    %7569 = vmatpush1.msra.mxu0 0.0
    %7570 = vmatprep.subr.mxu0 0.0
    %7571 = vmatpush1.msra.mxu0 0.0
    %7572 = vmatprep.subr.mxu0 0.0
    %7573 = vmatpush1.msra.mxu0 0.0
    %7574 = vmatprep.subr.mxu0 0.0
    %v7575 = vand.u32 %v115, 4294901760
    %7576 = vmatpush1.msra.mxu0 %v7575
    %7577 = vmatprep.subr.mxu0 0.0
    %v7578 = vand.u32 %v114, 4294901760
    %7579 = vmatpush1.msra.mxu0 %v7578
    %7580 = vmatprep.subr.mxu0 0.0
    %v7581 = vand.u32 %v113, 4294901760
    %7582 = vmatpush1.msra.mxu0 %v7581
    %7583 = vmatprep.subr.mxu0 0.0
    %v7584 = vand.u32 %v112, 4294901760
    %7585 = vmatpush1.msra.mxu0 %v7584
    %7586 = vmatprep.subr.mxu0 0.0
    %7587 = vmatpush2.msra.mxu0 0.0
    %7588 = vmatprep.subr.mxu0 0.0
    %7589 = vmatpush2.msra.mxu0 0.0
    %7590 = vmatprep.subr.mxu0 0.0
    %7591 = vmatpush2.msra.mxu0 0.0
    %7592 = vmatprep.subr.mxu0 0.0
    %7593 = vmatpush2.msra.mxu0 0.0
    %7594 = vmatprep.subr.mxu0 0.0
    %7595 = vmatpush2.msra.mxu0 0.0
    %7596 = vmatprep.subr.mxu0 0.0
    %7597 = vmatpush2.msra.mxu0 0.0
    %7598 = vmatprep.subr.mxu0 0.0
    %7599 = vmatpush2.msra.mxu0 0.0
    %7600 = vmatprep.subr.mxu0 0.0
    %7601 = vmatpush2.msra.mxu0 0.0
    %7602 = vmatprep.subr.mxu0 0.0
    %7603 = vmatpush2.msra.mxu0 0.0
    %7604 = vmatprep.subr.mxu0 0.0
    %7605 = vmatpush2.msra.mxu0 0.0
    %7606 = vmatprep.subr.mxu0 0.0
    %7607 = vmatpush2.msra.mxu0 0.0
    %7608 = vmatprep.subr.mxu0 0.0
    %7609 = vmatpush2.msra.mxu0 0.0
    %7610 = vmatprep.subr.mxu0 0.0
    %7611 = vmatpush2.msra.mxu0 0.0
    %7612 = vmatprep.subr.mxu0 0.0
    %7613 = vmatpush2.msra.mxu0 0.0
    %7614 = vmatprep.subr.mxu0 0.0
    %7615 = vmatpush2.msra.mxu0 0.0
    %7616 = vmatprep.subr.mxu0 0.0
    %7617 = vmatpush2.msra.mxu0 0.0
    %7618 = vmatprep.mubr.f32.mxu0 0.0
    %v7619 = vand.u32 %v7138, 4294901760
    %7620 = vmatmul.mubr.f32.gmra.mxu0 %v7619
    %v7621 = vpop.f32.mrf.mxu0
    %v7622 = vadd.f32 %v7547, %v7621
    %v7623 = vpop.f32.mrf.mxu0
    %7624 = vdwg.mxu0
    %7626 = vrot.lane.b32.xlu0 %v7134, 32
    %v7627 = vpop.permute.xlu0 %7626
    %v7628 = vsel %vm117, %v7627, 0
    %7630 = vmatprep.subr.mxu0 0.0
    %7631 = vmatpush1.msra.mxu0 0.0
    %7632 = vmatprep.subr.mxu0 0.0
    %7633 = vmatpush1.msra.mxu0 0.0
    %7634 = vmatprep.subr.mxu0 0.0
    %7635 = vmatpush1.msra.mxu0 0.0
    %7636 = vmatprep.subr.mxu0 0.0
    %7637 = vmatpush1.msra.mxu0 0.0
    %7638 = vmatprep.subr.mxu0 0.0
    %7639 = vmatpush1.msra.mxu0 0.0
    %7640 = vmatprep.subr.mxu0 0.0
    %7641 = vmatpush1.msra.mxu0 0.0
    %7642 = vmatprep.subr.mxu0 0.0
    %7643 = vmatpush1.msra.mxu0 0.0
    %7644 = vmatprep.subr.mxu0 0.0
    %7645 = vmatpush1.msra.mxu0 0.0
    %7646 = vmatprep.subr.mxu0 0.0
    %7647 = vmatpush1.msra.mxu0 0.0
    %7648 = vmatprep.subr.mxu0 0.0
    %7649 = vmatpush1.msra.mxu0 0.0
    %7650 = vmatprep.subr.mxu0 0.0
    %7651 = vmatpush1.msra.mxu0 0.0
    %7652 = vmatprep.subr.mxu0 0.0
    %7653 = vmatpush1.msra.mxu0 0.0
    %7654 = vmatprep.subr.mxu0 0.0
    %v7655 = vand.u32 %v111, 4294901760
    %7656 = vmatpush1.msra.mxu0 %v7655
    %7657 = vmatprep.subr.mxu0 0.0
    %v7658 = vand.u32 %v110, 4294901760
    %7659 = vmatpush1.msra.mxu0 %v7658
    %7660 = vmatprep.subr.mxu0 0.0
    %v7661 = vand.u32 %v109, 4294901760
    %7662 = vmatpush1.msra.mxu0 %v7661
    %7663 = vmatprep.subr.mxu0 0.0
    %v7664 = vand.u32 %v108, 4294901760
    %7665 = vmatpush1.msra.mxu0 %v7664
    %7666 = vmatprep.subr.mxu0 0.0
    %7667 = vmatpush2.msra.mxu0 0.0
    %7668 = vmatprep.subr.mxu0 0.0
    %7669 = vmatpush2.msra.mxu0 0.0
    %7670 = vmatprep.subr.mxu0 0.0
    %7671 = vmatpush2.msra.mxu0 0.0
    %7672 = vmatprep.subr.mxu0 0.0
    %7673 = vmatpush2.msra.mxu0 0.0
    %7674 = vmatprep.subr.mxu0 0.0
    %7675 = vmatpush2.msra.mxu0 0.0
    %7676 = vmatprep.subr.mxu0 0.0
    %7677 = vmatpush2.msra.mxu0 0.0
    %7678 = vmatprep.subr.mxu0 0.0
    %7679 = vmatpush2.msra.mxu0 0.0
    %7680 = vmatprep.subr.mxu0 0.0
    %7681 = vmatpush2.msra.mxu0 0.0
    %7682 = vmatprep.subr.mxu0 0.0
    %7683 = vmatpush2.msra.mxu0 0.0
    %7684 = vmatprep.subr.mxu0 0.0
    %7685 = vmatpush2.msra.mxu0 0.0
    %7686 = vmatprep.subr.mxu0 0.0
    %7687 = vmatpush2.msra.mxu0 0.0
    %7688 = vmatprep.subr.mxu0 0.0
    %7689 = vmatpush2.msra.mxu0 0.0
    %7690 = vmatprep.subr.mxu0 0.0
    %7691 = vmatpush2.msra.mxu0 0.0
    %7692 = vmatprep.subr.mxu0 0.0
    %7693 = vmatpush2.msra.mxu0 0.0
    %7694 = vmatprep.subr.mxu0 0.0
    %7695 = vmatpush2.msra.mxu0 0.0
    %7696 = vmatprep.subr.mxu0 0.0
    %7697 = vmatpush2.msra.mxu0 0.0
    %7698 = vmatprep.mubr.f32.mxu0 0.0
    %v7699 = vand.u32 %v7628, 4294901760
    %v7700 = vsub.f32 %v7628, %v7699
    %v7701 = vand.u32 %v7700, 4294901760
    %v7702 = vsub.f32 %v7700, %v7701
    %v7703 = vand.u32 %v7702, 4294901760
    %7704 = vmatmul.mubr.f32.gmra.mxu0 %v7703
    %v7705 = vpop.f32.mrf.mxu0
    %v7706 = vadd.f32 %v7622, %v7705
    %v7707 = vpop.f32.mrf.mxu0
    %7708 = vdwg.mxu0
    %7709 = vmatprep.subr.mxu0 0.0
    %7710 = vmatpush1.msra.mxu0 0.0
    %7711 = vmatprep.subr.mxu0 0.0
    %7712 = vmatpush1.msra.mxu0 0.0
    %7713 = vmatprep.subr.mxu0 0.0
    %7714 = vmatpush1.msra.mxu0 0.0
    %7715 = vmatprep.subr.mxu0 0.0
    %7716 = vmatpush1.msra.mxu0 0.0
    %7717 = vmatprep.subr.mxu0 0.0
    %7718 = vmatpush1.msra.mxu0 0.0
    %7719 = vmatprep.subr.mxu0 0.0
    %7720 = vmatpush1.msra.mxu0 0.0
    %7721 = vmatprep.subr.mxu0 0.0
    %7722 = vmatpush1.msra.mxu0 0.0
    %7723 = vmatprep.subr.mxu0 0.0
    %7724 = vmatpush1.msra.mxu0 0.0
    %7725 = vmatprep.subr.mxu0 0.0
    %7726 = vmatpush1.msra.mxu0 0.0
    %7727 = vmatprep.subr.mxu0 0.0
    %7728 = vmatpush1.msra.mxu0 0.0
    %7729 = vmatprep.subr.mxu0 0.0
    %7730 = vmatpush1.msra.mxu0 0.0
    %7731 = vmatprep.subr.mxu0 0.0
    %7732 = vmatpush1.msra.mxu0 0.0
    %7733 = vmatprep.subr.mxu0 0.0
    %v7734 = vand.u32 %v111, 4294901760
    %v7735 = vsub.f32 %v111, %v7734
    %v7736 = vand.u32 %v7735, 4294901760
    %v7737 = vsub.f32 %v7735, %v7736
    %v7738 = vand.u32 %v7737, 4294901760
    %7739 = vmatpush1.msra.mxu0 %v7738
    %7740 = vmatprep.subr.mxu0 0.0
    %v7741 = vand.u32 %v110, 4294901760
    %v7742 = vsub.f32 %v110, %v7741
    %v7743 = vand.u32 %v7742, 4294901760
    %v7744 = vsub.f32 %v7742, %v7743
    %v7745 = vand.u32 %v7744, 4294901760
    %7746 = vmatpush1.msra.mxu0 %v7745
    %7747 = vmatprep.subr.mxu0 0.0
    %v7748 = vand.u32 %v109, 4294901760
    %v7749 = vsub.f32 %v109, %v7748
    %v7750 = vand.u32 %v7749, 4294901760
    %v7751 = vsub.f32 %v7749, %v7750
    %v7752 = vand.u32 %v7751, 4294901760
    %7753 = vmatpush1.msra.mxu0 %v7752
    %7754 = vmatprep.subr.mxu0 0.0
    %v7755 = vand.u32 %v108, 4294901760
    %v7756 = vsub.f32 %v108, %v7755
    %v7757 = vand.u32 %v7756, 4294901760
    %v7758 = vsub.f32 %v7756, %v7757
    %v7759 = vand.u32 %v7758, 4294901760
    %7760 = vmatpush1.msra.mxu0 %v7759
    %7761 = vmatprep.subr.mxu0 0.0
    %7762 = vmatpush2.msra.mxu0 0.0
    %7763 = vmatprep.subr.mxu0 0.0
    %7764 = vmatpush2.msra.mxu0 0.0
    %7765 = vmatprep.subr.mxu0 0.0
    %7766 = vmatpush2.msra.mxu0 0.0
    %7767 = vmatprep.subr.mxu0 0.0
    %7768 = vmatpush2.msra.mxu0 0.0
    %7769 = vmatprep.subr.mxu0 0.0
    %7770 = vmatpush2.msra.mxu0 0.0
    %7771 = vmatprep.subr.mxu0 0.0
    %7772 = vmatpush2.msra.mxu0 0.0
    %7773 = vmatprep.subr.mxu0 0.0
    %7774 = vmatpush2.msra.mxu0 0.0
    %7775 = vmatprep.subr.mxu0 0.0
    %7776 = vmatpush2.msra.mxu0 0.0
    %7777 = vmatprep.subr.mxu0 0.0
    %7778 = vmatpush2.msra.mxu0 0.0
    %7779 = vmatprep.subr.mxu0 0.0
    %7780 = vmatpush2.msra.mxu0 0.0
    %7781 = vmatprep.subr.mxu0 0.0
    %7782 = vmatpush2.msra.mxu0 0.0
    %7783 = vmatprep.subr.mxu0 0.0
    %7784 = vmatpush2.msra.mxu0 0.0
    %7785 = vmatprep.subr.mxu0 0.0
    %7786 = vmatpush2.msra.mxu0 0.0
    %7787 = vmatprep.subr.mxu0 0.0
    %7788 = vmatpush2.msra.mxu0 0.0
    %7789 = vmatprep.subr.mxu0 0.0
    %7790 = vmatpush2.msra.mxu0 0.0
    %7791 = vmatprep.subr.mxu0 0.0
    %7792 = vmatpush2.msra.mxu0 0.0
    %7793 = vmatprep.mubr.f32.mxu0 0.0
    %v7794 = vand.u32 %v7628, 4294901760
    %7795 = vmatmul.mubr.f32.gmra.mxu0 %v7794
    %v7796 = vpop.f32.mrf.mxu0
    %v7797 = vadd.f32 %v7706, %v7796
    %v7798 = vpop.f32.mrf.mxu0
    %7799 = vdwg.mxu0
    %7800 = vmatprep.subr.mxu0 0.0
    %7801 = vmatpush1.msra.mxu0 0.0
    %7802 = vmatprep.subr.mxu0 0.0
    %7803 = vmatpush1.msra.mxu0 0.0
    %7804 = vmatprep.subr.mxu0 0.0
    %7805 = vmatpush1.msra.mxu0 0.0
    %7806 = vmatprep.subr.mxu0 0.0
    %7807 = vmatpush1.msra.mxu0 0.0
    %7808 = vmatprep.subr.mxu0 0.0
    %7809 = vmatpush1.msra.mxu0 0.0
    %7810 = vmatprep.subr.mxu0 0.0
    %7811 = vmatpush1.msra.mxu0 0.0
    %7812 = vmatprep.subr.mxu0 0.0
    %7813 = vmatpush1.msra.mxu0 0.0
    %7814 = vmatprep.subr.mxu0 0.0
    %7815 = vmatpush1.msra.mxu0 0.0
    %7816 = vmatprep.subr.mxu0 0.0
    %7817 = vmatpush1.msra.mxu0 0.0
    %7818 = vmatprep.subr.mxu0 0.0
    %7819 = vmatpush1.msra.mxu0 0.0
    %7820 = vmatprep.subr.mxu0 0.0
    %7821 = vmatpush1.msra.mxu0 0.0
    %7822 = vmatprep.subr.mxu0 0.0
    %7823 = vmatpush1.msra.mxu0 0.0
    %7824 = vmatprep.subr.mxu0 0.0
    %v7825 = vand.u32 %v111, 4294901760
    %v7826 = vsub.f32 %v111, %v7825
    %7827 = vmatpush1.msra.mxu0 %v7826
    %7828 = vmatprep.subr.mxu0 0.0
    %v7829 = vand.u32 %v110, 4294901760
    %v7830 = vsub.f32 %v110, %v7829
    %7831 = vmatpush1.msra.mxu0 %v7830
    %7832 = vmatprep.subr.mxu0 0.0
    %v7833 = vand.u32 %v109, 4294901760
    %v7834 = vsub.f32 %v109, %v7833
    %7835 = vmatpush1.msra.mxu0 %v7834
    %7836 = vmatprep.subr.mxu0 0.0
    %v7837 = vand.u32 %v108, 4294901760
    %v7838 = vsub.f32 %v108, %v7837
    %7839 = vmatpush1.msra.mxu0 %v7838
    %7840 = vmatprep.subr.mxu0 0.0
    %7841 = vmatpush2.msra.mxu0 0.0
    %7842 = vmatprep.subr.mxu0 0.0
    %7843 = vmatpush2.msra.mxu0 0.0
    %7844 = vmatprep.subr.mxu0 0.0
    %7845 = vmatpush2.msra.mxu0 0.0
    %7846 = vmatprep.subr.mxu0 0.0
    %7847 = vmatpush2.msra.mxu0 0.0
    %7848 = vmatprep.subr.mxu0 0.0
    %7849 = vmatpush2.msra.mxu0 0.0
    %7850 = vmatprep.subr.mxu0 0.0
    %7851 = vmatpush2.msra.mxu0 0.0
    %7852 = vmatprep.subr.mxu0 0.0
    %7853 = vmatpush2.msra.mxu0 0.0
    %7854 = vmatprep.subr.mxu0 0.0
    %7855 = vmatpush2.msra.mxu0 0.0
    %7856 = vmatprep.subr.mxu0 0.0
    %7857 = vmatpush2.msra.mxu0 0.0
    %7858 = vmatprep.subr.mxu0 0.0
    %7859 = vmatpush2.msra.mxu0 0.0
    %7860 = vmatprep.subr.mxu0 0.0
    %7861 = vmatpush2.msra.mxu0 0.0
    %7862 = vmatprep.subr.mxu0 0.0
    %7863 = vmatpush2.msra.mxu0 0.0
    %7864 = vmatprep.subr.mxu0 0.0
    %7865 = vmatpush2.msra.mxu0 0.0
    %7866 = vmatprep.subr.mxu0 0.0
    %7867 = vmatpush2.msra.mxu0 0.0
    %7868 = vmatprep.subr.mxu0 0.0
    %7869 = vmatpush2.msra.mxu0 0.0
    %7870 = vmatprep.subr.mxu0 0.0
    %7871 = vmatpush2.msra.mxu0 0.0
    %7872 = vmatprep.mubr.f32.mxu0 0.0
    %v7873 = vand.u32 %v7628, 4294901760
    %v7874 = vsub.f32 %v7628, %v7873
    %7875 = vmatmul.mubr.f32.gmra.mxu0 %v7874
    %v7876 = vpop.f32.mrf.mxu0
    %v7877 = vadd.f32 %v7797, %v7876
    %v7878 = vpop.f32.mrf.mxu0
    %7879 = vdwg.mxu0
    %7880 = vmatprep.subr.mxu0 0.0
    %7881 = vmatpush1.msra.mxu0 0.0
    %7882 = vmatprep.subr.mxu0 0.0
    %7883 = vmatpush1.msra.mxu0 0.0
    %7884 = vmatprep.subr.mxu0 0.0
    %7885 = vmatpush1.msra.mxu0 0.0
    %7886 = vmatprep.subr.mxu0 0.0
    %7887 = vmatpush1.msra.mxu0 0.0
    %7888 = vmatprep.subr.mxu0 0.0
    %7889 = vmatpush1.msra.mxu0 0.0
    %7890 = vmatprep.subr.mxu0 0.0
    %7891 = vmatpush1.msra.mxu0 0.0
    %7892 = vmatprep.subr.mxu0 0.0
    %7893 = vmatpush1.msra.mxu0 0.0
    %7894 = vmatprep.subr.mxu0 0.0
    %7895 = vmatpush1.msra.mxu0 0.0
    %7896 = vmatprep.subr.mxu0 0.0
    %7897 = vmatpush1.msra.mxu0 0.0
    %7898 = vmatprep.subr.mxu0 0.0
    %7899 = vmatpush1.msra.mxu0 0.0
    %7900 = vmatprep.subr.mxu0 0.0
    %7901 = vmatpush1.msra.mxu0 0.0
    %7902 = vmatprep.subr.mxu0 0.0
    %7903 = vmatpush1.msra.mxu0 0.0
    %7904 = vmatprep.subr.mxu0 0.0
    %v7905 = vand.u32 %v111, 4294901760
    %7906 = vmatpush1.msra.mxu0 %v7905
    %7907 = vmatprep.subr.mxu0 0.0
    %v7908 = vand.u32 %v110, 4294901760
    %7909 = vmatpush1.msra.mxu0 %v7908
    %7910 = vmatprep.subr.mxu0 0.0
    %v7911 = vand.u32 %v109, 4294901760
    %7912 = vmatpush1.msra.mxu0 %v7911
    %7913 = vmatprep.subr.mxu0 0.0
    %v7914 = vand.u32 %v108, 4294901760
    %7915 = vmatpush1.msra.mxu0 %v7914
    %7916 = vmatprep.subr.mxu0 0.0
    %7917 = vmatpush2.msra.mxu0 0.0
    %7918 = vmatprep.subr.mxu0 0.0
    %7919 = vmatpush2.msra.mxu0 0.0
    %7920 = vmatprep.subr.mxu0 0.0
    %7921 = vmatpush2.msra.mxu0 0.0
    %7922 = vmatprep.subr.mxu0 0.0
    %7923 = vmatpush2.msra.mxu0 0.0
    %7924 = vmatprep.subr.mxu0 0.0
    %7925 = vmatpush2.msra.mxu0 0.0
    %7926 = vmatprep.subr.mxu0 0.0
    %7927 = vmatpush2.msra.mxu0 0.0
    %7928 = vmatprep.subr.mxu0 0.0
    %7929 = vmatpush2.msra.mxu0 0.0
    %7930 = vmatprep.subr.mxu0 0.0
    %7931 = vmatpush2.msra.mxu0 0.0
    %7932 = vmatprep.subr.mxu0 0.0
    %7933 = vmatpush2.msra.mxu0 0.0
    %7934 = vmatprep.subr.mxu0 0.0
    %7935 = vmatpush2.msra.mxu0 0.0
    %7936 = vmatprep.subr.mxu0 0.0
    %7937 = vmatpush2.msra.mxu0 0.0
    %7938 = vmatprep.subr.mxu0 0.0
    %7939 = vmatpush2.msra.mxu0 0.0
    %7940 = vmatprep.subr.mxu0 0.0
    %7941 = vmatpush2.msra.mxu0 0.0
    %7942 = vmatprep.subr.mxu0 0.0
    %7943 = vmatpush2.msra.mxu0 0.0
    %7944 = vmatprep.subr.mxu0 0.0
    %7945 = vmatpush2.msra.mxu0 0.0
    %7946 = vmatprep.subr.mxu0 0.0
    %7947 = vmatpush2.msra.mxu0 0.0
    %7948 = vmatprep.mubr.f32.mxu0 0.0
    %v7949 = vand.u32 %v7628, 4294901760
    %v7950 = vsub.f32 %v7628, %v7949
    %v7951 = vand.u32 %v7950, 4294901760
    %7952 = vmatmul.mubr.f32.gmra.mxu0 %v7951
    %v7953 = vpop.f32.mrf.mxu0
    %v7954 = vadd.f32 %v7877, %v7953
    %v7955 = vpop.f32.mrf.mxu0
    %7956 = vdwg.mxu0
    %7957 = vmatprep.subr.mxu0 0.0
    %7958 = vmatpush1.msra.mxu0 0.0
    %7959 = vmatprep.subr.mxu0 0.0
    %7960 = vmatpush1.msra.mxu0 0.0
    %7961 = vmatprep.subr.mxu0 0.0
    %7962 = vmatpush1.msra.mxu0 0.0
    %7963 = vmatprep.subr.mxu0 0.0
    %7964 = vmatpush1.msra.mxu0 0.0
    %7965 = vmatprep.subr.mxu0 0.0
    %7966 = vmatpush1.msra.mxu0 0.0
    %7967 = vmatprep.subr.mxu0 0.0
    %7968 = vmatpush1.msra.mxu0 0.0
    %7969 = vmatprep.subr.mxu0 0.0
    %7970 = vmatpush1.msra.mxu0 0.0
    %7971 = vmatprep.subr.mxu0 0.0
    %7972 = vmatpush1.msra.mxu0 0.0
    %7973 = vmatprep.subr.mxu0 0.0
    %7974 = vmatpush1.msra.mxu0 0.0
    %7975 = vmatprep.subr.mxu0 0.0
    %7976 = vmatpush1.msra.mxu0 0.0
    %7977 = vmatprep.subr.mxu0 0.0
    %7978 = vmatpush1.msra.mxu0 0.0
    %7979 = vmatprep.subr.mxu0 0.0
    %7980 = vmatpush1.msra.mxu0 0.0
    %7981 = vmatprep.subr.mxu0 0.0
    %v7982 = vand.u32 %v111, 4294901760
    %v7983 = vsub.f32 %v111, %v7982
    %v7984 = vand.u32 %v7983, 4294901760
    %7985 = vmatpush1.msra.mxu0 %v7984
    %7986 = vmatprep.subr.mxu0 0.0
    %v7987 = vand.u32 %v110, 4294901760
    %v7988 = vsub.f32 %v110, %v7987
    %v7989 = vand.u32 %v7988, 4294901760
    %7990 = vmatpush1.msra.mxu0 %v7989
    %7991 = vmatprep.subr.mxu0 0.0
    %v7992 = vand.u32 %v109, 4294901760
    %v7993 = vsub.f32 %v109, %v7992
    %v7994 = vand.u32 %v7993, 4294901760
    %7995 = vmatpush1.msra.mxu0 %v7994
    %7996 = vmatprep.subr.mxu0 0.0
    %v7997 = vand.u32 %v108, 4294901760
    %v7998 = vsub.f32 %v108, %v7997
    %v7999 = vand.u32 %v7998, 4294901760
    %8000 = vmatpush1.msra.mxu0 %v7999
    %8001 = vmatprep.subr.mxu0 0.0
    %8002 = vmatpush2.msra.mxu0 0.0
    %8003 = vmatprep.subr.mxu0 0.0
    %8004 = vmatpush2.msra.mxu0 0.0
    %8005 = vmatprep.subr.mxu0 0.0
    %8006 = vmatpush2.msra.mxu0 0.0
    %8007 = vmatprep.subr.mxu0 0.0
    %8008 = vmatpush2.msra.mxu0 0.0
    %8009 = vmatprep.subr.mxu0 0.0
    %8010 = vmatpush2.msra.mxu0 0.0
    %8011 = vmatprep.subr.mxu0 0.0
    %8012 = vmatpush2.msra.mxu0 0.0
    %8013 = vmatprep.subr.mxu0 0.0
    %8014 = vmatpush2.msra.mxu0 0.0
    %8015 = vmatprep.subr.mxu0 0.0
    %8016 = vmatpush2.msra.mxu0 0.0
    %8017 = vmatprep.subr.mxu0 0.0
    %8018 = vmatpush2.msra.mxu0 0.0
    %8019 = vmatprep.subr.mxu0 0.0
    %8020 = vmatpush2.msra.mxu0 0.0
    %8021 = vmatprep.subr.mxu0 0.0
    %8022 = vmatpush2.msra.mxu0 0.0
    %8023 = vmatprep.subr.mxu0 0.0
    %8024 = vmatpush2.msra.mxu0 0.0
    %8025 = vmatprep.subr.mxu0 0.0
    %8026 = vmatpush2.msra.mxu0 0.0
    %8027 = vmatprep.subr.mxu0 0.0
    %8028 = vmatpush2.msra.mxu0 0.0
    %8029 = vmatprep.subr.mxu0 0.0
    %8030 = vmatpush2.msra.mxu0 0.0
    %8031 = vmatprep.subr.mxu0 0.0
    %8032 = vmatpush2.msra.mxu0 0.0
    %8033 = vmatprep.mubr.f32.mxu0 0.0
    %v8034 = vand.u32 %v7628, 4294901760
    %8035 = vmatmul.mubr.f32.gmra.mxu0 %v8034
    %v8036 = vpop.f32.mrf.mxu0
    %v8037 = vadd.f32 %v7954, %v8036
    %v8038 = vpop.f32.mrf.mxu0
    %8039 = vdwg.mxu0
    %8040 = vmatprep.subr.mxu0 0.0
    %8041 = vmatpush1.msra.mxu0 0.0
    %8042 = vmatprep.subr.mxu0 0.0
    %8043 = vmatpush1.msra.mxu0 0.0
    %8044 = vmatprep.subr.mxu0 0.0
    %8045 = vmatpush1.msra.mxu0 0.0
    %8046 = vmatprep.subr.mxu0 0.0
    %8047 = vmatpush1.msra.mxu0 0.0
    %8048 = vmatprep.subr.mxu0 0.0
    %8049 = vmatpush1.msra.mxu0 0.0
    %8050 = vmatprep.subr.mxu0 0.0
    %8051 = vmatpush1.msra.mxu0 0.0
    %8052 = vmatprep.subr.mxu0 0.0
    %8053 = vmatpush1.msra.mxu0 0.0
    %8054 = vmatprep.subr.mxu0 0.0
    %8055 = vmatpush1.msra.mxu0 0.0
    %8056 = vmatprep.subr.mxu0 0.0
    %8057 = vmatpush1.msra.mxu0 0.0
    %8058 = vmatprep.subr.mxu0 0.0
    %8059 = vmatpush1.msra.mxu0 0.0
    %8060 = vmatprep.subr.mxu0 0.0
    %8061 = vmatpush1.msra.mxu0 0.0
    %8062 = vmatprep.subr.mxu0 0.0
    %8063 = vmatpush1.msra.mxu0 0.0
    %8064 = vmatprep.subr.mxu0 0.0
    %v8065 = vand.u32 %v111, 4294901760
    %8066 = vmatpush1.msra.mxu0 %v8065
    %8067 = vmatprep.subr.mxu0 0.0
    %v8068 = vand.u32 %v110, 4294901760
    %8069 = vmatpush1.msra.mxu0 %v8068
    %8070 = vmatprep.subr.mxu0 0.0
    %v8071 = vand.u32 %v109, 4294901760
    %8072 = vmatpush1.msra.mxu0 %v8071
    %8073 = vmatprep.subr.mxu0 0.0
    %v8074 = vand.u32 %v108, 4294901760
    %8075 = vmatpush1.msra.mxu0 %v8074
    %8076 = vmatprep.subr.mxu0 0.0
    %8077 = vmatpush2.msra.mxu0 0.0
    %8078 = vmatprep.subr.mxu0 0.0
    %8079 = vmatpush2.msra.mxu0 0.0
    %8080 = vmatprep.subr.mxu0 0.0
    %8081 = vmatpush2.msra.mxu0 0.0
    %8082 = vmatprep.subr.mxu0 0.0
    %8083 = vmatpush2.msra.mxu0 0.0
    %8084 = vmatprep.subr.mxu0 0.0
    %8085 = vmatpush2.msra.mxu0 0.0
    %8086 = vmatprep.subr.mxu0 0.0
    %8087 = vmatpush2.msra.mxu0 0.0
    %8088 = vmatprep.subr.mxu0 0.0
    %8089 = vmatpush2.msra.mxu0 0.0
    %8090 = vmatprep.subr.mxu0 0.0
    %8091 = vmatpush2.msra.mxu0 0.0
    %8092 = vmatprep.subr.mxu0 0.0
    %8093 = vmatpush2.msra.mxu0 0.0
    %8094 = vmatprep.subr.mxu0 0.0
    %8095 = vmatpush2.msra.mxu0 0.0
    %8096 = vmatprep.subr.mxu0 0.0
    %8097 = vmatpush2.msra.mxu0 0.0
    %8098 = vmatprep.subr.mxu0 0.0
    %8099 = vmatpush2.msra.mxu0 0.0
    %8100 = vmatprep.subr.mxu0 0.0
    %8101 = vmatpush2.msra.mxu0 0.0
    %8102 = vmatprep.subr.mxu0 0.0
    %8103 = vmatpush2.msra.mxu0 0.0
    %8104 = vmatprep.subr.mxu0 0.0
    %8105 = vmatpush2.msra.mxu0 0.0
    %8106 = vmatprep.subr.mxu0 0.0
    %8107 = vmatpush2.msra.mxu0 0.0
    %8108 = vmatprep.mubr.f32.mxu0 0.0
    %v8109 = vand.u32 %v7628, 4294901760
    %8110 = vmatmul.mubr.f32.gmra.mxu0 %v8109
    %v8111 = vpop.f32.mrf.mxu0
    %v8112 = vadd.f32 %v8037, %v8111
    %v8113 = vpop.f32.mrf.mxu0
    %8114 = vdwg.mxu0
    %v8115 = vadd.f32 %v8112, %v2104
    %v8116 = vxor.u32 %v8115, 2147483648
    %v8117 = vmul.f32 %v8116, 1.442695
    %v8118 = vpow.pop %v8117
    %v8119 = vadd.f32 %v8118, 1.0
    %v8120 = vrcp.pop %v8119
    %v8121 = vmul.f32 1.0, %v8120
    %v8122 = vtanh.pop %v8115
    %v8123 = vmul.f32 %v8121, %v6130
    %8125 = vrot.lane.b32.xlu0 %v8122, 64
    %v8126 = vpop.permute.xlu0 %8125
    %v8128 = vmul.f32 %v8121, %v8126
    %8130 = vrot.lane.b32.xlu0 %v8128, 32
    %v8131 = vpop.permute.xlu0 %8130
    %v8133 = vadd.f32 %v8123, %v8131
    %v8134 = vtanh.pop %v8133
    %8136 = vrot.lane.b32.xlu0 %v8134, 64
    %v8137 = vpop.permute.xlu0 %8136
    %v8139 = vmul.f32 %v8121, %v8137
    %8141 = vrot.lane.b32.xlu0 %v8139, 32
    %v8142 = vpop.permute.xlu0 %8141
    %vm8147 = vcmask 254976
    %8148 = vst.msk [vmem:[#allocation11] sm:$0x3] %vm8147, %v3131
    %8149 = vst.msk [vmem:[#allocation11 + $0x2] sm:$0x3] %vm8147, %v5134
    %8150 = vst.msk [vmem:[#allocation11 + $0x4] sm:$0x3] %vm8147, %v7137
    %8151 = vst.msk [vmem:[#allocation11 + $0x6] sm:$0x3] %vm8147, %v8142
    // Predicated region
    $region50: #{tpu_custom_call.1} parent=1 // pred_check
      _
    $region51: #{tpu_custom_call.1} parent=1 // pred_check_branch
      %8153 = sbr.rel (0) target = $region53
    $region52: #{tpu_custom_call.1} parent=1 // pred_region
      %s8155 = ssub.s32 128, 128
      %8156 = vsyncadd [#allocation4], %s8155
      %s8157 = sshll.u32 [#allocation11], 4
      %s8158 = int_to_ptr.vmem [resolvable:$true] %s8157
      %8163 = dma.vmem_to_hbm [thread:$0]  %s8158, 128, %s7, [#allocation4], 32, 32, 2
    $region53: #{tpu_custom_call.1} parent=1 // pred_fallthru
      _
    // Predicated region
    $region54: #{tpu_custom_call.1} parent=1 // pred_check
      _
    $region55: #{tpu_custom_call.1} parent=1 // pred_check_branch
      %8165 = sbr.rel (0) target = $region57
    $region56: #{tpu_custom_call.1} parent=1 // pred_region
      %8166 = dma.done [#allocation4], 128
    $region57: #{tpu_custom_call.1} parent=1 // pred_fallthru
      _
    %8167 = vsyncpa [#allocation3], 1
    %8168 = vsyncpa [#allocation6], 1
    %8169 = vsyncpa [#allocation9], 1
    %8170 = vsyncpa [#allocation4], 1

</llo_original>
